<compile_context>
chip_gen: v7x
topology: tpu7x:2x2x1
jax: 0.10.0
libtpu: 0.0.40
codegen_flags: <defaults>
</compile_context>

<pallas_src>
import functools

import jax
import jax.numpy as jnp
import numpy as np
from jax.experimental import pallas as pl
from jax.experimental.pallas import tpu as pltpu


# ----------------------------------------------------------------------------- kernel

def _scam_kernel(x_ref, w_ref, b_ref, o_ref, *, rate, th, w8, cout_p):
    # x_ref: (th + 2r, W8 + 2r, Cin)  bf16   halo'd NHWC input tile
    # w_ref: (9, Cin, Cout_p)         bf16   conv weights with BN scale folded in (tap-major)
    # b_ref: (1, Cout_p)              f32    folded BN bias
    # o_ref: (th, W8, Cout_p)         bf16   NHWC output tile (channel-padded, lane-dense)
    acc = None
    for kh in range(3):
        for kw in range(3):
            tap = x_ref[kh * rate:kh * rate + th, kw * rate:kw * rate + w8, :]
            lhs = tap.reshape(th * w8, tap.shape[-1])      # layout-clean: W8 % 8 == 0
            d = jnp.dot(lhs, w_ref[kh * 3 + kw],
                        preferred_element_type=jnp.float32)  # MXU, f32 accumulate
            acc = d if acc is None else acc + d
    y = jnp.maximum(acc + b_ref[...], 0.0).astype(o_ref.dtype)
    o_ref[...] = y.reshape(th, w8, cout_p)


# ----------------------------------------------------------------------------- helpers

def _round_up(x, m):
    return ((x + m - 1) // m) * m


def _cdiv(a, b):
    return (a + b - 1) // b


def _vmem_capacity_bytes():
    try:
        return int(pltpu.get_tpu_info().vmem_capacity_bytes)
    except Exception:
        return 64 * 1024 * 1024          # conservative fallback (v7x per-core VMEM)


def _const_spec(block_shape, index_map, use_buffered):
    """Resident (constant index_map) block: single-buffer it when the API allows."""
    if use_buffered:
        try:
            return pl.BlockSpec(block_shape, index_map, pipeline_mode=pl.Buffered(1))
        except Exception:
            pass
    return pl.BlockSpec(block_shape, index_map)


def _choose_th(N, H, W8, Wp8, Cin, Cout_p, rate, vmem_budget):
    """Output-row tile height: multiple of 8, matmul M ~ 1-2K rows, fits VMEM, grid >= 2 steps."""
    target_rows = 2048 if vmem_budget >= (32 << 20) else 1024
    th = max(8, _cdiv(target_rows, W8))
    th = max(th, 4 * rate)                       # keep halo duplication <= ~1.5x
    th = min(_round_up(th, 8), _round_up(H, 8))

    def footprint(t):
        inp = 2 * (t + 2 * rate) * Wp8 * Cin * 2     # double-buffered bf16 input tile
        out = 2 * t * W8 * Cout_p * 2                # double-buffered bf16 output tile
        wgt = 9 * Cin * Cout_p * 2                   # (single-buffered) folded weights
        acc = t * W8 * Cout_p * 4                    # f32 accumulator temporaries
        tap = t * W8 * Cin * 2                       # per-tap lhs temporary
        return inp + out + wgt + acc + tap + (2 << 20)

    while th > 8 and footprint(th) > vmem_budget:
        th = max(8, _round_up(th // 2, 8))
    # make sure the "parallel" grid has >= 2 steps (megacore / 2-TC sharding)
    while th > 8 and N * _cdiv(H, th) < 2:
        th = max(8, _round_up(th // 2, 8))
    return th


# ----------------------------------------------------------------------------- wrapper

def scam_conv_pallas(x_nchw, w_oihw, gamma, beta, running_mean, running_var,
                     atrous_rate, eps=1e-5, use_buffered_consts=True):
    """Forward of _SCaMConv (eval-mode BN folded). x: (N,Cin,H,W) f32 -> (N,Cout,H,W) f32."""
    N, Cin, H, W = x_nchw.shape
    Cout = w_oihw.shape[0]
    r = int(atrous_rate)

    W8 = _round_up(W, 8)                 # keeps in-kernel reshapes layout-preserving
    Wp8 = W8 + 2 * r
    Cout_p = _round_up(Cout, 128)        # lane-dense output channels (dense vst); pad cols are 0
    # (256-multiple Cout_p would feed the full v6e/v7x MXU width, but costs extra store bytes
    #  in this memory-bound kernel, so we keep the 128 rounding.)

    vmem_cap = _vmem_capacity_bytes()
    th = _choose_th(N, H, W8, Wp8, Cin, Cout_p, r, vmem_budget=int(0.40 * vmem_cap))
    nH = _cdiv(H, th)
    H_t = nH * th

    # ---- fold eval-mode BatchNorm: scale into conv weights, bias as a (1, Cout_p) stream ----
    inv_std = 1.0 / jnp.sqrt(running_var.astype(jnp.float32) + eps)
    scale = gamma.astype(jnp.float32) * inv_std                                 # (Cout,)
    bias = beta.astype(jnp.float32) - running_mean.astype(jnp.float32) * scale  # (Cout,)
    w_k = jnp.transpose(w_oihw.astype(jnp.float32), (2, 3, 1, 0))               # (3,3,Cin,Cout)
    w_k = (w_k * scale).reshape(9, Cin, Cout)
    w_p = jnp.zeros((9, Cin, Cout_p), jnp.float32).at[..., :Cout].set(w_k).astype(jnp.bfloat16)
    bias_p = jnp.zeros((1, Cout_p), jnp.float32).at[0, :Cout].set(bias)

    # ---- layout plumbing: NHWC, bf16, spatial pad (conv halo r + W->W8 + H->H_t) ----
    x_nhwc = jnp.transpose(x_nchw, (0, 2, 3, 1)).astype(jnp.bfloat16)           # (N,H,W,Cin)
    x_pad = jnp.pad(x_nhwc, ((0, 0), (r, r + (H_t - H)), (r, r + (W8 - W)), (0, 0)))
    # Overlapping h-tiles with halo: (N, nH, th+2r, W8+2r, Cin); replaces the 9x im2col.
    x_tiles = jnp.stack([x_pad[:, i * th:i * th + th + 2 * r] for i in range(nH)], axis=1)

    kern = functools.partial(_scam_kernel, rate=r, th=th, w8=W8, cout_p=Cout_p)

    out = pl.pallas_call(
        kern,
        out_shape=jax.ShapeDtypeStruct((N, H_t, W8, Cout_p), jnp.bfloat16),
        grid=(N, nH),
        in_specs=[
            # halo'd input tile (leading N / tile dims squeezed)
            pl.BlockSpec((None, None, th + 2 * r, Wp8, Cin),
                         lambda n, i: (n, i, 0, 0, 0)),
            # resident folded weights / bias (constant index_map)
            _const_spec((9, Cin, Cout_p), lambda n, i: (0, 0, 0), use_buffered_consts),
            _const_spec((1, Cout_p), lambda n, i: (0, 0), use_buffered_consts),
        ],
        out_specs=pl.BlockSpec((None, th, W8, Cout_p), lambda n, i: (n, i, 0, 0)),
        compiler_params=pltpu.CompilerParams(
            dimension_semantics=("parallel", "parallel"),
            vmem_limit_bytes=int(0.70 * vmem_cap),
        ),
    )(x_tiles, w_p, bias_p)

    # epilogue: drop channel/spatial padding, cast back to f32, NHWC -> NCHW (single fused copy)
    y = out[:, :H, :W, :Cout].astype(jnp.float32)
    return jnp.transpose(y, (0, 3, 1, 2))


# ----------------------------------------------------------------------------- reference

def scam_conv_reference(x_nchw, w_oihw, gamma, beta, running_mean, running_var,
                        atrous_rate, eps=1e-5):
    r = atrous_rate
    conv = jax.lax.conv_general_dilated(
        x_nchw, w_oihw,
        window_strides=(1, 1),
        padding=[(r, r), (r, r)],
        rhs_dilation=(r, r),
        dimension_numbers=("NCHW", "OIHW", "NCHW"),
        precision=jax.lax.Precision.HIGHEST,
    )
    scale = (gamma / jnp.sqrt(running_var + eps))[None, :, None, None]
    bias = (beta - running_mean * gamma / jnp.sqrt(running_var + eps))[None, :, None, None]
    return jnp.maximum(conv * scale + bias, 0.0)


# ----------------------------------------------------------------------------- test

if __name__ == "__main__":
    N, Cin, Cout, H, W = 2, 4, 8, 16, 16
    atrous_rate = 2

    key = jax.random.PRNGKey(0)
    kx, kw = jax.random.split(key)
    x = jax.random.normal(kx, (N, Cin, H, W), dtype=jnp.float32)
    # Conv2d(in, out, 3, padding=rate, dilation=rate, bias=False) weight: (Cout, Cin, 3, 3)
    w = jax.random.normal(kw, (Cout, Cin, 3, 3), dtype=jnp.float32) * 0.1

    # Deterministic (synthetic) BatchNorm parameters.
    gamma = 1.0 + 0.1 * jnp.arange(Cout, dtype=jnp.float32)
    beta = 0.05 * jnp.arange(Cout, dtype=jnp.float32) - 0.2
    running_mean = 0.01 * jnp.arange(Cout, dtype=jnp.float32)
    running_var = 1.0 + 0.02 * jnp.arange(Cout, dtype=jnp.float32)

    def run(use_buffered):
        fn = jax.jit(functools.partial(scam_conv_pallas,
                                       atrous_rate=atrous_rate,
                                       use_buffered_consts=use_buffered))
        return fn(x, w, gamma, beta, running_mean, running_var)

    try:
        y = jax.block_until_ready(run(True))
    except Exception:
        # pl.Buffered(1) pipeline_mode unavailable in this environment -> default double buffering
        y = jax.block_until_ready(run(False))

    y_ref = scam_conv_reference(x, w, gamma, beta, running_mean, running_var, atrous_rate)
    # bf16 operands/output with f32 accumulation vs the f32 HIGHEST reference -> ~1e-3..1e-2 error.
    np.testing.assert_allclose(np.asarray(y), np.asarray(y_ref), rtol=2e-2, atol=2e-2)

    print("KERNEL_OK")
</pallas_src>

<mosaic_0001>
module attributes {stable_mosaic.version = 11 : i64} {
  func.func @_scam_kernel(%arg0: i32, %arg1: i32, %arg2: memref<1x1x20x20x4xbf16, #tpu.memory_space<vmem>>, %arg3: memref<9x4x128xbf16, #tpu.memory_space<vmem>>, %arg4: memref<1x128xf32, #tpu.memory_space<vmem>>, %arg5: memref<1x16x16x128xbf16, #tpu.memory_space<vmem>>) attributes {dimension_semantics = [#tpu.dimension_semantics<parallel>, #tpu.dimension_semantics<parallel>], iteration_bounds = array<i64: 2, 1>, scalar_prefetch = 0 : i64, scratch_operands = 0 : i64, tpu.core_type = #tpu.core_type<tc>, window_params = [{transform_indices = @transform_0, window_bounds = array<i64: 1, 1, 20, 20, 4>}, {pipeline_mode = #tpu.pipeline_mode<synchronous>, transform_indices = @transform_1, window_bounds = array<i64: 9, 4, 128>}, {pipeline_mode = #tpu.pipeline_mode<synchronous>, transform_indices = @transform_2, window_bounds = array<i64: 1, 128>}, {transform_indices = @transform_3, window_bounds = array<i64: 1, 16, 16, 128>}]} {
    %c0 = arith.constant 0 : index
    %c0_0 = arith.constant 0 : index
    %c0_1 = arith.constant 0 : index
    %c0_2 = arith.constant 0 : index
    %c0_3 = arith.constant 0 : index
    %0 = vector.load %arg2[%c0, %c0_0, %c0_1, %c0_2, %c0_3] : memref<1x1x20x20x4xbf16, #tpu.memory_space<vmem>>, vector<1x1x16x16x4xbf16>
    %1 = vector.shape_cast %0 : vector<1x1x16x16x4xbf16> to vector<16x16x4xbf16>
    %2 = vector.shape_cast %1 : vector<16x16x4xbf16> to vector<256x4xbf16>
    %c0_4 = arith.constant 0 : index
    %c0_5 = arith.constant 0 : index
    %c0_6 = arith.constant 0 : index
    %3 = vector.load %arg3[%c0_4, %c0_5, %c0_6] : memref<9x4x128xbf16, #tpu.memory_space<vmem>>, vector<1x4x128xbf16>
    %4 = vector.shape_cast %3 : vector<1x4x128xbf16> to vector<4x128xbf16>
    %cst = arith.constant dense<0.000000e+00> : vector<256x128xf32>
    %5 = tpu.matmul %2, %4, %cst {dimension_numbers = #tpu.dot_dimension_numbers<[1], [0], [0], [1], [0, 0, 1, 1], [], []>} : vector<256x4xbf16>, vector<4x128xbf16>, vector<256x128xf32> -> vector<256x128xf32>
    %c0_7 = arith.constant 0 : index
    %c0_8 = arith.constant 0 : index
    %c0_9 = arith.constant 0 : index
    %c2 = arith.constant 2 : index
    %c0_10 = arith.constant 0 : index
    %6 = vector.load %arg2[%c0_7, %c0_8, %c0_9, %c2, %c0_10] : memref<1x1x20x20x4xbf16, #tpu.memory_space<vmem>>, vector<1x1x16x16x4xbf16>
    %7 = vector.shape_cast %6 : vector<1x1x16x16x4xbf16> to vector<16x16x4xbf16>
    %8 = vector.shape_cast %7 : vector<16x16x4xbf16> to vector<256x4xbf16>
    %c1 = arith.constant 1 : index
    %c0_11 = arith.constant 0 : index
    %c0_12 = arith.constant 0 : index
    %9 = vector.load %arg3[%c1, %c0_11, %c0_12] : memref<9x4x128xbf16, #tpu.memory_space<vmem>>, vector<1x4x128xbf16>
    %10 = vector.shape_cast %9 : vector<1x4x128xbf16> to vector<4x128xbf16>
    %cst_13 = arith.constant dense<0.000000e+00> : vector<256x128xf32>
    %11 = tpu.matmul %8, %10, %cst_13 {dimension_numbers = #tpu.dot_dimension_numbers<[1], [0], [0], [1], [0, 0, 1, 1], [], []>} : vector<256x4xbf16>, vector<4x128xbf16>, vector<256x128xf32> -> vector<256x128xf32>
    %12 = arith.addf %5, %11 : vector<256x128xf32>
    %c0_14 = arith.constant 0 : index
    %c0_15 = arith.constant 0 : index
    %c0_16 = arith.constant 0 : index
    %c4 = arith.constant 4 : index
    %c0_17 = arith.constant 0 : index
    %13 = vector.load %arg2[%c0_14, %c0_15, %c0_16, %c4, %c0_17] : memref<1x1x20x20x4xbf16, #tpu.memory_space<vmem>>, vector<1x1x16x16x4xbf16>
    %14 = vector.shape_cast %13 : vector<1x1x16x16x4xbf16> to vector<16x16x4xbf16>
    %15 = vector.shape_cast %14 : vector<16x16x4xbf16> to vector<256x4xbf16>
    %c2_18 = arith.constant 2 : index
    %c0_19 = arith.constant 0 : index
    %c0_20 = arith.constant 0 : index
    %16 = vector.load %arg3[%c2_18, %c0_19, %c0_20] : memref<9x4x128xbf16, #tpu.memory_space<vmem>>, vector<1x4x128xbf16>
    %17 = vector.shape_cast %16 : vector<1x4x128xbf16> to vector<4x128xbf16>
    %cst_21 = arith.constant dense<0.000000e+00> : vector<256x128xf32>
    %18 = tpu.matmul %15, %17, %cst_21 {dimension_numbers = #tpu.dot_dimension_numbers<[1], [0], [0], [1], [0, 0, 1, 1], [], []>} : vector<256x4xbf16>, vector<4x128xbf16>, vector<256x128xf32> -> vector<256x128xf32>
    %19 = arith.addf %12, %18 : vector<256x128xf32>
    %c0_22 = arith.constant 0 : index
    %c0_23 = arith.constant 0 : index
    %c2_24 = arith.constant 2 : index
    %c0_25 = arith.constant 0 : index
    %c0_26 = arith.constant 0 : index
    %20 = vector.load %arg2[%c0_22, %c0_23, %c2_24, %c0_25, %c0_26] : memref<1x1x20x20x4xbf16, #tpu.memory_space<vmem>>, vector<1x1x16x16x4xbf16>
    %21 = vector.shape_cast %20 : vector<1x1x16x16x4xbf16> to vector<16x16x4xbf16>
    %22 = vector.shape_cast %21 : vector<16x16x4xbf16> to vector<256x4xbf16>
    %c3 = arith.constant 3 : index
    %c0_27 = arith.constant 0 : index
    %c0_28 = arith.constant 0 : index
    %23 = vector.load %arg3[%c3, %c0_27, %c0_28] : memref<9x4x128xbf16, #tpu.memory_space<vmem>>, vector<1x4x128xbf16>
    %24 = vector.shape_cast %23 : vector<1x4x128xbf16> to vector<4x128xbf16>
    %cst_29 = arith.constant dense<0.000000e+00> : vector<256x128xf32>
    %25 = tpu.matmul %22, %24, %cst_29 {dimension_numbers = #tpu.dot_dimension_numbers<[1], [0], [0], [1], [0, 0, 1, 1], [], []>} : vector<256x4xbf16>, vector<4x128xbf16>, vector<256x128xf32> -> vector<256x128xf32>
    %26 = arith.addf %19, %25 : vector<256x128xf32>
    %c0_30 = arith.constant 0 : index
    %c0_31 = arith.constant 0 : index
    %c2_32 = arith.constant 2 : index
    %c2_33 = arith.constant 2 : index
    %c0_34 = arith.constant 0 : index
    %27 = vector.load %arg2[%c0_30, %c0_31, %c2_32, %c2_33, %c0_34] : memref<1x1x20x20x4xbf16, #tpu.memory_space<vmem>>, vector<1x1x16x16x4xbf16>
    %28 = vector.shape_cast %27 : vector<1x1x16x16x4xbf16> to vector<16x16x4xbf16>
    %29 = vector.shape_cast %28 : vector<16x16x4xbf16> to vector<256x4xbf16>
    %c4_35 = arith.constant 4 : index
    %c0_36 = arith.constant 0 : index
    %c0_37 = arith.constant 0 : index
    %30 = vector.load %arg3[%c4_35, %c0_36, %c0_37] : memref<9x4x128xbf16, #tpu.memory_space<vmem>>, vector<1x4x128xbf16>
    %31 = vector.shape_cast %30 : vector<1x4x128xbf16> to vector<4x128xbf16>
    %cst_38 = arith.constant dense<0.000000e+00> : vector<256x128xf32>
    %32 = tpu.matmul %29, %31, %cst_38 {dimension_numbers = #tpu.dot_dimension_numbers<[1], [0], [0], [1], [0, 0, 1, 1], [], []>} : vector<256x4xbf16>, vector<4x128xbf16>, vector<256x128xf32> -> vector<256x128xf32>
    %33 = arith.addf %26, %32 : vector<256x128xf32>
    %c0_39 = arith.constant 0 : index
    %c0_40 = arith.constant 0 : index
    %c2_41 = arith.constant 2 : index
    %c4_42 = arith.constant 4 : index
    %c0_43 = arith.constant 0 : index
    %34 = vector.load %arg2[%c0_39, %c0_40, %c2_41, %c4_42, %c0_43] : memref<1x1x20x20x4xbf16, #tpu.memory_space<vmem>>, vector<1x1x16x16x4xbf16>
    %35 = vector.shape_cast %34 : vector<1x1x16x16x4xbf16> to vector<16x16x4xbf16>
    %36 = vector.shape_cast %35 : vector<16x16x4xbf16> to vector<256x4xbf16>
    %c5 = arith.constant 5 : index
    %c0_44 = arith.constant 0 : index
    %c0_45 = arith.constant 0 : index
    %37 = vector.load %arg3[%c5, %c0_44, %c0_45] : memref<9x4x128xbf16, #tpu.memory_space<vmem>>, vector<1x4x128xbf16>
    %38 = vector.shape_cast %37 : vector<1x4x128xbf16> to vector<4x128xbf16>
    %cst_46 = arith.constant dense<0.000000e+00> : vector<256x128xf32>
    %39 = tpu.matmul %36, %38, %cst_46 {dimension_numbers = #tpu.dot_dimension_numbers<[1], [0], [0], [1], [0, 0, 1, 1], [], []>} : vector<256x4xbf16>, vector<4x128xbf16>, vector<256x128xf32> -> vector<256x128xf32>
    %40 = arith.addf %33, %39 : vector<256x128xf32>
    %c0_47 = arith.constant 0 : index
    %c0_48 = arith.constant 0 : index
    %c4_49 = arith.constant 4 : index
    %c0_50 = arith.constant 0 : index
    %c0_51 = arith.constant 0 : index
    %41 = vector.load %arg2[%c0_47, %c0_48, %c4_49, %c0_50, %c0_51] : memref<1x1x20x20x4xbf16, #tpu.memory_space<vmem>>, vector<1x1x16x16x4xbf16>
    %42 = vector.shape_cast %41 : vector<1x1x16x16x4xbf16> to vector<16x16x4xbf16>
    %43 = vector.shape_cast %42 : vector<16x16x4xbf16> to vector<256x4xbf16>
    %c6 = arith.constant 6 : index
    %c0_52 = arith.constant 0 : index
    %c0_53 = arith.constant 0 : index
    %44 = vector.load %arg3[%c6, %c0_52, %c0_53] : memref<9x4x128xbf16, #tpu.memory_space<vmem>>, vector<1x4x128xbf16>
    %45 = vector.shape_cast %44 : vector<1x4x128xbf16> to vector<4x128xbf16>
    %cst_54 = arith.constant dense<0.000000e+00> : vector<256x128xf32>
    %46 = tpu.matmul %43, %45, %cst_54 {dimension_numbers = #tpu.dot_dimension_numbers<[1], [0], [0], [1], [0, 0, 1, 1], [], []>} : vector<256x4xbf16>, vector<4x128xbf16>, vector<256x128xf32> -> vector<256x128xf32>
    %47 = arith.addf %40, %46 : vector<256x128xf32>
    %c0_55 = arith.constant 0 : index
    %c0_56 = arith.constant 0 : index
    %c4_57 = arith.constant 4 : index
    %c2_58 = arith.constant 2 : index
    %c0_59 = arith.constant 0 : index
    %48 = vector.load %arg2[%c0_55, %c0_56, %c4_57, %c2_58, %c0_59] : memref<1x1x20x20x4xbf16, #tpu.memory_space<vmem>>, vector<1x1x16x16x4xbf16>
    %49 = vector.shape_cast %48 : vector<1x1x16x16x4xbf16> to vector<16x16x4xbf16>
    %50 = vector.shape_cast %49 : vector<16x16x4xbf16> to vector<256x4xbf16>
    %c7 = arith.constant 7 : index
    %c0_60 = arith.constant 0 : index
    %c0_61 = arith.constant 0 : index
    %51 = vector.load %arg3[%c7, %c0_60, %c0_61] : memref<9x4x128xbf16, #tpu.memory_space<vmem>>, vector<1x4x128xbf16>
    %52 = vector.shape_cast %51 : vector<1x4x128xbf16> to vector<4x128xbf16>
    %cst_62 = arith.constant dense<0.000000e+00> : vector<256x128xf32>
    %53 = tpu.matmul %50, %52, %cst_62 {dimension_numbers = #tpu.dot_dimension_numbers<[1], [0], [0], [1], [0, 0, 1, 1], [], []>} : vector<256x4xbf16>, vector<4x128xbf16>, vector<256x128xf32> -> vector<256x128xf32>
    %54 = arith.addf %47, %53 : vector<256x128xf32>
    %c0_63 = arith.constant 0 : index
    %c0_64 = arith.constant 0 : index
    %c4_65 = arith.constant 4 : index
    %c4_66 = arith.constant 4 : index
    %c0_67 = arith.constant 0 : index
    %55 = vector.load %arg2[%c0_63, %c0_64, %c4_65, %c4_66, %c0_67] : memref<1x1x20x20x4xbf16, #tpu.memory_space<vmem>>, vector<1x1x16x16x4xbf16>
    %56 = vector.shape_cast %55 : vector<1x1x16x16x4xbf16> to vector<16x16x4xbf16>
    %57 = vector.shape_cast %56 : vector<16x16x4xbf16> to vector<256x4xbf16>
    %c8 = arith.constant 8 : index
    %c0_68 = arith.constant 0 : index
    %c0_69 = arith.constant 0 : index
    %58 = vector.load %arg3[%c8, %c0_68, %c0_69] : memref<9x4x128xbf16, #tpu.memory_space<vmem>>, vector<1x4x128xbf16>
    %59 = vector.shape_cast %58 : vector<1x4x128xbf16> to vector<4x128xbf16>
    %cst_70 = arith.constant dense<0.000000e+00> : vector<256x128xf32>
    %60 = tpu.matmul %57, %59, %cst_70 {dimension_numbers = #tpu.dot_dimension_numbers<[1], [0], [0], [1], [0, 0, 1, 1], [], []>} : vector<256x4xbf16>, vector<4x128xbf16>, vector<256x128xf32> -> vector<256x128xf32>
    %61 = arith.addf %54, %60 : vector<256x128xf32>
    %c0_71 = arith.constant 0 : index
    %c0_72 = arith.constant 0 : index
    %62 = vector.load %arg4[%c0_71, %c0_72] : memref<1x128xf32, #tpu.memory_space<vmem>>, vector<1x128xf32>
    %63 = vector.broadcast %62 : vector<1x128xf32> to vector<256x128xf32>
    %64 = arith.addf %61, %63 : vector<256x128xf32>
    %cst_73 = arith.constant 0.000000e+00 : f32
    %65 = vector.broadcast %cst_73 : f32 to vector<256x128xf32>
    %66 = arith.maximumf %64, %65 : vector<256x128xf32>
    %67 = arith.truncf %66 : vector<256x128xf32> to vector<256x128xbf16>
    %68 = vector.shape_cast %67 : vector<256x128xbf16> to vector<16x16x128xbf16>
    %c0_74 = arith.constant 0 : index
    %c0_75 = arith.constant 0 : index
    %c0_76 = arith.constant 0 : index
    %c0_77 = arith.constant 0 : index
    %69 = vector.load %arg5[%c0_74, %c0_75, %c0_76, %c0_77] : memref<1x16x16x128xbf16, #tpu.memory_space<vmem>>, vector<1x16x16x128xbf16>
    %70 = vector.shape_cast %69 : vector<1x16x16x128xbf16> to vector<16x16x128xbf16>
    %71 = vector.shape_cast %68 : vector<16x16x128xbf16> to vector<1x16x16x128xbf16>
    tpu.vector_store %arg5[%c0_74, %c0_75, %c0_76, %c0_77], %71 {strides = array<i32>} : memref<1x16x16x128xbf16, #tpu.memory_space<vmem>>, vector<1x16x16x128xbf16>,
    return
  }
  func.func @transform_0(%arg0: i32, %arg1: i32) -> (i32, i32, i32, i32, i32) {
    %c0_i32 = arith.constant 0 : i32
    %c0_i32_0 = arith.constant 0 : i32
    %c0_i32_1 = arith.constant 0 : i32
    %c0_i32_2 = arith.constant 0 : i32
    return %arg0, %arg1, %c0_i32, %c0_i32_0, %c0_i32_1 : i32, i32, i32, i32, i32
  }
  func.func @transform_1(%arg0: i32, %arg1: i32) -> (i32, i32, i32) {
    %c0_i32 = arith.constant 0 : i32
    %c0_i32_0 = arith.constant 0 : i32
    %c0_i32_1 = arith.constant 0 : i32
    %c0_i32_2 = arith.constant 0 : i32
    return %c0_i32, %c0_i32_0, %c0_i32_1 : i32, i32, i32
  }
  func.func @transform_2(%arg0: i32, %arg1: i32) -> (i32, i32) {
    %c0_i32 = arith.constant 0 : i32
    %c0_i32_0 = arith.constant 0 : i32
    %c0_i32_1 = arith.constant 0 : i32
    return %c0_i32, %c0_i32_0 : i32, i32
  }
  func.func @transform_3(%arg0: i32, %arg1: i32) -> (i32, i32, i32, i32) {
    %c0_i32 = arith.constant 0 : i32
    %c0_i32_0 = arith.constant 0 : i32
    %c0_i32_1 = arith.constant 0 : i32
    return %arg0, %arg1, %c0_i32, %c0_i32_0 : i32, i32, i32, i32
  }
}

module attributes {stable_mosaic.version = 11 : i64} {
  func.func @_scam_kernel(%arg0: i32, %arg1: i32, %arg2: memref<1x1x20x20x4xbf16, #tpu.memory_space<vmem>>, %arg3: memref<9x4x128xbf16, #tpu.memory_space<vmem>>, %arg4: memref<1x128xf32, #tpu.memory_space<vmem>>, %arg5: memref<1x16x16x128xbf16, #tpu.memory_space<vmem>>) attributes {dimension_semantics = [#tpu.dimension_semantics<parallel>, #tpu.dimension_semantics<parallel>], iteration_bounds = array<i64: 2, 1>, scalar_prefetch = 0 : i64, scratch_operands = 0 : i64, tpu.core_type = #tpu.core_type<tc>, window_params = [{transform_indices = @transform_0, window_bounds = array<i64: 1, 1, 20, 20, 4>}, {pipeline_mode = #tpu.pipeline_mode<synchronous>, transform_indices = @transform_1, window_bounds = array<i64: 9, 4, 128>}, {pipeline_mode = #tpu.pipeline_mode<synchronous>, transform_indices = @transform_2, window_bounds = array<i64: 1, 128>}, {transform_indices = @transform_3, window_bounds = array<i64: 1, 16, 16, 128>}]} {
    %c0 = arith.constant 0 : index
    %c0_0 = arith.constant 0 : index
    %c0_1 = arith.constant 0 : index
    %c0_2 = arith.constant 0 : index
    %c0_3 = arith.constant 0 : index
    %0 = vector.load %arg2[%c0, %c0_0, %c0_1, %c0_2, %c0_3] : memref<1x1x20x20x4xbf16, #tpu.memory_space<vmem>>, vector<1x1x16x16x4xbf16>
    %1 = vector.shape_cast %0 : vector<1x1x16x16x4xbf16> to vector<16x16x4xbf16>
    %2 = vector.shape_cast %1 : vector<16x16x4xbf16> to vector<256x4xbf16>
    %c0_4 = arith.constant 0 : index
    %c0_5 = arith.constant 0 : index
    %c0_6 = arith.constant 0 : index
    %3 = vector.load %arg3[%c0_4, %c0_5, %c0_6] : memref<9x4x128xbf16, #tpu.memory_space<vmem>>, vector<1x4x128xbf16>
    %4 = vector.shape_cast %3 : vector<1x4x128xbf16> to vector<4x128xbf16>
    %cst = arith.constant dense<0.000000e+00> : vector<256x128xf32>
    %5 = tpu.matmul %2, %4, %cst {dimension_numbers = #tpu.dot_dimension_numbers<[1], [0], [0], [1], [0, 0, 1, 1], [], []>} : vector<256x4xbf16>, vector<4x128xbf16>, vector<256x128xf32> -> vector<256x128xf32>
    %c0_7 = arith.constant 0 : index
    %c0_8 = arith.constant 0 : index
    %c0_9 = arith.constant 0 : index
    %c2 = arith.constant 2 : index
    %c0_10 = arith.constant 0 : index
    %6 = vector.load %arg2[%c0_7, %c0_8, %c0_9, %c2, %c0_10] : memref<1x1x20x20x4xbf16, #tpu.memory_space<vmem>>, vector<1x1x16x16x4xbf16>
    %7 = vector.shape_cast %6 : vector<1x1x16x16x4xbf16> to vector<16x16x4xbf16>
    %8 = vector.shape_cast %7 : vector<16x16x4xbf16> to vector<256x4xbf16>
    %c1 = arith.constant 1 : index
    %c0_11 = arith.constant 0 : index
    %c0_12 = arith.constant 0 : index
    %9 = vector.load %arg3[%c1, %c0_11, %c0_12] : memref<9x4x128xbf16, #tpu.memory_space<vmem>>, vector<1x4x128xbf16>
    %10 = vector.shape_cast %9 : vector<1x4x128xbf16> to vector<4x128xbf16>
    %cst_13 = arith.constant dense<0.000000e+00> : vector<256x128xf32>
    %11 = tpu.matmul %8, %10, %cst_13 {dimension_numbers = #tpu.dot_dimension_numbers<[1], [0], [0], [1], [0, 0, 1, 1], [], []>} : vector<256x4xbf16>, vector<4x128xbf16>, vector<256x128xf32> -> vector<256x128xf32>
    %12 = arith.addf %5, %11 : vector<256x128xf32>
    %c0_14 = arith.constant 0 : index
    %c0_15 = arith.constant 0 : index
    %c0_16 = arith.constant 0 : index
    %c4 = arith.constant 4 : index
    %c0_17 = arith.constant 0 : index
    %13 = vector.load %arg2[%c0_14, %c0_15, %c0_16, %c4, %c0_17] : memref<1x1x20x20x4xbf16, #tpu.memory_space<vmem>>, vector<1x1x16x16x4xbf16>
    %14 = vector.shape_cast %13 : vector<1x1x16x16x4xbf16> to vector<16x16x4xbf16>
    %15 = vector.shape_cast %14 : vector<16x16x4xbf16> to vector<256x4xbf16>
    %c2_18 = arith.constant 2 : index
    %c0_19 = arith.constant 0 : index
    %c0_20 = arith.constant 0 : index
    %16 = vector.load %arg3[%c2_18, %c0_19, %c0_20] : memref<9x4x128xbf16, #tpu.memory_space<vmem>>, vector<1x4x128xbf16>
    %17 = vector.shape_cast %16 : vector<1x4x128xbf16> to vector<4x128xbf16>
    %cst_21 = arith.constant dense<0.000000e+00> : vector<256x128xf32>
    %18 = tpu.matmul %15, %17, %cst_21 {dimension_numbers = #tpu.dot_dimension_numbers<[1], [0], [0], [1], [0, 0, 1, 1], [], []>} : vector<256x4xbf16>, vector<4x128xbf16>, vector<256x128xf32> -> vector<256x128xf32>
    %19 = arith.addf %12, %18 : vector<256x128xf32>
    %c0_22 = arith.constant 0 : index
    %c0_23 = arith.constant 0 : index
    %c2_24 = arith.constant 2 : index
    %c0_25 = arith.constant 0 : index
    %c0_26 = arith.constant 0 : index
    %20 = vector.load %arg2[%c0_22, %c0_23, %c2_24, %c0_25, %c0_26] : memref<1x1x20x20x4xbf16, #tpu.memory_space<vmem>>, vector<1x1x16x16x4xbf16>
    %21 = vector.shape_cast %20 : vector<1x1x16x16x4xbf16> to vector<16x16x4xbf16>
    %22 = vector.shape_cast %21 : vector<16x16x4xbf16> to vector<256x4xbf16>
    %c3 = arith.constant 3 : index
    %c0_27 = arith.constant 0 : index
    %c0_28 = arith.constant 0 : index
    %23 = vector.load %arg3[%c3, %c0_27, %c0_28] : memref<9x4x128xbf16, #tpu.memory_space<vmem>>, vector<1x4x128xbf16>
    %24 = vector.shape_cast %23 : vector<1x4x128xbf16> to vector<4x128xbf16>
    %cst_29 = arith.constant dense<0.000000e+00> : vector<256x128xf32>
    %25 = tpu.matmul %22, %24, %cst_29 {dimension_numbers = #tpu.dot_dimension_numbers<[1], [0], [0], [1], [0, 0, 1, 1], [], []>} : vector<256x4xbf16>, vector<4x128xbf16>, vector<256x128xf32> -> vector<256x128xf32>
    %26 = arith.addf %19, %25 : vector<256x128xf32>
    %c0_30 = arith.constant 0 : index
    %c0_31 = arith.constant 0 : index
    %c2_32 = arith.constant 2 : index
    %c2_33 = arith.constant 2 : index
    %c0_34 = arith.constant 0 : index
    %27 = vector.load %arg2[%c0_30, %c0_31, %c2_32, %c2_33, %c0_34] : memref<1x1x20x20x4xbf16, #tpu.memory_space<vmem>>, vector<1x1x16x16x4xbf16>
    %28 = vector.shape_cast %27 : vector<1x1x16x16x4xbf16> to vector<16x16x4xbf16>
    %29 = vector.shape_cast %28 : vector<16x16x4xbf16> to vector<256x4xbf16>
    %c4_35 = arith.constant 4 : index
    %c0_36 = arith.constant 0 : index
    %c0_37 = arith.constant 0 : index
    %30 = vector.load %arg3[%c4_35, %c0_36, %c0_37] : memref<9x4x128xbf16, #tpu.memory_space<vmem>>, vector<1x4x128xbf16>
    %31 = vector.shape_cast %30 : vector<1x4x128xbf16> to vector<4x128xbf16>
    %cst_38 = arith.constant dense<0.000000e+00> : vector<256x128xf32>
    %32 = tpu.matmul %29, %31, %cst_38 {dimension_numbers = #tpu.dot_dimension_numbers<[1], [0], [0], [1], [0, 0, 1, 1], [], []>} : vector<256x4xbf16>, vector<4x128xbf16>, vector<256x128xf32> -> vector<256x128xf32>
    %33 = arith.addf %26, %32 : vector<256x128xf32>
    %c0_39 = arith.constant 0 : index
    %c0_40 = arith.constant 0 : index
    %c2_41 = arith.constant 2 : index
    %c4_42 = arith.constant 4 : index
    %c0_43 = arith.constant 0 : index
    %34 = vector.load %arg2[%c0_39, %c0_40, %c2_41, %c4_42, %c0_43] : memref<1x1x20x20x4xbf16, #tpu.memory_space<vmem>>, vector<1x1x16x16x4xbf16>
    %35 = vector.shape_cast %34 : vector<1x1x16x16x4xbf16> to vector<16x16x4xbf16>
    %36 = vector.shape_cast %35 : vector<16x16x4xbf16> to vector<256x4xbf16>
    %c5 = arith.constant 5 : index
    %c0_44 = arith.constant 0 : index
    %c0_45 = arith.constant 0 : index
    %37 = vector.load %arg3[%c5, %c0_44, %c0_45] : memref<9x4x128xbf16, #tpu.memory_space<vmem>>, vector<1x4x128xbf16>
    %38 = vector.shape_cast %37 : vector<1x4x128xbf16> to vector<4x128xbf16>
    %cst_46 = arith.constant dense<0.000000e+00> : vector<256x128xf32>
    %39 = tpu.matmul %36, %38, %cst_46 {dimension_numbers = #tpu.dot_dimension_numbers<[1], [0], [0], [1], [0, 0, 1, 1], [], []>} : vector<256x4xbf16>, vector<4x128xbf16>, vector<256x128xf32> -> vector<256x128xf32>
    %40 = arith.addf %33, %39 : vector<256x128xf32>
    %c0_47 = arith.constant 0 : index
    %c0_48 = arith.constant 0 : index
    %c4_49 = arith.constant 4 : index
    %c0_50 = arith.constant 0 : index
    %c0_51 = arith.constant 0 : index
    %41 = vector.load %arg2[%c0_47, %c0_48, %c4_49, %c0_50, %c0_51] : memref<1x1x20x20x4xbf16, #tpu.memory_space<vmem>>, vector<1x1x16x16x4xbf16>
    %42 = vector.shape_cast %41 : vector<1x1x16x16x4xbf16> to vector<16x16x4xbf16>
    %43 = vector.shape_cast %42 : vector<16x16x4xbf16> to vector<256x4xbf16>
    %c6 = arith.constant 6 : index
    %c0_52 = arith.constant 0 : index
    %c0_53 = arith.constant 0 : index
    %44 = vector.load %arg3[%c6, %c0_52, %c0_53] : memref<9x4x128xbf16, #tpu.memory_space<vmem>>, vector<1x4x128xbf16>
    %45 = vector.shape_cast %44 : vector<1x4x128xbf16> to vector<4x128xbf16>
    %cst_54 = arith.constant dense<0.000000e+00> : vector<256x128xf32>
    %46 = tpu.matmul %43, %45, %cst_54 {dimension_numbers = #tpu.dot_dimension_numbers<[1], [0], [0], [1], [0, 0, 1, 1], [], []>} : vector<256x4xbf16>, vector<4x128xbf16>, vector<256x128xf32> -> vector<256x128xf32>
    %47 = arith.addf %40, %46 : vector<256x128xf32>
    %c0_55 = arith.constant 0 : index
    %c0_56 = arith.constant 0 : index
    %c4_57 = arith.constant 4 : index
    %c2_58 = arith.constant 2 : index
    %c0_59 = arith.constant 0 : index
    %48 = vector.load %arg2[%c0_55, %c0_56, %c4_57, %c2_58, %c0_59] : memref<1x1x20x20x4xbf16, #tpu.memory_space<vmem>>, vector<1x1x16x16x4xbf16>
    %49 = vector.shape_cast %48 : vector<1x1x16x16x4xbf16> to vector<16x16x4xbf16>
    %50 = vector.shape_cast %49 : vector<16x16x4xbf16> to vector<256x4xbf16>
    %c7 = arith.constant 7 : index
    %c0_60 = arith.constant 0 : index
    %c0_61 = arith.constant 0 : index
    %51 = vector.load %arg3[%c7, %c0_60, %c0_61] : memref<9x4x128xbf16, #tpu.memory_space<vmem>>, vector<1x4x128xbf16>
    %52 = vector.shape_cast %51 : vector<1x4x128xbf16> to vector<4x128xbf16>
    %cst_62 = arith.constant dense<0.000000e+00> : vector<256x128xf32>
    %53 = tpu.matmul %50, %52, %cst_62 {dimension_numbers = #tpu.dot_dimension_numbers<[1], [0], [0], [1], [0, 0, 1, 1], [], []>} : vector<256x4xbf16>, vector<4x128xbf16>, vector<256x128xf32> -> vector<256x128xf32>
    %54 = arith.addf %47, %53 : vector<256x128xf32>
    %c0_63 = arith.constant 0 : index
    %c0_64 = arith.constant 0 : index
    %c4_65 = arith.constant 4 : index
    %c4_66 = arith.constant 4 : index
    %c0_67 = arith.constant 0 : index
    %55 = vector.load %arg2[%c0_63, %c0_64, %c4_65, %c4_66, %c0_67] : memref<1x1x20x20x4xbf16, #tpu.memory_space<vmem>>, vector<1x1x16x16x4xbf16>
    %56 = vector.shape_cast %55 : vector<1x1x16x16x4xbf16> to vector<16x16x4xbf16>
    %57 = vector.shape_cast %56 : vector<16x16x4xbf16> to vector<256x4xbf16>
    %c8 = arith.constant 8 : index
    %c0_68 = arith.constant 0 : index
    %c0_69 = arith.constant 0 : index
    %58 = vector.load %arg3[%c8, %c0_68, %c0_69] : memref<9x4x128xbf16, #tpu.memory_space<vmem>>, vector<1x4x128xbf16>
    %59 = vector.shape_cast %58 : vector<1x4x128xbf16> to vector<4x128xbf16>
    %cst_70 = arith.constant dense<0.000000e+00> : vector<256x128xf32>
    %60 = tpu.matmul %57, %59, %cst_70 {dimension_numbers = #tpu.dot_dimension_numbers<[1], [0], [0], [1], [0, 0, 1, 1], [], []>} : vector<256x4xbf16>, vector<4x128xbf16>, vector<256x128xf32> -> vector<256x128xf32>
    %61 = arith.addf %54, %60 : vector<256x128xf32>
    %c0_71 = arith.constant 0 : index
    %c0_72 = arith.constant 0 : index
    %62 = vector.load %arg4[%c0_71, %c0_72] : memref<1x128xf32, #tpu.memory_space<vmem>>, vector<1x128xf32>
    %63 = vector.broadcast %62 : vector<1x128xf32> to vector<256x128xf32>
    %64 = arith.addf %61, %63 : vector<256x128xf32>
    %cst_73 = arith.constant 0.000000e+00 : f32
    %65 = vector.broadcast %cst_73 : f32 to vector<256x128xf32>
    %66 = arith.maximumf %64, %65 : vector<256x128xf32>
    %67 = arith.truncf %66 : vector<256x128xf32> to vector<256x128xbf16>
    %68 = vector.shape_cast %67 : vector<256x128xbf16> to vector<16x16x128xbf16>
    %c0_74 = arith.constant 0 : index
    %c0_75 = arith.constant 0 : index
    %c0_76 = arith.constant 0 : index
    %c0_77 = arith.constant 0 : index
    %69 = vector.load %arg5[%c0_74, %c0_75, %c0_76, %c0_77] : memref<1x16x16x128xbf16, #tpu.memory_space<vmem>>, vector<1x16x16x128xbf16>
    %70 = vector.shape_cast %69 : vector<1x16x16x128xbf16> to vector<16x16x128xbf16>
    %71 = vector.shape_cast %68 : vector<16x16x128xbf16> to vector<1x16x16x128xbf16>
    tpu.vector_store %arg5[%c0_74, %c0_75, %c0_76, %c0_77], %71 {strides = array<i32>} : memref<1x16x16x128xbf16, #tpu.memory_space<vmem>>, vector<1x16x16x128xbf16>,
    return
  }
  func.func @transform_0(%arg0: i32, %arg1: i32) -> (i32, i32, i32, i32, i32) {
    %c0_i32 = arith.constant 0 : i32
    %c0_i32_0 = arith.constant 0 : i32
    %c0_i32_1 = arith.constant 0 : i32
    %c0_i32_2 = arith.constant 0 : i32
    return %arg0, %arg1, %c0_i32, %c0_i32_0, %c0_i32_1 : i32, i32, i32, i32, i32
  }
  func.func @transform_1(%arg0: i32, %arg1: i32) -> (i32, i32, i32) {
    %c0_i32 = arith.constant 0 : i32
    %c0_i32_0 = arith.constant 0 : i32
    %c0_i32_1 = arith.constant 0 : i32
    %c0_i32_2 = arith.constant 0 : i32
    return %c0_i32, %c0_i32_0, %c0_i32_1 : i32, i32, i32
  }
  func.func @transform_2(%arg0: i32, %arg1: i32) -> (i32, i32) {
    %c0_i32 = arith.constant 0 : i32
    %c0_i32_0 = arith.constant 0 : i32
    %c0_i32_1 = arith.constant 0 : i32
    return %c0_i32, %c0_i32_0 : i32, i32
  }
  func.func @transform_3(%arg0: i32, %arg1: i32) -> (i32, i32, i32, i32) {
    %c0_i32 = arith.constant 0 : i32
    %c0_i32_0 = arith.constant 0 : i32
    %c0_i32_1 = arith.constant 0 : i32
    return %arg0, %arg1, %c0_i32, %c0_i32_0 : i32, i32, i32, i32
  }
}

</mosaic_0001>

<llo_original>
// kernel: scam_conv_pallas.1
$region0: #{scam_conv_pallas.1}
  #allocation0 [shape = 'u32[]', space=smem, size = 0x4, offset = 0x4, fixed_abs, tag = 'smem constant byte address 0x4 - core index']
  #allocation1 [shape = 'u32[144,128]{1,0:T(1,128)}', space=vmem, size = 0x12000, scoped, tag = 'internal scratch']
  %s0 = inlined_call_operand.vmem [shape: bf16[2,1,20,20,4], index: 0, kind: input, shape index: {}]
  %s1 = inlined_call_operand.vmem [shape: bf16[9,4,128], index: 1, kind: input, shape index: {}]
  %s2 = inlined_call_operand.vmem [shape: f32[1,128], index: 2, kind: input, shape index: {}]
  %s3 = inlined_call_operand.vmem [shape: bf16[2,16,16,128], index: 3, kind: output, shape index: {}]
  %s4 = sld [smem:[#allocation0]]
  $region45: #{scam_conv_pallas.1} parent=0
    _
  %s6 = ssub.s32 1, %s4
  %s7 = scalar_select 0, %s6, %s4
  loop: start=0, step=1, limit=4
  $region2: #{scam_conv_pallas.1} parent=0 // loop_pre_header
    _
  $region3: #{scam_conv_pallas.1} parent=0 // loop_header
    %s9 = sphi 0, %s13
    %p10 = scmp.ge.s32.totalorder %s9, 4
    %s16 = sphi 0, %s28
    %s17 = sphi 0, %s24
    %s18 = sphi 0, %s16
    %s19 = sphi 0, %s17
    %s20 = sphi 0, %s18
    %s21 = sphi 0, %s19
    %s33 = sphi 0, %s35
    %s36 = sphi 0, %s33
    %s37 = sphi 0, %s36
    %s53 = sphi 0, %s37
    %s57 = sphi 0, %s57
    %s59 = sphi 0, %s57
    %s60 = sphi 0, %s59
    %s74 = sphi 0, %s60
    %s78 = sphi 0, %s78
    %s80 = sphi 0, %s78
    %s81 = sphi 0, %s80
    %s95 = sphi 0, %s81
    %s103 = sphi 0, %s105
    %s106 = sphi 0, %s103
    %s107 = sphi 0, %s106
    %s123 = sphi 0, %s107
  $region4: #{scam_conv_pallas.1} parent=0 // loop_header_branch
    %12 = sbr.rel (%p10) target = $region8
  $region5: #{scam_conv_pallas.1} parent=0 // loop_body
    %s14 = ssub.s32 %s9, 1
    %s15 = ssub.s32 %s9, 2
    %s22 = sadd.s32 1, %s17
    %p23 = scmp.ge.s32.totalorder %s22, 1
    %s24 = scalar_select %p23, 0, %s22
    %s25 = sadd.s32 1, %s16
    %s26 = scalar_select %p23, %s25, %s16
    %p27 = scmp.ge.s32.totalorder %s26, 2
    %s28 = scalar_select %p27, 0, %s26
    %s29 = ssub.s32 %s16, %s28
    %s30 = ssub.s32 %s17, %s24
    %s31 = sor.u32 %s29, %s30
    %p32 = scmp.eq.s32.totalorder %s31, 0
    %s34 = sadd.s32 %s33, 1
    %s35 = scalar_select %p32, %s33, %s34
    %p38 = pneg %p32
    %p39 = scmp.eq.s32.totalorder %s9, 1
    %p40 = por %p38, %p39
    %p41 = scmp.ne.s32.totalorder %s33, %s36
    %p42 = scmp.eq.s32.totalorder %s9, 0
    %p43 = por %p41, %p42
    %p44 = scmp.ne.s32.totalorder %s33, %s36
    %p45 = scmp.eq.s32.totalorder %s14, 1
    %p46 = por %p44, %p45
    %p47 = scmp.ne.s32.totalorder %s36, %s37
    %p48 = scmp.eq.s32.totalorder %s14, 0
    %p49 = por %p47, %p48
    %p50 = scmp.ne.s32.totalorder %s36, %s37
    %p51 = scmp.eq.s32.totalorder %s15, 1
    %p52 = por %p50, %p51
    %p54 = scmp.ne.s32.totalorder %s37, %s53
    %p55 = scmp.eq.s32.totalorder %s15, 0
    %p56 = por %p54, %p55
    %s58 = sadd.s32 %s57, 1
    %p61 = scmp.eq.s32.totalorder %s9, 1
    %p62 = scmp.ne.s32.totalorder %s57, %s59
    %p63 = scmp.eq.s32.totalorder %s9, 0
    %p64 = por %p62, %p63
    %p65 = scmp.ne.s32.totalorder %s57, %s59
    %p66 = scmp.eq.s32.totalorder %s14, 1
    %p67 = por %p65, %p66
    %p68 = scmp.ne.s32.totalorder %s59, %s60
    %p69 = scmp.eq.s32.totalorder %s14, 0
    %p70 = por %p68, %p69
    %p71 = scmp.ne.s32.totalorder %s59, %s60
    %p72 = scmp.eq.s32.totalorder %s15, 1
    %p73 = por %p71, %p72
    %p75 = scmp.ne.s32.totalorder %s60, %s74
    %p76 = scmp.eq.s32.totalorder %s15, 0
    %p77 = por %p75, %p76
    %s79 = sadd.s32 %s78, 1
    %p82 = scmp.eq.s32.totalorder %s9, 1
    %p83 = scmp.ne.s32.totalorder %s78, %s80
    %p84 = scmp.eq.s32.totalorder %s9, 0
    %p85 = por %p83, %p84
    %p86 = scmp.ne.s32.totalorder %s78, %s80
    %p87 = scmp.eq.s32.totalorder %s14, 1
    %p88 = por %p86, %p87
    %p89 = scmp.ne.s32.totalorder %s80, %s81
    %p90 = scmp.eq.s32.totalorder %s14, 0
    %p91 = por %p89, %p90
    %p92 = scmp.ne.s32.totalorder %s80, %s81
    %p93 = scmp.eq.s32.totalorder %s15, 1
    %p94 = por %p92, %p93
    %p96 = scmp.ne.s32.totalorder %s81, %s95
    %p97 = scmp.eq.s32.totalorder %s15, 0
    %p98 = por %p96, %p97
    %s99 = ssub.s32 %s16, %s28
    %s100 = ssub.s32 %s17, %s24
    %s101 = sor.u32 %s99, %s100
    %p102 = scmp.eq.s32.totalorder %s101, 0
    %s104 = sadd.s32 %s103, 1
    %s105 = scalar_select %p102, %s103, %s104
    %p108 = pneg %p102
    %p109 = scmp.eq.s32.totalorder %s9, 1
    %p110 = por %p108, %p109
    %p111 = scmp.ne.s32.totalorder %s103, %s106
    %p112 = scmp.eq.s32.totalorder %s9, 0
    %p113 = por %p111, %p112
    %p114 = scmp.ne.s32.totalorder %s103, %s106
    %p115 = scmp.eq.s32.totalorder %s14, 1
    %p116 = por %p114, %p115
    %p117 = scmp.ne.s32.totalorder %s106, %s107
    %p118 = scmp.eq.s32.totalorder %s14, 0
    %p119 = por %p117, %p118
    %p120 = scmp.ne.s32.totalorder %s106, %s107
    %p121 = scmp.eq.s32.totalorder %s15, 1
    %p122 = por %p120, %p121
    %p124 = scmp.ne.s32.totalorder %s107, %s123
    %p125 = scmp.eq.s32.totalorder %s15, 0
    %p126 = por %p124, %p125
    %p127 = scmp.le.s32.totalorder 1, %s9
    %p128 = scmp.lt.s32.totalorder %s9, 3
    %p129 = pnand %p127, %p128
    %p130 = pneg %p129
    // Predicated region
    $region9: #{scam_conv_pallas.1} parent=5 // pred_check
      _
    $region10: #{scam_conv_pallas.1} parent=5 // pred_check_branch
      %132 = sbr.rel (%p129) target = $region12
    $region11: #{scam_conv_pallas.1} parent=5 // pred_region
      %s133 = ssub.s32 %s9, 1
      // Predicated region
      $region13: #{scam_conv_pallas.1} parent=11 // pred_check
        %p134 = pneg %p70
      $region14: #{scam_conv_pallas.1} parent=11 // pred_check_branch
        %136 = sbr.rel (%p134) target = $region16
      $region15: #{scam_conv_pallas.1} parent=11 // pred_region
        _
      $region16: #{scam_conv_pallas.1} parent=11 // pred_fallthru
        _
      // Predicated region
      $region17: #{scam_conv_pallas.1} parent=11 // pred_check
        %p137 = pneg %p91
      $region18: #{scam_conv_pallas.1} parent=11 // pred_check_branch
        %139 = sbr.rel (%p137) target = $region20
      $region19: #{scam_conv_pallas.1} parent=11 // pred_region
        _
      $region20: #{scam_conv_pallas.1} parent=11 // pred_fallthru
        _
    $region12: #{scam_conv_pallas.1} parent=5 // pred_fallthru
      _
    %p140 = scmp.lt.s32.totalorder %s9, 2
    // Predicated region
    $region21: #{scam_conv_pallas.1} parent=5 // pred_check
      %p141 = pneg %p140
    $region22: #{scam_conv_pallas.1} parent=5 // pred_check_branch
      %143 = sbr.rel (%p141) target = $region24
    $region23: #{scam_conv_pallas.1} parent=5 // pred_region
      // Predicated region
      $region25: #{scam_conv_pallas.1} parent=23 // pred_check
        %p144 = pneg %p43
      $region26: #{scam_conv_pallas.1} parent=23 // pred_check_branch
        %146 = sbr.rel (%p144) target = $region28
      $region27: #{scam_conv_pallas.1} parent=23 // pred_region
        %p147 = scmp.lt.s32.totalorder %s16, 1
        %s148 = scalar_select %p147, %s16, 1
        %p149 = scmp.lt.s32.totalorder %s17, 0
        %s150 = scalar_select %p149, %s17, 0
        %s151 = smul.addr %s150, 60
        %s152 = smul.addr %s148, 60
        %s153 = sadd.s32 %s151, %s152
        %s154 = smul.addr %s153, 4
        %s155 = scalar_lea.vmem %s0, %s154
      $region28: #{scam_conv_pallas.1} parent=23 // pred_fallthru
        _
    $region24: #{scam_conv_pallas.1} parent=5 // pred_fallthru
      _
    %p156 = scmp.le.s32.totalorder 1, %s9
    %p157 = scmp.lt.s32.totalorder %s9, 3
    %p158 = pnand %p156, %p157
    %p159 = pneg %p158
    // Predicated region
    $region29: #{scam_conv_pallas.1} parent=5 // pred_check
      _
    $region30: #{scam_conv_pallas.1} parent=5 // pred_check_branch
      %161 = sbr.rel (%p158) target = $region32
    $region31: #{scam_conv_pallas.1} parent=5 // pred_region
      %s162 = ssub.s32 %s9, 1
      %p163 = scmp.lt.s32.totalorder %s18, 1
      %s164 = scalar_select %p163, %s18, 1
      %p165 = scmp.lt.s32.totalorder %s19, 0
      %s166 = scalar_select %p165, %s19, 0
      %s167 = smul.addr %s166, 60
      %s168 = smul.addr %s164, 60
      %s169 = sadd.s32 %s167, %s168
      %s170 = smul.addr %s169, 4
      %s171 = scalar_lea.vmem %s0, %s170
      %p172 = pneg %p49
      %p173 = pneg %p46
      %p174 = pneg %p70
      %p175 = pneg %p67
      %p176 = pneg %p91
      %p177 = pneg %p88
      %p178 = pneg %p119
      %p179 = pneg %p116
      %s180 = smul.u32 16, %s19
      %p181 = scmp.lt.s32.totalorder %s18, 1
      %s182 = scalar_select %p181, %s18, 1
      %p183 = scmp.lt.s32.totalorder %s180, 15
      %s184 = scalar_select %p183, %s180, 15
      %s185 = smul.addr %s184, 2
      %s186 = smul.addr %s182, 32
      %s187 = sadd.s32 %s185, %s186
      %s188 = smul.addr %s187, 4
      %s189 = scalar_lea.vmem %s3, %s188
      %p190 = scmp.lt.s32.totalorder %s18, 1
      %s191 = scalar_select %p190, %s18, 1
      %p192 = scmp.lt.s32.totalorder %s19, 0
      %s193 = scalar_select %p192, %s19, 0
      %s194 = smul.addr %s193, 60
      %s195 = smul.addr %s191, 60
      %s196 = sadd.s32 %s194, %s195
      %s197 = smul.addr %s196, 4
      %s198 = scalar_lea.vmem %s0, %s197
      %s199 = smul.u32 16, %s19
      %p200 = scmp.lt.s32.totalorder %s18, 1
      %s201 = scalar_select %p200, %s18, 1
      %p202 = scmp.lt.s32.totalorder %s199, 15
      %s203 = scalar_select %p202, %s199, 15
      %s204 = smul.addr %s203, 2
      %s205 = smul.addr %s201, 32
      %s206 = sadd.s32 %s204, %s205
      %s207 = smul.addr %s206, 4
      %s208 = scalar_lea.vmem %s3, %s207
      %s209 = smul.u32 16, %s19
      %v211 = vld [vmem:[%s198] sm:$0xf]
      %v212 = vld [vmem:[%s198 + $0x4] sm:$0xf]
      %v213 = vld [vmem:[%s198 + $0xc] sm:$0xf]
      %v214 = vld [vmem:[%s198 + $0x10] sm:$0xf]
      %v215 = vld [vmem:[%s198 + $0x18] sm:$0xf]
      %v216 = vld [vmem:[%s198 + $0x1c] sm:$0xf]
      %v217 = vld [vmem:[%s198 + $0x24] sm:$0xf]
      %v218 = vld [vmem:[%s198 + $0x28] sm:$0xf]
      %v219 = vld [vmem:[%s198 + $0x30] sm:$0xf]
      %v220 = vld [vmem:[%s198 + $0x34] sm:$0xf]
      %v221 = vld [vmem:[%s198 + $0x3c] sm:$0xf]
      %v222 = vld [vmem:[%s198 + $0x40] sm:$0xf]
      %v223 = vld [vmem:[%s198 + $0x48] sm:$0xf]
      %v224 = vld [vmem:[%s198 + $0x4c] sm:$0xf]
      %v225 = vld [vmem:[%s198 + $0x54] sm:$0xf]
      %v226 = vld [vmem:[%s198 + $0x58] sm:$0xf]
      %v227 = vld [vmem:[%s198 + $0x60] sm:$0xf]
      %v228 = vld [vmem:[%s198 + $0x64] sm:$0xf]
      %v229 = vld [vmem:[%s198 + $0x6c] sm:$0xf]
      %v230 = vld [vmem:[%s198 + $0x70] sm:$0xf]
      %v231 = vld [vmem:[%s198 + $0x78] sm:$0xf]
      %v232 = vld [vmem:[%s198 + $0x7c] sm:$0xf]
      %v233 = vld [vmem:[%s198 + $0x84] sm:$0xf]
      %v234 = vld [vmem:[%s198 + $0x88] sm:$0xf]
      %v235 = vld [vmem:[%s198 + $0x90] sm:$0xf]
      %v236 = vld [vmem:[%s198 + $0x94] sm:$0xf]
      %v237 = vld [vmem:[%s198 + $0x9c] sm:$0xf]
      %v238 = vld [vmem:[%s198 + $0xa0] sm:$0xf]
      %v239 = vld [vmem:[%s198 + $0xa8] sm:$0xf]
      %v240 = vld [vmem:[%s198 + $0xac] sm:$0xf]
      %v241 = vld [vmem:[%s198 + $0xb4] sm:$0xf]
      %v242 = vld [vmem:[%s198 + $0xb8] sm:$0xf]
      %v243 = vld [vmem:[%s1] sm:$0x3]
      %v244 = vld [vmem:[%s198] sm:$0xe]
      %v245 = vld [vmem:[%s198 + $0x8] sm:$0x1]
      %v246 = vld [vmem:[%s198 + $0xc] sm:$0xe]
      %v247 = vld [vmem:[%s198 + $0x14] sm:$0x1]
      %v248 = vld [vmem:[%s198 + $0x18] sm:$0xe]
      %v249 = vld [vmem:[%s198 + $0x20] sm:$0x1]
      %v250 = vld [vmem:[%s198 + $0x24] sm:$0xe]
      %v251 = vld [vmem:[%s198 + $0x2c] sm:$0x1]
      %v252 = vld [vmem:[%s198 + $0x30] sm:$0xe]
      %v253 = vld [vmem:[%s198 + $0x38] sm:$0x1]
      %v254 = vld [vmem:[%s198 + $0x3c] sm:$0xe]
      %v255 = vld [vmem:[%s198 + $0x44] sm:$0x1]
      %v256 = vld [vmem:[%s198 + $0x48] sm:$0xe]
      %v257 = vld [vmem:[%s198 + $0x50] sm:$0x1]
      %v258 = vld [vmem:[%s198 + $0x54] sm:$0xe]
      %v259 = vld [vmem:[%s198 + $0x5c] sm:$0x1]
      %v260 = vld [vmem:[%s198 + $0x60] sm:$0xe]
      %v261 = vld [vmem:[%s198 + $0x68] sm:$0x1]
      %v262 = vld [vmem:[%s198 + $0x6c] sm:$0xe]
      %v263 = vld [vmem:[%s198 + $0x74] sm:$0x1]
      %v264 = vld [vmem:[%s198 + $0x78] sm:$0xe]
      %v265 = vld [vmem:[%s198 + $0x80] sm:$0x1]
      %v266 = vld [vmem:[%s198 + $0x84] sm:$0xe]
      %v267 = vld [vmem:[%s198 + $0x8c] sm:$0x1]
      %v268 = vld [vmem:[%s198 + $0x90] sm:$0xe]
      %v269 = vld [vmem:[%s198 + $0x98] sm:$0x1]
      %v270 = vld [vmem:[%s198 + $0x9c] sm:$0xe]
      %v271 = vld [vmem:[%s198 + $0xa4] sm:$0x1]
      %v272 = vld [vmem:[%s198 + $0xa8] sm:$0xe]
      %v273 = vld [vmem:[%s198 + $0xb0] sm:$0x1]
      %v274 = vld [vmem:[%s198 + $0xb4] sm:$0xe]
      %v275 = vld [vmem:[%s198 + $0xbc] sm:$0x1]
      %vm324 = vcmask 1042432
      %vm325 = vcmask 1046532
      %vm326 = vmor %vm324, %vm325
      %v327 = vrot.slane %v244, 5
      %v328 = vrot.slane %v327, 4
      %v329 = vrot.slane %v212, 5
      %v330 = vsel %vm326, %v328, %v329
      %v331 = vrot.slane %v329, 4
      %v332 = vrot.slane %v245, 5
      %v333 = vsel %vm326, %v331, %v332
      %v334 = vrot.slane %v246, 5
      %v335 = vrot.slane %v334, 4
      %v336 = vrot.slane %v214, 5
      %v337 = vsel %vm326, %v335, %v336
      %v338 = vrot.slane %v336, 4
      %v339 = vrot.slane %v247, 5
      %v340 = vsel %vm326, %v338, %v339
      %v341 = vrot.slane %v248, 5
      %v342 = vrot.slane %v341, 4
      %v343 = vrot.slane %v216, 5
      %v344 = vsel %vm326, %v342, %v343
      %v345 = vrot.slane %v343, 4
      %v346 = vrot.slane %v249, 5
      %v347 = vsel %vm326, %v345, %v346
      %v348 = vrot.slane %v250, 5
      %v349 = vrot.slane %v348, 4
      %v350 = vrot.slane %v218, 5
      %v351 = vsel %vm326, %v349, %v350
      %v352 = vrot.slane %v350, 4
      %v353 = vrot.slane %v251, 5
      %v354 = vsel %vm326, %v352, %v353
      %v355 = vrot.slane %v252, 5
      %v356 = vrot.slane %v355, 4
      %v357 = vrot.slane %v220, 5
      %v358 = vsel %vm326, %v356, %v357
      %v359 = vrot.slane %v357, 4
      %v360 = vrot.slane %v253, 5
      %v361 = vsel %vm326, %v359, %v360
      %v362 = vrot.slane %v254, 5
      %v363 = vrot.slane %v362, 4
      %v364 = vrot.slane %v222, 5
      %v365 = vsel %vm326, %v363, %v364
      %v366 = vrot.slane %v364, 4
      %v367 = vrot.slane %v255, 5
      %v368 = vsel %vm326, %v366, %v367
      %v369 = vrot.slane %v256, 5
      %v370 = vrot.slane %v369, 4
      %v371 = vrot.slane %v224, 5
      %v372 = vsel %vm326, %v370, %v371
      %v373 = vrot.slane %v371, 4
      %v374 = vrot.slane %v257, 5
      %v375 = vsel %vm326, %v373, %v374
      %v376 = vrot.slane %v258, 5
      %v377 = vrot.slane %v376, 4
      %v378 = vrot.slane %v226, 5
      %v379 = vsel %vm326, %v377, %v378
      %v380 = vrot.slane %v378, 4
      %v381 = vrot.slane %v259, 5
      %v382 = vsel %vm326, %v380, %v381
      %v383 = vrot.slane %v260, 5
      %v384 = vrot.slane %v383, 4
      %v385 = vrot.slane %v228, 5
      %v386 = vsel %vm326, %v384, %v385
      %v387 = vrot.slane %v385, 4
      %v388 = vrot.slane %v261, 5
      %v389 = vsel %vm326, %v387, %v388
      %v390 = vrot.slane %v262, 5
      %v391 = vrot.slane %v390, 4
      %v392 = vrot.slane %v230, 5
      %v393 = vsel %vm326, %v391, %v392
      %v394 = vrot.slane %v392, 4
      %v395 = vrot.slane %v263, 5
      %v396 = vsel %vm326, %v394, %v395
      %v397 = vrot.slane %v264, 5
      %v398 = vrot.slane %v397, 4
      %v399 = vrot.slane %v232, 5
      %v400 = vsel %vm326, %v398, %v399
      %v401 = vrot.slane %v399, 4
      %v402 = vrot.slane %v265, 5
      %v403 = vsel %vm326, %v401, %v402
      %v404 = vrot.slane %v266, 5
      %v405 = vrot.slane %v404, 4
      %v406 = vrot.slane %v234, 5
      %v407 = vsel %vm326, %v405, %v406
      %v408 = vrot.slane %v406, 4
      %v409 = vrot.slane %v267, 5
      %v410 = vsel %vm326, %v408, %v409
      %v411 = vrot.slane %v268, 5
      %v412 = vrot.slane %v411, 4
      %v413 = vrot.slane %v236, 5
      %v414 = vsel %vm326, %v412, %v413
      %v415 = vrot.slane %v413, 4
      %v416 = vrot.slane %v269, 5
      %v417 = vsel %vm326, %v415, %v416
      %v418 = vrot.slane %v270, 5
      %v419 = vrot.slane %v418, 4
      %v420 = vrot.slane %v238, 5
      %v421 = vsel %vm326, %v419, %v420
      %v422 = vrot.slane %v420, 4
      %v423 = vrot.slane %v271, 5
      %v424 = vsel %vm326, %v422, %v423
      %v425 = vrot.slane %v272, 5
      %v426 = vrot.slane %v425, 4
      %v427 = vrot.slane %v240, 5
      %v428 = vsel %vm326, %v426, %v427
      %v429 = vrot.slane %v427, 4
      %v430 = vrot.slane %v273, 5
      %v431 = vsel %vm326, %v429, %v430
      %v432 = vrot.slane %v274, 5
      %v433 = vrot.slane %v432, 4
      %v434 = vrot.slane %v242, 5
      %v435 = vsel %vm326, %v433, %v434
      %v436 = vrot.slane %v434, 4
      %v437 = vrot.slane %v275, 5
      %v438 = vsel %vm326, %v436, %v437
      %s439 = scalar_lea.vmem %s1, 2
      %v440 = vld [vmem:[%s439] sm:$0x3]
      %v441 = vunpack.c.l.b16 %v330
      %v442 = vunpack.c.l.b16 %v333
      %v443 = vunpack.c.l.b16 %v337
      %v444 = vunpack.c.l.b16 %v340
      %v445 = vunpack.c.l.b16 %v344
      %v446 = vunpack.c.l.b16 %v347
      %v447 = vunpack.c.l.b16 %v351
      %v448 = vunpack.c.l.b16 %v354
      %v449 = vunpack.c.l.b16 %v358
      %v450 = vunpack.c.l.b16 %v361
      %v451 = vunpack.c.l.b16 %v365
      %v452 = vunpack.c.l.b16 %v368
      %v453 = vunpack.c.l.b16 %v372
      %v454 = vunpack.c.l.b16 %v375
      %v455 = vunpack.c.l.b16 %v379
      %v456 = vunpack.c.l.b16 %v382
      %v457 = vunpack.c.l.b16 %v386
      %v458 = vunpack.c.l.b16 %v389
      %v459 = vunpack.c.l.b16 %v393
      %v460 = vunpack.c.l.b16 %v396
      %v461 = vunpack.c.l.b16 %v400
      %v462 = vunpack.c.l.b16 %v403
      %v463 = vunpack.c.l.b16 %v407
      %v464 = vunpack.c.l.b16 %v410
      %v465 = vunpack.c.l.b16 %v414
      %v466 = vunpack.c.l.b16 %v417
      %v467 = vunpack.c.l.b16 %v421
      %v468 = vunpack.c.l.b16 %v424
      %v469 = vunpack.c.l.b16 %v428
      %v470 = vunpack.c.l.b16 %v431
      %v471 = vunpack.c.l.b16 %v435
      %v472 = vunpack.c.l.b16 %v438
      %v473 = vpack.c.b16 %v442, %v441
      %v474 = vpack.c.b16 %v444, %v443
      %v475 = vpack.c.b16 %v446, %v445
      %v476 = vpack.c.b16 %v448, %v447
      %v477 = vpack.c.b16 %v450, %v449
      %v478 = vpack.c.b16 %v452, %v451
      %v479 = vpack.c.b16 %v454, %v453
      %v480 = vpack.c.b16 %v456, %v455
      %v481 = vpack.c.b16 %v458, %v457
      %v482 = vpack.c.b16 %v460, %v459
      %v483 = vpack.c.b16 %v462, %v461
      %v484 = vpack.c.b16 %v464, %v463
      %v485 = vpack.c.b16 %v466, %v465
      %v486 = vpack.c.b16 %v468, %v467
      %v487 = vpack.c.b16 %v470, %v469
      %v488 = vpack.c.b16 %v472, %v471
      %vm489 = vcmask 31744
      %v491 = vsel %vm489, %v473, 0
      %v494 = vsel %vm489, %v474, 0
      %v497 = vsel %vm489, %v475, 0
      %v500 = vsel %vm489, %v476, 0
      %v503 = vsel %vm489, %v477, 0
      %v506 = vsel %vm489, %v478, 0
      %v509 = vsel %vm489, %v479, 0
      %v512 = vsel %vm489, %v480, 0
      %v515 = vsel %vm489, %v481, 0
      %v518 = vsel %vm489, %v482, 0
      %v521 = vsel %vm489, %v483, 0
      %v524 = vsel %vm489, %v484, 0
      %v527 = vsel %vm489, %v485, 0
      %v530 = vsel %vm489, %v486, 0
      %v533 = vsel %vm489, %v487, 0
      %v536 = vsel %vm489, %v488, 0
      %vm538 = vcmask 1041408
      %v540 = vsel %vm538, %v440, 0
      %542 = vmatprep.subr.bf16.mxu0 0
      %543 = vmatpush1.bf16.msra.mxu0 %v540
      %544 = vmatprep.subr.bf16.mxu0 0
      %545 = vmatpush1.bf16.msra.mxu0 0
      %546 = vmatprep.subr.bf16.mxu0 0
      %547 = vmatpush1.bf16.msra.mxu0 0
      %548 = vmatprep.subr.bf16.mxu0 0
      %549 = vmatpush1.bf16.msra.mxu0 0
      %550 = vmatprep.subr.bf16.mxu0 0
      %551 = vmatpush1.bf16.msra.mxu0 0
      %552 = vmatprep.subr.bf16.mxu0 0
      %553 = vmatpush1.bf16.msra.mxu0 0
      %554 = vmatprep.subr.bf16.mxu0 0
      %555 = vmatpush1.bf16.msra.mxu0 0
      %556 = vmatprep.subr.bf16.mxu0 0
      %557 = vmatpush1.bf16.msra.mxu0 0
      %558 = vmatprep.subr.bf16.mxu0 0
      %559 = vmatpush1.bf16.msra.mxu0 0
      %560 = vmatprep.subr.bf16.mxu0 0
      %561 = vmatpush1.bf16.msra.mxu0 0
      %562 = vmatprep.subr.bf16.mxu0 0
      %563 = vmatpush1.bf16.msra.mxu0 0
      %564 = vmatprep.subr.bf16.mxu0 0
      %565 = vmatpush1.bf16.msra.mxu0 0
      %566 = vmatprep.subr.bf16.mxu0 0
      %567 = vmatpush1.bf16.msra.mxu0 0
      %568 = vmatprep.subr.bf16.mxu0 0
      %569 = vmatpush1.bf16.msra.mxu0 0
      %570 = vmatprep.subr.bf16.mxu0 0
      %571 = vmatpush1.bf16.msra.mxu0 0
      %572 = vmatprep.subr.bf16.mxu0 0
      %573 = vmatpush1.bf16.msra.mxu0 0
      %574 = vmatprep.mubr.bf16.mxu0 0
      %575 = vmatmul.mubr.bf16.gmra.mrb[0].mxu0 %v491
      %v576 = vpop.f32.mrb[0].mxu0
      %v577 = vadd.f32 0.0, %v576
      %v578 = vpop.f32.mrb[0].mxu0
      %v579 = vpop.f32.mrb[0].mxu0
      %v580 = vadd.f32 0.0, %v579
      %v581 = vpop.f32.mrb[0].mxu0
      %582 = vmatprep.mubr.bf16.mxu0 0
      %583 = vmatmul.mubr.bf16.gmra.mrb[0].mxu0 %v494
      %v584 = vpop.f32.mrb[0].mxu0
      %v585 = vadd.f32 0.0, %v584
      %v586 = vpop.f32.mrb[0].mxu0
      %v587 = vpop.f32.mrb[0].mxu0
      %v588 = vadd.f32 0.0, %v587
      %v589 = vpop.f32.mrb[0].mxu0
      %590 = vmatprep.mubr.bf16.mxu0 0
      %591 = vmatmul.mubr.bf16.gmra.mrb[0].mxu0 %v497
      %v592 = vpop.f32.mrb[0].mxu0
      %v593 = vadd.f32 0.0, %v592
      %v594 = vpop.f32.mrb[0].mxu0
      %v595 = vpop.f32.mrb[0].mxu0
      %v596 = vadd.f32 0.0, %v595
      %v597 = vpop.f32.mrb[0].mxu0
      %598 = vmatprep.mubr.bf16.mxu0 0
      %599 = vmatmul.mubr.bf16.gmra.mrb[0].mxu0 %v500
      %v600 = vpop.f32.mrb[0].mxu0
      %v601 = vadd.f32 0.0, %v600
      %v602 = vpop.f32.mrb[0].mxu0
      %v603 = vpop.f32.mrb[0].mxu0
      %v604 = vadd.f32 0.0, %v603
      %v605 = vpop.f32.mrb[0].mxu0
      %606 = vmatprep.mubr.bf16.mxu0 0
      %607 = vmatmul.mubr.bf16.gmra.mrb[0].mxu0 %v503
      %v608 = vpop.f32.mrb[0].mxu0
      %v609 = vadd.f32 0.0, %v608
      %v610 = vpop.f32.mrb[0].mxu0
      %v611 = vpop.f32.mrb[0].mxu0
      %v612 = vadd.f32 0.0, %v611
      %v613 = vpop.f32.mrb[0].mxu0
      %614 = vmatprep.mubr.bf16.mxu0 0
      %615 = vmatmul.mubr.bf16.gmra.mrb[0].mxu0 %v506
      %v616 = vpop.f32.mrb[0].mxu0
      %v617 = vadd.f32 0.0, %v616
      %v618 = vpop.f32.mrb[0].mxu0
      %v619 = vpop.f32.mrb[0].mxu0
      %v620 = vadd.f32 0.0, %v619
      %v621 = vpop.f32.mrb[0].mxu0
      %622 = vmatprep.mubr.bf16.mxu0 0
      %623 = vmatmul.mubr.bf16.gmra.mrb[0].mxu0 %v509
      %v624 = vpop.f32.mrb[0].mxu0
      %v625 = vadd.f32 0.0, %v624
      %v626 = vpop.f32.mrb[0].mxu0
      %v627 = vpop.f32.mrb[0].mxu0
      %v628 = vadd.f32 0.0, %v627
      %v629 = vpop.f32.mrb[0].mxu0
      %630 = vmatprep.mubr.bf16.mxu0 0
      %631 = vmatmul.mubr.bf16.gmra.mrb[0].mxu0 %v512
      %v632 = vpop.f32.mrb[0].mxu0
      %v633 = vadd.f32 0.0, %v632
      %v634 = vpop.f32.mrb[0].mxu0
      %v635 = vpop.f32.mrb[0].mxu0
      %v636 = vadd.f32 0.0, %v635
      %v637 = vpop.f32.mrb[0].mxu0
      %638 = vmatprep.mubr.bf16.mxu0 0
      %639 = vmatmul.mubr.bf16.gmra.mrb[0].mxu0 %v515
      %v640 = vpop.f32.mrb[0].mxu0
      %v641 = vadd.f32 0.0, %v640
      %v642 = vpop.f32.mrb[0].mxu0
      %v643 = vpop.f32.mrb[0].mxu0
      %v644 = vadd.f32 0.0, %v643
      %v645 = vpop.f32.mrb[0].mxu0
      %646 = vmatprep.mubr.bf16.mxu0 0
      %647 = vmatmul.mubr.bf16.gmra.mrb[0].mxu0 %v518
      %v648 = vpop.f32.mrb[0].mxu0
      %v649 = vadd.f32 0.0, %v648
      %v650 = vpop.f32.mrb[0].mxu0
      %v651 = vpop.f32.mrb[0].mxu0
      %v652 = vadd.f32 0.0, %v651
      %v653 = vpop.f32.mrb[0].mxu0
      %654 = vmatprep.mubr.bf16.mxu0 0
      %655 = vmatmul.mubr.bf16.gmra.mrb[0].mxu0 %v521
      %v656 = vpop.f32.mrb[0].mxu0
      %v657 = vadd.f32 0.0, %v656
      %v658 = vpop.f32.mrb[0].mxu0
      %v659 = vpop.f32.mrb[0].mxu0
      %v660 = vadd.f32 0.0, %v659
      %v661 = vpop.f32.mrb[0].mxu0
      %662 = vmatprep.mubr.bf16.mxu0 0
      %663 = vmatmul.mubr.bf16.gmra.mrb[0].mxu0 %v524
      %v664 = vpop.f32.mrb[0].mxu0
      %v665 = vadd.f32 0.0, %v664
      %v666 = vpop.f32.mrb[0].mxu0
      %v667 = vpop.f32.mrb[0].mxu0
      %v668 = vadd.f32 0.0, %v667
      %v669 = vpop.f32.mrb[0].mxu0
      %670 = vmatprep.mubr.bf16.mxu0 0
      %671 = vmatmul.mubr.bf16.gmra.mrb[0].mxu0 %v527
      %v672 = vpop.f32.mrb[0].mxu0
      %v673 = vadd.f32 0.0, %v672
      %v674 = vpop.f32.mrb[0].mxu0
      %v675 = vpop.f32.mrb[0].mxu0
      %v676 = vadd.f32 0.0, %v675
      %v677 = vpop.f32.mrb[0].mxu0
      %678 = vmatprep.mubr.bf16.mxu0 0
      %679 = vmatmul.mubr.bf16.gmra.mrb[0].mxu0 %v530
      %v680 = vpop.f32.mrb[0].mxu0
      %v681 = vadd.f32 0.0, %v680
      %v682 = vpop.f32.mrb[0].mxu0
      %v683 = vpop.f32.mrb[0].mxu0
      %v684 = vadd.f32 0.0, %v683
      %v685 = vpop.f32.mrb[0].mxu0
      %686 = vmatprep.mubr.bf16.mxu0 0
      %687 = vmatmul.mubr.bf16.gmra.mrb[0].mxu0 %v533
      %v688 = vpop.f32.mrb[0].mxu0
      %v689 = vadd.f32 0.0, %v688
      %v690 = vpop.f32.mrb[0].mxu0
      %v691 = vpop.f32.mrb[0].mxu0
      %v692 = vadd.f32 0.0, %v691
      %v693 = vpop.f32.mrb[0].mxu0
      %694 = vmatprep.mubr.bf16.mxu0 0
      %695 = vmatmul.mubr.bf16.gmra.mrb[0].mxu0 %v536
      %v696 = vpop.f32.mrb[0].mxu0
      %v697 = vadd.f32 0.0, %v696
      %v698 = vpop.f32.mrb[0].mxu0
      %v699 = vpop.f32.mrb[0].mxu0
      %v700 = vadd.f32 0.0, %v699
      %v701 = vpop.f32.mrb[0].mxu0
      %702 = vdwg.mxu0
      %v719 = vunpack.c.l.b16 %v211
      %v720 = vunpack.c.l.b16 %v212
      %v721 = vunpack.c.l.b16 %v213
      %v722 = vunpack.c.l.b16 %v214
      %v723 = vunpack.c.l.b16 %v215
      %v724 = vunpack.c.l.b16 %v216
      %v725 = vunpack.c.l.b16 %v217
      %v726 = vunpack.c.l.b16 %v218
      %v727 = vunpack.c.l.b16 %v219
      %v728 = vunpack.c.l.b16 %v220
      %v729 = vunpack.c.l.b16 %v221
      %v730 = vunpack.c.l.b16 %v222
      %v731 = vunpack.c.l.b16 %v223
      %v732 = vunpack.c.l.b16 %v224
      %v733 = vunpack.c.l.b16 %v225
      %v734 = vunpack.c.l.b16 %v226
      %v735 = vunpack.c.l.b16 %v227
      %v736 = vunpack.c.l.b16 %v228
      %v737 = vunpack.c.l.b16 %v229
      %v738 = vunpack.c.l.b16 %v230
      %v739 = vunpack.c.l.b16 %v231
      %v740 = vunpack.c.l.b16 %v232
      %v741 = vunpack.c.l.b16 %v233
      %v742 = vunpack.c.l.b16 %v234
      %v743 = vunpack.c.l.b16 %v235
      %v744 = vunpack.c.l.b16 %v236
      %v745 = vunpack.c.l.b16 %v237
      %v746 = vunpack.c.l.b16 %v238
      %v747 = vunpack.c.l.b16 %v239
      %v748 = vunpack.c.l.b16 %v240
      %v749 = vunpack.c.l.b16 %v241
      %v750 = vunpack.c.l.b16 %v242
      %v751 = vpack.c.b16 %v720, %v719
      %v752 = vpack.c.b16 %v722, %v721
      %v753 = vpack.c.b16 %v724, %v723
      %v754 = vpack.c.b16 %v726, %v725
      %v755 = vpack.c.b16 %v728, %v727
      %v756 = vpack.c.b16 %v730, %v729
      %v757 = vpack.c.b16 %v732, %v731
      %v758 = vpack.c.b16 %v734, %v733
      %v759 = vpack.c.b16 %v736, %v735
      %v760 = vpack.c.b16 %v738, %v737
      %v761 = vpack.c.b16 %v740, %v739
      %v762 = vpack.c.b16 %v742, %v741
      %v763 = vpack.c.b16 %v744, %v743
      %v764 = vpack.c.b16 %v746, %v745
      %v765 = vpack.c.b16 %v748, %v747
      %v766 = vpack.c.b16 %v750, %v749
      %v768 = vsel %vm489, %v751, 0
      %v771 = vsel %vm489, %v752, 0
      %v774 = vsel %vm489, %v753, 0
      %v777 = vsel %vm489, %v754, 0
      %v780 = vsel %vm489, %v755, 0
      %v783 = vsel %vm489, %v756, 0
      %v786 = vsel %vm489, %v757, 0
      %v789 = vsel %vm489, %v758, 0
      %v792 = vsel %vm489, %v759, 0
      %v795 = vsel %vm489, %v760, 0
      %v798 = vsel %vm489, %v761, 0
      %v801 = vsel %vm489, %v762, 0
      %v804 = vsel %vm489, %v763, 0
      %v807 = vsel %vm489, %v764, 0
      %v810 = vsel %vm489, %v765, 0
      %v813 = vsel %vm489, %v766, 0
      %v816 = vsel %vm538, %v243, 0
      %818 = vmatprep.subr.bf16.mxu0 0
      %819 = vmatpush1.bf16.msra.mxu0 %v816
      %820 = vmatprep.subr.bf16.mxu0 0
      %821 = vmatpush1.bf16.msra.mxu0 0
      %822 = vmatprep.subr.bf16.mxu0 0
      %823 = vmatpush1.bf16.msra.mxu0 0
      %824 = vmatprep.subr.bf16.mxu0 0
      %825 = vmatpush1.bf16.msra.mxu0 0
      %826 = vmatprep.subr.bf16.mxu0 0
      %827 = vmatpush1.bf16.msra.mxu0 0
      %828 = vmatprep.subr.bf16.mxu0 0
      %829 = vmatpush1.bf16.msra.mxu0 0
      %830 = vmatprep.subr.bf16.mxu0 0
      %831 = vmatpush1.bf16.msra.mxu0 0
      %832 = vmatprep.subr.bf16.mxu0 0
      %833 = vmatpush1.bf16.msra.mxu0 0
      %834 = vmatprep.subr.bf16.mxu0 0
      %835 = vmatpush1.bf16.msra.mxu0 0
      %836 = vmatprep.subr.bf16.mxu0 0
      %837 = vmatpush1.bf16.msra.mxu0 0
      %838 = vmatprep.subr.bf16.mxu0 0
      %839 = vmatpush1.bf16.msra.mxu0 0
      %840 = vmatprep.subr.bf16.mxu0 0
      %841 = vmatpush1.bf16.msra.mxu0 0
      %842 = vmatprep.subr.bf16.mxu0 0
      %843 = vmatpush1.bf16.msra.mxu0 0
      %844 = vmatprep.subr.bf16.mxu0 0
      %845 = vmatpush1.bf16.msra.mxu0 0
      %846 = vmatprep.subr.bf16.mxu0 0
      %847 = vmatpush1.bf16.msra.mxu0 0
      %848 = vmatprep.subr.bf16.mxu0 0
      %849 = vmatpush1.bf16.msra.mxu0 0
      %850 = vmatprep.mubr.bf16.mxu0 0
      %851 = vmatmul.mubr.bf16.gmra.mrb[0].mxu0 %v768
      %v852 = vpop.f32.mrb[0].mxu0
      %v853 = vadd.f32 %v577, %v852
      %v854 = vpop.f32.mrb[0].mxu0
      %v855 = vpop.f32.mrb[0].mxu0
      %v856 = vadd.f32 %v580, %v855
      %v857 = vpop.f32.mrb[0].mxu0
      %858 = vmatprep.mubr.bf16.mxu0 0
      %859 = vmatmul.mubr.bf16.gmra.mrb[0].mxu0 %v771
      %v860 = vpop.f32.mrb[0].mxu0
      %v861 = vadd.f32 %v585, %v860
      %v862 = vpop.f32.mrb[0].mxu0
      %v863 = vpop.f32.mrb[0].mxu0
      %v864 = vadd.f32 %v588, %v863
      %v865 = vpop.f32.mrb[0].mxu0
      %866 = vmatprep.mubr.bf16.mxu0 0
      %867 = vmatmul.mubr.bf16.gmra.mrb[0].mxu0 %v774
      %v868 = vpop.f32.mrb[0].mxu0
      %v869 = vadd.f32 %v593, %v868
      %v870 = vpop.f32.mrb[0].mxu0
      %v871 = vpop.f32.mrb[0].mxu0
      %v872 = vadd.f32 %v596, %v871
      %v873 = vpop.f32.mrb[0].mxu0
      %874 = vmatprep.mubr.bf16.mxu0 0
      %875 = vmatmul.mubr.bf16.gmra.mrb[0].mxu0 %v777
      %v876 = vpop.f32.mrb[0].mxu0
      %v877 = vadd.f32 %v601, %v876
      %v878 = vpop.f32.mrb[0].mxu0
      %v879 = vpop.f32.mrb[0].mxu0
      %v880 = vadd.f32 %v604, %v879
      %v881 = vpop.f32.mrb[0].mxu0
      %882 = vmatprep.mubr.bf16.mxu0 0
      %883 = vmatmul.mubr.bf16.gmra.mrb[0].mxu0 %v780
      %v884 = vpop.f32.mrb[0].mxu0
      %v885 = vadd.f32 %v609, %v884
      %v886 = vpop.f32.mrb[0].mxu0
      %v887 = vpop.f32.mrb[0].mxu0
      %v888 = vadd.f32 %v612, %v887
      %v889 = vpop.f32.mrb[0].mxu0
      %890 = vmatprep.mubr.bf16.mxu0 0
      %891 = vmatmul.mubr.bf16.gmra.mrb[0].mxu0 %v783
      %v892 = vpop.f32.mrb[0].mxu0
      %v893 = vadd.f32 %v617, %v892
      %v894 = vpop.f32.mrb[0].mxu0
      %v895 = vpop.f32.mrb[0].mxu0
      %v896 = vadd.f32 %v620, %v895
      %v897 = vpop.f32.mrb[0].mxu0
      %898 = vmatprep.mubr.bf16.mxu0 0
      %899 = vmatmul.mubr.bf16.gmra.mrb[0].mxu0 %v786
      %v900 = vpop.f32.mrb[0].mxu0
      %v901 = vadd.f32 %v625, %v900
      %v902 = vpop.f32.mrb[0].mxu0
      %v903 = vpop.f32.mrb[0].mxu0
      %v904 = vadd.f32 %v628, %v903
      %v905 = vpop.f32.mrb[0].mxu0
      %906 = vmatprep.mubr.bf16.mxu0 0
      %907 = vmatmul.mubr.bf16.gmra.mrb[0].mxu0 %v789
      %v908 = vpop.f32.mrb[0].mxu0
      %v909 = vadd.f32 %v633, %v908
      %v910 = vpop.f32.mrb[0].mxu0
      %v911 = vpop.f32.mrb[0].mxu0
      %v912 = vadd.f32 %v636, %v911
      %v913 = vpop.f32.mrb[0].mxu0
      %914 = vmatprep.mubr.bf16.mxu0 0
      %915 = vmatmul.mubr.bf16.gmra.mrb[0].mxu0 %v792
      %v916 = vpop.f32.mrb[0].mxu0
      %v917 = vadd.f32 %v641, %v916
      %v918 = vpop.f32.mrb[0].mxu0
      %v919 = vpop.f32.mrb[0].mxu0
      %v920 = vadd.f32 %v644, %v919
      %v921 = vpop.f32.mrb[0].mxu0
      %922 = vmatprep.mubr.bf16.mxu0 0
      %923 = vmatmul.mubr.bf16.gmra.mrb[0].mxu0 %v795
      %v924 = vpop.f32.mrb[0].mxu0
      %v925 = vadd.f32 %v649, %v924
      %v926 = vpop.f32.mrb[0].mxu0
      %v927 = vpop.f32.mrb[0].mxu0
      %v928 = vadd.f32 %v652, %v927
      %v929 = vpop.f32.mrb[0].mxu0
      %930 = vmatprep.mubr.bf16.mxu0 0
      %931 = vmatmul.mubr.bf16.gmra.mrb[0].mxu0 %v798
      %v932 = vpop.f32.mrb[0].mxu0
      %v933 = vadd.f32 %v657, %v932
      %v934 = vpop.f32.mrb[0].mxu0
      %v935 = vpop.f32.mrb[0].mxu0
      %v936 = vadd.f32 %v660, %v935
      %v937 = vpop.f32.mrb[0].mxu0
      %938 = vmatprep.mubr.bf16.mxu0 0
      %939 = vmatmul.mubr.bf16.gmra.mrb[0].mxu0 %v801
      %v940 = vpop.f32.mrb[0].mxu0
      %v941 = vadd.f32 %v665, %v940
      %v942 = vpop.f32.mrb[0].mxu0
      %v943 = vpop.f32.mrb[0].mxu0
      %v944 = vadd.f32 %v668, %v943
      %v945 = vpop.f32.mrb[0].mxu0
      %946 = vmatprep.mubr.bf16.mxu0 0
      %947 = vmatmul.mubr.bf16.gmra.mrb[0].mxu0 %v804
      %v948 = vpop.f32.mrb[0].mxu0
      %v949 = vadd.f32 %v673, %v948
      %v950 = vpop.f32.mrb[0].mxu0
      %v951 = vpop.f32.mrb[0].mxu0
      %v952 = vadd.f32 %v676, %v951
      %v953 = vpop.f32.mrb[0].mxu0
      %954 = vmatprep.mubr.bf16.mxu0 0
      %955 = vmatmul.mubr.bf16.gmra.mrb[0].mxu0 %v807
      %v956 = vpop.f32.mrb[0].mxu0
      %v957 = vadd.f32 %v681, %v956
      %v958 = vpop.f32.mrb[0].mxu0
      %v959 = vpop.f32.mrb[0].mxu0
      %v960 = vadd.f32 %v684, %v959
      %v961 = vpop.f32.mrb[0].mxu0
      %962 = vmatprep.mubr.bf16.mxu0 0
      %963 = vmatmul.mubr.bf16.gmra.mrb[0].mxu0 %v810
      %v964 = vpop.f32.mrb[0].mxu0
      %v965 = vadd.f32 %v689, %v964
      %v966 = vpop.f32.mrb[0].mxu0
      %v967 = vpop.f32.mrb[0].mxu0
      %v968 = vadd.f32 %v692, %v967
      %v969 = vpop.f32.mrb[0].mxu0
      %970 = vmatprep.mubr.bf16.mxu0 0
      %971 = vmatmul.mubr.bf16.gmra.mrb[0].mxu0 %v813
      %v972 = vpop.f32.mrb[0].mxu0
      %v973 = vadd.f32 %v697, %v972
      %v974 = vpop.f32.mrb[0].mxu0
      %v975 = vpop.f32.mrb[0].mxu0
      %v976 = vadd.f32 %v700, %v975
      %v977 = vpop.f32.mrb[0].mxu0
      %978 = vdwg.mxu0
      %v979 = vld [vmem:[%s198] sm:$0xc]
      %v980 = vld [vmem:[%s198 + $0x8] sm:$0x3]
      %v981 = vld [vmem:[%s198 + $0xc] sm:$0xc]
      %v982 = vld [vmem:[%s198 + $0x14] sm:$0x3]
      %v983 = vld [vmem:[%s198 + $0x18] sm:$0xc]
      %v984 = vld [vmem:[%s198 + $0x20] sm:$0x3]
      %v985 = vld [vmem:[%s198 + $0x24] sm:$0xc]
      %v986 = vld [vmem:[%s198 + $0x2c] sm:$0x3]
      %v987 = vld [vmem:[%s198 + $0x30] sm:$0xc]
      %v988 = vld [vmem:[%s198 + $0x38] sm:$0x3]
      %v989 = vld [vmem:[%s198 + $0x3c] sm:$0xc]
      %v990 = vld [vmem:[%s198 + $0x44] sm:$0x3]
      %v991 = vld [vmem:[%s198 + $0x48] sm:$0xc]
      %v992 = vld [vmem:[%s198 + $0x50] sm:$0x3]
      %v993 = vld [vmem:[%s198 + $0x54] sm:$0xc]
      %v994 = vld [vmem:[%s198 + $0x5c] sm:$0x3]
      %v995 = vld [vmem:[%s198 + $0x60] sm:$0xc]
      %v996 = vld [vmem:[%s198 + $0x68] sm:$0x3]
      %v997 = vld [vmem:[%s198 + $0x6c] sm:$0xc]
      %v998 = vld [vmem:[%s198 + $0x74] sm:$0x3]
      %v999 = vld [vmem:[%s198 + $0x78] sm:$0xc]
      %v1000 = vld [vmem:[%s198 + $0x80] sm:$0x3]
      %v1001 = vld [vmem:[%s198 + $0x84] sm:$0xc]
      %v1002 = vld [vmem:[%s198 + $0x8c] sm:$0x3]
      %v1003 = vld [vmem:[%s198 + $0x90] sm:$0xc]
      %v1004 = vld [vmem:[%s198 + $0x98] sm:$0x3]
      %v1005 = vld [vmem:[%s198 + $0x9c] sm:$0xc]
      %v1006 = vld [vmem:[%s198 + $0xa4] sm:$0x3]
      %v1007 = vld [vmem:[%s198 + $0xa8] sm:$0xc]
      %v1008 = vld [vmem:[%s198 + $0xb0] sm:$0x3]
      %v1009 = vld [vmem:[%s198 + $0xb4] sm:$0xc]
      %v1010 = vld [vmem:[%s198 + $0xbc] sm:$0x3]
      %vm1043 = vcmask 1041408
      %vm1044 = vcmask 1045508
      %vm1045 = vmor %vm1043, %vm1044
      %v1046 = vrot.slane %v979, 6
      %v1047 = vrot.slane %v1046, 4
      %v1048 = vrot.slane %v212, 6
      %v1049 = vsel %vm1045, %v1047, %v1048
      %v1050 = vrot.slane %v1048, 4
      %v1051 = vrot.slane %v980, 6
      %v1052 = vsel %vm1045, %v1050, %v1051
      %v1053 = vrot.slane %v981, 6
      %v1054 = vrot.slane %v1053, 4
      %v1055 = vrot.slane %v214, 6
      %v1056 = vsel %vm1045, %v1054, %v1055
      %v1057 = vrot.slane %v1055, 4
      %v1058 = vrot.slane %v982, 6
      %v1059 = vsel %vm1045, %v1057, %v1058
      %v1060 = vrot.slane %v983, 6
      %v1061 = vrot.slane %v1060, 4
      %v1062 = vrot.slane %v216, 6
      %v1063 = vsel %vm1045, %v1061, %v1062
      %v1064 = vrot.slane %v1062, 4
      %v1065 = vrot.slane %v984, 6
      %v1066 = vsel %vm1045, %v1064, %v1065
      %v1067 = vrot.slane %v985, 6
      %v1068 = vrot.slane %v1067, 4
      %v1069 = vrot.slane %v218, 6
      %v1070 = vsel %vm1045, %v1068, %v1069
      %v1071 = vrot.slane %v1069, 4
      %v1072 = vrot.slane %v986, 6
      %v1073 = vsel %vm1045, %v1071, %v1072
      %v1074 = vrot.slane %v987, 6
      %v1075 = vrot.slane %v1074, 4
      %v1076 = vrot.slane %v220, 6
      %v1077 = vsel %vm1045, %v1075, %v1076
      %v1078 = vrot.slane %v1076, 4
      %v1079 = vrot.slane %v988, 6
      %v1080 = vsel %vm1045, %v1078, %v1079
      %v1081 = vrot.slane %v989, 6
      %v1082 = vrot.slane %v1081, 4
      %v1083 = vrot.slane %v222, 6
      %v1084 = vsel %vm1045, %v1082, %v1083
      %v1085 = vrot.slane %v1083, 4
      %v1086 = vrot.slane %v990, 6
      %v1087 = vsel %vm1045, %v1085, %v1086
      %v1088 = vrot.slane %v991, 6
      %v1089 = vrot.slane %v1088, 4
      %v1090 = vrot.slane %v224, 6
      %v1091 = vsel %vm1045, %v1089, %v1090
      %v1092 = vrot.slane %v1090, 4
      %v1093 = vrot.slane %v992, 6
      %v1094 = vsel %vm1045, %v1092, %v1093
      %v1095 = vrot.slane %v993, 6
      %v1096 = vrot.slane %v1095, 4
      %v1097 = vrot.slane %v226, 6
      %v1098 = vsel %vm1045, %v1096, %v1097
      %v1099 = vrot.slane %v1097, 4
      %v1100 = vrot.slane %v994, 6
      %v1101 = vsel %vm1045, %v1099, %v1100
      %v1102 = vrot.slane %v995, 6
      %v1103 = vrot.slane %v1102, 4
      %v1104 = vrot.slane %v228, 6
      %v1105 = vsel %vm1045, %v1103, %v1104
      %v1106 = vrot.slane %v1104, 4
      %v1107 = vrot.slane %v996, 6
      %v1108 = vsel %vm1045, %v1106, %v1107
      %v1109 = vrot.slane %v997, 6
      %v1110 = vrot.slane %v1109, 4
      %v1111 = vrot.slane %v230, 6
      %v1112 = vsel %vm1045, %v1110, %v1111
      %v1113 = vrot.slane %v1111, 4
      %v1114 = vrot.slane %v998, 6
      %v1115 = vsel %vm1045, %v1113, %v1114
      %v1116 = vrot.slane %v999, 6
      %v1117 = vrot.slane %v1116, 4
      %v1118 = vrot.slane %v232, 6
      %v1119 = vsel %vm1045, %v1117, %v1118
      %v1120 = vrot.slane %v1118, 4
      %v1121 = vrot.slane %v1000, 6
      %v1122 = vsel %vm1045, %v1120, %v1121
      %v1123 = vrot.slane %v1001, 6
      %v1124 = vrot.slane %v1123, 4
      %v1125 = vrot.slane %v234, 6
      %v1126 = vsel %vm1045, %v1124, %v1125
      %v1127 = vrot.slane %v1125, 4
      %v1128 = vrot.slane %v1002, 6
      %v1129 = vsel %vm1045, %v1127, %v1128
      %v1130 = vrot.slane %v1003, 6
      %v1131 = vrot.slane %v1130, 4
      %v1132 = vrot.slane %v236, 6
      %v1133 = vsel %vm1045, %v1131, %v1132
      %v1134 = vrot.slane %v1132, 4
      %v1135 = vrot.slane %v1004, 6
      %v1136 = vsel %vm1045, %v1134, %v1135
      %v1137 = vrot.slane %v1005, 6
      %v1138 = vrot.slane %v1137, 4
      %v1139 = vrot.slane %v238, 6
      %v1140 = vsel %vm1045, %v1138, %v1139
      %v1141 = vrot.slane %v1139, 4
      %v1142 = vrot.slane %v1006, 6
      %v1143 = vsel %vm1045, %v1141, %v1142
      %v1144 = vrot.slane %v1007, 6
      %v1145 = vrot.slane %v1144, 4
      %v1146 = vrot.slane %v240, 6
      %v1147 = vsel %vm1045, %v1145, %v1146
      %v1148 = vrot.slane %v1146, 4
      %v1149 = vrot.slane %v1008, 6
      %v1150 = vsel %vm1045, %v1148, %v1149
      %v1151 = vrot.slane %v1009, 6
      %v1152 = vrot.slane %v1151, 4
      %v1153 = vrot.slane %v242, 6
      %v1154 = vsel %vm1045, %v1152, %v1153
      %v1155 = vrot.slane %v1153, 4
      %v1156 = vrot.slane %v1010, 6
      %v1157 = vsel %vm1045, %v1155, %v1156
      %s1158 = scalar_lea.vmem %s1, 4
      %v1159 = vld [vmem:[%s1158] sm:$0x3]
      %v1160 = vunpack.c.l.b16 %v1049
      %v1161 = vunpack.c.l.b16 %v1052
      %v1162 = vunpack.c.l.b16 %v1056
      %v1163 = vunpack.c.l.b16 %v1059
      %v1164 = vunpack.c.l.b16 %v1063
      %v1165 = vunpack.c.l.b16 %v1066
      %v1166 = vunpack.c.l.b16 %v1070
      %v1167 = vunpack.c.l.b16 %v1073
      %v1168 = vunpack.c.l.b16 %v1077
      %v1169 = vunpack.c.l.b16 %v1080
      %v1170 = vunpack.c.l.b16 %v1084
      %v1171 = vunpack.c.l.b16 %v1087
      %v1172 = vunpack.c.l.b16 %v1091
      %v1173 = vunpack.c.l.b16 %v1094
      %v1174 = vunpack.c.l.b16 %v1098
      %v1175 = vunpack.c.l.b16 %v1101
      %v1176 = vunpack.c.l.b16 %v1105
      %v1177 = vunpack.c.l.b16 %v1108
      %v1178 = vunpack.c.l.b16 %v1112
      %v1179 = vunpack.c.l.b16 %v1115
      %v1180 = vunpack.c.l.b16 %v1119
      %v1181 = vunpack.c.l.b16 %v1122
      %v1182 = vunpack.c.l.b16 %v1126
      %v1183 = vunpack.c.l.b16 %v1129
      %v1184 = vunpack.c.l.b16 %v1133
      %v1185 = vunpack.c.l.b16 %v1136
      %v1186 = vunpack.c.l.b16 %v1140
      %v1187 = vunpack.c.l.b16 %v1143
      %v1188 = vunpack.c.l.b16 %v1147
      %v1189 = vunpack.c.l.b16 %v1150
      %v1190 = vunpack.c.l.b16 %v1154
      %v1191 = vunpack.c.l.b16 %v1157
      %v1192 = vpack.c.b16 %v1161, %v1160
      %v1193 = vpack.c.b16 %v1163, %v1162
      %v1194 = vpack.c.b16 %v1165, %v1164
      %v1195 = vpack.c.b16 %v1167, %v1166
      %v1196 = vpack.c.b16 %v1169, %v1168
      %v1197 = vpack.c.b16 %v1171, %v1170
      %v1198 = vpack.c.b16 %v1173, %v1172
      %v1199 = vpack.c.b16 %v1175, %v1174
      %v1200 = vpack.c.b16 %v1177, %v1176
      %v1201 = vpack.c.b16 %v1179, %v1178
      %v1202 = vpack.c.b16 %v1181, %v1180
      %v1203 = vpack.c.b16 %v1183, %v1182
      %v1204 = vpack.c.b16 %v1185, %v1184
      %v1205 = vpack.c.b16 %v1187, %v1186
      %v1206 = vpack.c.b16 %v1189, %v1188
      %v1207 = vpack.c.b16 %v1191, %v1190
      %v1209 = vsel %vm489, %v1192, 0
      %v1212 = vsel %vm489, %v1193, 0
      %v1215 = vsel %vm489, %v1194, 0
      %v1218 = vsel %vm489, %v1195, 0
      %v1221 = vsel %vm489, %v1196, 0
      %v1224 = vsel %vm489, %v1197, 0
      %v1227 = vsel %vm489, %v1198, 0
      %v1230 = vsel %vm489, %v1199, 0
      %v1233 = vsel %vm489, %v1200, 0
      %v1236 = vsel %vm489, %v1201, 0
      %v1239 = vsel %vm489, %v1202, 0
      %v1242 = vsel %vm489, %v1203, 0
      %v1245 = vsel %vm489, %v1204, 0
      %v1248 = vsel %vm489, %v1205, 0
      %v1251 = vsel %vm489, %v1206, 0
      %v1254 = vsel %vm489, %v1207, 0
      %v1257 = vsel %vm538, %v1159, 0
      %1259 = vmatprep.subr.bf16.mxu0 0
      %1260 = vmatpush1.bf16.msra.mxu0 %v1257
      %1261 = vmatprep.subr.bf16.mxu0 0
      %1262 = vmatpush1.bf16.msra.mxu0 0
      %1263 = vmatprep.subr.bf16.mxu0 0
      %1264 = vmatpush1.bf16.msra.mxu0 0
      %1265 = vmatprep.subr.bf16.mxu0 0
      %1266 = vmatpush1.bf16.msra.mxu0 0
      %1267 = vmatprep.subr.bf16.mxu0 0
      %1268 = vmatpush1.bf16.msra.mxu0 0
      %1269 = vmatprep.subr.bf16.mxu0 0
      %1270 = vmatpush1.bf16.msra.mxu0 0
      %1271 = vmatprep.subr.bf16.mxu0 0
      %1272 = vmatpush1.bf16.msra.mxu0 0
      %1273 = vmatprep.subr.bf16.mxu0 0
      %1274 = vmatpush1.bf16.msra.mxu0 0
      %1275 = vmatprep.subr.bf16.mxu0 0
      %1276 = vmatpush1.bf16.msra.mxu0 0
      %1277 = vmatprep.subr.bf16.mxu0 0
      %1278 = vmatpush1.bf16.msra.mxu0 0
      %1279 = vmatprep.subr.bf16.mxu0 0
      %1280 = vmatpush1.bf16.msra.mxu0 0
      %1281 = vmatprep.subr.bf16.mxu0 0
      %1282 = vmatpush1.bf16.msra.mxu0 0
      %1283 = vmatprep.subr.bf16.mxu0 0
      %1284 = vmatpush1.bf16.msra.mxu0 0
      %1285 = vmatprep.subr.bf16.mxu0 0
      %1286 = vmatpush1.bf16.msra.mxu0 0
      %1287 = vmatprep.subr.bf16.mxu0 0
      %1288 = vmatpush1.bf16.msra.mxu0 0
      %1289 = vmatprep.subr.bf16.mxu0 0
      %1290 = vmatpush1.bf16.msra.mxu0 0
      %1291 = vmatprep.mubr.bf16.mxu0 0
      %1292 = vmatmul.mubr.bf16.gmra.mrb[0].mxu0 %v1209
      %v1293 = vpop.f32.mrb[0].mxu0
      %v1294 = vadd.f32 0.0, %v1293
      %v1295 = vpop.f32.mrb[0].mxu0
      %v1296 = vpop.f32.mrb[0].mxu0
      %v1297 = vadd.f32 0.0, %v1296
      %v1298 = vpop.f32.mrb[0].mxu0
      %1299 = vmatprep.mubr.bf16.mxu0 0
      %1300 = vmatmul.mubr.bf16.gmra.mrb[0].mxu0 %v1212
      %v1301 = vpop.f32.mrb[0].mxu0
      %v1302 = vadd.f32 0.0, %v1301
      %v1303 = vpop.f32.mrb[0].mxu0
      %v1304 = vpop.f32.mrb[0].mxu0
      %v1305 = vadd.f32 0.0, %v1304
      %v1306 = vpop.f32.mrb[0].mxu0
      %1307 = vmatprep.mubr.bf16.mxu0 0
      %1308 = vmatmul.mubr.bf16.gmra.mrb[0].mxu0 %v1215
      %v1309 = vpop.f32.mrb[0].mxu0
      %v1310 = vadd.f32 0.0, %v1309
      %v1311 = vpop.f32.mrb[0].mxu0
      %v1312 = vpop.f32.mrb[0].mxu0
      %v1313 = vadd.f32 0.0, %v1312
      %v1314 = vpop.f32.mrb[0].mxu0
      %1315 = vmatprep.mubr.bf16.mxu0 0
      %1316 = vmatmul.mubr.bf16.gmra.mrb[0].mxu0 %v1218
      %v1317 = vpop.f32.mrb[0].mxu0
      %v1318 = vadd.f32 0.0, %v1317
      %v1319 = vpop.f32.mrb[0].mxu0
      %v1320 = vpop.f32.mrb[0].mxu0
      %v1321 = vadd.f32 0.0, %v1320
      %v1322 = vpop.f32.mrb[0].mxu0
      %1323 = vmatprep.mubr.bf16.mxu0 0
      %1324 = vmatmul.mubr.bf16.gmra.mrb[0].mxu0 %v1221
      %v1325 = vpop.f32.mrb[0].mxu0
      %v1326 = vadd.f32 0.0, %v1325
      %v1327 = vpop.f32.mrb[0].mxu0
      %v1328 = vpop.f32.mrb[0].mxu0
      %v1329 = vadd.f32 0.0, %v1328
      %v1330 = vpop.f32.mrb[0].mxu0
      %1331 = vmatprep.mubr.bf16.mxu0 0
      %1332 = vmatmul.mubr.bf16.gmra.mrb[0].mxu0 %v1224
      %v1333 = vpop.f32.mrb[0].mxu0
      %v1334 = vadd.f32 0.0, %v1333
      %v1335 = vpop.f32.mrb[0].mxu0
      %v1336 = vpop.f32.mrb[0].mxu0
      %v1337 = vadd.f32 0.0, %v1336
      %v1338 = vpop.f32.mrb[0].mxu0
      %1339 = vmatprep.mubr.bf16.mxu0 0
      %1340 = vmatmul.mubr.bf16.gmra.mrb[0].mxu0 %v1227
      %v1341 = vpop.f32.mrb[0].mxu0
      %v1342 = vadd.f32 0.0, %v1341
      %v1343 = vpop.f32.mrb[0].mxu0
      %v1344 = vpop.f32.mrb[0].mxu0
      %v1345 = vadd.f32 0.0, %v1344
      %v1346 = vpop.f32.mrb[0].mxu0
      %1347 = vmatprep.mubr.bf16.mxu0 0
      %1348 = vmatmul.mubr.bf16.gmra.mrb[0].mxu0 %v1230
      %v1349 = vpop.f32.mrb[0].mxu0
      %v1350 = vadd.f32 0.0, %v1349
      %v1351 = vpop.f32.mrb[0].mxu0
      %v1352 = vpop.f32.mrb[0].mxu0
      %v1353 = vadd.f32 0.0, %v1352
      %v1354 = vpop.f32.mrb[0].mxu0
      %1355 = vmatprep.mubr.bf16.mxu0 0
      %1356 = vmatmul.mubr.bf16.gmra.mrb[0].mxu0 %v1233
      %v1357 = vpop.f32.mrb[0].mxu0
      %v1358 = vadd.f32 0.0, %v1357
      %v1359 = vpop.f32.mrb[0].mxu0
      %v1360 = vpop.f32.mrb[0].mxu0
      %v1361 = vadd.f32 0.0, %v1360
      %v1362 = vpop.f32.mrb[0].mxu0
      %1363 = vmatprep.mubr.bf16.mxu0 0
      %1364 = vmatmul.mubr.bf16.gmra.mrb[0].mxu0 %v1236
      %v1365 = vpop.f32.mrb[0].mxu0
      %v1366 = vadd.f32 0.0, %v1365
      %v1367 = vpop.f32.mrb[0].mxu0
      %v1368 = vpop.f32.mrb[0].mxu0
      %v1369 = vadd.f32 0.0, %v1368
      %v1370 = vpop.f32.mrb[0].mxu0
      %1371 = vmatprep.mubr.bf16.mxu0 0
      %1372 = vmatmul.mubr.bf16.gmra.mrb[0].mxu0 %v1239
      %v1373 = vpop.f32.mrb[0].mxu0
      %v1374 = vadd.f32 0.0, %v1373
      %v1375 = vpop.f32.mrb[0].mxu0
      %v1376 = vpop.f32.mrb[0].mxu0
      %v1377 = vadd.f32 0.0, %v1376
      %v1378 = vpop.f32.mrb[0].mxu0
      %1379 = vmatprep.mubr.bf16.mxu0 0
      %1380 = vmatmul.mubr.bf16.gmra.mrb[0].mxu0 %v1242
      %v1381 = vpop.f32.mrb[0].mxu0
      %v1382 = vadd.f32 0.0, %v1381
      %v1383 = vpop.f32.mrb[0].mxu0
      %v1384 = vpop.f32.mrb[0].mxu0
      %v1385 = vadd.f32 0.0, %v1384
      %v1386 = vpop.f32.mrb[0].mxu0
      %1387 = vmatprep.mubr.bf16.mxu0 0
      %1388 = vmatmul.mubr.bf16.gmra.mrb[0].mxu0 %v1245
      %v1389 = vpop.f32.mrb[0].mxu0
      %v1390 = vadd.f32 0.0, %v1389
      %v1391 = vpop.f32.mrb[0].mxu0
      %v1392 = vpop.f32.mrb[0].mxu0
      %v1393 = vadd.f32 0.0, %v1392
      %v1394 = vpop.f32.mrb[0].mxu0
      %1395 = vmatprep.mubr.bf16.mxu0 0
      %1396 = vmatmul.mubr.bf16.gmra.mrb[0].mxu0 %v1248
      %v1397 = vpop.f32.mrb[0].mxu0
      %v1398 = vadd.f32 0.0, %v1397
      %v1399 = vpop.f32.mrb[0].mxu0
      %v1400 = vpop.f32.mrb[0].mxu0
      %v1401 = vadd.f32 0.0, %v1400
      %v1402 = vpop.f32.mrb[0].mxu0
      %1403 = vmatprep.mubr.bf16.mxu0 0
      %1404 = vmatmul.mubr.bf16.gmra.mrb[0].mxu0 %v1251
      %v1405 = vpop.f32.mrb[0].mxu0
      %v1406 = vadd.f32 0.0, %v1405
      %v1407 = vpop.f32.mrb[0].mxu0
      %v1408 = vpop.f32.mrb[0].mxu0
      %v1409 = vadd.f32 0.0, %v1408
      %v1410 = vpop.f32.mrb[0].mxu0
      %1411 = vmatprep.mubr.bf16.mxu0 0
      %1412 = vmatmul.mubr.bf16.gmra.mrb[0].mxu0 %v1254
      %v1413 = vpop.f32.mrb[0].mxu0
      %v1414 = vadd.f32 0.0, %v1413
      %v1415 = vpop.f32.mrb[0].mxu0
      %v1416 = vpop.f32.mrb[0].mxu0
      %v1417 = vadd.f32 0.0, %v1416
      %v1418 = vpop.f32.mrb[0].mxu0
      %1419 = vdwg.mxu0
      %v1420 = vadd.f32 %v853, %v1294
      %v1421 = vadd.f32 %v856, %v1297
      %v1422 = vadd.f32 %v861, %v1302
      %v1423 = vadd.f32 %v864, %v1305
      %v1424 = vadd.f32 %v869, %v1310
      %v1425 = vadd.f32 %v872, %v1313
      %v1426 = vadd.f32 %v877, %v1318
      %v1427 = vadd.f32 %v880, %v1321
      %v1428 = vadd.f32 %v885, %v1326
      %v1429 = vadd.f32 %v888, %v1329
      %v1430 = vadd.f32 %v893, %v1334
      %v1431 = vadd.f32 %v896, %v1337
      %v1432 = vadd.f32 %v901, %v1342
      %v1433 = vadd.f32 %v904, %v1345
      %v1434 = vadd.f32 %v909, %v1350
      %v1435 = vadd.f32 %v912, %v1353
      %v1436 = vadd.f32 %v917, %v1358
      %v1437 = vadd.f32 %v920, %v1361
      %v1438 = vadd.f32 %v925, %v1366
      %v1439 = vadd.f32 %v928, %v1369
      %v1440 = vadd.f32 %v933, %v1374
      %v1441 = vadd.f32 %v936, %v1377
      %v1442 = vadd.f32 %v941, %v1382
      %v1443 = vadd.f32 %v944, %v1385
      %v1444 = vadd.f32 %v949, %v1390
      %v1445 = vadd.f32 %v952, %v1393
      %v1446 = vadd.f32 %v957, %v1398
      %v1447 = vadd.f32 %v960, %v1401
      %v1448 = vadd.f32 %v965, %v1406
      %v1449 = vadd.f32 %v968, %v1409
      %v1450 = vadd.f32 %v973, %v1414
      %v1451 = vadd.f32 %v976, %v1417
      %s1452 = scalar_lea.vmem %s198, 24
      %v1453 = vld [vmem:[%s1452] sm:$0xf]
      %v1454 = vld [vmem:[%s1452 + $0x4] sm:$0xf]
      %v1455 = vld [vmem:[%s1452 + $0xc] sm:$0xf]
      %v1456 = vld [vmem:[%s1452 + $0x10] sm:$0xf]
      %v1457 = vld [vmem:[%s1452 + $0x18] sm:$0xf]
      %v1458 = vld [vmem:[%s1452 + $0x1c] sm:$0xf]
      %v1459 = vld [vmem:[%s1452 + $0x24] sm:$0xf]
      %v1460 = vld [vmem:[%s1452 + $0x28] sm:$0xf]
      %v1461 = vld [vmem:[%s1452 + $0x30] sm:$0xf]
      %v1462 = vld [vmem:[%s1452 + $0x34] sm:$0xf]
      %v1463 = vld [vmem:[%s1452 + $0x3c] sm:$0xf]
      %v1464 = vld [vmem:[%s1452 + $0x40] sm:$0xf]
      %v1465 = vld [vmem:[%s1452 + $0x48] sm:$0xf]
      %v1466 = vld [vmem:[%s1452 + $0x4c] sm:$0xf]
      %v1467 = vld [vmem:[%s1452 + $0x54] sm:$0xf]
      %v1468 = vld [vmem:[%s1452 + $0x58] sm:$0xf]
      %v1469 = vld [vmem:[%s1452 + $0x60] sm:$0xf]
      %v1470 = vld [vmem:[%s1452 + $0x64] sm:$0xf]
      %v1471 = vld [vmem:[%s1452 + $0x6c] sm:$0xf]
      %v1472 = vld [vmem:[%s1452 + $0x70] sm:$0xf]
      %v1473 = vld [vmem:[%s1452 + $0x78] sm:$0xf]
      %v1474 = vld [vmem:[%s1452 + $0x7c] sm:$0xf]
      %v1475 = vld [vmem:[%s1452 + $0x84] sm:$0xf]
      %v1476 = vld [vmem:[%s1452 + $0x88] sm:$0xf]
      %v1477 = vld [vmem:[%s1452 + $0x90] sm:$0xf]
      %v1478 = vld [vmem:[%s1452 + $0x94] sm:$0xf]
      %v1479 = vld [vmem:[%s1452 + $0x9c] sm:$0xf]
      %v1480 = vld [vmem:[%s1452 + $0xa0] sm:$0xf]
      %v1481 = vld [vmem:[%s1452 + $0xa8] sm:$0xf]
      %v1482 = vld [vmem:[%s1452 + $0xac] sm:$0xf]
      %v1483 = vld [vmem:[%s1452 + $0xb4] sm:$0xf]
      %v1484 = vld [vmem:[%s1452 + $0xb8] sm:$0xf]
      %s1485 = scalar_lea.vmem %s1, 6
      %v1486 = vld [vmem:[%s1485] sm:$0x3]
      %v1519 = vunpack.c.l.b16 %v1453
      %v1520 = vunpack.c.l.b16 %v1454
      %v1521 = vunpack.c.l.b16 %v1455
      %v1522 = vunpack.c.l.b16 %v1456
      %v1523 = vunpack.c.l.b16 %v1457
      %v1524 = vunpack.c.l.b16 %v1458
      %v1525 = vunpack.c.l.b16 %v1459
      %v1526 = vunpack.c.l.b16 %v1460
      %v1527 = vunpack.c.l.b16 %v1461
      %v1528 = vunpack.c.l.b16 %v1462
      %v1529 = vunpack.c.l.b16 %v1463
      %v1530 = vunpack.c.l.b16 %v1464
      %v1531 = vunpack.c.l.b16 %v1465
      %v1532 = vunpack.c.l.b16 %v1466
      %v1533 = vunpack.c.l.b16 %v1467
      %v1534 = vunpack.c.l.b16 %v1468
      %v1535 = vunpack.c.l.b16 %v1469
      %v1536 = vunpack.c.l.b16 %v1470
      %v1537 = vunpack.c.l.b16 %v1471
      %v1538 = vunpack.c.l.b16 %v1472
      %v1539 = vunpack.c.l.b16 %v1473
      %v1540 = vunpack.c.l.b16 %v1474
      %v1541 = vunpack.c.l.b16 %v1475
      %v1542 = vunpack.c.l.b16 %v1476
      %v1543 = vunpack.c.l.b16 %v1477
      %v1544 = vunpack.c.l.b16 %v1478
      %v1545 = vunpack.c.l.b16 %v1479
      %v1546 = vunpack.c.l.b16 %v1480
      %v1547 = vunpack.c.l.b16 %v1481
      %v1548 = vunpack.c.l.b16 %v1482
      %v1549 = vunpack.c.l.b16 %v1483
      %v1550 = vunpack.c.l.b16 %v1484
      %v1551 = vpack.c.b16 %v1520, %v1519
      %v1552 = vpack.c.b16 %v1522, %v1521
      %v1553 = vpack.c.b16 %v1524, %v1523
      %v1554 = vpack.c.b16 %v1526, %v1525
      %v1555 = vpack.c.b16 %v1528, %v1527
      %v1556 = vpack.c.b16 %v1530, %v1529
      %v1557 = vpack.c.b16 %v1532, %v1531
      %v1558 = vpack.c.b16 %v1534, %v1533
      %v1559 = vpack.c.b16 %v1536, %v1535
      %v1560 = vpack.c.b16 %v1538, %v1537
      %v1561 = vpack.c.b16 %v1540, %v1539
      %v1562 = vpack.c.b16 %v1542, %v1541
      %v1563 = vpack.c.b16 %v1544, %v1543
      %v1564 = vpack.c.b16 %v1546, %v1545
      %v1565 = vpack.c.b16 %v1548, %v1547
      %v1566 = vpack.c.b16 %v1550, %v1549
      %v1568 = vsel %vm489, %v1551, 0
      %v1571 = vsel %vm489, %v1552, 0
      %v1574 = vsel %vm489, %v1553, 0
      %v1577 = vsel %vm489, %v1554, 0
      %v1580 = vsel %vm489, %v1555, 0
      %v1583 = vsel %vm489, %v1556, 0
      %v1586 = vsel %vm489, %v1557, 0
      %v1589 = vsel %vm489, %v1558, 0
      %v1592 = vsel %vm489, %v1559, 0
      %v1595 = vsel %vm489, %v1560, 0
      %v1598 = vsel %vm489, %v1561, 0
      %v1601 = vsel %vm489, %v1562, 0
      %v1604 = vsel %vm489, %v1563, 0
      %v1607 = vsel %vm489, %v1564, 0
      %v1610 = vsel %vm489, %v1565, 0
      %v1613 = vsel %vm489, %v1566, 0
      %v1616 = vsel %vm538, %v1486, 0
      %1618 = vmatprep.subr.bf16.mxu0 0
      %1619 = vmatpush1.bf16.msra.mxu0 %v1616
      %1620 = vmatprep.subr.bf16.mxu0 0
      %1621 = vmatpush1.bf16.msra.mxu0 0
      %1622 = vmatprep.subr.bf16.mxu0 0
      %1623 = vmatpush1.bf16.msra.mxu0 0
      %1624 = vmatprep.subr.bf16.mxu0 0
      %1625 = vmatpush1.bf16.msra.mxu0 0
      %1626 = vmatprep.subr.bf16.mxu0 0
      %1627 = vmatpush1.bf16.msra.mxu0 0
      %1628 = vmatprep.subr.bf16.mxu0 0
      %1629 = vmatpush1.bf16.msra.mxu0 0
      %1630 = vmatprep.subr.bf16.mxu0 0
      %1631 = vmatpush1.bf16.msra.mxu0 0
      %1632 = vmatprep.subr.bf16.mxu0 0
      %1633 = vmatpush1.bf16.msra.mxu0 0
      %1634 = vmatprep.subr.bf16.mxu0 0
      %1635 = vmatpush1.bf16.msra.mxu0 0
      %1636 = vmatprep.subr.bf16.mxu0 0
      %1637 = vmatpush1.bf16.msra.mxu0 0
      %1638 = vmatprep.subr.bf16.mxu0 0
      %1639 = vmatpush1.bf16.msra.mxu0 0
      %1640 = vmatprep.subr.bf16.mxu0 0
      %1641 = vmatpush1.bf16.msra.mxu0 0
      %1642 = vmatprep.subr.bf16.mxu0 0
      %1643 = vmatpush1.bf16.msra.mxu0 0
      %1644 = vmatprep.subr.bf16.mxu0 0
      %1645 = vmatpush1.bf16.msra.mxu0 0
      %1646 = vmatprep.subr.bf16.mxu0 0
      %1647 = vmatpush1.bf16.msra.mxu0 0
      %1648 = vmatprep.subr.bf16.mxu0 0
      %1649 = vmatpush1.bf16.msra.mxu0 0
      %1650 = vmatprep.mubr.bf16.mxu0 0
      %1651 = vmatmul.mubr.bf16.gmra.mrb[0].mxu0 %v1568
      %v1652 = vpop.f32.mrb[0].mxu0
      %v1653 = vadd.f32 0.0, %v1652
      %v1654 = vpop.f32.mrb[0].mxu0
      %v1655 = vpop.f32.mrb[0].mxu0
      %v1656 = vadd.f32 0.0, %v1655
      %v1657 = vpop.f32.mrb[0].mxu0
      %1658 = vmatprep.mubr.bf16.mxu0 0
      %1659 = vmatmul.mubr.bf16.gmra.mrb[0].mxu0 %v1571
      %v1660 = vpop.f32.mrb[0].mxu0
      %v1661 = vadd.f32 0.0, %v1660
      %v1662 = vpop.f32.mrb[0].mxu0
      %v1663 = vpop.f32.mrb[0].mxu0
      %v1664 = vadd.f32 0.0, %v1663
      %v1665 = vpop.f32.mrb[0].mxu0
      %1666 = vmatprep.mubr.bf16.mxu0 0
      %1667 = vmatmul.mubr.bf16.gmra.mrb[0].mxu0 %v1574
      %v1668 = vpop.f32.mrb[0].mxu0
      %v1669 = vadd.f32 0.0, %v1668
      %v1670 = vpop.f32.mrb[0].mxu0
      %v1671 = vpop.f32.mrb[0].mxu0
      %v1672 = vadd.f32 0.0, %v1671
      %v1673 = vpop.f32.mrb[0].mxu0
      %1674 = vmatprep.mubr.bf16.mxu0 0
      %1675 = vmatmul.mubr.bf16.gmra.mrb[0].mxu0 %v1577
      %v1676 = vpop.f32.mrb[0].mxu0
      %v1677 = vadd.f32 0.0, %v1676
      %v1678 = vpop.f32.mrb[0].mxu0
      %v1679 = vpop.f32.mrb[0].mxu0
      %v1680 = vadd.f32 0.0, %v1679
      %v1681 = vpop.f32.mrb[0].mxu0
      %1682 = vmatprep.mubr.bf16.mxu0 0
      %1683 = vmatmul.mubr.bf16.gmra.mrb[0].mxu0 %v1580
      %v1684 = vpop.f32.mrb[0].mxu0
      %v1685 = vadd.f32 0.0, %v1684
      %v1686 = vpop.f32.mrb[0].mxu0
      %v1687 = vpop.f32.mrb[0].mxu0
      %v1688 = vadd.f32 0.0, %v1687
      %v1689 = vpop.f32.mrb[0].mxu0
      %1690 = vmatprep.mubr.bf16.mxu0 0
      %1691 = vmatmul.mubr.bf16.gmra.mrb[0].mxu0 %v1583
      %v1692 = vpop.f32.mrb[0].mxu0
      %v1693 = vadd.f32 0.0, %v1692
      %v1694 = vpop.f32.mrb[0].mxu0
      %v1695 = vpop.f32.mrb[0].mxu0
      %v1696 = vadd.f32 0.0, %v1695
      %v1697 = vpop.f32.mrb[0].mxu0
      %1698 = vmatprep.mubr.bf16.mxu0 0
      %1699 = vmatmul.mubr.bf16.gmra.mrb[0].mxu0 %v1586
      %v1700 = vpop.f32.mrb[0].mxu0
      %v1701 = vadd.f32 0.0, %v1700
      %v1702 = vpop.f32.mrb[0].mxu0
      %v1703 = vpop.f32.mrb[0].mxu0
      %v1704 = vadd.f32 0.0, %v1703
      %v1705 = vpop.f32.mrb[0].mxu0
      %1706 = vmatprep.mubr.bf16.mxu0 0
      %1707 = vmatmul.mubr.bf16.gmra.mrb[0].mxu0 %v1589
      %v1708 = vpop.f32.mrb[0].mxu0
      %v1709 = vadd.f32 0.0, %v1708
      %v1710 = vpop.f32.mrb[0].mxu0
      %v1711 = vpop.f32.mrb[0].mxu0
      %v1712 = vadd.f32 0.0, %v1711
      %v1713 = vpop.f32.mrb[0].mxu0
      %1714 = vmatprep.mubr.bf16.mxu0 0
      %1715 = vmatmul.mubr.bf16.gmra.mrb[0].mxu0 %v1592
      %v1716 = vpop.f32.mrb[0].mxu0
      %v1717 = vadd.f32 0.0, %v1716
      %v1718 = vpop.f32.mrb[0].mxu0
      %v1719 = vpop.f32.mrb[0].mxu0
      %v1720 = vadd.f32 0.0, %v1719
      %v1721 = vpop.f32.mrb[0].mxu0
      %1722 = vmatprep.mubr.bf16.mxu0 0
      %1723 = vmatmul.mubr.bf16.gmra.mrb[0].mxu0 %v1595
      %v1724 = vpop.f32.mrb[0].mxu0
      %v1725 = vadd.f32 0.0, %v1724
      %v1726 = vpop.f32.mrb[0].mxu0
      %v1727 = vpop.f32.mrb[0].mxu0
      %v1728 = vadd.f32 0.0, %v1727
      %v1729 = vpop.f32.mrb[0].mxu0
      %1730 = vmatprep.mubr.bf16.mxu0 0
      %1731 = vmatmul.mubr.bf16.gmra.mrb[0].mxu0 %v1598
      %v1732 = vpop.f32.mrb[0].mxu0
      %v1733 = vadd.f32 0.0, %v1732
      %v1734 = vpop.f32.mrb[0].mxu0
      %v1735 = vpop.f32.mrb[0].mxu0
      %v1736 = vadd.f32 0.0, %v1735
      %v1737 = vpop.f32.mrb[0].mxu0
      %1738 = vmatprep.mubr.bf16.mxu0 0
      %1739 = vmatmul.mubr.bf16.gmra.mrb[0].mxu0 %v1601
      %v1740 = vpop.f32.mrb[0].mxu0
      %v1741 = vadd.f32 0.0, %v1740
      %v1742 = vpop.f32.mrb[0].mxu0
      %v1743 = vpop.f32.mrb[0].mxu0
      %v1744 = vadd.f32 0.0, %v1743
      %v1745 = vpop.f32.mrb[0].mxu0
      %1746 = vmatprep.mubr.bf16.mxu0 0
      %1747 = vmatmul.mubr.bf16.gmra.mrb[0].mxu0 %v1604
      %v1748 = vpop.f32.mrb[0].mxu0
      %v1749 = vadd.f32 0.0, %v1748
      %v1750 = vpop.f32.mrb[0].mxu0
      %v1751 = vpop.f32.mrb[0].mxu0
      %v1752 = vadd.f32 0.0, %v1751
      %v1753 = vpop.f32.mrb[0].mxu0
      %1754 = vmatprep.mubr.bf16.mxu0 0
      %1755 = vmatmul.mubr.bf16.gmra.mrb[0].mxu0 %v1607
      %v1756 = vpop.f32.mrb[0].mxu0
      %v1757 = vadd.f32 0.0, %v1756
      %v1758 = vpop.f32.mrb[0].mxu0
      %v1759 = vpop.f32.mrb[0].mxu0
      %v1760 = vadd.f32 0.0, %v1759
      %v1761 = vpop.f32.mrb[0].mxu0
      %1762 = vmatprep.mubr.bf16.mxu0 0
      %1763 = vmatmul.mubr.bf16.gmra.mrb[0].mxu0 %v1610
      %v1764 = vpop.f32.mrb[0].mxu0
      %v1765 = vadd.f32 0.0, %v1764
      %v1766 = vpop.f32.mrb[0].mxu0
      %v1767 = vpop.f32.mrb[0].mxu0
      %v1768 = vadd.f32 0.0, %v1767
      %v1769 = vpop.f32.mrb[0].mxu0
      %1770 = vmatprep.mubr.bf16.mxu0 0
      %1771 = vmatmul.mubr.bf16.gmra.mrb[0].mxu0 %v1613
      %v1772 = vpop.f32.mrb[0].mxu0
      %v1773 = vadd.f32 0.0, %v1772
      %v1774 = vpop.f32.mrb[0].mxu0
      %v1775 = vpop.f32.mrb[0].mxu0
      %v1776 = vadd.f32 0.0, %v1775
      %v1777 = vpop.f32.mrb[0].mxu0
      %1778 = vdwg.mxu0
      %v1779 = vadd.f32 %v1420, %v1653
      %v1780 = vadd.f32 %v1421, %v1656
      %v1781 = vadd.f32 %v1422, %v1661
      %v1782 = vadd.f32 %v1423, %v1664
      %v1783 = vadd.f32 %v1424, %v1669
      %v1784 = vadd.f32 %v1425, %v1672
      %v1785 = vadd.f32 %v1426, %v1677
      %v1786 = vadd.f32 %v1427, %v1680
      %v1787 = vadd.f32 %v1428, %v1685
      %v1788 = vadd.f32 %v1429, %v1688
      %v1789 = vadd.f32 %v1430, %v1693
      %v1790 = vadd.f32 %v1431, %v1696
      %v1791 = vadd.f32 %v1432, %v1701
      %v1792 = vadd.f32 %v1433, %v1704
      %v1793 = vadd.f32 %v1434, %v1709
      %v1794 = vadd.f32 %v1435, %v1712
      %v1795 = vadd.f32 %v1436, %v1717
      %v1796 = vadd.f32 %v1437, %v1720
      %v1797 = vadd.f32 %v1438, %v1725
      %v1798 = vadd.f32 %v1439, %v1728
      %v1799 = vadd.f32 %v1440, %v1733
      %v1800 = vadd.f32 %v1441, %v1736
      %v1801 = vadd.f32 %v1442, %v1741
      %v1802 = vadd.f32 %v1443, %v1744
      %v1803 = vadd.f32 %v1444, %v1749
      %v1804 = vadd.f32 %v1445, %v1752
      %v1805 = vadd.f32 %v1446, %v1757
      %v1806 = vadd.f32 %v1447, %v1760
      %v1807 = vadd.f32 %v1448, %v1765
      %v1808 = vadd.f32 %v1449, %v1768
      %v1809 = vadd.f32 %v1450, %v1773
      %v1810 = vadd.f32 %v1451, %v1776
      %v1811 = vld [vmem:[%s1452] sm:$0xe]
      %v1812 = vld [vmem:[%s1452 + $0x4] sm:$0xf]
      %v1813 = vld [vmem:[%s1452 + $0x8] sm:$0x1]
      %v1814 = vld [vmem:[%s1452 + $0xc] sm:$0xe]
      %v1815 = vld [vmem:[%s1452 + $0x10] sm:$0xf]
      %v1816 = vld [vmem:[%s1452 + $0x14] sm:$0x1]
      %v1817 = vld [vmem:[%s1452 + $0x18] sm:$0xe]
      %v1818 = vld [vmem:[%s1452 + $0x1c] sm:$0xf]
      %v1819 = vld [vmem:[%s1452 + $0x20] sm:$0x1]
      %v1820 = vld [vmem:[%s1452 + $0x24] sm:$0xe]
      %v1821 = vld [vmem:[%s1452 + $0x28] sm:$0xf]
      %v1822 = vld [vmem:[%s1452 + $0x2c] sm:$0x1]
      %v1823 = vld [vmem:[%s1452 + $0x30] sm:$0xe]
      %v1824 = vld [vmem:[%s1452 + $0x34] sm:$0xf]
      %v1825 = vld [vmem:[%s1452 + $0x38] sm:$0x1]
      %v1826 = vld [vmem:[%s1452 + $0x3c] sm:$0xe]
      %v1827 = vld [vmem:[%s1452 + $0x40] sm:$0xf]
      %v1828 = vld [vmem:[%s1452 + $0x44] sm:$0x1]
      %v1829 = vld [vmem:[%s1452 + $0x48] sm:$0xe]
      %v1830 = vld [vmem:[%s1452 + $0x4c] sm:$0xf]
      %v1831 = vld [vmem:[%s1452 + $0x50] sm:$0x1]
      %v1832 = vld [vmem:[%s1452 + $0x54] sm:$0xe]
      %v1833 = vld [vmem:[%s1452 + $0x58] sm:$0xf]
      %v1834 = vld [vmem:[%s1452 + $0x5c] sm:$0x1]
      %v1835 = vld [vmem:[%s1452 + $0x60] sm:$0xe]
      %v1836 = vld [vmem:[%s1452 + $0x64] sm:$0xf]
      %v1837 = vld [vmem:[%s1452 + $0x68] sm:$0x1]
      %v1838 = vld [vmem:[%s1452 + $0x6c] sm:$0xe]
      %v1839 = vld [vmem:[%s1452 + $0x70] sm:$0xf]
      %v1840 = vld [vmem:[%s1452 + $0x74] sm:$0x1]
      %v1841 = vld [vmem:[%s1452 + $0x78] sm:$0xe]
      %v1842 = vld [vmem:[%s1452 + $0x7c] sm:$0xf]
      %v1843 = vld [vmem:[%s1452 + $0x80] sm:$0x1]
      %v1844 = vld [vmem:[%s1452 + $0x84] sm:$0xe]
      %v1845 = vld [vmem:[%s1452 + $0x88] sm:$0xf]
      %v1846 = vld [vmem:[%s1452 + $0x8c] sm:$0x1]
      %v1847 = vld [vmem:[%s1452 + $0x90] sm:$0xe]
      %v1848 = vld [vmem:[%s1452 + $0x94] sm:$0xf]
      %v1849 = vld [vmem:[%s1452 + $0x98] sm:$0x1]
      %v1850 = vld [vmem:[%s1452 + $0x9c] sm:$0xe]
      %v1851 = vld [vmem:[%s1452 + $0xa0] sm:$0xf]
      %v1852 = vld [vmem:[%s1452 + $0xa4] sm:$0x1]
      %v1853 = vld [vmem:[%s1452 + $0xa8] sm:$0xe]
      %v1854 = vld [vmem:[%s1452 + $0xac] sm:$0xf]
      %v1855 = vld [vmem:[%s1452 + $0xb0] sm:$0x1]
      %v1856 = vld [vmem:[%s1452 + $0xb4] sm:$0xe]
      %v1857 = vld [vmem:[%s1452 + $0xb8] sm:$0xf]
      %v1858 = vld [vmem:[%s1452 + $0xbc] sm:$0x1]
      %v1907 = vrot.slane %v1811, 5
      %v1908 = vrot.slane %v1907, 4
      %v1909 = vrot.slane %v1812, 5
      %v1910 = vsel %vm326, %v1908, %v1909
      %v1911 = vrot.slane %v1909, 4
      %v1912 = vrot.slane %v1813, 5
      %v1913 = vsel %vm326, %v1911, %v1912
      %v1914 = vrot.slane %v1814, 5
      %v1915 = vrot.slane %v1914, 4
      %v1916 = vrot.slane %v1815, 5
      %v1917 = vsel %vm326, %v1915, %v1916
      %v1918 = vrot.slane %v1916, 4
      %v1919 = vrot.slane %v1816, 5
      %v1920 = vsel %vm326, %v1918, %v1919
      %v1921 = vrot.slane %v1817, 5
      %v1922 = vrot.slane %v1921, 4
      %v1923 = vrot.slane %v1818, 5
      %v1924 = vsel %vm326, %v1922, %v1923
      %v1925 = vrot.slane %v1923, 4
      %v1926 = vrot.slane %v1819, 5
      %v1927 = vsel %vm326, %v1925, %v1926
      %v1928 = vrot.slane %v1820, 5
      %v1929 = vrot.slane %v1928, 4
      %v1930 = vrot.slane %v1821, 5
      %v1931 = vsel %vm326, %v1929, %v1930
      %v1932 = vrot.slane %v1930, 4
      %v1933 = vrot.slane %v1822, 5
      %v1934 = vsel %vm326, %v1932, %v1933
      %v1935 = vrot.slane %v1823, 5
      %v1936 = vrot.slane %v1935, 4
      %v1937 = vrot.slane %v1824, 5
      %v1938 = vsel %vm326, %v1936, %v1937
      %v1939 = vrot.slane %v1937, 4
      %v1940 = vrot.slane %v1825, 5
      %v1941 = vsel %vm326, %v1939, %v1940
      %v1942 = vrot.slane %v1826, 5
      %v1943 = vrot.slane %v1942, 4
      %v1944 = vrot.slane %v1827, 5
      %v1945 = vsel %vm326, %v1943, %v1944
      %v1946 = vrot.slane %v1944, 4
      %v1947 = vrot.slane %v1828, 5
      %v1948 = vsel %vm326, %v1946, %v1947
      %v1949 = vrot.slane %v1829, 5
      %v1950 = vrot.slane %v1949, 4
      %v1951 = vrot.slane %v1830, 5
      %v1952 = vsel %vm326, %v1950, %v1951
      %v1953 = vrot.slane %v1951, 4
      %v1954 = vrot.slane %v1831, 5
      %v1955 = vsel %vm326, %v1953, %v1954
      %v1956 = vrot.slane %v1832, 5
      %v1957 = vrot.slane %v1956, 4
      %v1958 = vrot.slane %v1833, 5
      %v1959 = vsel %vm326, %v1957, %v1958
      %v1960 = vrot.slane %v1958, 4
      %v1961 = vrot.slane %v1834, 5
      %v1962 = vsel %vm326, %v1960, %v1961
      %v1963 = vrot.slane %v1835, 5
      %v1964 = vrot.slane %v1963, 4
      %v1965 = vrot.slane %v1836, 5
      %v1966 = vsel %vm326, %v1964, %v1965
      %v1967 = vrot.slane %v1965, 4
      %v1968 = vrot.slane %v1837, 5
      %v1969 = vsel %vm326, %v1967, %v1968
      %v1970 = vrot.slane %v1838, 5
      %v1971 = vrot.slane %v1970, 4
      %v1972 = vrot.slane %v1839, 5
      %v1973 = vsel %vm326, %v1971, %v1972
      %v1974 = vrot.slane %v1972, 4
      %v1975 = vrot.slane %v1840, 5
      %v1976 = vsel %vm326, %v1974, %v1975
      %v1977 = vrot.slane %v1841, 5
      %v1978 = vrot.slane %v1977, 4
      %v1979 = vrot.slane %v1842, 5
      %v1980 = vsel %vm326, %v1978, %v1979
      %v1981 = vrot.slane %v1979, 4
      %v1982 = vrot.slane %v1843, 5
      %v1983 = vsel %vm326, %v1981, %v1982
      %v1984 = vrot.slane %v1844, 5
      %v1985 = vrot.slane %v1984, 4
      %v1986 = vrot.slane %v1845, 5
      %v1987 = vsel %vm326, %v1985, %v1986
      %v1988 = vrot.slane %v1986, 4
      %v1989 = vrot.slane %v1846, 5
      %v1990 = vsel %vm326, %v1988, %v1989
      %v1991 = vrot.slane %v1847, 5
      %v1992 = vrot.slane %v1991, 4
      %v1993 = vrot.slane %v1848, 5
      %v1994 = vsel %vm326, %v1992, %v1993
      %v1995 = vrot.slane %v1993, 4
      %v1996 = vrot.slane %v1849, 5
      %v1997 = vsel %vm326, %v1995, %v1996
      %v1998 = vrot.slane %v1850, 5
      %v1999 = vrot.slane %v1998, 4
      %v2000 = vrot.slane %v1851, 5
      %v2001 = vsel %vm326, %v1999, %v2000
      %v2002 = vrot.slane %v2000, 4
      %v2003 = vrot.slane %v1852, 5
      %v2004 = vsel %vm326, %v2002, %v2003
      %v2005 = vrot.slane %v1853, 5
      %v2006 = vrot.slane %v2005, 4
      %v2007 = vrot.slane %v1854, 5
      %v2008 = vsel %vm326, %v2006, %v2007
      %v2009 = vrot.slane %v2007, 4
      %v2010 = vrot.slane %v1855, 5
      %v2011 = vsel %vm326, %v2009, %v2010
      %v2012 = vrot.slane %v1856, 5
      %v2013 = vrot.slane %v2012, 4
      %v2014 = vrot.slane %v1857, 5
      %v2015 = vsel %vm326, %v2013, %v2014
      %v2016 = vrot.slane %v2014, 4
      %v2017 = vrot.slane %v1858, 5
      %v2018 = vsel %vm326, %v2016, %v2017
      %s2019 = scalar_lea.vmem %s1, 8
      %v2020 = vld [vmem:[%s2019] sm:$0x3]
      %v2021 = vunpack.c.l.b16 %v1910
      %v2022 = vunpack.c.l.b16 %v1913
      %v2023 = vunpack.c.l.b16 %v1917
      %v2024 = vunpack.c.l.b16 %v1920
      %v2025 = vunpack.c.l.b16 %v1924
      %v2026 = vunpack.c.l.b16 %v1927
      %v2027 = vunpack.c.l.b16 %v1931
      %v2028 = vunpack.c.l.b16 %v1934
      %v2029 = vunpack.c.l.b16 %v1938
      %v2030 = vunpack.c.l.b16 %v1941
      %v2031 = vunpack.c.l.b16 %v1945
      %v2032 = vunpack.c.l.b16 %v1948
      %v2033 = vunpack.c.l.b16 %v1952
      %v2034 = vunpack.c.l.b16 %v1955
      %v2035 = vunpack.c.l.b16 %v1959
      %v2036 = vunpack.c.l.b16 %v1962
      %v2037 = vunpack.c.l.b16 %v1966
      %v2038 = vunpack.c.l.b16 %v1969
      %v2039 = vunpack.c.l.b16 %v1973
      %v2040 = vunpack.c.l.b16 %v1976
      %v2041 = vunpack.c.l.b16 %v1980
      %v2042 = vunpack.c.l.b16 %v1983
      %v2043 = vunpack.c.l.b16 %v1987
      %v2044 = vunpack.c.l.b16 %v1990
      %v2045 = vunpack.c.l.b16 %v1994
      %v2046 = vunpack.c.l.b16 %v1997
      %v2047 = vunpack.c.l.b16 %v2001
      %v2048 = vunpack.c.l.b16 %v2004
      %v2049 = vunpack.c.l.b16 %v2008
      %v2050 = vunpack.c.l.b16 %v2011
      %v2051 = vunpack.c.l.b16 %v2015
      %v2052 = vunpack.c.l.b16 %v2018
      %v2053 = vpack.c.b16 %v2022, %v2021
      %v2054 = vpack.c.b16 %v2024, %v2023
      %v2055 = vpack.c.b16 %v2026, %v2025
      %v2056 = vpack.c.b16 %v2028, %v2027
      %v2057 = vpack.c.b16 %v2030, %v2029
      %v2058 = vpack.c.b16 %v2032, %v2031
      %v2059 = vpack.c.b16 %v2034, %v2033
      %v2060 = vpack.c.b16 %v2036, %v2035
      %v2061 = vpack.c.b16 %v2038, %v2037
      %v2062 = vpack.c.b16 %v2040, %v2039
      %v2063 = vpack.c.b16 %v2042, %v2041
      %v2064 = vpack.c.b16 %v2044, %v2043
      %v2065 = vpack.c.b16 %v2046, %v2045
      %v2066 = vpack.c.b16 %v2048, %v2047
      %v2067 = vpack.c.b16 %v2050, %v2049
      %v2068 = vpack.c.b16 %v2052, %v2051
      %v2070 = vsel %vm489, %v2053, 0
      %v2073 = vsel %vm489, %v2054, 0
      %v2076 = vsel %vm489, %v2055, 0
      %v2079 = vsel %vm489, %v2056, 0
      %v2082 = vsel %vm489, %v2057, 0
      %v2085 = vsel %vm489, %v2058, 0
      %v2088 = vsel %vm489, %v2059, 0
      %v2091 = vsel %vm489, %v2060, 0
      %v2094 = vsel %vm489, %v2061, 0
      %v2097 = vsel %vm489, %v2062, 0
      %v2100 = vsel %vm489, %v2063, 0
      %v2103 = vsel %vm489, %v2064, 0
      %v2106 = vsel %vm489, %v2065, 0
      %v2109 = vsel %vm489, %v2066, 0
      %v2112 = vsel %vm489, %v2067, 0
      %v2115 = vsel %vm489, %v2068, 0
      %v2118 = vsel %vm538, %v2020, 0
      %2120 = vmatprep.subr.bf16.mxu0 0
      %2121 = vmatpush1.bf16.msra.mxu0 %v2118
      %2122 = vmatprep.subr.bf16.mxu0 0
      %2123 = vmatpush1.bf16.msra.mxu0 0
      %2124 = vmatprep.subr.bf16.mxu0 0
      %2125 = vmatpush1.bf16.msra.mxu0 0
      %2126 = vmatprep.subr.bf16.mxu0 0
      %2127 = vmatpush1.bf16.msra.mxu0 0
      %2128 = vmatprep.subr.bf16.mxu0 0
      %2129 = vmatpush1.bf16.msra.mxu0 0
      %2130 = vmatprep.subr.bf16.mxu0 0
      %2131 = vmatpush1.bf16.msra.mxu0 0
      %2132 = vmatprep.subr.bf16.mxu0 0
      %2133 = vmatpush1.bf16.msra.mxu0 0
      %2134 = vmatprep.subr.bf16.mxu0 0
      %2135 = vmatpush1.bf16.msra.mxu0 0
      %2136 = vmatprep.subr.bf16.mxu0 0
      %2137 = vmatpush1.bf16.msra.mxu0 0
      %2138 = vmatprep.subr.bf16.mxu0 0
      %2139 = vmatpush1.bf16.msra.mxu0 0
      %2140 = vmatprep.subr.bf16.mxu0 0
      %2141 = vmatpush1.bf16.msra.mxu0 0
      %2142 = vmatprep.subr.bf16.mxu0 0
      %2143 = vmatpush1.bf16.msra.mxu0 0
      %2144 = vmatprep.subr.bf16.mxu0 0
      %2145 = vmatpush1.bf16.msra.mxu0 0
      %2146 = vmatprep.subr.bf16.mxu0 0
      %2147 = vmatpush1.bf16.msra.mxu0 0
      %2148 = vmatprep.subr.bf16.mxu0 0
      %2149 = vmatpush1.bf16.msra.mxu0 0
      %2150 = vmatprep.subr.bf16.mxu0 0
      %2151 = vmatpush1.bf16.msra.mxu0 0
      %2152 = vmatprep.mubr.bf16.mxu0 0
      %2153 = vmatmul.mubr.bf16.gmra.mrb[0].mxu0 %v2070
      %v2154 = vpop.f32.mrb[0].mxu0
      %v2155 = vadd.f32 0.0, %v2154
      %v2156 = vpop.f32.mrb[0].mxu0
      %v2157 = vpop.f32.mrb[0].mxu0
      %v2158 = vadd.f32 0.0, %v2157
      %v2159 = vpop.f32.mrb[0].mxu0
      %2160 = vmatprep.mubr.bf16.mxu0 0
      %2161 = vmatmul.mubr.bf16.gmra.mrb[0].mxu0 %v2073
      %v2162 = vpop.f32.mrb[0].mxu0
      %v2163 = vadd.f32 0.0, %v2162
      %v2164 = vpop.f32.mrb[0].mxu0
      %v2165 = vpop.f32.mrb[0].mxu0
      %v2166 = vadd.f32 0.0, %v2165
      %v2167 = vpop.f32.mrb[0].mxu0
      %2168 = vmatprep.mubr.bf16.mxu0 0
      %2169 = vmatmul.mubr.bf16.gmra.mrb[0].mxu0 %v2076
      %v2170 = vpop.f32.mrb[0].mxu0
      %v2171 = vadd.f32 0.0, %v2170
      %v2172 = vpop.f32.mrb[0].mxu0
      %v2173 = vpop.f32.mrb[0].mxu0
      %v2174 = vadd.f32 0.0, %v2173
      %v2175 = vpop.f32.mrb[0].mxu0
      %2176 = vmatprep.mubr.bf16.mxu0 0
      %2177 = vmatmul.mubr.bf16.gmra.mrb[0].mxu0 %v2079
      %v2178 = vpop.f32.mrb[0].mxu0
      %v2179 = vadd.f32 0.0, %v2178
      %v2180 = vpop.f32.mrb[0].mxu0
      %v2181 = vpop.f32.mrb[0].mxu0
      %v2182 = vadd.f32 0.0, %v2181
      %v2183 = vpop.f32.mrb[0].mxu0
      %2184 = vmatprep.mubr.bf16.mxu0 0
      %2185 = vmatmul.mubr.bf16.gmra.mrb[0].mxu0 %v2082
      %v2186 = vpop.f32.mrb[0].mxu0
      %v2187 = vadd.f32 0.0, %v2186
      %v2188 = vpop.f32.mrb[0].mxu0
      %v2189 = vpop.f32.mrb[0].mxu0
      %v2190 = vadd.f32 0.0, %v2189
      %v2191 = vpop.f32.mrb[0].mxu0
      %2192 = vmatprep.mubr.bf16.mxu0 0
      %2193 = vmatmul.mubr.bf16.gmra.mrb[0].mxu0 %v2085
      %v2194 = vpop.f32.mrb[0].mxu0
      %v2195 = vadd.f32 0.0, %v2194
      %v2196 = vpop.f32.mrb[0].mxu0
      %v2197 = vpop.f32.mrb[0].mxu0
      %v2198 = vadd.f32 0.0, %v2197
      %v2199 = vpop.f32.mrb[0].mxu0
      %2200 = vmatprep.mubr.bf16.mxu0 0
      %2201 = vmatmul.mubr.bf16.gmra.mrb[0].mxu0 %v2088
      %v2202 = vpop.f32.mrb[0].mxu0
      %v2203 = vadd.f32 0.0, %v2202
      %v2204 = vpop.f32.mrb[0].mxu0
      %v2205 = vpop.f32.mrb[0].mxu0
      %v2206 = vadd.f32 0.0, %v2205
      %v2207 = vpop.f32.mrb[0].mxu0
      %2208 = vmatprep.mubr.bf16.mxu0 0
      %2209 = vmatmul.mubr.bf16.gmra.mrb[0].mxu0 %v2091
      %v2210 = vpop.f32.mrb[0].mxu0
      %v2211 = vadd.f32 0.0, %v2210
      %v2212 = vpop.f32.mrb[0].mxu0
      %v2213 = vpop.f32.mrb[0].mxu0
      %v2214 = vadd.f32 0.0, %v2213
      %v2215 = vpop.f32.mrb[0].mxu0
      %2216 = vmatprep.mubr.bf16.mxu0 0
      %2217 = vmatmul.mubr.bf16.gmra.mrb[0].mxu0 %v2094
      %v2218 = vpop.f32.mrb[0].mxu0
      %v2219 = vadd.f32 0.0, %v2218
      %v2220 = vpop.f32.mrb[0].mxu0
      %v2221 = vpop.f32.mrb[0].mxu0
      %v2222 = vadd.f32 0.0, %v2221
      %v2223 = vpop.f32.mrb[0].mxu0
      %2224 = vmatprep.mubr.bf16.mxu0 0
      %2225 = vmatmul.mubr.bf16.gmra.mrb[0].mxu0 %v2097
      %v2226 = vpop.f32.mrb[0].mxu0
      %v2227 = vadd.f32 0.0, %v2226
      %v2228 = vpop.f32.mrb[0].mxu0
      %v2229 = vpop.f32.mrb[0].mxu0
      %v2230 = vadd.f32 0.0, %v2229
      %v2231 = vpop.f32.mrb[0].mxu0
      %2232 = vmatprep.mubr.bf16.mxu0 0
      %2233 = vmatmul.mubr.bf16.gmra.mrb[0].mxu0 %v2100
      %v2234 = vpop.f32.mrb[0].mxu0
      %v2235 = vadd.f32 0.0, %v2234
      %v2236 = vpop.f32.mrb[0].mxu0
      %v2237 = vpop.f32.mrb[0].mxu0
      %v2238 = vadd.f32 0.0, %v2237
      %v2239 = vpop.f32.mrb[0].mxu0
      %2240 = vmatprep.mubr.bf16.mxu0 0
      %2241 = vmatmul.mubr.bf16.gmra.mrb[0].mxu0 %v2103
      %v2242 = vpop.f32.mrb[0].mxu0
      %v2243 = vadd.f32 0.0, %v2242
      %v2244 = vpop.f32.mrb[0].mxu0
      %v2245 = vpop.f32.mrb[0].mxu0
      %v2246 = vadd.f32 0.0, %v2245
      %v2247 = vpop.f32.mrb[0].mxu0
      %2248 = vmatprep.mubr.bf16.mxu0 0
      %2249 = vmatmul.mubr.bf16.gmra.mrb[0].mxu0 %v2106
      %v2250 = vpop.f32.mrb[0].mxu0
      %v2251 = vadd.f32 0.0, %v2250
      %v2252 = vpop.f32.mrb[0].mxu0
      %v2253 = vpop.f32.mrb[0].mxu0
      %v2254 = vadd.f32 0.0, %v2253
      %v2255 = vpop.f32.mrb[0].mxu0
      %2256 = vmatprep.mubr.bf16.mxu0 0
      %2257 = vmatmul.mubr.bf16.gmra.mrb[0].mxu0 %v2109
      %v2258 = vpop.f32.mrb[0].mxu0
      %v2259 = vadd.f32 0.0, %v2258
      %v2260 = vpop.f32.mrb[0].mxu0
      %v2261 = vpop.f32.mrb[0].mxu0
      %v2262 = vadd.f32 0.0, %v2261
      %v2263 = vpop.f32.mrb[0].mxu0
      %2264 = vmatprep.mubr.bf16.mxu0 0
      %2265 = vmatmul.mubr.bf16.gmra.mrb[0].mxu0 %v2112
      %v2266 = vpop.f32.mrb[0].mxu0
      %v2267 = vadd.f32 0.0, %v2266
      %v2268 = vpop.f32.mrb[0].mxu0
      %v2269 = vpop.f32.mrb[0].mxu0
      %v2270 = vadd.f32 0.0, %v2269
      %v2271 = vpop.f32.mrb[0].mxu0
      %2272 = vmatprep.mubr.bf16.mxu0 0
      %2273 = vmatmul.mubr.bf16.gmra.mrb[0].mxu0 %v2115
      %v2274 = vpop.f32.mrb[0].mxu0
      %v2275 = vadd.f32 0.0, %v2274
      %v2276 = vpop.f32.mrb[0].mxu0
      %v2277 = vpop.f32.mrb[0].mxu0
      %v2278 = vadd.f32 0.0, %v2277
      %v2279 = vpop.f32.mrb[0].mxu0
      %2280 = vdwg.mxu0
      %v2281 = vadd.f32 %v1779, %v2155
      %v2282 = vadd.f32 %v1780, %v2158
      %v2283 = vadd.f32 %v1781, %v2163
      %v2284 = vadd.f32 %v1782, %v2166
      %v2285 = vadd.f32 %v1783, %v2171
      %v2286 = vadd.f32 %v1784, %v2174
      %v2287 = vadd.f32 %v1785, %v2179
      %v2288 = vadd.f32 %v1786, %v2182
      %v2289 = vadd.f32 %v1787, %v2187
      %v2290 = vadd.f32 %v1788, %v2190
      %v2291 = vadd.f32 %v1789, %v2195
      %v2292 = vadd.f32 %v1790, %v2198
      %v2293 = vadd.f32 %v1791, %v2203
      %v2294 = vadd.f32 %v1792, %v2206
      %v2295 = vadd.f32 %v1793, %v2211
      %v2296 = vadd.f32 %v1794, %v2214
      %v2297 = vadd.f32 %v1795, %v2219
      %v2298 = vadd.f32 %v1796, %v2222
      %v2299 = vadd.f32 %v1797, %v2227
      %v2300 = vadd.f32 %v1798, %v2230
      %v2301 = vadd.f32 %v1799, %v2235
      %v2302 = vadd.f32 %v1800, %v2238
      %v2303 = vadd.f32 %v1801, %v2243
      %v2304 = vadd.f32 %v1802, %v2246
      %v2305 = vadd.f32 %v1803, %v2251
      %v2306 = vadd.f32 %v1804, %v2254
      %v2307 = vadd.f32 %v1805, %v2259
      %v2308 = vadd.f32 %v1806, %v2262
      %v2309 = vadd.f32 %v1807, %v2267
      %v2310 = vadd.f32 %v1808, %v2270
      %v2311 = vadd.f32 %v1809, %v2275
      %v2312 = vadd.f32 %v1810, %v2278
      %v2313 = vld [vmem:[%s1452] sm:$0xc]
      %v2314 = vld [vmem:[%s1452 + $0x8] sm:$0x3]
      %v2315 = vld [vmem:[%s1452 + $0xc] sm:$0xc]
      %v2316 = vld [vmem:[%s1452 + $0x14] sm:$0x3]
      %v2317 = vld [vmem:[%s1452 + $0x18] sm:$0xc]
      %v2318 = vld [vmem:[%s1452 + $0x20] sm:$0x3]
      %v2319 = vld [vmem:[%s1452 + $0x24] sm:$0xc]
      %v2320 = vld [vmem:[%s1452 + $0x2c] sm:$0x3]
      %v2321 = vld [vmem:[%s1452 + $0x30] sm:$0xc]
      %v2322 = vld [vmem:[%s1452 + $0x38] sm:$0x3]
      %v2323 = vld [vmem:[%s1452 + $0x3c] sm:$0xc]
      %v2324 = vld [vmem:[%s1452 + $0x44] sm:$0x3]
      %v2325 = vld [vmem:[%s1452 + $0x48] sm:$0xc]
      %v2326 = vld [vmem:[%s1452 + $0x50] sm:$0x3]
      %v2327 = vld [vmem:[%s1452 + $0x54] sm:$0xc]
      %v2328 = vld [vmem:[%s1452 + $0x5c] sm:$0x3]
      %v2329 = vld [vmem:[%s1452 + $0x60] sm:$0xc]
      %v2330 = vld [vmem:[%s1452 + $0x68] sm:$0x3]
      %v2331 = vld [vmem:[%s1452 + $0x6c] sm:$0xc]
      %v2332 = vld [vmem:[%s1452 + $0x74] sm:$0x3]
      %v2333 = vld [vmem:[%s1452 + $0x78] sm:$0xc]
      %v2334 = vld [vmem:[%s1452 + $0x80] sm:$0x3]
      %v2335 = vld [vmem:[%s1452 + $0x84] sm:$0xc]
      %v2336 = vld [vmem:[%s1452 + $0x8c] sm:$0x3]
      %v2337 = vld [vmem:[%s1452 + $0x90] sm:$0xc]
      %v2338 = vld [vmem:[%s1452 + $0x98] sm:$0x3]
      %v2339 = vld [vmem:[%s1452 + $0x9c] sm:$0xc]
      %v2340 = vld [vmem:[%s1452 + $0xa4] sm:$0x3]
      %v2341 = vld [vmem:[%s1452 + $0xa8] sm:$0xc]
      %v2342 = vld [vmem:[%s1452 + $0xb0] sm:$0x3]
      %v2343 = vld [vmem:[%s1452 + $0xb4] sm:$0xc]
      %v2344 = vld [vmem:[%s1452 + $0xbc] sm:$0x3]
      %v2377 = vrot.slane %v2313, 6
      %v2378 = vrot.slane %v2377, 4
      %v2379 = vrot.slane %v1812, 6
      %v2380 = vsel %vm1045, %v2378, %v2379
      %v2381 = vrot.slane %v2379, 4
      %v2382 = vrot.slane %v2314, 6
      %v2383 = vsel %vm1045, %v2381, %v2382
      %v2384 = vrot.slane %v2315, 6
      %v2385 = vrot.slane %v2384, 4
      %v2386 = vrot.slane %v1815, 6
      %v2387 = vsel %vm1045, %v2385, %v2386
      %v2388 = vrot.slane %v2386, 4
      %v2389 = vrot.slane %v2316, 6
      %v2390 = vsel %vm1045, %v2388, %v2389
      %v2391 = vrot.slane %v2317, 6
      %v2392 = vrot.slane %v2391, 4
      %v2393 = vrot.slane %v1818, 6
      %v2394 = vsel %vm1045, %v2392, %v2393
      %v2395 = vrot.slane %v2393, 4
      %v2396 = vrot.slane %v2318, 6
      %v2397 = vsel %vm1045, %v2395, %v2396
      %v2398 = vrot.slane %v2319, 6
      %v2399 = vrot.slane %v2398, 4
      %v2400 = vrot.slane %v1821, 6
      %v2401 = vsel %vm1045, %v2399, %v2400
      %v2402 = vrot.slane %v2400, 4
      %v2403 = vrot.slane %v2320, 6
      %v2404 = vsel %vm1045, %v2402, %v2403
      %v2405 = vrot.slane %v2321, 6
      %v2406 = vrot.slane %v2405, 4
      %v2407 = vrot.slane %v1824, 6
      %v2408 = vsel %vm1045, %v2406, %v2407
      %v2409 = vrot.slane %v2407, 4
      %v2410 = vrot.slane %v2322, 6
      %v2411 = vsel %vm1045, %v2409, %v2410
      %v2412 = vrot.slane %v2323, 6
      %v2413 = vrot.slane %v2412, 4
      %v2414 = vrot.slane %v1827, 6
      %v2415 = vsel %vm1045, %v2413, %v2414
      %v2416 = vrot.slane %v2414, 4
      %v2417 = vrot.slane %v2324, 6
      %v2418 = vsel %vm1045, %v2416, %v2417
      %v2419 = vrot.slane %v2325, 6
      %v2420 = vrot.slane %v2419, 4
      %v2421 = vrot.slane %v1830, 6
      %v2422 = vsel %vm1045, %v2420, %v2421
      %v2423 = vrot.slane %v2421, 4
      %v2424 = vrot.slane %v2326, 6
      %v2425 = vsel %vm1045, %v2423, %v2424
      %v2426 = vrot.slane %v2327, 6
      %v2427 = vrot.slane %v2426, 4
      %v2428 = vrot.slane %v1833, 6
      %v2429 = vsel %vm1045, %v2427, %v2428
      %v2430 = vrot.slane %v2428, 4
      %v2431 = vrot.slane %v2328, 6
      %v2432 = vsel %vm1045, %v2430, %v2431
      %v2433 = vrot.slane %v2329, 6
      %v2434 = vrot.slane %v2433, 4
      %v2435 = vrot.slane %v1836, 6
      %v2436 = vsel %vm1045, %v2434, %v2435
      %v2437 = vrot.slane %v2435, 4
      %v2438 = vrot.slane %v2330, 6
      %v2439 = vsel %vm1045, %v2437, %v2438
      %v2440 = vrot.slane %v2331, 6
      %v2441 = vrot.slane %v2440, 4
      %v2442 = vrot.slane %v1839, 6
      %v2443 = vsel %vm1045, %v2441, %v2442
      %v2444 = vrot.slane %v2442, 4
      %v2445 = vrot.slane %v2332, 6
      %v2446 = vsel %vm1045, %v2444, %v2445
      %v2447 = vrot.slane %v2333, 6
      %v2448 = vrot.slane %v2447, 4
      %v2449 = vrot.slane %v1842, 6
      %v2450 = vsel %vm1045, %v2448, %v2449
      %v2451 = vrot.slane %v2449, 4
      %v2452 = vrot.slane %v2334, 6
      %v2453 = vsel %vm1045, %v2451, %v2452
      %v2454 = vrot.slane %v2335, 6
      %v2455 = vrot.slane %v2454, 4
      %v2456 = vrot.slane %v1845, 6
      %v2457 = vsel %vm1045, %v2455, %v2456
      %v2458 = vrot.slane %v2456, 4
      %v2459 = vrot.slane %v2336, 6
      %v2460 = vsel %vm1045, %v2458, %v2459
      %v2461 = vrot.slane %v2337, 6
      %v2462 = vrot.slane %v2461, 4
      %v2463 = vrot.slane %v1848, 6
      %v2464 = vsel %vm1045, %v2462, %v2463
      %v2465 = vrot.slane %v2463, 4
      %v2466 = vrot.slane %v2338, 6
      %v2467 = vsel %vm1045, %v2465, %v2466
      %v2468 = vrot.slane %v2339, 6
      %v2469 = vrot.slane %v2468, 4
      %v2470 = vrot.slane %v1851, 6
      %v2471 = vsel %vm1045, %v2469, %v2470
      %v2472 = vrot.slane %v2470, 4
      %v2473 = vrot.slane %v2340, 6
      %v2474 = vsel %vm1045, %v2472, %v2473
      %v2475 = vrot.slane %v2341, 6
      %v2476 = vrot.slane %v2475, 4
      %v2477 = vrot.slane %v1854, 6
      %v2478 = vsel %vm1045, %v2476, %v2477
      %v2479 = vrot.slane %v2477, 4
      %v2480 = vrot.slane %v2342, 6
      %v2481 = vsel %vm1045, %v2479, %v2480
      %v2482 = vrot.slane %v2343, 6
      %v2483 = vrot.slane %v2482, 4
      %v2484 = vrot.slane %v1857, 6
      %v2485 = vsel %vm1045, %v2483, %v2484
      %v2486 = vrot.slane %v2484, 4
      %v2487 = vrot.slane %v2344, 6
      %v2488 = vsel %vm1045, %v2486, %v2487
      %s2489 = scalar_lea.vmem %s1, 10
      %v2490 = vld [vmem:[%s2489] sm:$0x3]
      %v2491 = vunpack.c.l.b16 %v2380
      %v2492 = vunpack.c.l.b16 %v2383
      %v2493 = vunpack.c.l.b16 %v2387
      %v2494 = vunpack.c.l.b16 %v2390
      %v2495 = vunpack.c.l.b16 %v2394
      %v2496 = vunpack.c.l.b16 %v2397
      %v2497 = vunpack.c.l.b16 %v2401
      %v2498 = vunpack.c.l.b16 %v2404
      %v2499 = vunpack.c.l.b16 %v2408
      %v2500 = vunpack.c.l.b16 %v2411
      %v2501 = vunpack.c.l.b16 %v2415
      %v2502 = vunpack.c.l.b16 %v2418
      %v2503 = vunpack.c.l.b16 %v2422
      %v2504 = vunpack.c.l.b16 %v2425
      %v2505 = vunpack.c.l.b16 %v2429
      %v2506 = vunpack.c.l.b16 %v2432
      %v2507 = vunpack.c.l.b16 %v2436
      %v2508 = vunpack.c.l.b16 %v2439
      %v2509 = vunpack.c.l.b16 %v2443
      %v2510 = vunpack.c.l.b16 %v2446
      %v2511 = vunpack.c.l.b16 %v2450
      %v2512 = vunpack.c.l.b16 %v2453
      %v2513 = vunpack.c.l.b16 %v2457
      %v2514 = vunpack.c.l.b16 %v2460
      %v2515 = vunpack.c.l.b16 %v2464
      %v2516 = vunpack.c.l.b16 %v2467
      %v2517 = vunpack.c.l.b16 %v2471
      %v2518 = vunpack.c.l.b16 %v2474
      %v2519 = vunpack.c.l.b16 %v2478
      %v2520 = vunpack.c.l.b16 %v2481
      %v2521 = vunpack.c.l.b16 %v2485
      %v2522 = vunpack.c.l.b16 %v2488
      %v2523 = vpack.c.b16 %v2492, %v2491
      %v2524 = vpack.c.b16 %v2494, %v2493
      %v2525 = vpack.c.b16 %v2496, %v2495
      %v2526 = vpack.c.b16 %v2498, %v2497
      %v2527 = vpack.c.b16 %v2500, %v2499
      %v2528 = vpack.c.b16 %v2502, %v2501
      %v2529 = vpack.c.b16 %v2504, %v2503
      %v2530 = vpack.c.b16 %v2506, %v2505
      %v2531 = vpack.c.b16 %v2508, %v2507
      %v2532 = vpack.c.b16 %v2510, %v2509
      %v2533 = vpack.c.b16 %v2512, %v2511
      %v2534 = vpack.c.b16 %v2514, %v2513
      %v2535 = vpack.c.b16 %v2516, %v2515
      %v2536 = vpack.c.b16 %v2518, %v2517
      %v2537 = vpack.c.b16 %v2520, %v2519
      %v2538 = vpack.c.b16 %v2522, %v2521
      %v2540 = vsel %vm489, %v2523, 0
      %v2543 = vsel %vm489, %v2524, 0
      %v2546 = vsel %vm489, %v2525, 0
      %v2549 = vsel %vm489, %v2526, 0
      %v2552 = vsel %vm489, %v2527, 0
      %v2555 = vsel %vm489, %v2528, 0
      %v2558 = vsel %vm489, %v2529, 0
      %v2561 = vsel %vm489, %v2530, 0
      %v2564 = vsel %vm489, %v2531, 0
      %v2567 = vsel %vm489, %v2532, 0
      %v2570 = vsel %vm489, %v2533, 0
      %v2573 = vsel %vm489, %v2534, 0
      %v2576 = vsel %vm489, %v2535, 0
      %v2579 = vsel %vm489, %v2536, 0
      %v2582 = vsel %vm489, %v2537, 0
      %v2585 = vsel %vm489, %v2538, 0
      %v2588 = vsel %vm538, %v2490, 0
      %2590 = vmatprep.subr.bf16.mxu0 0
      %2591 = vmatpush1.bf16.msra.mxu0 %v2588
      %2592 = vmatprep.subr.bf16.mxu0 0
      %2593 = vmatpush1.bf16.msra.mxu0 0
      %2594 = vmatprep.subr.bf16.mxu0 0
      %2595 = vmatpush1.bf16.msra.mxu0 0
      %2596 = vmatprep.subr.bf16.mxu0 0
      %2597 = vmatpush1.bf16.msra.mxu0 0
      %2598 = vmatprep.subr.bf16.mxu0 0
      %2599 = vmatpush1.bf16.msra.mxu0 0
      %2600 = vmatprep.subr.bf16.mxu0 0
      %2601 = vmatpush1.bf16.msra.mxu0 0
      %2602 = vmatprep.subr.bf16.mxu0 0
      %2603 = vmatpush1.bf16.msra.mxu0 0
      %2604 = vmatprep.subr.bf16.mxu0 0
      %2605 = vmatpush1.bf16.msra.mxu0 0
      %2606 = vmatprep.subr.bf16.mxu0 0
      %2607 = vmatpush1.bf16.msra.mxu0 0
      %2608 = vmatprep.subr.bf16.mxu0 0
      %2609 = vmatpush1.bf16.msra.mxu0 0
      %2610 = vmatprep.subr.bf16.mxu0 0
      %2611 = vmatpush1.bf16.msra.mxu0 0
      %2612 = vmatprep.subr.bf16.mxu0 0
      %2613 = vmatpush1.bf16.msra.mxu0 0
      %2614 = vmatprep.subr.bf16.mxu0 0
      %2615 = vmatpush1.bf16.msra.mxu0 0
      %2616 = vmatprep.subr.bf16.mxu0 0
      %2617 = vmatpush1.bf16.msra.mxu0 0
      %2618 = vmatprep.subr.bf16.mxu0 0
      %2619 = vmatpush1.bf16.msra.mxu0 0
      %2620 = vmatprep.subr.bf16.mxu0 0
      %2621 = vmatpush1.bf16.msra.mxu0 0
      %2622 = vmatprep.mubr.bf16.mxu0 0
      %2623 = vmatmul.mubr.bf16.gmra.mrb[0].mxu0 %v2540
      %v2624 = vpop.f32.mrb[0].mxu0
      %v2625 = vadd.f32 0.0, %v2624
      %v2626 = vpop.f32.mrb[0].mxu0
      %v2627 = vpop.f32.mrb[0].mxu0
      %v2628 = vadd.f32 0.0, %v2627
      %v2629 = vpop.f32.mrb[0].mxu0
      %2630 = vmatprep.mubr.bf16.mxu0 0
      %2631 = vmatmul.mubr.bf16.gmra.mrb[0].mxu0 %v2543
      %v2632 = vpop.f32.mrb[0].mxu0
      %v2633 = vadd.f32 0.0, %v2632
      %v2634 = vpop.f32.mrb[0].mxu0
      %v2635 = vpop.f32.mrb[0].mxu0
      %v2636 = vadd.f32 0.0, %v2635
      %v2637 = vpop.f32.mrb[0].mxu0
      %2638 = vmatprep.mubr.bf16.mxu0 0
      %2639 = vmatmul.mubr.bf16.gmra.mrb[0].mxu0 %v2546
      %v2640 = vpop.f32.mrb[0].mxu0
      %v2641 = vadd.f32 0.0, %v2640
      %v2642 = vpop.f32.mrb[0].mxu0
      %v2643 = vpop.f32.mrb[0].mxu0
      %v2644 = vadd.f32 0.0, %v2643
      %v2645 = vpop.f32.mrb[0].mxu0
      %2646 = vmatprep.mubr.bf16.mxu0 0
      %2647 = vmatmul.mubr.bf16.gmra.mrb[0].mxu0 %v2549
      %v2648 = vpop.f32.mrb[0].mxu0
      %v2649 = vadd.f32 0.0, %v2648
      %v2650 = vpop.f32.mrb[0].mxu0
      %v2651 = vpop.f32.mrb[0].mxu0
      %v2652 = vadd.f32 0.0, %v2651
      %v2653 = vpop.f32.mrb[0].mxu0
      %2654 = vmatprep.mubr.bf16.mxu0 0
      %2655 = vmatmul.mubr.bf16.gmra.mrb[0].mxu0 %v2552
      %v2656 = vpop.f32.mrb[0].mxu0
      %v2657 = vadd.f32 0.0, %v2656
      %v2658 = vpop.f32.mrb[0].mxu0
      %v2659 = vpop.f32.mrb[0].mxu0
      %v2660 = vadd.f32 0.0, %v2659
      %v2661 = vpop.f32.mrb[0].mxu0
      %2662 = vmatprep.mubr.bf16.mxu0 0
      %2663 = vmatmul.mubr.bf16.gmra.mrb[0].mxu0 %v2555
      %v2664 = vpop.f32.mrb[0].mxu0
      %v2665 = vadd.f32 0.0, %v2664
      %v2666 = vpop.f32.mrb[0].mxu0
      %v2667 = vpop.f32.mrb[0].mxu0
      %v2668 = vadd.f32 0.0, %v2667
      %v2669 = vpop.f32.mrb[0].mxu0
      %2670 = vmatprep.mubr.bf16.mxu0 0
      %2671 = vmatmul.mubr.bf16.gmra.mrb[0].mxu0 %v2558
      %v2672 = vpop.f32.mrb[0].mxu0
      %v2673 = vadd.f32 0.0, %v2672
      %v2674 = vpop.f32.mrb[0].mxu0
      %v2675 = vpop.f32.mrb[0].mxu0
      %v2676 = vadd.f32 0.0, %v2675
      %v2677 = vpop.f32.mrb[0].mxu0
      %2678 = vmatprep.mubr.bf16.mxu0 0
      %2679 = vmatmul.mubr.bf16.gmra.mrb[0].mxu0 %v2561
      %v2680 = vpop.f32.mrb[0].mxu0
      %v2681 = vadd.f32 0.0, %v2680
      %v2682 = vpop.f32.mrb[0].mxu0
      %v2683 = vpop.f32.mrb[0].mxu0
      %v2684 = vadd.f32 0.0, %v2683
      %v2685 = vpop.f32.mrb[0].mxu0
      %2686 = vmatprep.mubr.bf16.mxu0 0
      %2687 = vmatmul.mubr.bf16.gmra.mrb[0].mxu0 %v2564
      %v2688 = vpop.f32.mrb[0].mxu0
      %v2689 = vadd.f32 0.0, %v2688
      %v2690 = vpop.f32.mrb[0].mxu0
      %v2691 = vpop.f32.mrb[0].mxu0
      %v2692 = vadd.f32 0.0, %v2691
      %v2693 = vpop.f32.mrb[0].mxu0
      %2694 = vmatprep.mubr.bf16.mxu0 0
      %2695 = vmatmul.mubr.bf16.gmra.mrb[0].mxu0 %v2567
      %v2696 = vpop.f32.mrb[0].mxu0
      %v2697 = vadd.f32 0.0, %v2696
      %v2698 = vpop.f32.mrb[0].mxu0
      %v2699 = vpop.f32.mrb[0].mxu0
      %v2700 = vadd.f32 0.0, %v2699
      %v2701 = vpop.f32.mrb[0].mxu0
      %2702 = vmatprep.mubr.bf16.mxu0 0
      %2703 = vmatmul.mubr.bf16.gmra.mrb[0].mxu0 %v2570
      %v2704 = vpop.f32.mrb[0].mxu0
      %v2705 = vadd.f32 0.0, %v2704
      %v2706 = vpop.f32.mrb[0].mxu0
      %v2707 = vpop.f32.mrb[0].mxu0
      %v2708 = vadd.f32 0.0, %v2707
      %v2709 = vpop.f32.mrb[0].mxu0
      %2710 = vmatprep.mubr.bf16.mxu0 0
      %2711 = vmatmul.mubr.bf16.gmra.mrb[0].mxu0 %v2573
      %v2712 = vpop.f32.mrb[0].mxu0
      %v2713 = vadd.f32 0.0, %v2712
      %v2714 = vpop.f32.mrb[0].mxu0
      %v2715 = vpop.f32.mrb[0].mxu0
      %v2716 = vadd.f32 0.0, %v2715
      %v2717 = vpop.f32.mrb[0].mxu0
      %2718 = vmatprep.mubr.bf16.mxu0 0
      %2719 = vmatmul.mubr.bf16.gmra.mrb[0].mxu0 %v2576
      %v2720 = vpop.f32.mrb[0].mxu0
      %v2721 = vadd.f32 0.0, %v2720
      %v2722 = vpop.f32.mrb[0].mxu0
      %v2723 = vpop.f32.mrb[0].mxu0
      %v2724 = vadd.f32 0.0, %v2723
      %v2725 = vpop.f32.mrb[0].mxu0
      %2726 = vmatprep.mubr.bf16.mxu0 0
      %2727 = vmatmul.mubr.bf16.gmra.mrb[0].mxu0 %v2579
      %v2728 = vpop.f32.mrb[0].mxu0
      %v2729 = vadd.f32 0.0, %v2728
      %v2730 = vpop.f32.mrb[0].mxu0
      %v2731 = vpop.f32.mrb[0].mxu0
      %v2732 = vadd.f32 0.0, %v2731
      %v2733 = vpop.f32.mrb[0].mxu0
      %2734 = vmatprep.mubr.bf16.mxu0 0
      %2735 = vmatmul.mubr.bf16.gmra.mrb[0].mxu0 %v2582
      %v2736 = vpop.f32.mrb[0].mxu0
      %v2737 = vadd.f32 0.0, %v2736
      %v2738 = vpop.f32.mrb[0].mxu0
      %v2739 = vpop.f32.mrb[0].mxu0
      %v2740 = vadd.f32 0.0, %v2739
      %v2741 = vpop.f32.mrb[0].mxu0
      %2742 = vmatprep.mubr.bf16.mxu0 0
      %2743 = vmatmul.mubr.bf16.gmra.mrb[0].mxu0 %v2585
      %v2744 = vpop.f32.mrb[0].mxu0
      %v2745 = vadd.f32 0.0, %v2744
      %v2746 = vpop.f32.mrb[0].mxu0
      %v2747 = vpop.f32.mrb[0].mxu0
      %v2748 = vadd.f32 0.0, %v2747
      %v2749 = vpop.f32.mrb[0].mxu0
      %2750 = vdwg.mxu0
      %v2751 = vadd.f32 %v2281, %v2625
      %v2752 = vadd.f32 %v2282, %v2628
      %v2753 = vadd.f32 %v2283, %v2633
      %v2754 = vadd.f32 %v2284, %v2636
      %v2755 = vadd.f32 %v2285, %v2641
      %v2756 = vadd.f32 %v2286, %v2644
      %v2757 = vadd.f32 %v2287, %v2649
      %v2758 = vadd.f32 %v2288, %v2652
      %v2759 = vadd.f32 %v2289, %v2657
      %v2760 = vadd.f32 %v2290, %v2660
      %v2761 = vadd.f32 %v2291, %v2665
      %v2762 = vadd.f32 %v2292, %v2668
      %v2763 = vadd.f32 %v2293, %v2673
      %v2764 = vadd.f32 %v2294, %v2676
      %v2765 = vadd.f32 %v2295, %v2681
      %v2766 = vadd.f32 %v2296, %v2684
      %v2767 = vadd.f32 %v2297, %v2689
      %v2768 = vadd.f32 %v2298, %v2692
      %v2769 = vadd.f32 %v2299, %v2697
      %v2770 = vadd.f32 %v2300, %v2700
      %v2771 = vadd.f32 %v2301, %v2705
      %v2772 = vadd.f32 %v2302, %v2708
      %v2773 = vadd.f32 %v2303, %v2713
      %v2774 = vadd.f32 %v2304, %v2716
      %v2775 = vadd.f32 %v2305, %v2721
      %v2776 = vadd.f32 %v2306, %v2724
      %v2777 = vadd.f32 %v2307, %v2729
      %v2778 = vadd.f32 %v2308, %v2732
      %v2779 = vadd.f32 %v2309, %v2737
      %v2780 = vadd.f32 %v2310, %v2740
      %v2781 = vadd.f32 %v2311, %v2745
      %v2782 = vadd.f32 %v2312, %v2748
      %s2783 = scalar_lea.vmem %s198, 48
      %v2784 = vld [vmem:[%s2783] sm:$0xf]
      %v2785 = vld [vmem:[%s2783 + $0x4] sm:$0xf]
      %v2786 = vld [vmem:[%s2783 + $0xc] sm:$0xf]
      %v2787 = vld [vmem:[%s2783 + $0x10] sm:$0xf]
      %v2788 = vld [vmem:[%s2783 + $0x18] sm:$0xf]
      %v2789 = vld [vmem:[%s2783 + $0x1c] sm:$0xf]
      %v2790 = vld [vmem:[%s2783 + $0x24] sm:$0xf]
      %v2791 = vld [vmem:[%s2783 + $0x28] sm:$0xf]
      %v2792 = vld [vmem:[%s2783 + $0x30] sm:$0xf]
      %v2793 = vld [vmem:[%s2783 + $0x34] sm:$0xf]
      %v2794 = vld [vmem:[%s2783 + $0x3c] sm:$0xf]
      %v2795 = vld [vmem:[%s2783 + $0x40] sm:$0xf]
      %v2796 = vld [vmem:[%s2783 + $0x48] sm:$0xf]
      %v2797 = vld [vmem:[%s2783 + $0x4c] sm:$0xf]
      %v2798 = vld [vmem:[%s2783 + $0x54] sm:$0xf]
      %v2799 = vld [vmem:[%s2783 + $0x58] sm:$0xf]
      %v2800 = vld [vmem:[%s2783 + $0x60] sm:$0xf]
      %v2801 = vld [vmem:[%s2783 + $0x64] sm:$0xf]
      %v2802 = vld [vmem:[%s2783 + $0x6c] sm:$0xf]
      %v2803 = vld [vmem:[%s2783 + $0x70] sm:$0xf]
      %v2804 = vld [vmem:[%s2783 + $0x78] sm:$0xf]
      %v2805 = vld [vmem:[%s2783 + $0x7c] sm:$0xf]
      %v2806 = vld [vmem:[%s2783 + $0x84] sm:$0xf]
      %v2807 = vld [vmem:[%s2783 + $0x88] sm:$0xf]
      %v2808 = vld [vmem:[%s2783 + $0x90] sm:$0xf]
      %v2809 = vld [vmem:[%s2783 + $0x94] sm:$0xf]
      %v2810 = vld [vmem:[%s2783 + $0x9c] sm:$0xf]
      %v2811 = vld [vmem:[%s2783 + $0xa0] sm:$0xf]
      %v2812 = vld [vmem:[%s2783 + $0xa8] sm:$0xf]
      %v2813 = vld [vmem:[%s2783 + $0xac] sm:$0xf]
      %v2814 = vld [vmem:[%s2783 + $0xb4] sm:$0xf]
      %v2815 = vld [vmem:[%s2783 + $0xb8] sm:$0xf]
      %s2816 = scalar_lea.vmem %s1, 12
      %v2817 = vld [vmem:[%s2816] sm:$0x3]
      %v2850 = vunpack.c.l.b16 %v2784
      %v2851 = vunpack.c.l.b16 %v2785
      %v2852 = vunpack.c.l.b16 %v2786
      %v2853 = vunpack.c.l.b16 %v2787
      %v2854 = vunpack.c.l.b16 %v2788
      %v2855 = vunpack.c.l.b16 %v2789
      %v2856 = vunpack.c.l.b16 %v2790
      %v2857 = vunpack.c.l.b16 %v2791
      %v2858 = vunpack.c.l.b16 %v2792
      %v2859 = vunpack.c.l.b16 %v2793
      %v2860 = vunpack.c.l.b16 %v2794
      %v2861 = vunpack.c.l.b16 %v2795
      %v2862 = vunpack.c.l.b16 %v2796
      %v2863 = vunpack.c.l.b16 %v2797
      %v2864 = vunpack.c.l.b16 %v2798
      %v2865 = vunpack.c.l.b16 %v2799
      %v2866 = vunpack.c.l.b16 %v2800
      %v2867 = vunpack.c.l.b16 %v2801
      %v2868 = vunpack.c.l.b16 %v2802
      %v2869 = vunpack.c.l.b16 %v2803
      %v2870 = vunpack.c.l.b16 %v2804
      %v2871 = vunpack.c.l.b16 %v2805
      %v2872 = vunpack.c.l.b16 %v2806
      %v2873 = vunpack.c.l.b16 %v2807
      %v2874 = vunpack.c.l.b16 %v2808
      %v2875 = vunpack.c.l.b16 %v2809
      %v2876 = vunpack.c.l.b16 %v2810
      %v2877 = vunpack.c.l.b16 %v2811
      %v2878 = vunpack.c.l.b16 %v2812
      %v2879 = vunpack.c.l.b16 %v2813
      %v2880 = vunpack.c.l.b16 %v2814
      %v2881 = vunpack.c.l.b16 %v2815
      %v2882 = vpack.c.b16 %v2851, %v2850
      %v2883 = vpack.c.b16 %v2853, %v2852
      %v2884 = vpack.c.b16 %v2855, %v2854
      %v2885 = vpack.c.b16 %v2857, %v2856
      %v2886 = vpack.c.b16 %v2859, %v2858
      %v2887 = vpack.c.b16 %v2861, %v2860
      %v2888 = vpack.c.b16 %v2863, %v2862
      %v2889 = vpack.c.b16 %v2865, %v2864
      %v2890 = vpack.c.b16 %v2867, %v2866
      %v2891 = vpack.c.b16 %v2869, %v2868
      %v2892 = vpack.c.b16 %v2871, %v2870
      %v2893 = vpack.c.b16 %v2873, %v2872
      %v2894 = vpack.c.b16 %v2875, %v2874
      %v2895 = vpack.c.b16 %v2877, %v2876
      %v2896 = vpack.c.b16 %v2879, %v2878
      %v2897 = vpack.c.b16 %v2881, %v2880
      %v2899 = vsel %vm489, %v2882, 0
      %v2902 = vsel %vm489, %v2883, 0
      %v2905 = vsel %vm489, %v2884, 0
      %v2908 = vsel %vm489, %v2885, 0
      %v2911 = vsel %vm489, %v2886, 0
      %v2914 = vsel %vm489, %v2887, 0
      %v2917 = vsel %vm489, %v2888, 0
      %v2920 = vsel %vm489, %v2889, 0
      %v2923 = vsel %vm489, %v2890, 0
      %v2926 = vsel %vm489, %v2891, 0
      %v2929 = vsel %vm489, %v2892, 0
      %v2932 = vsel %vm489, %v2893, 0
      %v2935 = vsel %vm489, %v2894, 0
      %v2938 = vsel %vm489, %v2895, 0
      %v2941 = vsel %vm489, %v2896, 0
      %v2944 = vsel %vm489, %v2897, 0
      %v2947 = vsel %vm538, %v2817, 0
      %2949 = vmatprep.subr.bf16.mxu0 0
      %2950 = vmatpush1.bf16.msra.mxu0 %v2947
      %2951 = vmatprep.subr.bf16.mxu0 0
      %2952 = vmatpush1.bf16.msra.mxu0 0
      %2953 = vmatprep.subr.bf16.mxu0 0
      %2954 = vmatpush1.bf16.msra.mxu0 0
      %2955 = vmatprep.subr.bf16.mxu0 0
      %2956 = vmatpush1.bf16.msra.mxu0 0
      %2957 = vmatprep.subr.bf16.mxu0 0
      %2958 = vmatpush1.bf16.msra.mxu0 0
      %2959 = vmatprep.subr.bf16.mxu0 0
      %2960 = vmatpush1.bf16.msra.mxu0 0
      %2961 = vmatprep.subr.bf16.mxu0 0
      %2962 = vmatpush1.bf16.msra.mxu0 0
      %2963 = vmatprep.subr.bf16.mxu0 0
      %2964 = vmatpush1.bf16.msra.mxu0 0
      %2965 = vmatprep.subr.bf16.mxu0 0
      %2966 = vmatpush1.bf16.msra.mxu0 0
      %2967 = vmatprep.subr.bf16.mxu0 0
      %2968 = vmatpush1.bf16.msra.mxu0 0
      %2969 = vmatprep.subr.bf16.mxu0 0
      %2970 = vmatpush1.bf16.msra.mxu0 0
      %2971 = vmatprep.subr.bf16.mxu0 0
      %2972 = vmatpush1.bf16.msra.mxu0 0
      %2973 = vmatprep.subr.bf16.mxu0 0
      %2974 = vmatpush1.bf16.msra.mxu0 0
      %2975 = vmatprep.subr.bf16.mxu0 0
      %2976 = vmatpush1.bf16.msra.mxu0 0
      %2977 = vmatprep.subr.bf16.mxu0 0
      %2978 = vmatpush1.bf16.msra.mxu0 0
      %2979 = vmatprep.subr.bf16.mxu0 0
      %2980 = vmatpush1.bf16.msra.mxu0 0
      %2981 = vmatprep.mubr.bf16.mxu0 0
      %2982 = vmatmul.mubr.bf16.gmra.mrb[0].mxu0 %v2899
      %v2983 = vpop.f32.mrb[0].mxu0
      %v2984 = vadd.f32 0.0, %v2983
      %v2985 = vpop.f32.mrb[0].mxu0
      %v2986 = vpop.f32.mrb[0].mxu0
      %v2987 = vadd.f32 0.0, %v2986
      %v2988 = vpop.f32.mrb[0].mxu0
      %2989 = vmatprep.mubr.bf16.mxu0 0
      %2990 = vmatmul.mubr.bf16.gmra.mrb[0].mxu0 %v2902
      %v2991 = vpop.f32.mrb[0].mxu0
      %v2992 = vadd.f32 0.0, %v2991
      %v2993 = vpop.f32.mrb[0].mxu0
      %v2994 = vpop.f32.mrb[0].mxu0
      %v2995 = vadd.f32 0.0, %v2994
      %v2996 = vpop.f32.mrb[0].mxu0
      %2997 = vmatprep.mubr.bf16.mxu0 0
      %2998 = vmatmul.mubr.bf16.gmra.mrb[0].mxu0 %v2905
      %v2999 = vpop.f32.mrb[0].mxu0
      %v3000 = vadd.f32 0.0, %v2999
      %v3001 = vpop.f32.mrb[0].mxu0
      %v3002 = vpop.f32.mrb[0].mxu0
      %v3003 = vadd.f32 0.0, %v3002
      %v3004 = vpop.f32.mrb[0].mxu0
      %3005 = vmatprep.mubr.bf16.mxu0 0
      %3006 = vmatmul.mubr.bf16.gmra.mrb[0].mxu0 %v2908
      %v3007 = vpop.f32.mrb[0].mxu0
      %v3008 = vadd.f32 0.0, %v3007
      %v3009 = vpop.f32.mrb[0].mxu0
      %v3010 = vpop.f32.mrb[0].mxu0
      %v3011 = vadd.f32 0.0, %v3010
      %v3012 = vpop.f32.mrb[0].mxu0
      %3013 = vmatprep.mubr.bf16.mxu0 0
      %3014 = vmatmul.mubr.bf16.gmra.mrb[0].mxu0 %v2911
      %v3015 = vpop.f32.mrb[0].mxu0
      %v3016 = vadd.f32 0.0, %v3015
      %v3017 = vpop.f32.mrb[0].mxu0
      %v3018 = vpop.f32.mrb[0].mxu0
      %v3019 = vadd.f32 0.0, %v3018
      %v3020 = vpop.f32.mrb[0].mxu0
      %3021 = vmatprep.mubr.bf16.mxu0 0
      %3022 = vmatmul.mubr.bf16.gmra.mrb[0].mxu0 %v2914
      %v3023 = vpop.f32.mrb[0].mxu0
      %v3024 = vadd.f32 0.0, %v3023
      %v3025 = vpop.f32.mrb[0].mxu0
      %v3026 = vpop.f32.mrb[0].mxu0
      %v3027 = vadd.f32 0.0, %v3026
      %v3028 = vpop.f32.mrb[0].mxu0
      %3029 = vmatprep.mubr.bf16.mxu0 0
      %3030 = vmatmul.mubr.bf16.gmra.mrb[0].mxu0 %v2917
      %v3031 = vpop.f32.mrb[0].mxu0
      %v3032 = vadd.f32 0.0, %v3031
      %v3033 = vpop.f32.mrb[0].mxu0
      %v3034 = vpop.f32.mrb[0].mxu0
      %v3035 = vadd.f32 0.0, %v3034
      %v3036 = vpop.f32.mrb[0].mxu0
      %3037 = vmatprep.mubr.bf16.mxu0 0
      %3038 = vmatmul.mubr.bf16.gmra.mrb[0].mxu0 %v2920
      %v3039 = vpop.f32.mrb[0].mxu0
      %v3040 = vadd.f32 0.0, %v3039
      %v3041 = vpop.f32.mrb[0].mxu0
      %v3042 = vpop.f32.mrb[0].mxu0
      %v3043 = vadd.f32 0.0, %v3042
      %v3044 = vpop.f32.mrb[0].mxu0
      %3045 = vmatprep.mubr.bf16.mxu0 0
      %3046 = vmatmul.mubr.bf16.gmra.mrb[0].mxu0 %v2923
      %v3047 = vpop.f32.mrb[0].mxu0
      %v3048 = vadd.f32 0.0, %v3047
      %v3049 = vpop.f32.mrb[0].mxu0
      %v3050 = vpop.f32.mrb[0].mxu0
      %v3051 = vadd.f32 0.0, %v3050
      %v3052 = vpop.f32.mrb[0].mxu0
      %3053 = vmatprep.mubr.bf16.mxu0 0
      %3054 = vmatmul.mubr.bf16.gmra.mrb[0].mxu0 %v2926
      %v3055 = vpop.f32.mrb[0].mxu0
      %v3056 = vadd.f32 0.0, %v3055
      %v3057 = vpop.f32.mrb[0].mxu0
      %v3058 = vpop.f32.mrb[0].mxu0
      %v3059 = vadd.f32 0.0, %v3058
      %v3060 = vpop.f32.mrb[0].mxu0
      %3061 = vmatprep.mubr.bf16.mxu0 0
      %3062 = vmatmul.mubr.bf16.gmra.mrb[0].mxu0 %v2929
      %v3063 = vpop.f32.mrb[0].mxu0
      %v3064 = vadd.f32 0.0, %v3063
      %v3065 = vpop.f32.mrb[0].mxu0
      %v3066 = vpop.f32.mrb[0].mxu0
      %v3067 = vadd.f32 0.0, %v3066
      %v3068 = vpop.f32.mrb[0].mxu0
      %3069 = vmatprep.mubr.bf16.mxu0 0
      %3070 = vmatmul.mubr.bf16.gmra.mrb[0].mxu0 %v2932
      %v3071 = vpop.f32.mrb[0].mxu0
      %v3072 = vadd.f32 0.0, %v3071
      %v3073 = vpop.f32.mrb[0].mxu0
      %v3074 = vpop.f32.mrb[0].mxu0
      %v3075 = vadd.f32 0.0, %v3074
      %v3076 = vpop.f32.mrb[0].mxu0
      %3077 = vmatprep.mubr.bf16.mxu0 0
      %3078 = vmatmul.mubr.bf16.gmra.mrb[0].mxu0 %v2935
      %v3079 = vpop.f32.mrb[0].mxu0
      %v3080 = vadd.f32 0.0, %v3079
      %v3081 = vpop.f32.mrb[0].mxu0
      %v3082 = vpop.f32.mrb[0].mxu0
      %v3083 = vadd.f32 0.0, %v3082
      %v3084 = vpop.f32.mrb[0].mxu0
      %3085 = vmatprep.mubr.bf16.mxu0 0
      %3086 = vmatmul.mubr.bf16.gmra.mrb[0].mxu0 %v2938
      %v3087 = vpop.f32.mrb[0].mxu0
      %v3088 = vadd.f32 0.0, %v3087
      %v3089 = vpop.f32.mrb[0].mxu0
      %v3090 = vpop.f32.mrb[0].mxu0
      %v3091 = vadd.f32 0.0, %v3090
      %v3092 = vpop.f32.mrb[0].mxu0
      %3093 = vmatprep.mubr.bf16.mxu0 0
      %3094 = vmatmul.mubr.bf16.gmra.mrb[0].mxu0 %v2941
      %v3095 = vpop.f32.mrb[0].mxu0
      %v3096 = vadd.f32 0.0, %v3095
      %v3097 = vpop.f32.mrb[0].mxu0
      %v3098 = vpop.f32.mrb[0].mxu0
      %v3099 = vadd.f32 0.0, %v3098
      %v3100 = vpop.f32.mrb[0].mxu0
      %3101 = vmatprep.mubr.bf16.mxu0 0
      %3102 = vmatmul.mubr.bf16.gmra.mrb[0].mxu0 %v2944
      %v3103 = vpop.f32.mrb[0].mxu0
      %v3104 = vadd.f32 0.0, %v3103
      %v3105 = vpop.f32.mrb[0].mxu0
      %v3106 = vpop.f32.mrb[0].mxu0
      %v3107 = vadd.f32 0.0, %v3106
      %v3108 = vpop.f32.mrb[0].mxu0
      %3109 = vdwg.mxu0
      %v3110 = vadd.f32 %v2751, %v2984
      %v3111 = vadd.f32 %v2752, %v2987
      %v3112 = vadd.f32 %v2753, %v2992
      %v3113 = vadd.f32 %v2754, %v2995
      %v3114 = vadd.f32 %v2755, %v3000
      %v3115 = vadd.f32 %v2756, %v3003
      %v3116 = vadd.f32 %v2757, %v3008
      %v3117 = vadd.f32 %v2758, %v3011
      %v3118 = vadd.f32 %v2759, %v3016
      %v3119 = vadd.f32 %v2760, %v3019
      %v3120 = vadd.f32 %v2761, %v3024
      %v3121 = vadd.f32 %v2762, %v3027
      %v3122 = vadd.f32 %v2763, %v3032
      %v3123 = vadd.f32 %v2764, %v3035
      %v3124 = vadd.f32 %v2765, %v3040
      %v3125 = vadd.f32 %v2766, %v3043
      %v3126 = vadd.f32 %v2767, %v3048
      %v3127 = vadd.f32 %v2768, %v3051
      %v3128 = vadd.f32 %v2769, %v3056
      %v3129 = vadd.f32 %v2770, %v3059
      %v3130 = vadd.f32 %v2771, %v3064
      %v3131 = vadd.f32 %v2772, %v3067
      %v3132 = vadd.f32 %v2773, %v3072
      %v3133 = vadd.f32 %v2774, %v3075
      %v3134 = vadd.f32 %v2775, %v3080
      %v3135 = vadd.f32 %v2776, %v3083
      %v3136 = vadd.f32 %v2777, %v3088
      %v3137 = vadd.f32 %v2778, %v3091
      %v3138 = vadd.f32 %v2779, %v3096
      %v3139 = vadd.f32 %v2780, %v3099
      %v3140 = vadd.f32 %v2781, %v3104
      %v3141 = vadd.f32 %v2782, %v3107
      %v3142 = vld [vmem:[%s2783] sm:$0xe]
      %v3143 = vld [vmem:[%s2783 + $0x4] sm:$0xf]
      %v3144 = vld [vmem:[%s2783 + $0x8] sm:$0x1]
      %v3145 = vld [vmem:[%s2783 + $0xc] sm:$0xe]
      %v3146 = vld [vmem:[%s2783 + $0x10] sm:$0xf]
      %v3147 = vld [vmem:[%s2783 + $0x14] sm:$0x1]
      %v3148 = vld [vmem:[%s2783 + $0x18] sm:$0xe]
      %v3149 = vld [vmem:[%s2783 + $0x1c] sm:$0xf]
      %v3150 = vld [vmem:[%s2783 + $0x20] sm:$0x1]
      %v3151 = vld [vmem:[%s2783 + $0x24] sm:$0xe]
      %v3152 = vld [vmem:[%s2783 + $0x28] sm:$0xf]
      %v3153 = vld [vmem:[%s2783 + $0x2c] sm:$0x1]
      %v3154 = vld [vmem:[%s2783 + $0x30] sm:$0xe]
      %v3155 = vld [vmem:[%s2783 + $0x34] sm:$0xf]
      %v3156 = vld [vmem:[%s2783 + $0x38] sm:$0x1]
      %v3157 = vld [vmem:[%s2783 + $0x3c] sm:$0xe]
      %v3158 = vld [vmem:[%s2783 + $0x40] sm:$0xf]
      %v3159 = vld [vmem:[%s2783 + $0x44] sm:$0x1]
      %v3160 = vld [vmem:[%s2783 + $0x48] sm:$0xe]
      %v3161 = vld [vmem:[%s2783 + $0x4c] sm:$0xf]
      %v3162 = vld [vmem:[%s2783 + $0x50] sm:$0x1]
      %v3163 = vld [vmem:[%s2783 + $0x54] sm:$0xe]
      %v3164 = vld [vmem:[%s2783 + $0x58] sm:$0xf]
      %v3165 = vld [vmem:[%s2783 + $0x5c] sm:$0x1]
      %v3166 = vld [vmem:[%s2783 + $0x60] sm:$0xe]
      %v3167 = vld [vmem:[%s2783 + $0x64] sm:$0xf]
      %v3168 = vld [vmem:[%s2783 + $0x68] sm:$0x1]
      %v3169 = vld [vmem:[%s2783 + $0x6c] sm:$0xe]
      %v3170 = vld [vmem:[%s2783 + $0x70] sm:$0xf]
      %v3171 = vld [vmem:[%s2783 + $0x74] sm:$0x1]
      %v3172 = vld [vmem:[%s2783 + $0x78] sm:$0xe]
      %v3173 = vld [vmem:[%s2783 + $0x7c] sm:$0xf]
      %v3174 = vld [vmem:[%s2783 + $0x80] sm:$0x1]
      %v3175 = vld [vmem:[%s2783 + $0x84] sm:$0xe]
      %v3176 = vld [vmem:[%s2783 + $0x88] sm:$0xf]
      %v3177 = vld [vmem:[%s2783 + $0x8c] sm:$0x1]
      %v3178 = vld [vmem:[%s2783 + $0x90] sm:$0xe]
      %v3179 = vld [vmem:[%s2783 + $0x94] sm:$0xf]
      %v3180 = vld [vmem:[%s2783 + $0x98] sm:$0x1]
      %v3181 = vld [vmem:[%s2783 + $0x9c] sm:$0xe]
      %v3182 = vld [vmem:[%s2783 + $0xa0] sm:$0xf]
      %v3183 = vld [vmem:[%s2783 + $0xa4] sm:$0x1]
      %v3184 = vld [vmem:[%s2783 + $0xa8] sm:$0xe]
      %v3185 = vld [vmem:[%s2783 + $0xac] sm:$0xf]
      %v3186 = vld [vmem:[%s2783 + $0xb0] sm:$0x1]
      %v3187 = vld [vmem:[%s2783 + $0xb4] sm:$0xe]
      %v3188 = vld [vmem:[%s2783 + $0xb8] sm:$0xf]
      %v3189 = vld [vmem:[%s2783 + $0xbc] sm:$0x1]
      %v3238 = vrot.slane %v3142, 5
      %v3239 = vrot.slane %v3238, 4
      %v3240 = vrot.slane %v3143, 5
      %v3241 = vsel %vm326, %v3239, %v3240
      %v3242 = vrot.slane %v3240, 4
      %v3243 = vrot.slane %v3144, 5
      %v3244 = vsel %vm326, %v3242, %v3243
      %v3245 = vrot.slane %v3145, 5
      %v3246 = vrot.slane %v3245, 4
      %v3247 = vrot.slane %v3146, 5
      %v3248 = vsel %vm326, %v3246, %v3247
      %v3249 = vrot.slane %v3247, 4
      %v3250 = vrot.slane %v3147, 5
      %v3251 = vsel %vm326, %v3249, %v3250
      %v3252 = vrot.slane %v3148, 5
      %v3253 = vrot.slane %v3252, 4
      %v3254 = vrot.slane %v3149, 5
      %v3255 = vsel %vm326, %v3253, %v3254
      %v3256 = vrot.slane %v3254, 4
      %v3257 = vrot.slane %v3150, 5
      %v3258 = vsel %vm326, %v3256, %v3257
      %v3259 = vrot.slane %v3151, 5
      %v3260 = vrot.slane %v3259, 4
      %v3261 = vrot.slane %v3152, 5
      %v3262 = vsel %vm326, %v3260, %v3261
      %v3263 = vrot.slane %v3261, 4
      %v3264 = vrot.slane %v3153, 5
      %v3265 = vsel %vm326, %v3263, %v3264
      %v3266 = vrot.slane %v3154, 5
      %v3267 = vrot.slane %v3266, 4
      %v3268 = vrot.slane %v3155, 5
      %v3269 = vsel %vm326, %v3267, %v3268
      %v3270 = vrot.slane %v3268, 4
      %v3271 = vrot.slane %v3156, 5
      %v3272 = vsel %vm326, %v3270, %v3271
      %v3273 = vrot.slane %v3157, 5
      %v3274 = vrot.slane %v3273, 4
      %v3275 = vrot.slane %v3158, 5
      %v3276 = vsel %vm326, %v3274, %v3275
      %v3277 = vrot.slane %v3275, 4
      %v3278 = vrot.slane %v3159, 5
      %v3279 = vsel %vm326, %v3277, %v3278
      %v3280 = vrot.slane %v3160, 5
      %v3281 = vrot.slane %v3280, 4
      %v3282 = vrot.slane %v3161, 5
      %v3283 = vsel %vm326, %v3281, %v3282
      %v3284 = vrot.slane %v3282, 4
      %v3285 = vrot.slane %v3162, 5
      %v3286 = vsel %vm326, %v3284, %v3285
      %v3287 = vrot.slane %v3163, 5
      %v3288 = vrot.slane %v3287, 4
      %v3289 = vrot.slane %v3164, 5
      %v3290 = vsel %vm326, %v3288, %v3289
      %v3291 = vrot.slane %v3289, 4
      %v3292 = vrot.slane %v3165, 5
      %v3293 = vsel %vm326, %v3291, %v3292
      %v3294 = vrot.slane %v3166, 5
      %v3295 = vrot.slane %v3294, 4
      %v3296 = vrot.slane %v3167, 5
      %v3297 = vsel %vm326, %v3295, %v3296
      %v3298 = vrot.slane %v3296, 4
      %v3299 = vrot.slane %v3168, 5
      %v3300 = vsel %vm326, %v3298, %v3299
      %v3301 = vrot.slane %v3169, 5
      %v3302 = vrot.slane %v3301, 4
      %v3303 = vrot.slane %v3170, 5
      %v3304 = vsel %vm326, %v3302, %v3303
      %v3305 = vrot.slane %v3303, 4
      %v3306 = vrot.slane %v3171, 5
      %v3307 = vsel %vm326, %v3305, %v3306
      %v3308 = vrot.slane %v3172, 5
      %v3309 = vrot.slane %v3308, 4
      %v3310 = vrot.slane %v3173, 5
      %v3311 = vsel %vm326, %v3309, %v3310
      %v3312 = vrot.slane %v3310, 4
      %v3313 = vrot.slane %v3174, 5
      %v3314 = vsel %vm326, %v3312, %v3313
      %v3315 = vrot.slane %v3175, 5
      %v3316 = vrot.slane %v3315, 4
      %v3317 = vrot.slane %v3176, 5
      %v3318 = vsel %vm326, %v3316, %v3317
      %v3319 = vrot.slane %v3317, 4
      %v3320 = vrot.slane %v3177, 5
      %v3321 = vsel %vm326, %v3319, %v3320
      %v3322 = vrot.slane %v3178, 5
      %v3323 = vrot.slane %v3322, 4
      %v3324 = vrot.slane %v3179, 5
      %v3325 = vsel %vm326, %v3323, %v3324
      %v3326 = vrot.slane %v3324, 4
      %v3327 = vrot.slane %v3180, 5
      %v3328 = vsel %vm326, %v3326, %v3327
      %v3329 = vrot.slane %v3181, 5
      %v3330 = vrot.slane %v3329, 4
      %v3331 = vrot.slane %v3182, 5
      %v3332 = vsel %vm326, %v3330, %v3331
      %v3333 = vrot.slane %v3331, 4
      %v3334 = vrot.slane %v3183, 5
      %v3335 = vsel %vm326, %v3333, %v3334
      %v3336 = vrot.slane %v3184, 5
      %v3337 = vrot.slane %v3336, 4
      %v3338 = vrot.slane %v3185, 5
      %v3339 = vsel %vm326, %v3337, %v3338
      %v3340 = vrot.slane %v3338, 4
      %v3341 = vrot.slane %v3186, 5
      %v3342 = vsel %vm326, %v3340, %v3341
      %v3343 = vrot.slane %v3187, 5
      %v3344 = vrot.slane %v3343, 4
      %v3345 = vrot.slane %v3188, 5
      %v3346 = vsel %vm326, %v3344, %v3345
      %v3347 = vrot.slane %v3345, 4
      %v3348 = vrot.slane %v3189, 5
      %v3349 = vsel %vm326, %v3347, %v3348
      %s3350 = scalar_lea.vmem %s1, 14
      %v3351 = vld [vmem:[%s3350] sm:$0x3]
      %v3352 = vunpack.c.l.b16 %v3241
      %v3353 = vunpack.c.l.b16 %v3244
      %v3354 = vunpack.c.l.b16 %v3248
      %v3355 = vunpack.c.l.b16 %v3251
      %v3356 = vunpack.c.l.b16 %v3255
      %v3357 = vunpack.c.l.b16 %v3258
      %v3358 = vunpack.c.l.b16 %v3262
      %v3359 = vunpack.c.l.b16 %v3265
      %v3360 = vunpack.c.l.b16 %v3269
      %v3361 = vunpack.c.l.b16 %v3272
      %v3362 = vunpack.c.l.b16 %v3276
      %v3363 = vunpack.c.l.b16 %v3279
      %v3364 = vunpack.c.l.b16 %v3283
      %v3365 = vunpack.c.l.b16 %v3286
      %v3366 = vunpack.c.l.b16 %v3290
      %v3367 = vunpack.c.l.b16 %v3293
      %v3368 = vunpack.c.l.b16 %v3297
      %v3369 = vunpack.c.l.b16 %v3300
      %v3370 = vunpack.c.l.b16 %v3304
      %v3371 = vunpack.c.l.b16 %v3307
      %v3372 = vunpack.c.l.b16 %v3311
      %v3373 = vunpack.c.l.b16 %v3314
      %v3374 = vunpack.c.l.b16 %v3318
      %v3375 = vunpack.c.l.b16 %v3321
      %v3376 = vunpack.c.l.b16 %v3325
      %v3377 = vunpack.c.l.b16 %v3328
      %v3378 = vunpack.c.l.b16 %v3332
      %v3379 = vunpack.c.l.b16 %v3335
      %v3380 = vunpack.c.l.b16 %v3339
      %v3381 = vunpack.c.l.b16 %v3342
      %v3382 = vunpack.c.l.b16 %v3346
      %v3383 = vunpack.c.l.b16 %v3349
      %v3384 = vpack.c.b16 %v3353, %v3352
      %v3385 = vpack.c.b16 %v3355, %v3354
      %v3386 = vpack.c.b16 %v3357, %v3356
      %v3387 = vpack.c.b16 %v3359, %v3358
      %v3388 = vpack.c.b16 %v3361, %v3360
      %v3389 = vpack.c.b16 %v3363, %v3362
      %v3390 = vpack.c.b16 %v3365, %v3364
      %v3391 = vpack.c.b16 %v3367, %v3366
      %v3392 = vpack.c.b16 %v3369, %v3368
      %v3393 = vpack.c.b16 %v3371, %v3370
      %v3394 = vpack.c.b16 %v3373, %v3372
      %v3395 = vpack.c.b16 %v3375, %v3374
      %v3396 = vpack.c.b16 %v3377, %v3376
      %v3397 = vpack.c.b16 %v3379, %v3378
      %v3398 = vpack.c.b16 %v3381, %v3380
      %v3399 = vpack.c.b16 %v3383, %v3382
      %v3401 = vsel %vm489, %v3384, 0
      %v3404 = vsel %vm489, %v3385, 0
      %v3407 = vsel %vm489, %v3386, 0
      %v3410 = vsel %vm489, %v3387, 0
      %v3413 = vsel %vm489, %v3388, 0
      %v3416 = vsel %vm489, %v3389, 0
      %v3419 = vsel %vm489, %v3390, 0
      %v3422 = vsel %vm489, %v3391, 0
      %v3425 = vsel %vm489, %v3392, 0
      %v3428 = vsel %vm489, %v3393, 0
      %v3431 = vsel %vm489, %v3394, 0
      %v3434 = vsel %vm489, %v3395, 0
      %v3437 = vsel %vm489, %v3396, 0
      %v3440 = vsel %vm489, %v3397, 0
      %v3443 = vsel %vm489, %v3398, 0
      %v3446 = vsel %vm489, %v3399, 0
      %v3449 = vsel %vm538, %v3351, 0
      %3451 = vmatprep.subr.bf16.mxu0 0
      %3452 = vmatpush1.bf16.msra.mxu0 %v3449
      %3453 = vmatprep.subr.bf16.mxu0 0
      %3454 = vmatpush1.bf16.msra.mxu0 0
      %3455 = vmatprep.subr.bf16.mxu0 0
      %3456 = vmatpush1.bf16.msra.mxu0 0
      %3457 = vmatprep.subr.bf16.mxu0 0
      %3458 = vmatpush1.bf16.msra.mxu0 0
      %3459 = vmatprep.subr.bf16.mxu0 0
      %3460 = vmatpush1.bf16.msra.mxu0 0
      %3461 = vmatprep.subr.bf16.mxu0 0
      %3462 = vmatpush1.bf16.msra.mxu0 0
      %3463 = vmatprep.subr.bf16.mxu0 0
      %3464 = vmatpush1.bf16.msra.mxu0 0
      %3465 = vmatprep.subr.bf16.mxu0 0
      %3466 = vmatpush1.bf16.msra.mxu0 0
      %3467 = vmatprep.subr.bf16.mxu0 0
      %3468 = vmatpush1.bf16.msra.mxu0 0
      %3469 = vmatprep.subr.bf16.mxu0 0
      %3470 = vmatpush1.bf16.msra.mxu0 0
      %3471 = vmatprep.subr.bf16.mxu0 0
      %3472 = vmatpush1.bf16.msra.mxu0 0
      %3473 = vmatprep.subr.bf16.mxu0 0
      %3474 = vmatpush1.bf16.msra.mxu0 0
      %3475 = vmatprep.subr.bf16.mxu0 0
      %3476 = vmatpush1.bf16.msra.mxu0 0
      %3477 = vmatprep.subr.bf16.mxu0 0
      %3478 = vmatpush1.bf16.msra.mxu0 0
      %3479 = vmatprep.subr.bf16.mxu0 0
      %3480 = vmatpush1.bf16.msra.mxu0 0
      %3481 = vmatprep.subr.bf16.mxu0 0
      %3482 = vmatpush1.bf16.msra.mxu0 0
      %3483 = vmatprep.mubr.bf16.mxu0 0
      %3484 = vmatmul.mubr.bf16.gmra.mrb[0].mxu0 %v3401
      %v3485 = vpop.f32.mrb[0].mxu0
      %v3486 = vadd.f32 0.0, %v3485
      %v3487 = vpop.f32.mrb[0].mxu0
      %v3488 = vpop.f32.mrb[0].mxu0
      %v3489 = vadd.f32 0.0, %v3488
      %v3490 = vpop.f32.mrb[0].mxu0
      %3491 = vmatprep.mubr.bf16.mxu0 0
      %3492 = vmatmul.mubr.bf16.gmra.mrb[0].mxu0 %v3404
      %v3493 = vpop.f32.mrb[0].mxu0
      %v3494 = vadd.f32 0.0, %v3493
      %v3495 = vpop.f32.mrb[0].mxu0
      %v3496 = vpop.f32.mrb[0].mxu0
      %v3497 = vadd.f32 0.0, %v3496
      %v3498 = vpop.f32.mrb[0].mxu0
      %3499 = vmatprep.mubr.bf16.mxu0 0
      %3500 = vmatmul.mubr.bf16.gmra.mrb[0].mxu0 %v3407
      %v3501 = vpop.f32.mrb[0].mxu0
      %v3502 = vadd.f32 0.0, %v3501
      %v3503 = vpop.f32.mrb[0].mxu0
      %v3504 = vpop.f32.mrb[0].mxu0
      %v3505 = vadd.f32 0.0, %v3504
      %v3506 = vpop.f32.mrb[0].mxu0
      %3507 = vmatprep.mubr.bf16.mxu0 0
      %3508 = vmatmul.mubr.bf16.gmra.mrb[0].mxu0 %v3410
      %v3509 = vpop.f32.mrb[0].mxu0
      %v3510 = vadd.f32 0.0, %v3509
      %v3511 = vpop.f32.mrb[0].mxu0
      %v3512 = vpop.f32.mrb[0].mxu0
      %v3513 = vadd.f32 0.0, %v3512
      %v3514 = vpop.f32.mrb[0].mxu0
      %3515 = vmatprep.mubr.bf16.mxu0 0
      %3516 = vmatmul.mubr.bf16.gmra.mrb[0].mxu0 %v3413
      %v3517 = vpop.f32.mrb[0].mxu0
      %v3518 = vadd.f32 0.0, %v3517
      %v3519 = vpop.f32.mrb[0].mxu0
      %v3520 = vpop.f32.mrb[0].mxu0
      %v3521 = vadd.f32 0.0, %v3520
      %v3522 = vpop.f32.mrb[0].mxu0
      %3523 = vmatprep.mubr.bf16.mxu0 0
      %3524 = vmatmul.mubr.bf16.gmra.mrb[0].mxu0 %v3416
      %v3525 = vpop.f32.mrb[0].mxu0
      %v3526 = vadd.f32 0.0, %v3525
      %v3527 = vpop.f32.mrb[0].mxu0
      %v3528 = vpop.f32.mrb[0].mxu0
      %v3529 = vadd.f32 0.0, %v3528
      %v3530 = vpop.f32.mrb[0].mxu0
      %3531 = vmatprep.mubr.bf16.mxu0 0
      %3532 = vmatmul.mubr.bf16.gmra.mrb[0].mxu0 %v3419
      %v3533 = vpop.f32.mrb[0].mxu0
      %v3534 = vadd.f32 0.0, %v3533
      %v3535 = vpop.f32.mrb[0].mxu0
      %v3536 = vpop.f32.mrb[0].mxu0
      %v3537 = vadd.f32 0.0, %v3536
      %v3538 = vpop.f32.mrb[0].mxu0
      %3539 = vmatprep.mubr.bf16.mxu0 0
      %3540 = vmatmul.mubr.bf16.gmra.mrb[0].mxu0 %v3422
      %v3541 = vpop.f32.mrb[0].mxu0
      %v3542 = vadd.f32 0.0, %v3541
      %v3543 = vpop.f32.mrb[0].mxu0
      %v3544 = vpop.f32.mrb[0].mxu0
      %v3545 = vadd.f32 0.0, %v3544
      %v3546 = vpop.f32.mrb[0].mxu0
      %3547 = vmatprep.mubr.bf16.mxu0 0
      %3548 = vmatmul.mubr.bf16.gmra.mrb[0].mxu0 %v3425
      %v3549 = vpop.f32.mrb[0].mxu0
      %v3550 = vadd.f32 0.0, %v3549
      %v3551 = vpop.f32.mrb[0].mxu0
      %v3552 = vpop.f32.mrb[0].mxu0
      %v3553 = vadd.f32 0.0, %v3552
      %v3554 = vpop.f32.mrb[0].mxu0
      %3555 = vmatprep.mubr.bf16.mxu0 0
      %3556 = vmatmul.mubr.bf16.gmra.mrb[0].mxu0 %v3428
      %v3557 = vpop.f32.mrb[0].mxu0
      %v3558 = vadd.f32 0.0, %v3557
      %v3559 = vpop.f32.mrb[0].mxu0
      %v3560 = vpop.f32.mrb[0].mxu0
      %v3561 = vadd.f32 0.0, %v3560
      %v3562 = vpop.f32.mrb[0].mxu0
      %3563 = vmatprep.mubr.bf16.mxu0 0
      %3564 = vmatmul.mubr.bf16.gmra.mrb[0].mxu0 %v3431
      %v3565 = vpop.f32.mrb[0].mxu0
      %v3566 = vadd.f32 0.0, %v3565
      %v3567 = vpop.f32.mrb[0].mxu0
      %v3568 = vpop.f32.mrb[0].mxu0
      %v3569 = vadd.f32 0.0, %v3568
      %v3570 = vpop.f32.mrb[0].mxu0
      %3571 = vmatprep.mubr.bf16.mxu0 0
      %3572 = vmatmul.mubr.bf16.gmra.mrb[0].mxu0 %v3434
      %v3573 = vpop.f32.mrb[0].mxu0
      %v3574 = vadd.f32 0.0, %v3573
      %v3575 = vpop.f32.mrb[0].mxu0
      %v3576 = vpop.f32.mrb[0].mxu0
      %v3577 = vadd.f32 0.0, %v3576
      %v3578 = vpop.f32.mrb[0].mxu0
      %3579 = vmatprep.mubr.bf16.mxu0 0
      %3580 = vmatmul.mubr.bf16.gmra.mrb[0].mxu0 %v3437
      %v3581 = vpop.f32.mrb[0].mxu0
      %v3582 = vadd.f32 0.0, %v3581
      %v3583 = vpop.f32.mrb[0].mxu0
      %v3584 = vpop.f32.mrb[0].mxu0
      %v3585 = vadd.f32 0.0, %v3584
      %v3586 = vpop.f32.mrb[0].mxu0
      %3587 = vmatprep.mubr.bf16.mxu0 0
      %3588 = vmatmul.mubr.bf16.gmra.mrb[0].mxu0 %v3440
      %v3589 = vpop.f32.mrb[0].mxu0
      %v3590 = vadd.f32 0.0, %v3589
      %v3591 = vpop.f32.mrb[0].mxu0
      %v3592 = vpop.f32.mrb[0].mxu0
      %v3593 = vadd.f32 0.0, %v3592
      %v3594 = vpop.f32.mrb[0].mxu0
      %3595 = vmatprep.mubr.bf16.mxu0 0
      %3596 = vmatmul.mubr.bf16.gmra.mrb[0].mxu0 %v3443
      %v3597 = vpop.f32.mrb[0].mxu0
      %v3598 = vadd.f32 0.0, %v3597
      %v3599 = vpop.f32.mrb[0].mxu0
      %v3600 = vpop.f32.mrb[0].mxu0
      %v3601 = vadd.f32 0.0, %v3600
      %v3602 = vpop.f32.mrb[0].mxu0
      %3603 = vmatprep.mubr.bf16.mxu0 0
      %3604 = vmatmul.mubr.bf16.gmra.mrb[0].mxu0 %v3446
      %v3605 = vpop.f32.mrb[0].mxu0
      %v3606 = vadd.f32 0.0, %v3605
      %v3607 = vpop.f32.mrb[0].mxu0
      %v3608 = vpop.f32.mrb[0].mxu0
      %v3609 = vadd.f32 0.0, %v3608
      %v3610 = vpop.f32.mrb[0].mxu0
      %3611 = vdwg.mxu0
      %v3612 = vadd.f32 %v3110, %v3486
      %v3613 = vadd.f32 %v3111, %v3489
      %v3614 = vadd.f32 %v3112, %v3494
      %v3615 = vadd.f32 %v3113, %v3497
      %v3616 = vadd.f32 %v3114, %v3502
      %v3617 = vadd.f32 %v3115, %v3505
      %v3618 = vadd.f32 %v3116, %v3510
      %v3619 = vadd.f32 %v3117, %v3513
      %v3620 = vadd.f32 %v3118, %v3518
      %v3621 = vadd.f32 %v3119, %v3521
      %v3622 = vadd.f32 %v3120, %v3526
      %v3623 = vadd.f32 %v3121, %v3529
      %v3624 = vadd.f32 %v3122, %v3534
      %v3625 = vadd.f32 %v3123, %v3537
      %v3626 = vadd.f32 %v3124, %v3542
      %v3627 = vadd.f32 %v3125, %v3545
      %v3628 = vadd.f32 %v3126, %v3550
      %v3629 = vadd.f32 %v3127, %v3553
      %v3630 = vadd.f32 %v3128, %v3558
      %v3631 = vadd.f32 %v3129, %v3561
      %v3632 = vadd.f32 %v3130, %v3566
      %v3633 = vadd.f32 %v3131, %v3569
      %v3634 = vadd.f32 %v3132, %v3574
      %v3635 = vadd.f32 %v3133, %v3577
      %v3636 = vadd.f32 %v3134, %v3582
      %v3637 = vadd.f32 %v3135, %v3585
      %v3638 = vadd.f32 %v3136, %v3590
      %v3639 = vadd.f32 %v3137, %v3593
      %v3640 = vadd.f32 %v3138, %v3598
      %v3641 = vadd.f32 %v3139, %v3601
      %v3642 = vadd.f32 %v3140, %v3606
      %v3643 = vadd.f32 %v3141, %v3609
      %v3644 = vld [vmem:[%s2783] sm:$0xc]
      %v3645 = vld [vmem:[%s2783 + $0x8] sm:$0x3]
      %v3646 = vld [vmem:[%s2783 + $0xc] sm:$0xc]
      %v3647 = vld [vmem:[%s2783 + $0x14] sm:$0x3]
      %v3648 = vld [vmem:[%s2783 + $0x18] sm:$0xc]
      %v3649 = vld [vmem:[%s2783 + $0x20] sm:$0x3]
      %v3650 = vld [vmem:[%s2783 + $0x24] sm:$0xc]
      %v3651 = vld [vmem:[%s2783 + $0x2c] sm:$0x3]
      %v3652 = vld [vmem:[%s2783 + $0x30] sm:$0xc]
      %v3653 = vld [vmem:[%s2783 + $0x38] sm:$0x3]
      %v3654 = vld [vmem:[%s2783 + $0x3c] sm:$0xc]
      %v3655 = vld [vmem:[%s2783 + $0x44] sm:$0x3]
      %v3656 = vld [vmem:[%s2783 + $0x48] sm:$0xc]
      %v3657 = vld [vmem:[%s2783 + $0x50] sm:$0x3]
      %v3658 = vld [vmem:[%s2783 + $0x54] sm:$0xc]
      %v3659 = vld [vmem:[%s2783 + $0x5c] sm:$0x3]
      %v3660 = vld [vmem:[%s2783 + $0x60] sm:$0xc]
      %v3661 = vld [vmem:[%s2783 + $0x68] sm:$0x3]
      %v3662 = vld [vmem:[%s2783 + $0x6c] sm:$0xc]
      %v3663 = vld [vmem:[%s2783 + $0x74] sm:$0x3]
      %v3664 = vld [vmem:[%s2783 + $0x78] sm:$0xc]
      %v3665 = vld [vmem:[%s2783 + $0x80] sm:$0x3]
      %v3666 = vld [vmem:[%s2783 + $0x84] sm:$0xc]
      %v3667 = vld [vmem:[%s2783 + $0x8c] sm:$0x3]
      %v3668 = vld [vmem:[%s2783 + $0x90] sm:$0xc]
      %v3669 = vld [vmem:[%s2783 + $0x98] sm:$0x3]
      %v3670 = vld [vmem:[%s2783 + $0x9c] sm:$0xc]
      %v3671 = vld [vmem:[%s2783 + $0xa4] sm:$0x3]
      %v3672 = vld [vmem:[%s2783 + $0xa8] sm:$0xc]
      %v3673 = vld [vmem:[%s2783 + $0xb0] sm:$0x3]
      %v3674 = vld [vmem:[%s2783 + $0xb4] sm:$0xc]
      %v3675 = vld [vmem:[%s2783 + $0xbc] sm:$0x3]
      %v3708 = vrot.slane %v3644, 6
      %v3709 = vrot.slane %v3708, 4
      %v3710 = vrot.slane %v3143, 6
      %v3711 = vsel %vm1045, %v3709, %v3710
      %v3712 = vrot.slane %v3710, 4
      %v3713 = vrot.slane %v3645, 6
      %v3714 = vsel %vm1045, %v3712, %v3713
      %v3715 = vrot.slane %v3646, 6
      %v3716 = vrot.slane %v3715, 4
      %v3717 = vrot.slane %v3146, 6
      %v3718 = vsel %vm1045, %v3716, %v3717
      %v3719 = vrot.slane %v3717, 4
      %v3720 = vrot.slane %v3647, 6
      %v3721 = vsel %vm1045, %v3719, %v3720
      %v3722 = vrot.slane %v3648, 6
      %v3723 = vrot.slane %v3722, 4
      %v3724 = vrot.slane %v3149, 6
      %v3725 = vsel %vm1045, %v3723, %v3724
      %v3726 = vrot.slane %v3724, 4
      %v3727 = vrot.slane %v3649, 6
      %v3728 = vsel %vm1045, %v3726, %v3727
      %v3729 = vrot.slane %v3650, 6
      %v3730 = vrot.slane %v3729, 4
      %v3731 = vrot.slane %v3152, 6
      %v3732 = vsel %vm1045, %v3730, %v3731
      %v3733 = vrot.slane %v3731, 4
      %v3734 = vrot.slane %v3651, 6
      %v3735 = vsel %vm1045, %v3733, %v3734
      %v3736 = vrot.slane %v3652, 6
      %v3737 = vrot.slane %v3736, 4
      %v3738 = vrot.slane %v3155, 6
      %v3739 = vsel %vm1045, %v3737, %v3738
      %v3740 = vrot.slane %v3738, 4
      %v3741 = vrot.slane %v3653, 6
      %v3742 = vsel %vm1045, %v3740, %v3741
      %v3743 = vrot.slane %v3654, 6
      %v3744 = vrot.slane %v3743, 4
      %v3745 = vrot.slane %v3158, 6
      %v3746 = vsel %vm1045, %v3744, %v3745
      %v3747 = vrot.slane %v3745, 4
      %v3748 = vrot.slane %v3655, 6
      %v3749 = vsel %vm1045, %v3747, %v3748
      %v3750 = vrot.slane %v3656, 6
      %v3751 = vrot.slane %v3750, 4
      %v3752 = vrot.slane %v3161, 6
      %v3753 = vsel %vm1045, %v3751, %v3752
      %v3754 = vrot.slane %v3752, 4
      %v3755 = vrot.slane %v3657, 6
      %v3756 = vsel %vm1045, %v3754, %v3755
      %v3757 = vrot.slane %v3658, 6
      %v3758 = vrot.slane %v3757, 4
      %v3759 = vrot.slane %v3164, 6
      %v3760 = vsel %vm1045, %v3758, %v3759
      %v3761 = vrot.slane %v3759, 4
      %v3762 = vrot.slane %v3659, 6
      %v3763 = vsel %vm1045, %v3761, %v3762
      %v3764 = vrot.slane %v3660, 6
      %v3765 = vrot.slane %v3764, 4
      %v3766 = vrot.slane %v3167, 6
      %v3767 = vsel %vm1045, %v3765, %v3766
      %v3768 = vrot.slane %v3766, 4
      %v3769 = vrot.slane %v3661, 6
      %v3770 = vsel %vm1045, %v3768, %v3769
      %v3771 = vrot.slane %v3662, 6
      %v3772 = vrot.slane %v3771, 4
      %v3773 = vrot.slane %v3170, 6
      %v3774 = vsel %vm1045, %v3772, %v3773
      %v3775 = vrot.slane %v3773, 4
      %v3776 = vrot.slane %v3663, 6
      %v3777 = vsel %vm1045, %v3775, %v3776
      %v3778 = vrot.slane %v3664, 6
      %v3779 = vrot.slane %v3778, 4
      %v3780 = vrot.slane %v3173, 6
      %v3781 = vsel %vm1045, %v3779, %v3780
      %v3782 = vrot.slane %v3780, 4
      %v3783 = vrot.slane %v3665, 6
      %v3784 = vsel %vm1045, %v3782, %v3783
      %v3785 = vrot.slane %v3666, 6
      %v3786 = vrot.slane %v3785, 4
      %v3787 = vrot.slane %v3176, 6
      %v3788 = vsel %vm1045, %v3786, %v3787
      %v3789 = vrot.slane %v3787, 4
      %v3790 = vrot.slane %v3667, 6
      %v3791 = vsel %vm1045, %v3789, %v3790
      %v3792 = vrot.slane %v3668, 6
      %v3793 = vrot.slane %v3792, 4
      %v3794 = vrot.slane %v3179, 6
      %v3795 = vsel %vm1045, %v3793, %v3794
      %v3796 = vrot.slane %v3794, 4
      %v3797 = vrot.slane %v3669, 6
      %v3798 = vsel %vm1045, %v3796, %v3797
      %v3799 = vrot.slane %v3670, 6
      %v3800 = vrot.slane %v3799, 4
      %v3801 = vrot.slane %v3182, 6
      %v3802 = vsel %vm1045, %v3800, %v3801
      %v3803 = vrot.slane %v3801, 4
      %v3804 = vrot.slane %v3671, 6
      %v3805 = vsel %vm1045, %v3803, %v3804
      %v3806 = vrot.slane %v3672, 6
      %v3807 = vrot.slane %v3806, 4
      %v3808 = vrot.slane %v3185, 6
      %v3809 = vsel %vm1045, %v3807, %v3808
      %v3810 = vrot.slane %v3808, 4
      %v3811 = vrot.slane %v3673, 6
      %v3812 = vsel %vm1045, %v3810, %v3811
      %v3813 = vrot.slane %v3674, 6
      %v3814 = vrot.slane %v3813, 4
      %v3815 = vrot.slane %v3188, 6
      %v3816 = vsel %vm1045, %v3814, %v3815
      %v3817 = vrot.slane %v3815, 4
      %v3818 = vrot.slane %v3675, 6
      %v3819 = vsel %vm1045, %v3817, %v3818
      %s3820 = scalar_lea.vmem %s1, 16
      %v3821 = vld [vmem:[%s3820] sm:$0x3]
      %v3822 = vunpack.c.l.b16 %v3711
      %v3823 = vunpack.c.l.b16 %v3714
      %v3824 = vunpack.c.l.b16 %v3718
      %v3825 = vunpack.c.l.b16 %v3721
      %v3826 = vunpack.c.l.b16 %v3725
      %v3827 = vunpack.c.l.b16 %v3728
      %v3828 = vunpack.c.l.b16 %v3732
      %v3829 = vunpack.c.l.b16 %v3735
      %v3830 = vunpack.c.l.b16 %v3739
      %v3831 = vunpack.c.l.b16 %v3742
      %v3832 = vunpack.c.l.b16 %v3746
      %v3833 = vunpack.c.l.b16 %v3749
      %v3834 = vunpack.c.l.b16 %v3753
      %v3835 = vunpack.c.l.b16 %v3756
      %v3836 = vunpack.c.l.b16 %v3760
      %v3837 = vunpack.c.l.b16 %v3763
      %v3838 = vunpack.c.l.b16 %v3767
      %v3839 = vunpack.c.l.b16 %v3770
      %v3840 = vunpack.c.l.b16 %v3774
      %v3841 = vunpack.c.l.b16 %v3777
      %v3842 = vunpack.c.l.b16 %v3781
      %v3843 = vunpack.c.l.b16 %v3784
      %v3844 = vunpack.c.l.b16 %v3788
      %v3845 = vunpack.c.l.b16 %v3791
      %v3846 = vunpack.c.l.b16 %v3795
      %v3847 = vunpack.c.l.b16 %v3798
      %v3848 = vunpack.c.l.b16 %v3802
      %v3849 = vunpack.c.l.b16 %v3805
      %v3850 = vunpack.c.l.b16 %v3809
      %v3851 = vunpack.c.l.b16 %v3812
      %v3852 = vunpack.c.l.b16 %v3816
      %v3853 = vunpack.c.l.b16 %v3819
      %v3854 = vpack.c.b16 %v3823, %v3822
      %v3855 = vpack.c.b16 %v3825, %v3824
      %v3856 = vpack.c.b16 %v3827, %v3826
      %v3857 = vpack.c.b16 %v3829, %v3828
      %v3858 = vpack.c.b16 %v3831, %v3830
      %v3859 = vpack.c.b16 %v3833, %v3832
      %v3860 = vpack.c.b16 %v3835, %v3834
      %v3861 = vpack.c.b16 %v3837, %v3836
      %v3862 = vpack.c.b16 %v3839, %v3838
      %v3863 = vpack.c.b16 %v3841, %v3840
      %v3864 = vpack.c.b16 %v3843, %v3842
      %v3865 = vpack.c.b16 %v3845, %v3844
      %v3866 = vpack.c.b16 %v3847, %v3846
      %v3867 = vpack.c.b16 %v3849, %v3848
      %v3868 = vpack.c.b16 %v3851, %v3850
      %v3869 = vpack.c.b16 %v3853, %v3852
      %v3871 = vsel %vm489, %v3854, 0
      %v3874 = vsel %vm489, %v3855, 0
      %v3877 = vsel %vm489, %v3856, 0
      %v3880 = vsel %vm489, %v3857, 0
      %v3883 = vsel %vm489, %v3858, 0
      %v3886 = vsel %vm489, %v3859, 0
      %v3889 = vsel %vm489, %v3860, 0
      %v3892 = vsel %vm489, %v3861, 0
      %v3895 = vsel %vm489, %v3862, 0
      %v3898 = vsel %vm489, %v3863, 0
      %v3901 = vsel %vm489, %v3864, 0
      %v3904 = vsel %vm489, %v3865, 0
      %v3907 = vsel %vm489, %v3866, 0
      %v3910 = vsel %vm489, %v3867, 0
      %v3913 = vsel %vm489, %v3868, 0
      %v3916 = vsel %vm489, %v3869, 0
      %v3919 = vsel %vm538, %v3821, 0
      %3921 = vmatprep.subr.bf16.mxu0 0
      %3922 = vmatpush1.bf16.msra.mxu0 %v3919
      %3923 = vmatprep.subr.bf16.mxu0 0
      %3924 = vmatpush1.bf16.msra.mxu0 0
      %3925 = vmatprep.subr.bf16.mxu0 0
      %3926 = vmatpush1.bf16.msra.mxu0 0
      %3927 = vmatprep.subr.bf16.mxu0 0
      %3928 = vmatpush1.bf16.msra.mxu0 0
      %3929 = vmatprep.subr.bf16.mxu0 0
      %3930 = vmatpush1.bf16.msra.mxu0 0
      %3931 = vmatprep.subr.bf16.mxu0 0
      %3932 = vmatpush1.bf16.msra.mxu0 0
      %3933 = vmatprep.subr.bf16.mxu0 0
      %3934 = vmatpush1.bf16.msra.mxu0 0
      %3935 = vmatprep.subr.bf16.mxu0 0
      %3936 = vmatpush1.bf16.msra.mxu0 0
      %3937 = vmatprep.subr.bf16.mxu0 0
      %3938 = vmatpush1.bf16.msra.mxu0 0
      %3939 = vmatprep.subr.bf16.mxu0 0
      %3940 = vmatpush1.bf16.msra.mxu0 0
      %3941 = vmatprep.subr.bf16.mxu0 0
      %3942 = vmatpush1.bf16.msra.mxu0 0
      %3943 = vmatprep.subr.bf16.mxu0 0
      %3944 = vmatpush1.bf16.msra.mxu0 0
      %3945 = vmatprep.subr.bf16.mxu0 0
      %3946 = vmatpush1.bf16.msra.mxu0 0
      %3947 = vmatprep.subr.bf16.mxu0 0
      %3948 = vmatpush1.bf16.msra.mxu0 0
      %3949 = vmatprep.subr.bf16.mxu0 0
      %3950 = vmatpush1.bf16.msra.mxu0 0
      %3951 = vmatprep.subr.bf16.mxu0 0
      %3952 = vmatpush1.bf16.msra.mxu0 0
      %3953 = vmatprep.mubr.bf16.mxu0 0
      %3954 = vmatmul.mubr.bf16.gmra.mrb[0].mxu0 %v3871
      %v3955 = vpop.f32.mrb[0].mxu0
      %v3956 = vadd.f32 0.0, %v3955
      %v3957 = vpop.f32.mrb[0].mxu0
      %v3958 = vpop.f32.mrb[0].mxu0
      %v3959 = vadd.f32 0.0, %v3958
      %v3960 = vpop.f32.mrb[0].mxu0
      %3961 = vmatprep.mubr.bf16.mxu0 0
      %3962 = vmatmul.mubr.bf16.gmra.mrb[0].mxu0 %v3874
      %v3963 = vpop.f32.mrb[0].mxu0
      %v3964 = vadd.f32 0.0, %v3963
      %v3965 = vpop.f32.mrb[0].mxu0
      %v3966 = vpop.f32.mrb[0].mxu0
      %v3967 = vadd.f32 0.0, %v3966
      %v3968 = vpop.f32.mrb[0].mxu0
      %3969 = vmatprep.mubr.bf16.mxu0 0
      %3970 = vmatmul.mubr.bf16.gmra.mrb[0].mxu0 %v3877
      %v3971 = vpop.f32.mrb[0].mxu0
      %v3972 = vadd.f32 0.0, %v3971
      %v3973 = vpop.f32.mrb[0].mxu0
      %v3974 = vpop.f32.mrb[0].mxu0
      %v3975 = vadd.f32 0.0, %v3974
      %v3976 = vpop.f32.mrb[0].mxu0
      %3977 = vmatprep.mubr.bf16.mxu0 0
      %3978 = vmatmul.mubr.bf16.gmra.mrb[0].mxu0 %v3880
      %v3979 = vpop.f32.mrb[0].mxu0
      %v3980 = vadd.f32 0.0, %v3979
      %v3981 = vpop.f32.mrb[0].mxu0
      %v3982 = vpop.f32.mrb[0].mxu0
      %v3983 = vadd.f32 0.0, %v3982
      %v3984 = vpop.f32.mrb[0].mxu0
      %3985 = vmatprep.mubr.bf16.mxu0 0
      %3986 = vmatmul.mubr.bf16.gmra.mrb[0].mxu0 %v3883
      %v3987 = vpop.f32.mrb[0].mxu0
      %v3988 = vadd.f32 0.0, %v3987
      %v3989 = vpop.f32.mrb[0].mxu0
      %v3990 = vpop.f32.mrb[0].mxu0
      %v3991 = vadd.f32 0.0, %v3990
      %v3992 = vpop.f32.mrb[0].mxu0
      %3993 = vmatprep.mubr.bf16.mxu0 0
      %3994 = vmatmul.mubr.bf16.gmra.mrb[0].mxu0 %v3886
      %v3995 = vpop.f32.mrb[0].mxu0
      %v3996 = vadd.f32 0.0, %v3995
      %v3997 = vpop.f32.mrb[0].mxu0
      %v3998 = vpop.f32.mrb[0].mxu0
      %v3999 = vadd.f32 0.0, %v3998
      %v4000 = vpop.f32.mrb[0].mxu0
      %4001 = vmatprep.mubr.bf16.mxu0 0
      %4002 = vmatmul.mubr.bf16.gmra.mrb[0].mxu0 %v3889
      %v4003 = vpop.f32.mrb[0].mxu0
      %v4004 = vadd.f32 0.0, %v4003
      %v4005 = vpop.f32.mrb[0].mxu0
      %v4006 = vpop.f32.mrb[0].mxu0
      %v4007 = vadd.f32 0.0, %v4006
      %v4008 = vpop.f32.mrb[0].mxu0
      %4009 = vmatprep.mubr.bf16.mxu0 0
      %4010 = vmatmul.mubr.bf16.gmra.mrb[0].mxu0 %v3892
      %v4011 = vpop.f32.mrb[0].mxu0
      %v4012 = vadd.f32 0.0, %v4011
      %v4013 = vpop.f32.mrb[0].mxu0
      %v4014 = vpop.f32.mrb[0].mxu0
      %v4015 = vadd.f32 0.0, %v4014
      %v4016 = vpop.f32.mrb[0].mxu0
      %4017 = vmatprep.mubr.bf16.mxu0 0
      %4018 = vmatmul.mubr.bf16.gmra.mrb[0].mxu0 %v3895
      %v4019 = vpop.f32.mrb[0].mxu0
      %v4020 = vadd.f32 0.0, %v4019
      %v4021 = vpop.f32.mrb[0].mxu0
      %v4022 = vpop.f32.mrb[0].mxu0
      %v4023 = vadd.f32 0.0, %v4022
      %v4024 = vpop.f32.mrb[0].mxu0
      %4025 = vmatprep.mubr.bf16.mxu0 0
      %4026 = vmatmul.mubr.bf16.gmra.mrb[0].mxu0 %v3898
      %v4027 = vpop.f32.mrb[0].mxu0
      %v4028 = vadd.f32 0.0, %v4027
      %v4029 = vpop.f32.mrb[0].mxu0
      %v4030 = vpop.f32.mrb[0].mxu0
      %v4031 = vadd.f32 0.0, %v4030
      %v4032 = vpop.f32.mrb[0].mxu0
      %4033 = vmatprep.mubr.bf16.mxu0 0
      %4034 = vmatmul.mubr.bf16.gmra.mrb[0].mxu0 %v3901
      %v4035 = vpop.f32.mrb[0].mxu0
      %v4036 = vadd.f32 0.0, %v4035
      %v4037 = vpop.f32.mrb[0].mxu0
      %v4038 = vpop.f32.mrb[0].mxu0
      %v4039 = vadd.f32 0.0, %v4038
      %v4040 = vpop.f32.mrb[0].mxu0
      %4041 = vmatprep.mubr.bf16.mxu0 0
      %4042 = vmatmul.mubr.bf16.gmra.mrb[0].mxu0 %v3904
      %v4043 = vpop.f32.mrb[0].mxu0
      %v4044 = vadd.f32 0.0, %v4043
      %v4045 = vpop.f32.mrb[0].mxu0
      %v4046 = vpop.f32.mrb[0].mxu0
      %v4047 = vadd.f32 0.0, %v4046
      %v4048 = vpop.f32.mrb[0].mxu0
      %4049 = vmatprep.mubr.bf16.mxu0 0
      %4050 = vmatmul.mubr.bf16.gmra.mrb[0].mxu0 %v3907
      %v4051 = vpop.f32.mrb[0].mxu0
      %v4052 = vadd.f32 0.0, %v4051
      %v4053 = vpop.f32.mrb[0].mxu0
      %v4054 = vpop.f32.mrb[0].mxu0
      %v4055 = vadd.f32 0.0, %v4054
      %v4056 = vpop.f32.mrb[0].mxu0
      %4057 = vmatprep.mubr.bf16.mxu0 0
      %4058 = vmatmul.mubr.bf16.gmra.mrb[0].mxu0 %v3910
      %v4059 = vpop.f32.mrb[0].mxu0
      %v4060 = vadd.f32 0.0, %v4059
      %v4061 = vpop.f32.mrb[0].mxu0
      %v4062 = vpop.f32.mrb[0].mxu0
      %v4063 = vadd.f32 0.0, %v4062
      %v4064 = vpop.f32.mrb[0].mxu0
      %4065 = vmatprep.mubr.bf16.mxu0 0
      %4066 = vmatmul.mubr.bf16.gmra.mrb[0].mxu0 %v3913
      %v4067 = vpop.f32.mrb[0].mxu0
      %v4068 = vadd.f32 0.0, %v4067
      %v4069 = vpop.f32.mrb[0].mxu0
      %v4070 = vpop.f32.mrb[0].mxu0
      %v4071 = vadd.f32 0.0, %v4070
      %v4072 = vpop.f32.mrb[0].mxu0
      %4073 = vmatprep.mubr.bf16.mxu0 0
      %4074 = vmatmul.mubr.bf16.gmra.mrb[0].mxu0 %v3916
      %v4075 = vpop.f32.mrb[0].mxu0
      %v4076 = vadd.f32 0.0, %v4075
      %v4077 = vpop.f32.mrb[0].mxu0
      %v4078 = vpop.f32.mrb[0].mxu0
      %v4079 = vadd.f32 0.0, %v4078
      %v4080 = vpop.f32.mrb[0].mxu0
      %4081 = vdwg.mxu0
      %v4082 = vadd.f32 %v3612, %v3956
      %v4083 = vadd.f32 %v3613, %v3959
      %v4084 = vadd.f32 %v3614, %v3964
      %v4085 = vadd.f32 %v3615, %v3967
      %v4086 = vadd.f32 %v3616, %v3972
      %v4087 = vadd.f32 %v3617, %v3975
      %v4088 = vadd.f32 %v3618, %v3980
      %v4089 = vadd.f32 %v3619, %v3983
      %v4090 = vadd.f32 %v3620, %v3988
      %v4091 = vadd.f32 %v3621, %v3991
      %v4092 = vadd.f32 %v3622, %v3996
      %v4093 = vadd.f32 %v3623, %v3999
      %v4094 = vadd.f32 %v3624, %v4004
      %v4095 = vadd.f32 %v3625, %v4007
      %v4096 = vadd.f32 %v3626, %v4012
      %v4097 = vadd.f32 %v3627, %v4015
      %v4098 = vadd.f32 %v3628, %v4020
      %v4099 = vadd.f32 %v3629, %v4023
      %v4100 = vadd.f32 %v3630, %v4028
      %v4101 = vadd.f32 %v3631, %v4031
      %v4102 = vadd.f32 %v3632, %v4036
      %v4103 = vadd.f32 %v3633, %v4039
      %v4104 = vadd.f32 %v3634, %v4044
      %v4105 = vadd.f32 %v3635, %v4047
      %v4106 = vadd.f32 %v3636, %v4052
      %v4107 = vadd.f32 %v3637, %v4055
      %v4108 = vadd.f32 %v3638, %v4060
      %v4109 = vadd.f32 %v3639, %v4063
      %v4110 = vadd.f32 %v3640, %v4068
      %v4111 = vadd.f32 %v3641, %v4071
      %v4112 = vadd.f32 %v3642, %v4076
      %v4113 = vadd.f32 %v3643, %v4079
      %v4114 = vld [vmem:[%s2] sm:$0x1]
      %v4116 = vlaneseq
      %v4117 = vshrl.u32 %v4116, 7
      %v4118 = vsub.s32 0, %v4117
      %v4119 = vrot.slane %v4114, %v4118
      %v4121 = vadd.f32 %v4082, %v4119
      %v4122 = vadd.f32 %v4083, %v4119
      %v4123 = vadd.f32 %v4084, %v4119
      %v4124 = vadd.f32 %v4085, %v4119
      %v4125 = vadd.f32 %v4086, %v4119
      %v4126 = vadd.f32 %v4087, %v4119
      %v4127 = vadd.f32 %v4088, %v4119
      %v4128 = vadd.f32 %v4089, %v4119
      %v4129 = vadd.f32 %v4090, %v4119
      %v4130 = vadd.f32 %v4091, %v4119
      %v4131 = vadd.f32 %v4092, %v4119
      %v4132 = vadd.f32 %v4093, %v4119
      %v4133 = vadd.f32 %v4094, %v4119
      %v4134 = vadd.f32 %v4095, %v4119
      %v4135 = vadd.f32 %v4096, %v4119
      %v4136 = vadd.f32 %v4097, %v4119
      %v4137 = vadd.f32 %v4098, %v4119
      %v4138 = vadd.f32 %v4099, %v4119
      %v4139 = vadd.f32 %v4100, %v4119
      %v4140 = vadd.f32 %v4101, %v4119
      %v4141 = vadd.f32 %v4102, %v4119
      %v4142 = vadd.f32 %v4103, %v4119
      %v4143 = vadd.f32 %v4104, %v4119
      %v4144 = vadd.f32 %v4105, %v4119
      %v4145 = vadd.f32 %v4106, %v4119
      %v4146 = vadd.f32 %v4107, %v4119
      %v4147 = vadd.f32 %v4108, %v4119
      %v4148 = vadd.f32 %v4109, %v4119
      %v4149 = vadd.f32 %v4110, %v4119
      %v4150 = vadd.f32 %v4111, %v4119
      %v4151 = vadd.f32 %v4112, %v4119
      %v4152 = vadd.f32 %v4113, %v4119
      %v4153 = vmax.f32 %v4121, 0.0
      %v4154 = vmax.f32 %v4122, 0.0
      %v4155 = vmax.f32 %v4123, 0.0
      %v4156 = vmax.f32 %v4124, 0.0
      %v4157 = vmax.f32 %v4125, 0.0
      %v4158 = vmax.f32 %v4126, 0.0
      %v4159 = vmax.f32 %v4127, 0.0
      %v4160 = vmax.f32 %v4128, 0.0
      %v4161 = vmax.f32 %v4129, 0.0
      %v4162 = vmax.f32 %v4130, 0.0
      %v4163 = vmax.f32 %v4131, 0.0
      %v4164 = vmax.f32 %v4132, 0.0
      %v4165 = vmax.f32 %v4133, 0.0
      %v4166 = vmax.f32 %v4134, 0.0
      %v4167 = vmax.f32 %v4135, 0.0
      %v4168 = vmax.f32 %v4136, 0.0
      %v4169 = vmax.f32 %v4137, 0.0
      %v4170 = vmax.f32 %v4138, 0.0
      %v4171 = vmax.f32 %v4139, 0.0
      %v4172 = vmax.f32 %v4140, 0.0
      %v4173 = vmax.f32 %v4141, 0.0
      %v4174 = vmax.f32 %v4142, 0.0
      %v4175 = vmax.f32 %v4143, 0.0
      %v4176 = vmax.f32 %v4144, 0.0
      %v4177 = vmax.f32 %v4145, 0.0
      %v4178 = vmax.f32 %v4146, 0.0
      %v4179 = vmax.f32 %v4147, 0.0
      %v4180 = vmax.f32 %v4148, 0.0
      %v4181 = vmax.f32 %v4149, 0.0
      %v4182 = vmax.f32 %v4150, 0.0
      %v4183 = vmax.f32 %v4151, 0.0
      %v4184 = vmax.f32 %v4152, 0.0
      %v4185 = vpack.c.bf16 %v4154, %v4153
      %v4186 = vpack.c.bf16 %v4156, %v4155
      %v4187 = vpack.c.bf16 %v4158, %v4157
      %v4188 = vpack.c.bf16 %v4160, %v4159
      %v4189 = vpack.c.bf16 %v4162, %v4161
      %v4190 = vpack.c.bf16 %v4164, %v4163
      %v4191 = vpack.c.bf16 %v4166, %v4165
      %v4192 = vpack.c.bf16 %v4168, %v4167
      %v4193 = vpack.c.bf16 %v4170, %v4169
      %v4194 = vpack.c.bf16 %v4172, %v4171
      %v4195 = vpack.c.bf16 %v4174, %v4173
      %v4196 = vpack.c.bf16 %v4176, %v4175
      %v4197 = vpack.c.bf16 %v4178, %v4177
      %v4198 = vpack.c.bf16 %v4180, %v4179
      %v4199 = vpack.c.bf16 %v4182, %v4181
      %v4200 = vpack.c.bf16 %v4184, %v4183
      %v4217 = vunpack.c.l.b16 %v4185
      %v4218 = vunpack.c.h.b16 %v4185
      %v4219 = vunpack.c.l.b16 %v4186
      %v4220 = vunpack.c.h.b16 %v4186
      %v4221 = vunpack.c.l.b16 %v4187
      %v4222 = vunpack.c.h.b16 %v4187
      %v4223 = vunpack.c.l.b16 %v4188
      %v4224 = vunpack.c.h.b16 %v4188
      %v4225 = vunpack.c.l.b16 %v4189
      %v4226 = vunpack.c.h.b16 %v4189
      %v4227 = vunpack.c.l.b16 %v4190
      %v4228 = vunpack.c.h.b16 %v4190
      %v4229 = vunpack.c.l.b16 %v4191
      %v4230 = vunpack.c.h.b16 %v4191
      %v4231 = vunpack.c.l.b16 %v4192
      %v4232 = vunpack.c.h.b16 %v4192
      %v4233 = vunpack.c.l.b16 %v4193
      %v4234 = vunpack.c.h.b16 %v4193
      %v4235 = vunpack.c.l.b16 %v4194
      %v4236 = vunpack.c.h.b16 %v4194
      %v4237 = vunpack.c.l.b16 %v4195
      %v4238 = vunpack.c.h.b16 %v4195
      %v4239 = vunpack.c.l.b16 %v4196
      %v4240 = vunpack.c.h.b16 %v4196
      %v4241 = vunpack.c.l.b16 %v4197
      %v4242 = vunpack.c.h.b16 %v4197
      %v4243 = vunpack.c.l.b16 %v4198
      %v4244 = vunpack.c.h.b16 %v4198
      %v4245 = vunpack.c.l.b16 %v4199
      %v4246 = vunpack.c.h.b16 %v4199
      %v4247 = vunpack.c.l.b16 %v4200
      %v4248 = vunpack.c.h.b16 %v4200
      %v4249 = vpack.c.b16 %v4217, %v4217
      %v4250 = vpack.c.b16 %v4218, %v4218
      %v4251 = vpack.c.b16 %v4219, %v4219
      %v4252 = vpack.c.b16 %v4220, %v4220
      %v4253 = vpack.c.b16 %v4221, %v4221
      %v4254 = vpack.c.b16 %v4222, %v4222
      %v4255 = vpack.c.b16 %v4223, %v4223
      %v4256 = vpack.c.b16 %v4224, %v4224
      %v4257 = vpack.c.b16 %v4225, %v4225
      %v4258 = vpack.c.b16 %v4226, %v4226
      %v4259 = vpack.c.b16 %v4227, %v4227
      %v4260 = vpack.c.b16 %v4228, %v4228
      %v4261 = vpack.c.b16 %v4229, %v4229
      %v4262 = vpack.c.b16 %v4230, %v4230
      %v4263 = vpack.c.b16 %v4231, %v4231
      %v4264 = vpack.c.b16 %v4232, %v4232
      %v4265 = vpack.c.b16 %v4233, %v4233
      %v4266 = vpack.c.b16 %v4234, %v4234
      %v4267 = vpack.c.b16 %v4235, %v4235
      %v4268 = vpack.c.b16 %v4236, %v4236
      %v4269 = vpack.c.b16 %v4237, %v4237
      %v4270 = vpack.c.b16 %v4238, %v4238
      %v4271 = vpack.c.b16 %v4239, %v4239
      %v4272 = vpack.c.b16 %v4240, %v4240
      %v4273 = vpack.c.b16 %v4241, %v4241
      %v4274 = vpack.c.b16 %v4242, %v4242
      %v4275 = vpack.c.b16 %v4243, %v4243
      %v4276 = vpack.c.b16 %v4244, %v4244
      %v4277 = vpack.c.b16 %v4245, %v4245
      %v4278 = vpack.c.b16 %v4246, %v4246
      %v4279 = vpack.c.b16 %v4247, %v4247
      %v4280 = vpack.c.b16 %v4248, %v4248
      %4313 = vst [vmem:[%s208] sm:$0xf] %v4249
      %4314 = vst [vmem:[%s208 + $0x4] sm:$0xf] %v4250
      %4315 = vst [vmem:[%s208 + $0x8] sm:$0xf] %v4251
      %4316 = vst [vmem:[%s208 + $0xc] sm:$0xf] %v4252
      %4317 = vst [vmem:[%s208 + $0x10] sm:$0xf] %v4253
      %4318 = vst [vmem:[%s208 + $0x14] sm:$0xf] %v4254
      %4319 = vst [vmem:[%s208 + $0x18] sm:$0xf] %v4255
      %4320 = vst [vmem:[%s208 + $0x1c] sm:$0xf] %v4256
      %4321 = vst [vmem:[%s208 + $0x20] sm:$0xf] %v4257
      %4322 = vst [vmem:[%s208 + $0x24] sm:$0xf] %v4258
      %4323 = vst [vmem:[%s208 + $0x28] sm:$0xf] %v4259
      %4324 = vst [vmem:[%s208 + $0x2c] sm:$0xf] %v4260
      %4325 = vst [vmem:[%s208 + $0x30] sm:$0xf] %v4261
      %4326 = vst [vmem:[%s208 + $0x34] sm:$0xf] %v4262
      %4327 = vst [vmem:[%s208 + $0x38] sm:$0xf] %v4263
      %4328 = vst [vmem:[%s208 + $0x3c] sm:$0xf] %v4264
      %4329 = vst [vmem:[%s208 + $0x40] sm:$0xf] %v4265
      %4330 = vst [vmem:[%s208 + $0x44] sm:$0xf] %v4266
      %4331 = vst [vmem:[%s208 + $0x48] sm:$0xf] %v4267
      %4332 = vst [vmem:[%s208 + $0x4c] sm:$0xf] %v4268
      %4333 = vst [vmem:[%s208 + $0x50] sm:$0xf] %v4269
      %4334 = vst [vmem:[%s208 + $0x54] sm:$0xf] %v4270
      %4335 = vst [vmem:[%s208 + $0x58] sm:$0xf] %v4271
      %4336 = vst [vmem:[%s208 + $0x5c] sm:$0xf] %v4272
      %4337 = vst [vmem:[%s208 + $0x60] sm:$0xf] %v4273
      %4338 = vst [vmem:[%s208 + $0x64] sm:$0xf] %v4274
      %4339 = vst [vmem:[%s208 + $0x68] sm:$0xf] %v4275
      %4340 = vst [vmem:[%s208 + $0x6c] sm:$0xf] %v4276
      %4341 = vst [vmem:[%s208 + $0x70] sm:$0xf] %v4277
      %4342 = vst [vmem:[%s208 + $0x74] sm:$0xf] %v4278
      %4343 = vst [vmem:[%s208 + $0x78] sm:$0xf] %v4279
      %4344 = vst [vmem:[%s208 + $0x7c] sm:$0xf] %v4280
      %s4345 = smul.u32 16, %s19
      %p4346 = scmp.lt.s32.totalorder %s18, 1
      %s4347 = scalar_select %p4346, %s18, 1
      %p4348 = scmp.lt.s32.totalorder %s4345, 15
      %s4349 = scalar_select %p4348, %s4345, 15
      %s4350 = smul.addr %s4349, 2
      %s4351 = smul.addr %s4347, 32
      %s4352 = sadd.s32 %s4350, %s4351
      %s4353 = smul.addr %s4352, 4
      %s4354 = scalar_lea.vmem %s3, %s4353
      // Predicated region
      $region33: #{scam_conv_pallas.1} parent=31 // pred_check
        %p4355 = pneg %p116
      $region34: #{scam_conv_pallas.1} parent=31 // pred_check_branch
        %4357 = sbr.rel (%p4355) target = $region36
      $region35: #{scam_conv_pallas.1} parent=31 // pred_region
        %s4358 = smul.u32 16, %s19
      $region36: #{scam_conv_pallas.1} parent=31 // pred_fallthru
        _
    $region32: #{scam_conv_pallas.1} parent=5 // pred_fallthru
      _
    %p4359 = scmp.le.s32.totalorder 2, %s9
    // Predicated region
    $region37: #{scam_conv_pallas.1} parent=5 // pred_check
      %p4360 = pneg %p4359
    $region38: #{scam_conv_pallas.1} parent=5 // pred_check_branch
      %4362 = sbr.rel (%p4360) target = $region40
    $region39: #{scam_conv_pallas.1} parent=5 // pred_region
      %s4363 = ssub.s32 %s9, 2
      // Predicated region
      $region41: #{scam_conv_pallas.1} parent=39 // pred_check
        %p4364 = pneg %p122
      $region42: #{scam_conv_pallas.1} parent=39 // pred_check_branch
        %4366 = sbr.rel (%p4364) target = $region44
      $region43: #{scam_conv_pallas.1} parent=39 // pred_region
        %s4367 = smul.u32 16, %s21
        %p4368 = scmp.lt.s32.totalorder %s20, 1
        %s4369 = scalar_select %p4368, %s20, 1
        %p4370 = scmp.lt.s32.totalorder %s4367, 15
        %s4371 = scalar_select %p4370, %s4367, 15
        %s4372 = smul.addr %s4371, 2
        %s4373 = smul.addr %s4369, 32
        %s4374 = sadd.s32 %s4372, %s4373
        %s4375 = smul.addr %s4374, 4
        %s4376 = scalar_lea.vmem %s3, %s4375
      $region44: #{scam_conv_pallas.1} parent=39 // pred_fallthru
        _
    $region40: #{scam_conv_pallas.1} parent=5 // pred_fallthru
      _
  $region6: #{scam_conv_pallas.1} parent=0 // loop_footer
    %s13 = sadd.s32 1, %s9
  $region7: #{scam_conv_pallas.1} parent=0 // loop_footer_branch
    %8 = sbr.rel target = $region3
  $region8: #{scam_conv_pallas.1} parent=0 // loop_exit
    _

// kernel: scam_conv_pallas.1
$region0: #{scam_conv_pallas.1}
  #allocation0 [shape = 'u32[]', space=smem, size = 0x4, offset = 0x4, fixed_abs, tag = 'smem constant byte address 0x4 - core index']
  #allocation1 [shape = 'u32[144,128]{1,0:T(1,128)}', space=vmem, size = 0x12000, scoped, tag = 'internal scratch']
  %s0 = inlined_call_operand.vmem [shape: bf16[2,1,20,20,4], index: 0, kind: input, shape index: {}]
  %s1 = inlined_call_operand.vmem [shape: bf16[9,4,128], index: 1, kind: input, shape index: {}]
  %s2 = inlined_call_operand.vmem [shape: f32[1,128], index: 2, kind: input, shape index: {}]
  %s3 = inlined_call_operand.vmem [shape: bf16[2,16,16,128], index: 3, kind: output, shape index: {}]
  %s4 = sld [smem:[#allocation0]]
  $region45: #{scam_conv_pallas.1} parent=0
    _
  %s6 = ssub.s32 1, %s4
  %s7 = scalar_select 0, %s6, %s4
  loop: start=0, step=1, limit=4
  $region2: #{scam_conv_pallas.1} parent=0 // loop_pre_header
    _
  $region3: #{scam_conv_pallas.1} parent=0 // loop_header
    %s9 = sphi 0, %s13
    %p10 = scmp.ge.s32.totalorder %s9, 4
    %s16 = sphi 0, %s28
    %s17 = sphi 0, %s24
    %s18 = sphi 0, %s16
    %s19 = sphi 0, %s17
    %s20 = sphi 0, %s18
    %s21 = sphi 0, %s19
    %s33 = sphi 0, %s35
    %s36 = sphi 0, %s33
    %s37 = sphi 0, %s36
    %s53 = sphi 0, %s37
    %s57 = sphi 0, %s57
    %s59 = sphi 0, %s57
    %s60 = sphi 0, %s59
    %s74 = sphi 0, %s60
    %s78 = sphi 0, %s78
    %s80 = sphi 0, %s78
    %s81 = sphi 0, %s80
    %s95 = sphi 0, %s81
    %s103 = sphi 0, %s105
    %s106 = sphi 0, %s103
    %s107 = sphi 0, %s106
    %s123 = sphi 0, %s107
  $region4: #{scam_conv_pallas.1} parent=0 // loop_header_branch
    %12 = sbr.rel (%p10) target = $region8
  $region5: #{scam_conv_pallas.1} parent=0 // loop_body
    %s14 = ssub.s32 %s9, 1
    %s15 = ssub.s32 %s9, 2
    %s22 = sadd.s32 1, %s17
    %p23 = scmp.ge.s32.totalorder %s22, 1
    %s24 = scalar_select %p23, 0, %s22
    %s25 = sadd.s32 1, %s16
    %s26 = scalar_select %p23, %s25, %s16
    %p27 = scmp.ge.s32.totalorder %s26, 2
    %s28 = scalar_select %p27, 0, %s26
    %s29 = ssub.s32 %s16, %s28
    %s30 = ssub.s32 %s17, %s24
    %s31 = sor.u32 %s29, %s30
    %p32 = scmp.eq.s32.totalorder %s31, 0
    %s34 = sadd.s32 %s33, 1
    %s35 = scalar_select %p32, %s33, %s34
    %p38 = pneg %p32
    %p39 = scmp.eq.s32.totalorder %s9, 1
    %p40 = por %p38, %p39
    %p41 = scmp.ne.s32.totalorder %s33, %s36
    %p42 = scmp.eq.s32.totalorder %s9, 0
    %p43 = por %p41, %p42
    %p44 = scmp.ne.s32.totalorder %s33, %s36
    %p45 = scmp.eq.s32.totalorder %s14, 1
    %p46 = por %p44, %p45
    %p47 = scmp.ne.s32.totalorder %s36, %s37
    %p48 = scmp.eq.s32.totalorder %s14, 0
    %p49 = por %p47, %p48
    %p50 = scmp.ne.s32.totalorder %s36, %s37
    %p51 = scmp.eq.s32.totalorder %s15, 1
    %p52 = por %p50, %p51
    %p54 = scmp.ne.s32.totalorder %s37, %s53
    %p55 = scmp.eq.s32.totalorder %s15, 0
    %p56 = por %p54, %p55
    %s58 = sadd.s32 %s57, 1
    %p61 = scmp.eq.s32.totalorder %s9, 1
    %p62 = scmp.ne.s32.totalorder %s57, %s59
    %p63 = scmp.eq.s32.totalorder %s9, 0
    %p64 = por %p62, %p63
    %p65 = scmp.ne.s32.totalorder %s57, %s59
    %p66 = scmp.eq.s32.totalorder %s14, 1
    %p67 = por %p65, %p66
    %p68 = scmp.ne.s32.totalorder %s59, %s60
    %p69 = scmp.eq.s32.totalorder %s14, 0
    %p70 = por %p68, %p69
    %p71 = scmp.ne.s32.totalorder %s59, %s60
    %p72 = scmp.eq.s32.totalorder %s15, 1
    %p73 = por %p71, %p72
    %p75 = scmp.ne.s32.totalorder %s60, %s74
    %p76 = scmp.eq.s32.totalorder %s15, 0
    %p77 = por %p75, %p76
    %s79 = sadd.s32 %s78, 1
    %p82 = scmp.eq.s32.totalorder %s9, 1
    %p83 = scmp.ne.s32.totalorder %s78, %s80
    %p84 = scmp.eq.s32.totalorder %s9, 0
    %p85 = por %p83, %p84
    %p86 = scmp.ne.s32.totalorder %s78, %s80
    %p87 = scmp.eq.s32.totalorder %s14, 1
    %p88 = por %p86, %p87
    %p89 = scmp.ne.s32.totalorder %s80, %s81
    %p90 = scmp.eq.s32.totalorder %s14, 0
    %p91 = por %p89, %p90
    %p92 = scmp.ne.s32.totalorder %s80, %s81
    %p93 = scmp.eq.s32.totalorder %s15, 1
    %p94 = por %p92, %p93
    %p96 = scmp.ne.s32.totalorder %s81, %s95
    %p97 = scmp.eq.s32.totalorder %s15, 0
    %p98 = por %p96, %p97
    %s99 = ssub.s32 %s16, %s28
    %s100 = ssub.s32 %s17, %s24
    %s101 = sor.u32 %s99, %s100
    %p102 = scmp.eq.s32.totalorder %s101, 0
    %s104 = sadd.s32 %s103, 1
    %s105 = scalar_select %p102, %s103, %s104
    %p108 = pneg %p102
    %p109 = scmp.eq.s32.totalorder %s9, 1
    %p110 = por %p108, %p109
    %p111 = scmp.ne.s32.totalorder %s103, %s106
    %p112 = scmp.eq.s32.totalorder %s9, 0
    %p113 = por %p111, %p112
    %p114 = scmp.ne.s32.totalorder %s103, %s106
    %p115 = scmp.eq.s32.totalorder %s14, 1
    %p116 = por %p114, %p115
    %p117 = scmp.ne.s32.totalorder %s106, %s107
    %p118 = scmp.eq.s32.totalorder %s14, 0
    %p119 = por %p117, %p118
    %p120 = scmp.ne.s32.totalorder %s106, %s107
    %p121 = scmp.eq.s32.totalorder %s15, 1
    %p122 = por %p120, %p121
    %p124 = scmp.ne.s32.totalorder %s107, %s123
    %p125 = scmp.eq.s32.totalorder %s15, 0
    %p126 = por %p124, %p125
    %p127 = scmp.le.s32.totalorder 1, %s9
    %p128 = scmp.lt.s32.totalorder %s9, 3
    %p129 = pnand %p127, %p128
    %p130 = pneg %p129
    // Predicated region
    $region9: #{scam_conv_pallas.1} parent=5 // pred_check
      _
    $region10: #{scam_conv_pallas.1} parent=5 // pred_check_branch
      %132 = sbr.rel (%p129) target = $region12
    $region11: #{scam_conv_pallas.1} parent=5 // pred_region
      %s133 = ssub.s32 %s9, 1
      // Predicated region
      $region13: #{scam_conv_pallas.1} parent=11 // pred_check
        %p134 = pneg %p70
      $region14: #{scam_conv_pallas.1} parent=11 // pred_check_branch
        %136 = sbr.rel (%p134) target = $region16
      $region15: #{scam_conv_pallas.1} parent=11 // pred_region
        _
      $region16: #{scam_conv_pallas.1} parent=11 // pred_fallthru
        _
      // Predicated region
      $region17: #{scam_conv_pallas.1} parent=11 // pred_check
        %p137 = pneg %p91
      $region18: #{scam_conv_pallas.1} parent=11 // pred_check_branch
        %139 = sbr.rel (%p137) target = $region20
      $region19: #{scam_conv_pallas.1} parent=11 // pred_region
        _
      $region20: #{scam_conv_pallas.1} parent=11 // pred_fallthru
        _
    $region12: #{scam_conv_pallas.1} parent=5 // pred_fallthru
      _
    %p140 = scmp.lt.s32.totalorder %s9, 2
    // Predicated region
    $region21: #{scam_conv_pallas.1} parent=5 // pred_check
      %p141 = pneg %p140
    $region22: #{scam_conv_pallas.1} parent=5 // pred_check_branch
      %143 = sbr.rel (%p141) target = $region24
    $region23: #{scam_conv_pallas.1} parent=5 // pred_region
      // Predicated region
      $region25: #{scam_conv_pallas.1} parent=23 // pred_check
        %p144 = pneg %p43
      $region26: #{scam_conv_pallas.1} parent=23 // pred_check_branch
        %146 = sbr.rel (%p144) target = $region28
      $region27: #{scam_conv_pallas.1} parent=23 // pred_region
        %p147 = scmp.lt.s32.totalorder %s16, 1
        %s148 = scalar_select %p147, %s16, 1
        %p149 = scmp.lt.s32.totalorder %s17, 0
        %s150 = scalar_select %p149, %s17, 0
        %s151 = smul.addr %s150, 60
        %s152 = smul.addr %s148, 60
        %s153 = sadd.s32 %s151, %s152
        %s154 = smul.addr %s153, 4
        %s155 = scalar_lea.vmem %s0, %s154
      $region28: #{scam_conv_pallas.1} parent=23 // pred_fallthru
        _
    $region24: #{scam_conv_pallas.1} parent=5 // pred_fallthru
      _
    %p156 = scmp.le.s32.totalorder 1, %s9
    %p157 = scmp.lt.s32.totalorder %s9, 3
    %p158 = pnand %p156, %p157
    %p159 = pneg %p158
    // Predicated region
    $region29: #{scam_conv_pallas.1} parent=5 // pred_check
      _
    $region30: #{scam_conv_pallas.1} parent=5 // pred_check_branch
      %161 = sbr.rel (%p158) target = $region32
    $region31: #{scam_conv_pallas.1} parent=5 // pred_region
      %s162 = ssub.s32 %s9, 1
      %p163 = scmp.lt.s32.totalorder %s18, 1
      %s164 = scalar_select %p163, %s18, 1
      %p165 = scmp.lt.s32.totalorder %s19, 0
      %s166 = scalar_select %p165, %s19, 0
      %s167 = smul.addr %s166, 60
      %s168 = smul.addr %s164, 60
      %s169 = sadd.s32 %s167, %s168
      %s170 = smul.addr %s169, 4
      %s171 = scalar_lea.vmem %s0, %s170
      %p172 = pneg %p49
      %p173 = pneg %p46
      %p174 = pneg %p70
      %p175 = pneg %p67
      %p176 = pneg %p91
      %p177 = pneg %p88
      %p178 = pneg %p119
      %p179 = pneg %p116
      %s180 = smul.u32 16, %s19
      %p181 = scmp.lt.s32.totalorder %s18, 1
      %s182 = scalar_select %p181, %s18, 1
      %p183 = scmp.lt.s32.totalorder %s180, 15
      %s184 = scalar_select %p183, %s180, 15
      %s185 = smul.addr %s184, 2
      %s186 = smul.addr %s182, 32
      %s187 = sadd.s32 %s185, %s186
      %s188 = smul.addr %s187, 4
      %s189 = scalar_lea.vmem %s3, %s188
      %p190 = scmp.lt.s32.totalorder %s18, 1
      %s191 = scalar_select %p190, %s18, 1
      %p192 = scmp.lt.s32.totalorder %s19, 0
      %s193 = scalar_select %p192, %s19, 0
      %s194 = smul.addr %s193, 60
      %s195 = smul.addr %s191, 60
      %s196 = sadd.s32 %s194, %s195
      %s197 = smul.addr %s196, 4
      %s198 = scalar_lea.vmem %s0, %s197
      %s199 = smul.u32 16, %s19
      %p200 = scmp.lt.s32.totalorder %s18, 1
      %s201 = scalar_select %p200, %s18, 1
      %p202 = scmp.lt.s32.totalorder %s199, 15
      %s203 = scalar_select %p202, %s199, 15
      %s204 = smul.addr %s203, 2
      %s205 = smul.addr %s201, 32
      %s206 = sadd.s32 %s204, %s205
      %s207 = smul.addr %s206, 4
      %s208 = scalar_lea.vmem %s3, %s207
      %s209 = smul.u32 16, %s19
      %v211 = vld [vmem:[%s198] sm:$0xf]
      %v212 = vld [vmem:[%s198 + $0x4] sm:$0xf]
      %v213 = vld [vmem:[%s198 + $0xc] sm:$0xf]
      %v214 = vld [vmem:[%s198 + $0x10] sm:$0xf]
      %v215 = vld [vmem:[%s198 + $0x18] sm:$0xf]
      %v216 = vld [vmem:[%s198 + $0x1c] sm:$0xf]
      %v217 = vld [vmem:[%s198 + $0x24] sm:$0xf]
      %v218 = vld [vmem:[%s198 + $0x28] sm:$0xf]
      %v219 = vld [vmem:[%s198 + $0x30] sm:$0xf]
      %v220 = vld [vmem:[%s198 + $0x34] sm:$0xf]
      %v221 = vld [vmem:[%s198 + $0x3c] sm:$0xf]
      %v222 = vld [vmem:[%s198 + $0x40] sm:$0xf]
      %v223 = vld [vmem:[%s198 + $0x48] sm:$0xf]
      %v224 = vld [vmem:[%s198 + $0x4c] sm:$0xf]
      %v225 = vld [vmem:[%s198 + $0x54] sm:$0xf]
      %v226 = vld [vmem:[%s198 + $0x58] sm:$0xf]
      %v227 = vld [vmem:[%s198 + $0x60] sm:$0xf]
      %v228 = vld [vmem:[%s198 + $0x64] sm:$0xf]
      %v229 = vld [vmem:[%s198 + $0x6c] sm:$0xf]
      %v230 = vld [vmem:[%s198 + $0x70] sm:$0xf]
      %v231 = vld [vmem:[%s198 + $0x78] sm:$0xf]
      %v232 = vld [vmem:[%s198 + $0x7c] sm:$0xf]
      %v233 = vld [vmem:[%s198 + $0x84] sm:$0xf]
      %v234 = vld [vmem:[%s198 + $0x88] sm:$0xf]
      %v235 = vld [vmem:[%s198 + $0x90] sm:$0xf]
      %v236 = vld [vmem:[%s198 + $0x94] sm:$0xf]
      %v237 = vld [vmem:[%s198 + $0x9c] sm:$0xf]
      %v238 = vld [vmem:[%s198 + $0xa0] sm:$0xf]
      %v239 = vld [vmem:[%s198 + $0xa8] sm:$0xf]
      %v240 = vld [vmem:[%s198 + $0xac] sm:$0xf]
      %v241 = vld [vmem:[%s198 + $0xb4] sm:$0xf]
      %v242 = vld [vmem:[%s198 + $0xb8] sm:$0xf]
      %v243 = vld [vmem:[%s1] sm:$0x3]
      %v244 = vld [vmem:[%s198] sm:$0xe]
      %v245 = vld [vmem:[%s198 + $0x8] sm:$0x1]
      %v246 = vld [vmem:[%s198 + $0xc] sm:$0xe]
      %v247 = vld [vmem:[%s198 + $0x14] sm:$0x1]
      %v248 = vld [vmem:[%s198 + $0x18] sm:$0xe]
      %v249 = vld [vmem:[%s198 + $0x20] sm:$0x1]
      %v250 = vld [vmem:[%s198 + $0x24] sm:$0xe]
      %v251 = vld [vmem:[%s198 + $0x2c] sm:$0x1]
      %v252 = vld [vmem:[%s198 + $0x30] sm:$0xe]
      %v253 = vld [vmem:[%s198 + $0x38] sm:$0x1]
      %v254 = vld [vmem:[%s198 + $0x3c] sm:$0xe]
      %v255 = vld [vmem:[%s198 + $0x44] sm:$0x1]
      %v256 = vld [vmem:[%s198 + $0x48] sm:$0xe]
      %v257 = vld [vmem:[%s198 + $0x50] sm:$0x1]
      %v258 = vld [vmem:[%s198 + $0x54] sm:$0xe]
      %v259 = vld [vmem:[%s198 + $0x5c] sm:$0x1]
      %v260 = vld [vmem:[%s198 + $0x60] sm:$0xe]
      %v261 = vld [vmem:[%s198 + $0x68] sm:$0x1]
      %v262 = vld [vmem:[%s198 + $0x6c] sm:$0xe]
      %v263 = vld [vmem:[%s198 + $0x74] sm:$0x1]
      %v264 = vld [vmem:[%s198 + $0x78] sm:$0xe]
      %v265 = vld [vmem:[%s198 + $0x80] sm:$0x1]
      %v266 = vld [vmem:[%s198 + $0x84] sm:$0xe]
      %v267 = vld [vmem:[%s198 + $0x8c] sm:$0x1]
      %v268 = vld [vmem:[%s198 + $0x90] sm:$0xe]
      %v269 = vld [vmem:[%s198 + $0x98] sm:$0x1]
      %v270 = vld [vmem:[%s198 + $0x9c] sm:$0xe]
      %v271 = vld [vmem:[%s198 + $0xa4] sm:$0x1]
      %v272 = vld [vmem:[%s198 + $0xa8] sm:$0xe]
      %v273 = vld [vmem:[%s198 + $0xb0] sm:$0x1]
      %v274 = vld [vmem:[%s198 + $0xb4] sm:$0xe]
      %v275 = vld [vmem:[%s198 + $0xbc] sm:$0x1]
      %vm324 = vcmask 1042432
      %vm325 = vcmask 1046532
      %vm326 = vmor %vm324, %vm325
      %v327 = vrot.slane %v244, 5
      %v328 = vrot.slane %v327, 4
      %v329 = vrot.slane %v212, 5
      %v330 = vsel %vm326, %v328, %v329
      %v331 = vrot.slane %v329, 4
      %v332 = vrot.slane %v245, 5
      %v333 = vsel %vm326, %v331, %v332
      %v334 = vrot.slane %v246, 5
      %v335 = vrot.slane %v334, 4
      %v336 = vrot.slane %v214, 5
      %v337 = vsel %vm326, %v335, %v336
      %v338 = vrot.slane %v336, 4
      %v339 = vrot.slane %v247, 5
      %v340 = vsel %vm326, %v338, %v339
      %v341 = vrot.slane %v248, 5
      %v342 = vrot.slane %v341, 4
      %v343 = vrot.slane %v216, 5
      %v344 = vsel %vm326, %v342, %v343
      %v345 = vrot.slane %v343, 4
      %v346 = vrot.slane %v249, 5
      %v347 = vsel %vm326, %v345, %v346
      %v348 = vrot.slane %v250, 5
      %v349 = vrot.slane %v348, 4
      %v350 = vrot.slane %v218, 5
      %v351 = vsel %vm326, %v349, %v350
      %v352 = vrot.slane %v350, 4
      %v353 = vrot.slane %v251, 5
      %v354 = vsel %vm326, %v352, %v353
      %v355 = vrot.slane %v252, 5
      %v356 = vrot.slane %v355, 4
      %v357 = vrot.slane %v220, 5
      %v358 = vsel %vm326, %v356, %v357
      %v359 = vrot.slane %v357, 4
      %v360 = vrot.slane %v253, 5
      %v361 = vsel %vm326, %v359, %v360
      %v362 = vrot.slane %v254, 5
      %v363 = vrot.slane %v362, 4
      %v364 = vrot.slane %v222, 5
      %v365 = vsel %vm326, %v363, %v364
      %v366 = vrot.slane %v364, 4
      %v367 = vrot.slane %v255, 5
      %v368 = vsel %vm326, %v366, %v367
      %v369 = vrot.slane %v256, 5
      %v370 = vrot.slane %v369, 4
      %v371 = vrot.slane %v224, 5
      %v372 = vsel %vm326, %v370, %v371
      %v373 = vrot.slane %v371, 4
      %v374 = vrot.slane %v257, 5
      %v375 = vsel %vm326, %v373, %v374
      %v376 = vrot.slane %v258, 5
      %v377 = vrot.slane %v376, 4
      %v378 = vrot.slane %v226, 5
      %v379 = vsel %vm326, %v377, %v378
      %v380 = vrot.slane %v378, 4
      %v381 = vrot.slane %v259, 5
      %v382 = vsel %vm326, %v380, %v381
      %v383 = vrot.slane %v260, 5
      %v384 = vrot.slane %v383, 4
      %v385 = vrot.slane %v228, 5
      %v386 = vsel %vm326, %v384, %v385
      %v387 = vrot.slane %v385, 4
      %v388 = vrot.slane %v261, 5
      %v389 = vsel %vm326, %v387, %v388
      %v390 = vrot.slane %v262, 5
      %v391 = vrot.slane %v390, 4
      %v392 = vrot.slane %v230, 5
      %v393 = vsel %vm326, %v391, %v392
      %v394 = vrot.slane %v392, 4
      %v395 = vrot.slane %v263, 5
      %v396 = vsel %vm326, %v394, %v395
      %v397 = vrot.slane %v264, 5
      %v398 = vrot.slane %v397, 4
      %v399 = vrot.slane %v232, 5
      %v400 = vsel %vm326, %v398, %v399
      %v401 = vrot.slane %v399, 4
      %v402 = vrot.slane %v265, 5
      %v403 = vsel %vm326, %v401, %v402
      %v404 = vrot.slane %v266, 5
      %v405 = vrot.slane %v404, 4
      %v406 = vrot.slane %v234, 5
      %v407 = vsel %vm326, %v405, %v406
      %v408 = vrot.slane %v406, 4
      %v409 = vrot.slane %v267, 5
      %v410 = vsel %vm326, %v408, %v409
      %v411 = vrot.slane %v268, 5
      %v412 = vrot.slane %v411, 4
      %v413 = vrot.slane %v236, 5
      %v414 = vsel %vm326, %v412, %v413
      %v415 = vrot.slane %v413, 4
      %v416 = vrot.slane %v269, 5
      %v417 = vsel %vm326, %v415, %v416
      %v418 = vrot.slane %v270, 5
      %v419 = vrot.slane %v418, 4
      %v420 = vrot.slane %v238, 5
      %v421 = vsel %vm326, %v419, %v420
      %v422 = vrot.slane %v420, 4
      %v423 = vrot.slane %v271, 5
      %v424 = vsel %vm326, %v422, %v423
      %v425 = vrot.slane %v272, 5
      %v426 = vrot.slane %v425, 4
      %v427 = vrot.slane %v240, 5
      %v428 = vsel %vm326, %v426, %v427
      %v429 = vrot.slane %v427, 4
      %v430 = vrot.slane %v273, 5
      %v431 = vsel %vm326, %v429, %v430
      %v432 = vrot.slane %v274, 5
      %v433 = vrot.slane %v432, 4
      %v434 = vrot.slane %v242, 5
      %v435 = vsel %vm326, %v433, %v434
      %v436 = vrot.slane %v434, 4
      %v437 = vrot.slane %v275, 5
      %v438 = vsel %vm326, %v436, %v437
      %s439 = scalar_lea.vmem %s1, 2
      %v440 = vld [vmem:[%s439] sm:$0x3]
      %v441 = vunpack.c.l.b16 %v330
      %v442 = vunpack.c.l.b16 %v333
      %v443 = vunpack.c.l.b16 %v337
      %v444 = vunpack.c.l.b16 %v340
      %v445 = vunpack.c.l.b16 %v344
      %v446 = vunpack.c.l.b16 %v347
      %v447 = vunpack.c.l.b16 %v351
      %v448 = vunpack.c.l.b16 %v354
      %v449 = vunpack.c.l.b16 %v358
      %v450 = vunpack.c.l.b16 %v361
      %v451 = vunpack.c.l.b16 %v365
      %v452 = vunpack.c.l.b16 %v368
      %v453 = vunpack.c.l.b16 %v372
      %v454 = vunpack.c.l.b16 %v375
      %v455 = vunpack.c.l.b16 %v379
      %v456 = vunpack.c.l.b16 %v382
      %v457 = vunpack.c.l.b16 %v386
      %v458 = vunpack.c.l.b16 %v389
      %v459 = vunpack.c.l.b16 %v393
      %v460 = vunpack.c.l.b16 %v396
      %v461 = vunpack.c.l.b16 %v400
      %v462 = vunpack.c.l.b16 %v403
      %v463 = vunpack.c.l.b16 %v407
      %v464 = vunpack.c.l.b16 %v410
      %v465 = vunpack.c.l.b16 %v414
      %v466 = vunpack.c.l.b16 %v417
      %v467 = vunpack.c.l.b16 %v421
      %v468 = vunpack.c.l.b16 %v424
      %v469 = vunpack.c.l.b16 %v428
      %v470 = vunpack.c.l.b16 %v431
      %v471 = vunpack.c.l.b16 %v435
      %v472 = vunpack.c.l.b16 %v438
      %v473 = vpack.c.b16 %v442, %v441
      %v474 = vpack.c.b16 %v444, %v443
      %v475 = vpack.c.b16 %v446, %v445
      %v476 = vpack.c.b16 %v448, %v447
      %v477 = vpack.c.b16 %v450, %v449
      %v478 = vpack.c.b16 %v452, %v451
      %v479 = vpack.c.b16 %v454, %v453
      %v480 = vpack.c.b16 %v456, %v455
      %v481 = vpack.c.b16 %v458, %v457
      %v482 = vpack.c.b16 %v460, %v459
      %v483 = vpack.c.b16 %v462, %v461
      %v484 = vpack.c.b16 %v464, %v463
      %v485 = vpack.c.b16 %v466, %v465
      %v486 = vpack.c.b16 %v468, %v467
      %v487 = vpack.c.b16 %v470, %v469
      %v488 = vpack.c.b16 %v472, %v471
      %vm489 = vcmask 31744
      %v491 = vsel %vm489, %v473, 0
      %v494 = vsel %vm489, %v474, 0
      %v497 = vsel %vm489, %v475, 0
      %v500 = vsel %vm489, %v476, 0
      %v503 = vsel %vm489, %v477, 0
      %v506 = vsel %vm489, %v478, 0
      %v509 = vsel %vm489, %v479, 0
      %v512 = vsel %vm489, %v480, 0
      %v515 = vsel %vm489, %v481, 0
      %v518 = vsel %vm489, %v482, 0
      %v521 = vsel %vm489, %v483, 0
      %v524 = vsel %vm489, %v484, 0
      %v527 = vsel %vm489, %v485, 0
      %v530 = vsel %vm489, %v486, 0
      %v533 = vsel %vm489, %v487, 0
      %v536 = vsel %vm489, %v488, 0
      %vm538 = vcmask 1041408
      %v540 = vsel %vm538, %v440, 0
      %542 = vmatprep.subr.bf16.mxu0 0
      %543 = vmatpush1.bf16.msra.mxu0 %v540
      %544 = vmatprep.subr.bf16.mxu0 0
      %545 = vmatpush1.bf16.msra.mxu0 0
      %546 = vmatprep.subr.bf16.mxu0 0
      %547 = vmatpush1.bf16.msra.mxu0 0
      %548 = vmatprep.subr.bf16.mxu0 0
      %549 = vmatpush1.bf16.msra.mxu0 0
      %550 = vmatprep.subr.bf16.mxu0 0
      %551 = vmatpush1.bf16.msra.mxu0 0
      %552 = vmatprep.subr.bf16.mxu0 0
      %553 = vmatpush1.bf16.msra.mxu0 0
      %554 = vmatprep.subr.bf16.mxu0 0
      %555 = vmatpush1.bf16.msra.mxu0 0
      %556 = vmatprep.subr.bf16.mxu0 0
      %557 = vmatpush1.bf16.msra.mxu0 0
      %558 = vmatprep.subr.bf16.mxu0 0
      %559 = vmatpush1.bf16.msra.mxu0 0
      %560 = vmatprep.subr.bf16.mxu0 0
      %561 = vmatpush1.bf16.msra.mxu0 0
      %562 = vmatprep.subr.bf16.mxu0 0
      %563 = vmatpush1.bf16.msra.mxu0 0
      %564 = vmatprep.subr.bf16.mxu0 0
      %565 = vmatpush1.bf16.msra.mxu0 0
      %566 = vmatprep.subr.bf16.mxu0 0
      %567 = vmatpush1.bf16.msra.mxu0 0
      %568 = vmatprep.subr.bf16.mxu0 0
      %569 = vmatpush1.bf16.msra.mxu0 0
      %570 = vmatprep.subr.bf16.mxu0 0
      %571 = vmatpush1.bf16.msra.mxu0 0
      %572 = vmatprep.subr.bf16.mxu0 0
      %573 = vmatpush1.bf16.msra.mxu0 0
      %574 = vmatprep.mubr.bf16.mxu0 0
      %575 = vmatmul.mubr.bf16.gmra.mrb[0].mxu0 %v491
      %v576 = vpop.f32.mrb[0].mxu0
      %v577 = vadd.f32 0.0, %v576
      %v578 = vpop.f32.mrb[0].mxu0
      %v579 = vpop.f32.mrb[0].mxu0
      %v580 = vadd.f32 0.0, %v579
      %v581 = vpop.f32.mrb[0].mxu0
      %582 = vmatprep.mubr.bf16.mxu0 0
      %583 = vmatmul.mubr.bf16.gmra.mrb[0].mxu0 %v494
      %v584 = vpop.f32.mrb[0].mxu0
      %v585 = vadd.f32 0.0, %v584
      %v586 = vpop.f32.mrb[0].mxu0
      %v587 = vpop.f32.mrb[0].mxu0
      %v588 = vadd.f32 0.0, %v587
      %v589 = vpop.f32.mrb[0].mxu0
      %590 = vmatprep.mubr.bf16.mxu0 0
      %591 = vmatmul.mubr.bf16.gmra.mrb[0].mxu0 %v497
      %v592 = vpop.f32.mrb[0].mxu0
      %v593 = vadd.f32 0.0, %v592
      %v594 = vpop.f32.mrb[0].mxu0
      %v595 = vpop.f32.mrb[0].mxu0
      %v596 = vadd.f32 0.0, %v595
      %v597 = vpop.f32.mrb[0].mxu0
      %598 = vmatprep.mubr.bf16.mxu0 0
      %599 = vmatmul.mubr.bf16.gmra.mrb[0].mxu0 %v500
      %v600 = vpop.f32.mrb[0].mxu0
      %v601 = vadd.f32 0.0, %v600
      %v602 = vpop.f32.mrb[0].mxu0
      %v603 = vpop.f32.mrb[0].mxu0
      %v604 = vadd.f32 0.0, %v603
      %v605 = vpop.f32.mrb[0].mxu0
      %606 = vmatprep.mubr.bf16.mxu0 0
      %607 = vmatmul.mubr.bf16.gmra.mrb[0].mxu0 %v503
      %v608 = vpop.f32.mrb[0].mxu0
      %v609 = vadd.f32 0.0, %v608
      %v610 = vpop.f32.mrb[0].mxu0
      %v611 = vpop.f32.mrb[0].mxu0
      %v612 = vadd.f32 0.0, %v611
      %v613 = vpop.f32.mrb[0].mxu0
      %614 = vmatprep.mubr.bf16.mxu0 0
      %615 = vmatmul.mubr.bf16.gmra.mrb[0].mxu0 %v506
      %v616 = vpop.f32.mrb[0].mxu0
      %v617 = vadd.f32 0.0, %v616
      %v618 = vpop.f32.mrb[0].mxu0
      %v619 = vpop.f32.mrb[0].mxu0
      %v620 = vadd.f32 0.0, %v619
      %v621 = vpop.f32.mrb[0].mxu0
      %622 = vmatprep.mubr.bf16.mxu0 0
      %623 = vmatmul.mubr.bf16.gmra.mrb[0].mxu0 %v509
      %v624 = vpop.f32.mrb[0].mxu0
      %v625 = vadd.f32 0.0, %v624
      %v626 = vpop.f32.mrb[0].mxu0
      %v627 = vpop.f32.mrb[0].mxu0
      %v628 = vadd.f32 0.0, %v627
      %v629 = vpop.f32.mrb[0].mxu0
      %630 = vmatprep.mubr.bf16.mxu0 0
      %631 = vmatmul.mubr.bf16.gmra.mrb[0].mxu0 %v512
      %v632 = vpop.f32.mrb[0].mxu0
      %v633 = vadd.f32 0.0, %v632
      %v634 = vpop.f32.mrb[0].mxu0
      %v635 = vpop.f32.mrb[0].mxu0
      %v636 = vadd.f32 0.0, %v635
      %v637 = vpop.f32.mrb[0].mxu0
      %638 = vmatprep.mubr.bf16.mxu0 0
      %639 = vmatmul.mubr.bf16.gmra.mrb[0].mxu0 %v515
      %v640 = vpop.f32.mrb[0].mxu0
      %v641 = vadd.f32 0.0, %v640
      %v642 = vpop.f32.mrb[0].mxu0
      %v643 = vpop.f32.mrb[0].mxu0
      %v644 = vadd.f32 0.0, %v643
      %v645 = vpop.f32.mrb[0].mxu0
      %646 = vmatprep.mubr.bf16.mxu0 0
      %647 = vmatmul.mubr.bf16.gmra.mrb[0].mxu0 %v518
      %v648 = vpop.f32.mrb[0].mxu0
      %v649 = vadd.f32 0.0, %v648
      %v650 = vpop.f32.mrb[0].mxu0
      %v651 = vpop.f32.mrb[0].mxu0
      %v652 = vadd.f32 0.0, %v651
      %v653 = vpop.f32.mrb[0].mxu0
      %654 = vmatprep.mubr.bf16.mxu0 0
      %655 = vmatmul.mubr.bf16.gmra.mrb[0].mxu0 %v521
      %v656 = vpop.f32.mrb[0].mxu0
      %v657 = vadd.f32 0.0, %v656
      %v658 = vpop.f32.mrb[0].mxu0
      %v659 = vpop.f32.mrb[0].mxu0
      %v660 = vadd.f32 0.0, %v659
      %v661 = vpop.f32.mrb[0].mxu0
      %662 = vmatprep.mubr.bf16.mxu0 0
      %663 = vmatmul.mubr.bf16.gmra.mrb[0].mxu0 %v524
      %v664 = vpop.f32.mrb[0].mxu0
      %v665 = vadd.f32 0.0, %v664
      %v666 = vpop.f32.mrb[0].mxu0
      %v667 = vpop.f32.mrb[0].mxu0
      %v668 = vadd.f32 0.0, %v667
      %v669 = vpop.f32.mrb[0].mxu0
      %670 = vmatprep.mubr.bf16.mxu0 0
      %671 = vmatmul.mubr.bf16.gmra.mrb[0].mxu0 %v527
      %v672 = vpop.f32.mrb[0].mxu0
      %v673 = vadd.f32 0.0, %v672
      %v674 = vpop.f32.mrb[0].mxu0
      %v675 = vpop.f32.mrb[0].mxu0
      %v676 = vadd.f32 0.0, %v675
      %v677 = vpop.f32.mrb[0].mxu0
      %678 = vmatprep.mubr.bf16.mxu0 0
      %679 = vmatmul.mubr.bf16.gmra.mrb[0].mxu0 %v530
      %v680 = vpop.f32.mrb[0].mxu0
      %v681 = vadd.f32 0.0, %v680
      %v682 = vpop.f32.mrb[0].mxu0
      %v683 = vpop.f32.mrb[0].mxu0
      %v684 = vadd.f32 0.0, %v683
      %v685 = vpop.f32.mrb[0].mxu0
      %686 = vmatprep.mubr.bf16.mxu0 0
      %687 = vmatmul.mubr.bf16.gmra.mrb[0].mxu0 %v533
      %v688 = vpop.f32.mrb[0].mxu0
      %v689 = vadd.f32 0.0, %v688
      %v690 = vpop.f32.mrb[0].mxu0
      %v691 = vpop.f32.mrb[0].mxu0
      %v692 = vadd.f32 0.0, %v691
      %v693 = vpop.f32.mrb[0].mxu0
      %694 = vmatprep.mubr.bf16.mxu0 0
      %695 = vmatmul.mubr.bf16.gmra.mrb[0].mxu0 %v536
      %v696 = vpop.f32.mrb[0].mxu0
      %v697 = vadd.f32 0.0, %v696
      %v698 = vpop.f32.mrb[0].mxu0
      %v699 = vpop.f32.mrb[0].mxu0
      %v700 = vadd.f32 0.0, %v699
      %v701 = vpop.f32.mrb[0].mxu0
      %702 = vdwg.mxu0
      %v719 = vunpack.c.l.b16 %v211
      %v720 = vunpack.c.l.b16 %v212
      %v721 = vunpack.c.l.b16 %v213
      %v722 = vunpack.c.l.b16 %v214
      %v723 = vunpack.c.l.b16 %v215
      %v724 = vunpack.c.l.b16 %v216
      %v725 = vunpack.c.l.b16 %v217
      %v726 = vunpack.c.l.b16 %v218
      %v727 = vunpack.c.l.b16 %v219
      %v728 = vunpack.c.l.b16 %v220
      %v729 = vunpack.c.l.b16 %v221
      %v730 = vunpack.c.l.b16 %v222
      %v731 = vunpack.c.l.b16 %v223
      %v732 = vunpack.c.l.b16 %v224
      %v733 = vunpack.c.l.b16 %v225
      %v734 = vunpack.c.l.b16 %v226
      %v735 = vunpack.c.l.b16 %v227
      %v736 = vunpack.c.l.b16 %v228
      %v737 = vunpack.c.l.b16 %v229
      %v738 = vunpack.c.l.b16 %v230
      %v739 = vunpack.c.l.b16 %v231
      %v740 = vunpack.c.l.b16 %v232
      %v741 = vunpack.c.l.b16 %v233
      %v742 = vunpack.c.l.b16 %v234
      %v743 = vunpack.c.l.b16 %v235
      %v744 = vunpack.c.l.b16 %v236
      %v745 = vunpack.c.l.b16 %v237
      %v746 = vunpack.c.l.b16 %v238
      %v747 = vunpack.c.l.b16 %v239
      %v748 = vunpack.c.l.b16 %v240
      %v749 = vunpack.c.l.b16 %v241
      %v750 = vunpack.c.l.b16 %v242
      %v751 = vpack.c.b16 %v720, %v719
      %v752 = vpack.c.b16 %v722, %v721
      %v753 = vpack.c.b16 %v724, %v723
      %v754 = vpack.c.b16 %v726, %v725
      %v755 = vpack.c.b16 %v728, %v727
      %v756 = vpack.c.b16 %v730, %v729
      %v757 = vpack.c.b16 %v732, %v731
      %v758 = vpack.c.b16 %v734, %v733
      %v759 = vpack.c.b16 %v736, %v735
      %v760 = vpack.c.b16 %v738, %v737
      %v761 = vpack.c.b16 %v740, %v739
      %v762 = vpack.c.b16 %v742, %v741
      %v763 = vpack.c.b16 %v744, %v743
      %v764 = vpack.c.b16 %v746, %v745
      %v765 = vpack.c.b16 %v748, %v747
      %v766 = vpack.c.b16 %v750, %v749
      %v768 = vsel %vm489, %v751, 0
      %v771 = vsel %vm489, %v752, 0
      %v774 = vsel %vm489, %v753, 0
      %v777 = vsel %vm489, %v754, 0
      %v780 = vsel %vm489, %v755, 0
      %v783 = vsel %vm489, %v756, 0
      %v786 = vsel %vm489, %v757, 0
      %v789 = vsel %vm489, %v758, 0
      %v792 = vsel %vm489, %v759, 0
      %v795 = vsel %vm489, %v760, 0
      %v798 = vsel %vm489, %v761, 0
      %v801 = vsel %vm489, %v762, 0
      %v804 = vsel %vm489, %v763, 0
      %v807 = vsel %vm489, %v764, 0
      %v810 = vsel %vm489, %v765, 0
      %v813 = vsel %vm489, %v766, 0
      %v816 = vsel %vm538, %v243, 0
      %818 = vmatprep.subr.bf16.mxu0 0
      %819 = vmatpush1.bf16.msra.mxu0 %v816
      %820 = vmatprep.subr.bf16.mxu0 0
      %821 = vmatpush1.bf16.msra.mxu0 0
      %822 = vmatprep.subr.bf16.mxu0 0
      %823 = vmatpush1.bf16.msra.mxu0 0
      %824 = vmatprep.subr.bf16.mxu0 0
      %825 = vmatpush1.bf16.msra.mxu0 0
      %826 = vmatprep.subr.bf16.mxu0 0
      %827 = vmatpush1.bf16.msra.mxu0 0
      %828 = vmatprep.subr.bf16.mxu0 0
      %829 = vmatpush1.bf16.msra.mxu0 0
      %830 = vmatprep.subr.bf16.mxu0 0
      %831 = vmatpush1.bf16.msra.mxu0 0
      %832 = vmatprep.subr.bf16.mxu0 0
      %833 = vmatpush1.bf16.msra.mxu0 0
      %834 = vmatprep.subr.bf16.mxu0 0
      %835 = vmatpush1.bf16.msra.mxu0 0
      %836 = vmatprep.subr.bf16.mxu0 0
      %837 = vmatpush1.bf16.msra.mxu0 0
      %838 = vmatprep.subr.bf16.mxu0 0
      %839 = vmatpush1.bf16.msra.mxu0 0
      %840 = vmatprep.subr.bf16.mxu0 0
      %841 = vmatpush1.bf16.msra.mxu0 0
      %842 = vmatprep.subr.bf16.mxu0 0
      %843 = vmatpush1.bf16.msra.mxu0 0
      %844 = vmatprep.subr.bf16.mxu0 0
      %845 = vmatpush1.bf16.msra.mxu0 0
      %846 = vmatprep.subr.bf16.mxu0 0
      %847 = vmatpush1.bf16.msra.mxu0 0
      %848 = vmatprep.subr.bf16.mxu0 0
      %849 = vmatpush1.bf16.msra.mxu0 0
      %850 = vmatprep.mubr.bf16.mxu0 0
      %851 = vmatmul.mubr.bf16.gmra.mrb[0].mxu0 %v768
      %v852 = vpop.f32.mrb[0].mxu0
      %v853 = vadd.f32 %v577, %v852
      %v854 = vpop.f32.mrb[0].mxu0
      %v855 = vpop.f32.mrb[0].mxu0
      %v856 = vadd.f32 %v580, %v855
      %v857 = vpop.f32.mrb[0].mxu0
      %858 = vmatprep.mubr.bf16.mxu0 0
      %859 = vmatmul.mubr.bf16.gmra.mrb[0].mxu0 %v771
      %v860 = vpop.f32.mrb[0].mxu0
      %v861 = vadd.f32 %v585, %v860
      %v862 = vpop.f32.mrb[0].mxu0
      %v863 = vpop.f32.mrb[0].mxu0
      %v864 = vadd.f32 %v588, %v863
      %v865 = vpop.f32.mrb[0].mxu0
      %866 = vmatprep.mubr.bf16.mxu0 0
      %867 = vmatmul.mubr.bf16.gmra.mrb[0].mxu0 %v774
      %v868 = vpop.f32.mrb[0].mxu0
      %v869 = vadd.f32 %v593, %v868
      %v870 = vpop.f32.mrb[0].mxu0
      %v871 = vpop.f32.mrb[0].mxu0
      %v872 = vadd.f32 %v596, %v871
      %v873 = vpop.f32.mrb[0].mxu0
      %874 = vmatprep.mubr.bf16.mxu0 0
      %875 = vmatmul.mubr.bf16.gmra.mrb[0].mxu0 %v777
      %v876 = vpop.f32.mrb[0].mxu0
      %v877 = vadd.f32 %v601, %v876
      %v878 = vpop.f32.mrb[0].mxu0
      %v879 = vpop.f32.mrb[0].mxu0
      %v880 = vadd.f32 %v604, %v879
      %v881 = vpop.f32.mrb[0].mxu0
      %882 = vmatprep.mubr.bf16.mxu0 0
      %883 = vmatmul.mubr.bf16.gmra.mrb[0].mxu0 %v780
      %v884 = vpop.f32.mrb[0].mxu0
      %v885 = vadd.f32 %v609, %v884
      %v886 = vpop.f32.mrb[0].mxu0
      %v887 = vpop.f32.mrb[0].mxu0
      %v888 = vadd.f32 %v612, %v887
      %v889 = vpop.f32.mrb[0].mxu0
      %890 = vmatprep.mubr.bf16.mxu0 0
      %891 = vmatmul.mubr.bf16.gmra.mrb[0].mxu0 %v783
      %v892 = vpop.f32.mrb[0].mxu0
      %v893 = vadd.f32 %v617, %v892
      %v894 = vpop.f32.mrb[0].mxu0
      %v895 = vpop.f32.mrb[0].mxu0
      %v896 = vadd.f32 %v620, %v895
      %v897 = vpop.f32.mrb[0].mxu0
      %898 = vmatprep.mubr.bf16.mxu0 0
      %899 = vmatmul.mubr.bf16.gmra.mrb[0].mxu0 %v786
      %v900 = vpop.f32.mrb[0].mxu0
      %v901 = vadd.f32 %v625, %v900
      %v902 = vpop.f32.mrb[0].mxu0
      %v903 = vpop.f32.mrb[0].mxu0
      %v904 = vadd.f32 %v628, %v903
      %v905 = vpop.f32.mrb[0].mxu0
      %906 = vmatprep.mubr.bf16.mxu0 0
      %907 = vmatmul.mubr.bf16.gmra.mrb[0].mxu0 %v789
      %v908 = vpop.f32.mrb[0].mxu0
      %v909 = vadd.f32 %v633, %v908
      %v910 = vpop.f32.mrb[0].mxu0
      %v911 = vpop.f32.mrb[0].mxu0
      %v912 = vadd.f32 %v636, %v911
      %v913 = vpop.f32.mrb[0].mxu0
      %914 = vmatprep.mubr.bf16.mxu0 0
      %915 = vmatmul.mubr.bf16.gmra.mrb[0].mxu0 %v792
      %v916 = vpop.f32.mrb[0].mxu0
      %v917 = vadd.f32 %v641, %v916
      %v918 = vpop.f32.mrb[0].mxu0
      %v919 = vpop.f32.mrb[0].mxu0
      %v920 = vadd.f32 %v644, %v919
      %v921 = vpop.f32.mrb[0].mxu0
      %922 = vmatprep.mubr.bf16.mxu0 0
      %923 = vmatmul.mubr.bf16.gmra.mrb[0].mxu0 %v795
      %v924 = vpop.f32.mrb[0].mxu0
      %v925 = vadd.f32 %v649, %v924
      %v926 = vpop.f32.mrb[0].mxu0
      %v927 = vpop.f32.mrb[0].mxu0
      %v928 = vadd.f32 %v652, %v927
      %v929 = vpop.f32.mrb[0].mxu0
      %930 = vmatprep.mubr.bf16.mxu0 0
      %931 = vmatmul.mubr.bf16.gmra.mrb[0].mxu0 %v798
      %v932 = vpop.f32.mrb[0].mxu0
      %v933 = vadd.f32 %v657, %v932
      %v934 = vpop.f32.mrb[0].mxu0
      %v935 = vpop.f32.mrb[0].mxu0
      %v936 = vadd.f32 %v660, %v935
      %v937 = vpop.f32.mrb[0].mxu0
      %938 = vmatprep.mubr.bf16.mxu0 0
      %939 = vmatmul.mubr.bf16.gmra.mrb[0].mxu0 %v801
      %v940 = vpop.f32.mrb[0].mxu0
      %v941 = vadd.f32 %v665, %v940
      %v942 = vpop.f32.mrb[0].mxu0
      %v943 = vpop.f32.mrb[0].mxu0
      %v944 = vadd.f32 %v668, %v943
      %v945 = vpop.f32.mrb[0].mxu0
      %946 = vmatprep.mubr.bf16.mxu0 0
      %947 = vmatmul.mubr.bf16.gmra.mrb[0].mxu0 %v804
      %v948 = vpop.f32.mrb[0].mxu0
      %v949 = vadd.f32 %v673, %v948
      %v950 = vpop.f32.mrb[0].mxu0
      %v951 = vpop.f32.mrb[0].mxu0
      %v952 = vadd.f32 %v676, %v951
      %v953 = vpop.f32.mrb[0].mxu0
      %954 = vmatprep.mubr.bf16.mxu0 0
      %955 = vmatmul.mubr.bf16.gmra.mrb[0].mxu0 %v807
      %v956 = vpop.f32.mrb[0].mxu0
      %v957 = vadd.f32 %v681, %v956
      %v958 = vpop.f32.mrb[0].mxu0
      %v959 = vpop.f32.mrb[0].mxu0
      %v960 = vadd.f32 %v684, %v959
      %v961 = vpop.f32.mrb[0].mxu0
      %962 = vmatprep.mubr.bf16.mxu0 0
      %963 = vmatmul.mubr.bf16.gmra.mrb[0].mxu0 %v810
      %v964 = vpop.f32.mrb[0].mxu0
      %v965 = vadd.f32 %v689, %v964
      %v966 = vpop.f32.mrb[0].mxu0
      %v967 = vpop.f32.mrb[0].mxu0
      %v968 = vadd.f32 %v692, %v967
      %v969 = vpop.f32.mrb[0].mxu0
      %970 = vmatprep.mubr.bf16.mxu0 0
      %971 = vmatmul.mubr.bf16.gmra.mrb[0].mxu0 %v813
      %v972 = vpop.f32.mrb[0].mxu0
      %v973 = vadd.f32 %v697, %v972
      %v974 = vpop.f32.mrb[0].mxu0
      %v975 = vpop.f32.mrb[0].mxu0
      %v976 = vadd.f32 %v700, %v975
      %v977 = vpop.f32.mrb[0].mxu0
      %978 = vdwg.mxu0
      %v979 = vld [vmem:[%s198] sm:$0xc]
      %v980 = vld [vmem:[%s198 + $0x8] sm:$0x3]
      %v981 = vld [vmem:[%s198 + $0xc] sm:$0xc]
      %v982 = vld [vmem:[%s198 + $0x14] sm:$0x3]
      %v983 = vld [vmem:[%s198 + $0x18] sm:$0xc]
      %v984 = vld [vmem:[%s198 + $0x20] sm:$0x3]
      %v985 = vld [vmem:[%s198 + $0x24] sm:$0xc]
      %v986 = vld [vmem:[%s198 + $0x2c] sm:$0x3]
      %v987 = vld [vmem:[%s198 + $0x30] sm:$0xc]
      %v988 = vld [vmem:[%s198 + $0x38] sm:$0x3]
      %v989 = vld [vmem:[%s198 + $0x3c] sm:$0xc]
      %v990 = vld [vmem:[%s198 + $0x44] sm:$0x3]
      %v991 = vld [vmem:[%s198 + $0x48] sm:$0xc]
      %v992 = vld [vmem:[%s198 + $0x50] sm:$0x3]
      %v993 = vld [vmem:[%s198 + $0x54] sm:$0xc]
      %v994 = vld [vmem:[%s198 + $0x5c] sm:$0x3]
      %v995 = vld [vmem:[%s198 + $0x60] sm:$0xc]
      %v996 = vld [vmem:[%s198 + $0x68] sm:$0x3]
      %v997 = vld [vmem:[%s198 + $0x6c] sm:$0xc]
      %v998 = vld [vmem:[%s198 + $0x74] sm:$0x3]
      %v999 = vld [vmem:[%s198 + $0x78] sm:$0xc]
      %v1000 = vld [vmem:[%s198 + $0x80] sm:$0x3]
      %v1001 = vld [vmem:[%s198 + $0x84] sm:$0xc]
      %v1002 = vld [vmem:[%s198 + $0x8c] sm:$0x3]
      %v1003 = vld [vmem:[%s198 + $0x90] sm:$0xc]
      %v1004 = vld [vmem:[%s198 + $0x98] sm:$0x3]
      %v1005 = vld [vmem:[%s198 + $0x9c] sm:$0xc]
      %v1006 = vld [vmem:[%s198 + $0xa4] sm:$0x3]
      %v1007 = vld [vmem:[%s198 + $0xa8] sm:$0xc]
      %v1008 = vld [vmem:[%s198 + $0xb0] sm:$0x3]
      %v1009 = vld [vmem:[%s198 + $0xb4] sm:$0xc]
      %v1010 = vld [vmem:[%s198 + $0xbc] sm:$0x3]
      %vm1043 = vcmask 1041408
      %vm1044 = vcmask 1045508
      %vm1045 = vmor %vm1043, %vm1044
      %v1046 = vrot.slane %v979, 6
      %v1047 = vrot.slane %v1046, 4
      %v1048 = vrot.slane %v212, 6
      %v1049 = vsel %vm1045, %v1047, %v1048
      %v1050 = vrot.slane %v1048, 4
      %v1051 = vrot.slane %v980, 6
      %v1052 = vsel %vm1045, %v1050, %v1051
      %v1053 = vrot.slane %v981, 6
      %v1054 = vrot.slane %v1053, 4
      %v1055 = vrot.slane %v214, 6
      %v1056 = vsel %vm1045, %v1054, %v1055
      %v1057 = vrot.slane %v1055, 4
      %v1058 = vrot.slane %v982, 6
      %v1059 = vsel %vm1045, %v1057, %v1058
      %v1060 = vrot.slane %v983, 6
      %v1061 = vrot.slane %v1060, 4
      %v1062 = vrot.slane %v216, 6
      %v1063 = vsel %vm1045, %v1061, %v1062
      %v1064 = vrot.slane %v1062, 4
      %v1065 = vrot.slane %v984, 6
      %v1066 = vsel %vm1045, %v1064, %v1065
      %v1067 = vrot.slane %v985, 6
      %v1068 = vrot.slane %v1067, 4
      %v1069 = vrot.slane %v218, 6
      %v1070 = vsel %vm1045, %v1068, %v1069
      %v1071 = vrot.slane %v1069, 4
      %v1072 = vrot.slane %v986, 6
      %v1073 = vsel %vm1045, %v1071, %v1072
      %v1074 = vrot.slane %v987, 6
      %v1075 = vrot.slane %v1074, 4
      %v1076 = vrot.slane %v220, 6
      %v1077 = vsel %vm1045, %v1075, %v1076
      %v1078 = vrot.slane %v1076, 4
      %v1079 = vrot.slane %v988, 6
      %v1080 = vsel %vm1045, %v1078, %v1079
      %v1081 = vrot.slane %v989, 6
      %v1082 = vrot.slane %v1081, 4
      %v1083 = vrot.slane %v222, 6
      %v1084 = vsel %vm1045, %v1082, %v1083
      %v1085 = vrot.slane %v1083, 4
      %v1086 = vrot.slane %v990, 6
      %v1087 = vsel %vm1045, %v1085, %v1086
      %v1088 = vrot.slane %v991, 6
      %v1089 = vrot.slane %v1088, 4
      %v1090 = vrot.slane %v224, 6
      %v1091 = vsel %vm1045, %v1089, %v1090
      %v1092 = vrot.slane %v1090, 4
      %v1093 = vrot.slane %v992, 6
      %v1094 = vsel %vm1045, %v1092, %v1093
      %v1095 = vrot.slane %v993, 6
      %v1096 = vrot.slane %v1095, 4
      %v1097 = vrot.slane %v226, 6
      %v1098 = vsel %vm1045, %v1096, %v1097
      %v1099 = vrot.slane %v1097, 4
      %v1100 = vrot.slane %v994, 6
      %v1101 = vsel %vm1045, %v1099, %v1100
      %v1102 = vrot.slane %v995, 6
      %v1103 = vrot.slane %v1102, 4
      %v1104 = vrot.slane %v228, 6
      %v1105 = vsel %vm1045, %v1103, %v1104
      %v1106 = vrot.slane %v1104, 4
      %v1107 = vrot.slane %v996, 6
      %v1108 = vsel %vm1045, %v1106, %v1107
      %v1109 = vrot.slane %v997, 6
      %v1110 = vrot.slane %v1109, 4
      %v1111 = vrot.slane %v230, 6
      %v1112 = vsel %vm1045, %v1110, %v1111
      %v1113 = vrot.slane %v1111, 4
      %v1114 = vrot.slane %v998, 6
      %v1115 = vsel %vm1045, %v1113, %v1114
      %v1116 = vrot.slane %v999, 6
      %v1117 = vrot.slane %v1116, 4
      %v1118 = vrot.slane %v232, 6
      %v1119 = vsel %vm1045, %v1117, %v1118
      %v1120 = vrot.slane %v1118, 4
      %v1121 = vrot.slane %v1000, 6
      %v1122 = vsel %vm1045, %v1120, %v1121
      %v1123 = vrot.slane %v1001, 6
      %v1124 = vrot.slane %v1123, 4
      %v1125 = vrot.slane %v234, 6
      %v1126 = vsel %vm1045, %v1124, %v1125
      %v1127 = vrot.slane %v1125, 4
      %v1128 = vrot.slane %v1002, 6
      %v1129 = vsel %vm1045, %v1127, %v1128
      %v1130 = vrot.slane %v1003, 6
      %v1131 = vrot.slane %v1130, 4
      %v1132 = vrot.slane %v236, 6
      %v1133 = vsel %vm1045, %v1131, %v1132
      %v1134 = vrot.slane %v1132, 4
      %v1135 = vrot.slane %v1004, 6
      %v1136 = vsel %vm1045, %v1134, %v1135
      %v1137 = vrot.slane %v1005, 6
      %v1138 = vrot.slane %v1137, 4
      %v1139 = vrot.slane %v238, 6
      %v1140 = vsel %vm1045, %v1138, %v1139
      %v1141 = vrot.slane %v1139, 4
      %v1142 = vrot.slane %v1006, 6
      %v1143 = vsel %vm1045, %v1141, %v1142
      %v1144 = vrot.slane %v1007, 6
      %v1145 = vrot.slane %v1144, 4
      %v1146 = vrot.slane %v240, 6
      %v1147 = vsel %vm1045, %v1145, %v1146
      %v1148 = vrot.slane %v1146, 4
      %v1149 = vrot.slane %v1008, 6
      %v1150 = vsel %vm1045, %v1148, %v1149
      %v1151 = vrot.slane %v1009, 6
      %v1152 = vrot.slane %v1151, 4
      %v1153 = vrot.slane %v242, 6
      %v1154 = vsel %vm1045, %v1152, %v1153
      %v1155 = vrot.slane %v1153, 4
      %v1156 = vrot.slane %v1010, 6
      %v1157 = vsel %vm1045, %v1155, %v1156
      %s1158 = scalar_lea.vmem %s1, 4
      %v1159 = vld [vmem:[%s1158] sm:$0x3]
      %v1160 = vunpack.c.l.b16 %v1049
      %v1161 = vunpack.c.l.b16 %v1052
      %v1162 = vunpack.c.l.b16 %v1056
      %v1163 = vunpack.c.l.b16 %v1059
      %v1164 = vunpack.c.l.b16 %v1063
      %v1165 = vunpack.c.l.b16 %v1066
      %v1166 = vunpack.c.l.b16 %v1070
      %v1167 = vunpack.c.l.b16 %v1073
      %v1168 = vunpack.c.l.b16 %v1077
      %v1169 = vunpack.c.l.b16 %v1080
      %v1170 = vunpack.c.l.b16 %v1084
      %v1171 = vunpack.c.l.b16 %v1087
      %v1172 = vunpack.c.l.b16 %v1091
      %v1173 = vunpack.c.l.b16 %v1094
      %v1174 = vunpack.c.l.b16 %v1098
      %v1175 = vunpack.c.l.b16 %v1101
      %v1176 = vunpack.c.l.b16 %v1105
      %v1177 = vunpack.c.l.b16 %v1108
      %v1178 = vunpack.c.l.b16 %v1112
      %v1179 = vunpack.c.l.b16 %v1115
      %v1180 = vunpack.c.l.b16 %v1119
      %v1181 = vunpack.c.l.b16 %v1122
      %v1182 = vunpack.c.l.b16 %v1126
      %v1183 = vunpack.c.l.b16 %v1129
      %v1184 = vunpack.c.l.b16 %v1133
      %v1185 = vunpack.c.l.b16 %v1136
      %v1186 = vunpack.c.l.b16 %v1140
      %v1187 = vunpack.c.l.b16 %v1143
      %v1188 = vunpack.c.l.b16 %v1147
      %v1189 = vunpack.c.l.b16 %v1150
      %v1190 = vunpack.c.l.b16 %v1154
      %v1191 = vunpack.c.l.b16 %v1157
      %v1192 = vpack.c.b16 %v1161, %v1160
      %v1193 = vpack.c.b16 %v1163, %v1162
      %v1194 = vpack.c.b16 %v1165, %v1164
      %v1195 = vpack.c.b16 %v1167, %v1166
      %v1196 = vpack.c.b16 %v1169, %v1168
      %v1197 = vpack.c.b16 %v1171, %v1170
      %v1198 = vpack.c.b16 %v1173, %v1172
      %v1199 = vpack.c.b16 %v1175, %v1174
      %v1200 = vpack.c.b16 %v1177, %v1176
      %v1201 = vpack.c.b16 %v1179, %v1178
      %v1202 = vpack.c.b16 %v1181, %v1180
      %v1203 = vpack.c.b16 %v1183, %v1182
      %v1204 = vpack.c.b16 %v1185, %v1184
      %v1205 = vpack.c.b16 %v1187, %v1186
      %v1206 = vpack.c.b16 %v1189, %v1188
      %v1207 = vpack.c.b16 %v1191, %v1190
      %v1209 = vsel %vm489, %v1192, 0
      %v1212 = vsel %vm489, %v1193, 0
      %v1215 = vsel %vm489, %v1194, 0
      %v1218 = vsel %vm489, %v1195, 0
      %v1221 = vsel %vm489, %v1196, 0
      %v1224 = vsel %vm489, %v1197, 0
      %v1227 = vsel %vm489, %v1198, 0
      %v1230 = vsel %vm489, %v1199, 0
      %v1233 = vsel %vm489, %v1200, 0
      %v1236 = vsel %vm489, %v1201, 0
      %v1239 = vsel %vm489, %v1202, 0
      %v1242 = vsel %vm489, %v1203, 0
      %v1245 = vsel %vm489, %v1204, 0
      %v1248 = vsel %vm489, %v1205, 0
      %v1251 = vsel %vm489, %v1206, 0
      %v1254 = vsel %vm489, %v1207, 0
      %v1257 = vsel %vm538, %v1159, 0
      %1259 = vmatprep.subr.bf16.mxu0 0
      %1260 = vmatpush1.bf16.msra.mxu0 %v1257
      %1261 = vmatprep.subr.bf16.mxu0 0
      %1262 = vmatpush1.bf16.msra.mxu0 0
      %1263 = vmatprep.subr.bf16.mxu0 0
      %1264 = vmatpush1.bf16.msra.mxu0 0
      %1265 = vmatprep.subr.bf16.mxu0 0
      %1266 = vmatpush1.bf16.msra.mxu0 0
      %1267 = vmatprep.subr.bf16.mxu0 0
      %1268 = vmatpush1.bf16.msra.mxu0 0
      %1269 = vmatprep.subr.bf16.mxu0 0
      %1270 = vmatpush1.bf16.msra.mxu0 0
      %1271 = vmatprep.subr.bf16.mxu0 0
      %1272 = vmatpush1.bf16.msra.mxu0 0
      %1273 = vmatprep.subr.bf16.mxu0 0
      %1274 = vmatpush1.bf16.msra.mxu0 0
      %1275 = vmatprep.subr.bf16.mxu0 0
      %1276 = vmatpush1.bf16.msra.mxu0 0
      %1277 = vmatprep.subr.bf16.mxu0 0
      %1278 = vmatpush1.bf16.msra.mxu0 0
      %1279 = vmatprep.subr.bf16.mxu0 0
      %1280 = vmatpush1.bf16.msra.mxu0 0
      %1281 = vmatprep.subr.bf16.mxu0 0
      %1282 = vmatpush1.bf16.msra.mxu0 0
      %1283 = vmatprep.subr.bf16.mxu0 0
      %1284 = vmatpush1.bf16.msra.mxu0 0
      %1285 = vmatprep.subr.bf16.mxu0 0
      %1286 = vmatpush1.bf16.msra.mxu0 0
      %1287 = vmatprep.subr.bf16.mxu0 0
      %1288 = vmatpush1.bf16.msra.mxu0 0
      %1289 = vmatprep.subr.bf16.mxu0 0
      %1290 = vmatpush1.bf16.msra.mxu0 0
      %1291 = vmatprep.mubr.bf16.mxu0 0
      %1292 = vmatmul.mubr.bf16.gmra.mrb[0].mxu0 %v1209
      %v1293 = vpop.f32.mrb[0].mxu0
      %v1294 = vadd.f32 0.0, %v1293
      %v1295 = vpop.f32.mrb[0].mxu0
      %v1296 = vpop.f32.mrb[0].mxu0
      %v1297 = vadd.f32 0.0, %v1296
      %v1298 = vpop.f32.mrb[0].mxu0
      %1299 = vmatprep.mubr.bf16.mxu0 0
      %1300 = vmatmul.mubr.bf16.gmra.mrb[0].mxu0 %v1212
      %v1301 = vpop.f32.mrb[0].mxu0
      %v1302 = vadd.f32 0.0, %v1301
      %v1303 = vpop.f32.mrb[0].mxu0
      %v1304 = vpop.f32.mrb[0].mxu0
      %v1305 = vadd.f32 0.0, %v1304
      %v1306 = vpop.f32.mrb[0].mxu0
      %1307 = vmatprep.mubr.bf16.mxu0 0
      %1308 = vmatmul.mubr.bf16.gmra.mrb[0].mxu0 %v1215
      %v1309 = vpop.f32.mrb[0].mxu0
      %v1310 = vadd.f32 0.0, %v1309
      %v1311 = vpop.f32.mrb[0].mxu0
      %v1312 = vpop.f32.mrb[0].mxu0
      %v1313 = vadd.f32 0.0, %v1312
      %v1314 = vpop.f32.mrb[0].mxu0
      %1315 = vmatprep.mubr.bf16.mxu0 0
      %1316 = vmatmul.mubr.bf16.gmra.mrb[0].mxu0 %v1218
      %v1317 = vpop.f32.mrb[0].mxu0
      %v1318 = vadd.f32 0.0, %v1317
      %v1319 = vpop.f32.mrb[0].mxu0
      %v1320 = vpop.f32.mrb[0].mxu0
      %v1321 = vadd.f32 0.0, %v1320
      %v1322 = vpop.f32.mrb[0].mxu0
      %1323 = vmatprep.mubr.bf16.mxu0 0
      %1324 = vmatmul.mubr.bf16.gmra.mrb[0].mxu0 %v1221
      %v1325 = vpop.f32.mrb[0].mxu0
      %v1326 = vadd.f32 0.0, %v1325
      %v1327 = vpop.f32.mrb[0].mxu0
      %v1328 = vpop.f32.mrb[0].mxu0
      %v1329 = vadd.f32 0.0, %v1328
      %v1330 = vpop.f32.mrb[0].mxu0
      %1331 = vmatprep.mubr.bf16.mxu0 0
      %1332 = vmatmul.mubr.bf16.gmra.mrb[0].mxu0 %v1224
      %v1333 = vpop.f32.mrb[0].mxu0
      %v1334 = vadd.f32 0.0, %v1333
      %v1335 = vpop.f32.mrb[0].mxu0
      %v1336 = vpop.f32.mrb[0].mxu0
      %v1337 = vadd.f32 0.0, %v1336
      %v1338 = vpop.f32.mrb[0].mxu0
      %1339 = vmatprep.mubr.bf16.mxu0 0
      %1340 = vmatmul.mubr.bf16.gmra.mrb[0].mxu0 %v1227
      %v1341 = vpop.f32.mrb[0].mxu0
      %v1342 = vadd.f32 0.0, %v1341
      %v1343 = vpop.f32.mrb[0].mxu0
      %v1344 = vpop.f32.mrb[0].mxu0
      %v1345 = vadd.f32 0.0, %v1344
      %v1346 = vpop.f32.mrb[0].mxu0
      %1347 = vmatprep.mubr.bf16.mxu0 0
      %1348 = vmatmul.mubr.bf16.gmra.mrb[0].mxu0 %v1230
      %v1349 = vpop.f32.mrb[0].mxu0
      %v1350 = vadd.f32 0.0, %v1349
      %v1351 = vpop.f32.mrb[0].mxu0
      %v1352 = vpop.f32.mrb[0].mxu0
      %v1353 = vadd.f32 0.0, %v1352
      %v1354 = vpop.f32.mrb[0].mxu0
      %1355 = vmatprep.mubr.bf16.mxu0 0
      %1356 = vmatmul.mubr.bf16.gmra.mrb[0].mxu0 %v1233
      %v1357 = vpop.f32.mrb[0].mxu0
      %v1358 = vadd.f32 0.0, %v1357
      %v1359 = vpop.f32.mrb[0].mxu0
      %v1360 = vpop.f32.mrb[0].mxu0
      %v1361 = vadd.f32 0.0, %v1360
      %v1362 = vpop.f32.mrb[0].mxu0
      %1363 = vmatprep.mubr.bf16.mxu0 0
      %1364 = vmatmul.mubr.bf16.gmra.mrb[0].mxu0 %v1236
      %v1365 = vpop.f32.mrb[0].mxu0
      %v1366 = vadd.f32 0.0, %v1365
      %v1367 = vpop.f32.mrb[0].mxu0
      %v1368 = vpop.f32.mrb[0].mxu0
      %v1369 = vadd.f32 0.0, %v1368
      %v1370 = vpop.f32.mrb[0].mxu0
      %1371 = vmatprep.mubr.bf16.mxu0 0
      %1372 = vmatmul.mubr.bf16.gmra.mrb[0].mxu0 %v1239
      %v1373 = vpop.f32.mrb[0].mxu0
      %v1374 = vadd.f32 0.0, %v1373
      %v1375 = vpop.f32.mrb[0].mxu0
      %v1376 = vpop.f32.mrb[0].mxu0
      %v1377 = vadd.f32 0.0, %v1376
      %v1378 = vpop.f32.mrb[0].mxu0
      %1379 = vmatprep.mubr.bf16.mxu0 0
      %1380 = vmatmul.mubr.bf16.gmra.mrb[0].mxu0 %v1242
      %v1381 = vpop.f32.mrb[0].mxu0
      %v1382 = vadd.f32 0.0, %v1381
      %v1383 = vpop.f32.mrb[0].mxu0
      %v1384 = vpop.f32.mrb[0].mxu0
      %v1385 = vadd.f32 0.0, %v1384
      %v1386 = vpop.f32.mrb[0].mxu0
      %1387 = vmatprep.mubr.bf16.mxu0 0
      %1388 = vmatmul.mubr.bf16.gmra.mrb[0].mxu0 %v1245
      %v1389 = vpop.f32.mrb[0].mxu0
      %v1390 = vadd.f32 0.0, %v1389
      %v1391 = vpop.f32.mrb[0].mxu0
      %v1392 = vpop.f32.mrb[0].mxu0
      %v1393 = vadd.f32 0.0, %v1392
      %v1394 = vpop.f32.mrb[0].mxu0
      %1395 = vmatprep.mubr.bf16.mxu0 0
      %1396 = vmatmul.mubr.bf16.gmra.mrb[0].mxu0 %v1248
      %v1397 = vpop.f32.mrb[0].mxu0
      %v1398 = vadd.f32 0.0, %v1397
      %v1399 = vpop.f32.mrb[0].mxu0
      %v1400 = vpop.f32.mrb[0].mxu0
      %v1401 = vadd.f32 0.0, %v1400
      %v1402 = vpop.f32.mrb[0].mxu0
      %1403 = vmatprep.mubr.bf16.mxu0 0
      %1404 = vmatmul.mubr.bf16.gmra.mrb[0].mxu0 %v1251
      %v1405 = vpop.f32.mrb[0].mxu0
      %v1406 = vadd.f32 0.0, %v1405
      %v1407 = vpop.f32.mrb[0].mxu0
      %v1408 = vpop.f32.mrb[0].mxu0
      %v1409 = vadd.f32 0.0, %v1408
      %v1410 = vpop.f32.mrb[0].mxu0
      %1411 = vmatprep.mubr.bf16.mxu0 0
      %1412 = vmatmul.mubr.bf16.gmra.mrb[0].mxu0 %v1254
      %v1413 = vpop.f32.mrb[0].mxu0
      %v1414 = vadd.f32 0.0, %v1413
      %v1415 = vpop.f32.mrb[0].mxu0
      %v1416 = vpop.f32.mrb[0].mxu0
      %v1417 = vadd.f32 0.0, %v1416
      %v1418 = vpop.f32.mrb[0].mxu0
      %1419 = vdwg.mxu0
      %v1420 = vadd.f32 %v853, %v1294
      %v1421 = vadd.f32 %v856, %v1297
      %v1422 = vadd.f32 %v861, %v1302
      %v1423 = vadd.f32 %v864, %v1305
      %v1424 = vadd.f32 %v869, %v1310
      %v1425 = vadd.f32 %v872, %v1313
      %v1426 = vadd.f32 %v877, %v1318
      %v1427 = vadd.f32 %v880, %v1321
      %v1428 = vadd.f32 %v885, %v1326
      %v1429 = vadd.f32 %v888, %v1329
      %v1430 = vadd.f32 %v893, %v1334
      %v1431 = vadd.f32 %v896, %v1337
      %v1432 = vadd.f32 %v901, %v1342
      %v1433 = vadd.f32 %v904, %v1345
      %v1434 = vadd.f32 %v909, %v1350
      %v1435 = vadd.f32 %v912, %v1353
      %v1436 = vadd.f32 %v917, %v1358
      %v1437 = vadd.f32 %v920, %v1361
      %v1438 = vadd.f32 %v925, %v1366
      %v1439 = vadd.f32 %v928, %v1369
      %v1440 = vadd.f32 %v933, %v1374
      %v1441 = vadd.f32 %v936, %v1377
      %v1442 = vadd.f32 %v941, %v1382
      %v1443 = vadd.f32 %v944, %v1385
      %v1444 = vadd.f32 %v949, %v1390
      %v1445 = vadd.f32 %v952, %v1393
      %v1446 = vadd.f32 %v957, %v1398
      %v1447 = vadd.f32 %v960, %v1401
      %v1448 = vadd.f32 %v965, %v1406
      %v1449 = vadd.f32 %v968, %v1409
      %v1450 = vadd.f32 %v973, %v1414
      %v1451 = vadd.f32 %v976, %v1417
      %s1452 = scalar_lea.vmem %s198, 24
      %v1453 = vld [vmem:[%s1452] sm:$0xf]
      %v1454 = vld [vmem:[%s1452 + $0x4] sm:$0xf]
      %v1455 = vld [vmem:[%s1452 + $0xc] sm:$0xf]
      %v1456 = vld [vmem:[%s1452 + $0x10] sm:$0xf]
      %v1457 = vld [vmem:[%s1452 + $0x18] sm:$0xf]
      %v1458 = vld [vmem:[%s1452 + $0x1c] sm:$0xf]
      %v1459 = vld [vmem:[%s1452 + $0x24] sm:$0xf]
      %v1460 = vld [vmem:[%s1452 + $0x28] sm:$0xf]
      %v1461 = vld [vmem:[%s1452 + $0x30] sm:$0xf]
      %v1462 = vld [vmem:[%s1452 + $0x34] sm:$0xf]
      %v1463 = vld [vmem:[%s1452 + $0x3c] sm:$0xf]
      %v1464 = vld [vmem:[%s1452 + $0x40] sm:$0xf]
      %v1465 = vld [vmem:[%s1452 + $0x48] sm:$0xf]
      %v1466 = vld [vmem:[%s1452 + $0x4c] sm:$0xf]
      %v1467 = vld [vmem:[%s1452 + $0x54] sm:$0xf]
      %v1468 = vld [vmem:[%s1452 + $0x58] sm:$0xf]
      %v1469 = vld [vmem:[%s1452 + $0x60] sm:$0xf]
      %v1470 = vld [vmem:[%s1452 + $0x64] sm:$0xf]
      %v1471 = vld [vmem:[%s1452 + $0x6c] sm:$0xf]
      %v1472 = vld [vmem:[%s1452 + $0x70] sm:$0xf]
      %v1473 = vld [vmem:[%s1452 + $0x78] sm:$0xf]
      %v1474 = vld [vmem:[%s1452 + $0x7c] sm:$0xf]
      %v1475 = vld [vmem:[%s1452 + $0x84] sm:$0xf]
      %v1476 = vld [vmem:[%s1452 + $0x88] sm:$0xf]
      %v1477 = vld [vmem:[%s1452 + $0x90] sm:$0xf]
      %v1478 = vld [vmem:[%s1452 + $0x94] sm:$0xf]
      %v1479 = vld [vmem:[%s1452 + $0x9c] sm:$0xf]
      %v1480 = vld [vmem:[%s1452 + $0xa0] sm:$0xf]
      %v1481 = vld [vmem:[%s1452 + $0xa8] sm:$0xf]
      %v1482 = vld [vmem:[%s1452 + $0xac] sm:$0xf]
      %v1483 = vld [vmem:[%s1452 + $0xb4] sm:$0xf]
      %v1484 = vld [vmem:[%s1452 + $0xb8] sm:$0xf]
      %s1485 = scalar_lea.vmem %s1, 6
      %v1486 = vld [vmem:[%s1485] sm:$0x3]
      %v1519 = vunpack.c.l.b16 %v1453
      %v1520 = vunpack.c.l.b16 %v1454
      %v1521 = vunpack.c.l.b16 %v1455
      %v1522 = vunpack.c.l.b16 %v1456
      %v1523 = vunpack.c.l.b16 %v1457
      %v1524 = vunpack.c.l.b16 %v1458
      %v1525 = vunpack.c.l.b16 %v1459
      %v1526 = vunpack.c.l.b16 %v1460
      %v1527 = vunpack.c.l.b16 %v1461
      %v1528 = vunpack.c.l.b16 %v1462
      %v1529 = vunpack.c.l.b16 %v1463
      %v1530 = vunpack.c.l.b16 %v1464
      %v1531 = vunpack.c.l.b16 %v1465
      %v1532 = vunpack.c.l.b16 %v1466
      %v1533 = vunpack.c.l.b16 %v1467
      %v1534 = vunpack.c.l.b16 %v1468
      %v1535 = vunpack.c.l.b16 %v1469
      %v1536 = vunpack.c.l.b16 %v1470
      %v1537 = vunpack.c.l.b16 %v1471
      %v1538 = vunpack.c.l.b16 %v1472
      %v1539 = vunpack.c.l.b16 %v1473
      %v1540 = vunpack.c.l.b16 %v1474
      %v1541 = vunpack.c.l.b16 %v1475
      %v1542 = vunpack.c.l.b16 %v1476
      %v1543 = vunpack.c.l.b16 %v1477
      %v1544 = vunpack.c.l.b16 %v1478
      %v1545 = vunpack.c.l.b16 %v1479
      %v1546 = vunpack.c.l.b16 %v1480
      %v1547 = vunpack.c.l.b16 %v1481
      %v1548 = vunpack.c.l.b16 %v1482
      %v1549 = vunpack.c.l.b16 %v1483
      %v1550 = vunpack.c.l.b16 %v1484
      %v1551 = vpack.c.b16 %v1520, %v1519
      %v1552 = vpack.c.b16 %v1522, %v1521
      %v1553 = vpack.c.b16 %v1524, %v1523
      %v1554 = vpack.c.b16 %v1526, %v1525
      %v1555 = vpack.c.b16 %v1528, %v1527
      %v1556 = vpack.c.b16 %v1530, %v1529
      %v1557 = vpack.c.b16 %v1532, %v1531
      %v1558 = vpack.c.b16 %v1534, %v1533
      %v1559 = vpack.c.b16 %v1536, %v1535
      %v1560 = vpack.c.b16 %v1538, %v1537
      %v1561 = vpack.c.b16 %v1540, %v1539
      %v1562 = vpack.c.b16 %v1542, %v1541
      %v1563 = vpack.c.b16 %v1544, %v1543
      %v1564 = vpack.c.b16 %v1546, %v1545
      %v1565 = vpack.c.b16 %v1548, %v1547
      %v1566 = vpack.c.b16 %v1550, %v1549
      %v1568 = vsel %vm489, %v1551, 0
      %v1571 = vsel %vm489, %v1552, 0
      %v1574 = vsel %vm489, %v1553, 0
      %v1577 = vsel %vm489, %v1554, 0
      %v1580 = vsel %vm489, %v1555, 0
      %v1583 = vsel %vm489, %v1556, 0
      %v1586 = vsel %vm489, %v1557, 0
      %v1589 = vsel %vm489, %v1558, 0
      %v1592 = vsel %vm489, %v1559, 0
      %v1595 = vsel %vm489, %v1560, 0
      %v1598 = vsel %vm489, %v1561, 0
      %v1601 = vsel %vm489, %v1562, 0
      %v1604 = vsel %vm489, %v1563, 0
      %v1607 = vsel %vm489, %v1564, 0
      %v1610 = vsel %vm489, %v1565, 0
      %v1613 = vsel %vm489, %v1566, 0
      %v1616 = vsel %vm538, %v1486, 0
      %1618 = vmatprep.subr.bf16.mxu0 0
      %1619 = vmatpush1.bf16.msra.mxu0 %v1616
      %1620 = vmatprep.subr.bf16.mxu0 0
      %1621 = vmatpush1.bf16.msra.mxu0 0
      %1622 = vmatprep.subr.bf16.mxu0 0
      %1623 = vmatpush1.bf16.msra.mxu0 0
      %1624 = vmatprep.subr.bf16.mxu0 0
      %1625 = vmatpush1.bf16.msra.mxu0 0
      %1626 = vmatprep.subr.bf16.mxu0 0
      %1627 = vmatpush1.bf16.msra.mxu0 0
      %1628 = vmatprep.subr.bf16.mxu0 0
      %1629 = vmatpush1.bf16.msra.mxu0 0
      %1630 = vmatprep.subr.bf16.mxu0 0
      %1631 = vmatpush1.bf16.msra.mxu0 0
      %1632 = vmatprep.subr.bf16.mxu0 0
      %1633 = vmatpush1.bf16.msra.mxu0 0
      %1634 = vmatprep.subr.bf16.mxu0 0
      %1635 = vmatpush1.bf16.msra.mxu0 0
      %1636 = vmatprep.subr.bf16.mxu0 0
      %1637 = vmatpush1.bf16.msra.mxu0 0
      %1638 = vmatprep.subr.bf16.mxu0 0
      %1639 = vmatpush1.bf16.msra.mxu0 0
      %1640 = vmatprep.subr.bf16.mxu0 0
      %1641 = vmatpush1.bf16.msra.mxu0 0
      %1642 = vmatprep.subr.bf16.mxu0 0
      %1643 = vmatpush1.bf16.msra.mxu0 0
      %1644 = vmatprep.subr.bf16.mxu0 0
      %1645 = vmatpush1.bf16.msra.mxu0 0
      %1646 = vmatprep.subr.bf16.mxu0 0
      %1647 = vmatpush1.bf16.msra.mxu0 0
      %1648 = vmatprep.subr.bf16.mxu0 0
      %1649 = vmatpush1.bf16.msra.mxu0 0
      %1650 = vmatprep.mubr.bf16.mxu0 0
      %1651 = vmatmul.mubr.bf16.gmra.mrb[0].mxu0 %v1568
      %v1652 = vpop.f32.mrb[0].mxu0
      %v1653 = vadd.f32 0.0, %v1652
      %v1654 = vpop.f32.mrb[0].mxu0
      %v1655 = vpop.f32.mrb[0].mxu0
      %v1656 = vadd.f32 0.0, %v1655
      %v1657 = vpop.f32.mrb[0].mxu0
      %1658 = vmatprep.mubr.bf16.mxu0 0
      %1659 = vmatmul.mubr.bf16.gmra.mrb[0].mxu0 %v1571
      %v1660 = vpop.f32.mrb[0].mxu0
      %v1661 = vadd.f32 0.0, %v1660
      %v1662 = vpop.f32.mrb[0].mxu0
      %v1663 = vpop.f32.mrb[0].mxu0
      %v1664 = vadd.f32 0.0, %v1663
      %v1665 = vpop.f32.mrb[0].mxu0
      %1666 = vmatprep.mubr.bf16.mxu0 0
      %1667 = vmatmul.mubr.bf16.gmra.mrb[0].mxu0 %v1574
      %v1668 = vpop.f32.mrb[0].mxu0
      %v1669 = vadd.f32 0.0, %v1668
      %v1670 = vpop.f32.mrb[0].mxu0
      %v1671 = vpop.f32.mrb[0].mxu0
      %v1672 = vadd.f32 0.0, %v1671
      %v1673 = vpop.f32.mrb[0].mxu0
      %1674 = vmatprep.mubr.bf16.mxu0 0
      %1675 = vmatmul.mubr.bf16.gmra.mrb[0].mxu0 %v1577
      %v1676 = vpop.f32.mrb[0].mxu0
      %v1677 = vadd.f32 0.0, %v1676
      %v1678 = vpop.f32.mrb[0].mxu0
      %v1679 = vpop.f32.mrb[0].mxu0
      %v1680 = vadd.f32 0.0, %v1679
      %v1681 = vpop.f32.mrb[0].mxu0
      %1682 = vmatprep.mubr.bf16.mxu0 0
      %1683 = vmatmul.mubr.bf16.gmra.mrb[0].mxu0 %v1580
      %v1684 = vpop.f32.mrb[0].mxu0
      %v1685 = vadd.f32 0.0, %v1684
      %v1686 = vpop.f32.mrb[0].mxu0
      %v1687 = vpop.f32.mrb[0].mxu0
      %v1688 = vadd.f32 0.0, %v1687
      %v1689 = vpop.f32.mrb[0].mxu0
      %1690 = vmatprep.mubr.bf16.mxu0 0
      %1691 = vmatmul.mubr.bf16.gmra.mrb[0].mxu0 %v1583
      %v1692 = vpop.f32.mrb[0].mxu0
      %v1693 = vadd.f32 0.0, %v1692
      %v1694 = vpop.f32.mrb[0].mxu0
      %v1695 = vpop.f32.mrb[0].mxu0
      %v1696 = vadd.f32 0.0, %v1695
      %v1697 = vpop.f32.mrb[0].mxu0
      %1698 = vmatprep.mubr.bf16.mxu0 0
      %1699 = vmatmul.mubr.bf16.gmra.mrb[0].mxu0 %v1586
      %v1700 = vpop.f32.mrb[0].mxu0
      %v1701 = vadd.f32 0.0, %v1700
      %v1702 = vpop.f32.mrb[0].mxu0
      %v1703 = vpop.f32.mrb[0].mxu0
      %v1704 = vadd.f32 0.0, %v1703
      %v1705 = vpop.f32.mrb[0].mxu0
      %1706 = vmatprep.mubr.bf16.mxu0 0
      %1707 = vmatmul.mubr.bf16.gmra.mrb[0].mxu0 %v1589
      %v1708 = vpop.f32.mrb[0].mxu0
      %v1709 = vadd.f32 0.0, %v1708
      %v1710 = vpop.f32.mrb[0].mxu0
      %v1711 = vpop.f32.mrb[0].mxu0
      %v1712 = vadd.f32 0.0, %v1711
      %v1713 = vpop.f32.mrb[0].mxu0
      %1714 = vmatprep.mubr.bf16.mxu0 0
      %1715 = vmatmul.mubr.bf16.gmra.mrb[0].mxu0 %v1592
      %v1716 = vpop.f32.mrb[0].mxu0
      %v1717 = vadd.f32 0.0, %v1716
      %v1718 = vpop.f32.mrb[0].mxu0
      %v1719 = vpop.f32.mrb[0].mxu0
      %v1720 = vadd.f32 0.0, %v1719
      %v1721 = vpop.f32.mrb[0].mxu0
      %1722 = vmatprep.mubr.bf16.mxu0 0
      %1723 = vmatmul.mubr.bf16.gmra.mrb[0].mxu0 %v1595
      %v1724 = vpop.f32.mrb[0].mxu0
      %v1725 = vadd.f32 0.0, %v1724
      %v1726 = vpop.f32.mrb[0].mxu0
      %v1727 = vpop.f32.mrb[0].mxu0
      %v1728 = vadd.f32 0.0, %v1727
      %v1729 = vpop.f32.mrb[0].mxu0
      %1730 = vmatprep.mubr.bf16.mxu0 0
      %1731 = vmatmul.mubr.bf16.gmra.mrb[0].mxu0 %v1598
      %v1732 = vpop.f32.mrb[0].mxu0
      %v1733 = vadd.f32 0.0, %v1732
      %v1734 = vpop.f32.mrb[0].mxu0
      %v1735 = vpop.f32.mrb[0].mxu0
      %v1736 = vadd.f32 0.0, %v1735
      %v1737 = vpop.f32.mrb[0].mxu0
      %1738 = vmatprep.mubr.bf16.mxu0 0
      %1739 = vmatmul.mubr.bf16.gmra.mrb[0].mxu0 %v1601
      %v1740 = vpop.f32.mrb[0].mxu0
      %v1741 = vadd.f32 0.0, %v1740
      %v1742 = vpop.f32.mrb[0].mxu0
      %v1743 = vpop.f32.mrb[0].mxu0
      %v1744 = vadd.f32 0.0, %v1743
      %v1745 = vpop.f32.mrb[0].mxu0
      %1746 = vmatprep.mubr.bf16.mxu0 0
      %1747 = vmatmul.mubr.bf16.gmra.mrb[0].mxu0 %v1604
      %v1748 = vpop.f32.mrb[0].mxu0
      %v1749 = vadd.f32 0.0, %v1748
      %v1750 = vpop.f32.mrb[0].mxu0
      %v1751 = vpop.f32.mrb[0].mxu0
      %v1752 = vadd.f32 0.0, %v1751
      %v1753 = vpop.f32.mrb[0].mxu0
      %1754 = vmatprep.mubr.bf16.mxu0 0
      %1755 = vmatmul.mubr.bf16.gmra.mrb[0].mxu0 %v1607
      %v1756 = vpop.f32.mrb[0].mxu0
      %v1757 = vadd.f32 0.0, %v1756
      %v1758 = vpop.f32.mrb[0].mxu0
      %v1759 = vpop.f32.mrb[0].mxu0
      %v1760 = vadd.f32 0.0, %v1759
      %v1761 = vpop.f32.mrb[0].mxu0
      %1762 = vmatprep.mubr.bf16.mxu0 0
      %1763 = vmatmul.mubr.bf16.gmra.mrb[0].mxu0 %v1610
      %v1764 = vpop.f32.mrb[0].mxu0
      %v1765 = vadd.f32 0.0, %v1764
      %v1766 = vpop.f32.mrb[0].mxu0
      %v1767 = vpop.f32.mrb[0].mxu0
      %v1768 = vadd.f32 0.0, %v1767
      %v1769 = vpop.f32.mrb[0].mxu0
      %1770 = vmatprep.mubr.bf16.mxu0 0
      %1771 = vmatmul.mubr.bf16.gmra.mrb[0].mxu0 %v1613
      %v1772 = vpop.f32.mrb[0].mxu0
      %v1773 = vadd.f32 0.0, %v1772
      %v1774 = vpop.f32.mrb[0].mxu0
      %v1775 = vpop.f32.mrb[0].mxu0
      %v1776 = vadd.f32 0.0, %v1775
      %v1777 = vpop.f32.mrb[0].mxu0
      %1778 = vdwg.mxu0
      %v1779 = vadd.f32 %v1420, %v1653
      %v1780 = vadd.f32 %v1421, %v1656
      %v1781 = vadd.f32 %v1422, %v1661
      %v1782 = vadd.f32 %v1423, %v1664
      %v1783 = vadd.f32 %v1424, %v1669
      %v1784 = vadd.f32 %v1425, %v1672
      %v1785 = vadd.f32 %v1426, %v1677
      %v1786 = vadd.f32 %v1427, %v1680
      %v1787 = vadd.f32 %v1428, %v1685
      %v1788 = vadd.f32 %v1429, %v1688
      %v1789 = vadd.f32 %v1430, %v1693
      %v1790 = vadd.f32 %v1431, %v1696
      %v1791 = vadd.f32 %v1432, %v1701
      %v1792 = vadd.f32 %v1433, %v1704
      %v1793 = vadd.f32 %v1434, %v1709
      %v1794 = vadd.f32 %v1435, %v1712
      %v1795 = vadd.f32 %v1436, %v1717
      %v1796 = vadd.f32 %v1437, %v1720
      %v1797 = vadd.f32 %v1438, %v1725
      %v1798 = vadd.f32 %v1439, %v1728
      %v1799 = vadd.f32 %v1440, %v1733
      %v1800 = vadd.f32 %v1441, %v1736
      %v1801 = vadd.f32 %v1442, %v1741
      %v1802 = vadd.f32 %v1443, %v1744
      %v1803 = vadd.f32 %v1444, %v1749
      %v1804 = vadd.f32 %v1445, %v1752
      %v1805 = vadd.f32 %v1446, %v1757
      %v1806 = vadd.f32 %v1447, %v1760
      %v1807 = vadd.f32 %v1448, %v1765
      %v1808 = vadd.f32 %v1449, %v1768
      %v1809 = vadd.f32 %v1450, %v1773
      %v1810 = vadd.f32 %v1451, %v1776
      %v1811 = vld [vmem:[%s1452] sm:$0xe]
      %v1812 = vld [vmem:[%s1452 + $0x4] sm:$0xf]
      %v1813 = vld [vmem:[%s1452 + $0x8] sm:$0x1]
      %v1814 = vld [vmem:[%s1452 + $0xc] sm:$0xe]
      %v1815 = vld [vmem:[%s1452 + $0x10] sm:$0xf]
      %v1816 = vld [vmem:[%s1452 + $0x14] sm:$0x1]
      %v1817 = vld [vmem:[%s1452 + $0x18] sm:$0xe]
      %v1818 = vld [vmem:[%s1452 + $0x1c] sm:$0xf]
      %v1819 = vld [vmem:[%s1452 + $0x20] sm:$0x1]
      %v1820 = vld [vmem:[%s1452 + $0x24] sm:$0xe]
      %v1821 = vld [vmem:[%s1452 + $0x28] sm:$0xf]
      %v1822 = vld [vmem:[%s1452 + $0x2c] sm:$0x1]
      %v1823 = vld [vmem:[%s1452 + $0x30] sm:$0xe]
      %v1824 = vld [vmem:[%s1452 + $0x34] sm:$0xf]
      %v1825 = vld [vmem:[%s1452 + $0x38] sm:$0x1]
      %v1826 = vld [vmem:[%s1452 + $0x3c] sm:$0xe]
      %v1827 = vld [vmem:[%s1452 + $0x40] sm:$0xf]
      %v1828 = vld [vmem:[%s1452 + $0x44] sm:$0x1]
      %v1829 = vld [vmem:[%s1452 + $0x48] sm:$0xe]
      %v1830 = vld [vmem:[%s1452 + $0x4c] sm:$0xf]
      %v1831 = vld [vmem:[%s1452 + $0x50] sm:$0x1]
      %v1832 = vld [vmem:[%s1452 + $0x54] sm:$0xe]
      %v1833 = vld [vmem:[%s1452 + $0x58] sm:$0xf]
      %v1834 = vld [vmem:[%s1452 + $0x5c] sm:$0x1]
      %v1835 = vld [vmem:[%s1452 + $0x60] sm:$0xe]
      %v1836 = vld [vmem:[%s1452 + $0x64] sm:$0xf]
      %v1837 = vld [vmem:[%s1452 + $0x68] sm:$0x1]
      %v1838 = vld [vmem:[%s1452 + $0x6c] sm:$0xe]
      %v1839 = vld [vmem:[%s1452 + $0x70] sm:$0xf]
      %v1840 = vld [vmem:[%s1452 + $0x74] sm:$0x1]
      %v1841 = vld [vmem:[%s1452 + $0x78] sm:$0xe]
      %v1842 = vld [vmem:[%s1452 + $0x7c] sm:$0xf]
      %v1843 = vld [vmem:[%s1452 + $0x80] sm:$0x1]
      %v1844 = vld [vmem:[%s1452 + $0x84] sm:$0xe]
      %v1845 = vld [vmem:[%s1452 + $0x88] sm:$0xf]
      %v1846 = vld [vmem:[%s1452 + $0x8c] sm:$0x1]
      %v1847 = vld [vmem:[%s1452 + $0x90] sm:$0xe]
      %v1848 = vld [vmem:[%s1452 + $0x94] sm:$0xf]
      %v1849 = vld [vmem:[%s1452 + $0x98] sm:$0x1]
      %v1850 = vld [vmem:[%s1452 + $0x9c] sm:$0xe]
      %v1851 = vld [vmem:[%s1452 + $0xa0] sm:$0xf]
      %v1852 = vld [vmem:[%s1452 + $0xa4] sm:$0x1]
      %v1853 = vld [vmem:[%s1452 + $0xa8] sm:$0xe]
      %v1854 = vld [vmem:[%s1452 + $0xac] sm:$0xf]
      %v1855 = vld [vmem:[%s1452 + $0xb0] sm:$0x1]
      %v1856 = vld [vmem:[%s1452 + $0xb4] sm:$0xe]
      %v1857 = vld [vmem:[%s1452 + $0xb8] sm:$0xf]
      %v1858 = vld [vmem:[%s1452 + $0xbc] sm:$0x1]
      %v1907 = vrot.slane %v1811, 5
      %v1908 = vrot.slane %v1907, 4
      %v1909 = vrot.slane %v1812, 5
      %v1910 = vsel %vm326, %v1908, %v1909
      %v1911 = vrot.slane %v1909, 4
      %v1912 = vrot.slane %v1813, 5
      %v1913 = vsel %vm326, %v1911, %v1912
      %v1914 = vrot.slane %v1814, 5
      %v1915 = vrot.slane %v1914, 4
      %v1916 = vrot.slane %v1815, 5
      %v1917 = vsel %vm326, %v1915, %v1916
      %v1918 = vrot.slane %v1916, 4
      %v1919 = vrot.slane %v1816, 5
      %v1920 = vsel %vm326, %v1918, %v1919
      %v1921 = vrot.slane %v1817, 5
      %v1922 = vrot.slane %v1921, 4
      %v1923 = vrot.slane %v1818, 5
      %v1924 = vsel %vm326, %v1922, %v1923
      %v1925 = vrot.slane %v1923, 4
      %v1926 = vrot.slane %v1819, 5
      %v1927 = vsel %vm326, %v1925, %v1926
      %v1928 = vrot.slane %v1820, 5
      %v1929 = vrot.slane %v1928, 4
      %v1930 = vrot.slane %v1821, 5
      %v1931 = vsel %vm326, %v1929, %v1930
      %v1932 = vrot.slane %v1930, 4
      %v1933 = vrot.slane %v1822, 5
      %v1934 = vsel %vm326, %v1932, %v1933
      %v1935 = vrot.slane %v1823, 5
      %v1936 = vrot.slane %v1935, 4
      %v1937 = vrot.slane %v1824, 5
      %v1938 = vsel %vm326, %v1936, %v1937
      %v1939 = vrot.slane %v1937, 4
      %v1940 = vrot.slane %v1825, 5
      %v1941 = vsel %vm326, %v1939, %v1940
      %v1942 = vrot.slane %v1826, 5
      %v1943 = vrot.slane %v1942, 4
      %v1944 = vrot.slane %v1827, 5
      %v1945 = vsel %vm326, %v1943, %v1944
      %v1946 = vrot.slane %v1944, 4
      %v1947 = vrot.slane %v1828, 5
      %v1948 = vsel %vm326, %v1946, %v1947
      %v1949 = vrot.slane %v1829, 5
      %v1950 = vrot.slane %v1949, 4
      %v1951 = vrot.slane %v1830, 5
      %v1952 = vsel %vm326, %v1950, %v1951
      %v1953 = vrot.slane %v1951, 4
      %v1954 = vrot.slane %v1831, 5
      %v1955 = vsel %vm326, %v1953, %v1954
      %v1956 = vrot.slane %v1832, 5
      %v1957 = vrot.slane %v1956, 4
      %v1958 = vrot.slane %v1833, 5
      %v1959 = vsel %vm326, %v1957, %v1958
      %v1960 = vrot.slane %v1958, 4
      %v1961 = vrot.slane %v1834, 5
      %v1962 = vsel %vm326, %v1960, %v1961
      %v1963 = vrot.slane %v1835, 5
      %v1964 = vrot.slane %v1963, 4
      %v1965 = vrot.slane %v1836, 5
      %v1966 = vsel %vm326, %v1964, %v1965
      %v1967 = vrot.slane %v1965, 4
      %v1968 = vrot.slane %v1837, 5
      %v1969 = vsel %vm326, %v1967, %v1968
      %v1970 = vrot.slane %v1838, 5
      %v1971 = vrot.slane %v1970, 4
      %v1972 = vrot.slane %v1839, 5
      %v1973 = vsel %vm326, %v1971, %v1972
      %v1974 = vrot.slane %v1972, 4
      %v1975 = vrot.slane %v1840, 5
      %v1976 = vsel %vm326, %v1974, %v1975
      %v1977 = vrot.slane %v1841, 5
      %v1978 = vrot.slane %v1977, 4
      %v1979 = vrot.slane %v1842, 5
      %v1980 = vsel %vm326, %v1978, %v1979
      %v1981 = vrot.slane %v1979, 4
      %v1982 = vrot.slane %v1843, 5
      %v1983 = vsel %vm326, %v1981, %v1982
      %v1984 = vrot.slane %v1844, 5
      %v1985 = vrot.slane %v1984, 4
      %v1986 = vrot.slane %v1845, 5
      %v1987 = vsel %vm326, %v1985, %v1986
      %v1988 = vrot.slane %v1986, 4
      %v1989 = vrot.slane %v1846, 5
      %v1990 = vsel %vm326, %v1988, %v1989
      %v1991 = vrot.slane %v1847, 5
      %v1992 = vrot.slane %v1991, 4
      %v1993 = vrot.slane %v1848, 5
      %v1994 = vsel %vm326, %v1992, %v1993
      %v1995 = vrot.slane %v1993, 4
      %v1996 = vrot.slane %v1849, 5
      %v1997 = vsel %vm326, %v1995, %v1996
      %v1998 = vrot.slane %v1850, 5
      %v1999 = vrot.slane %v1998, 4
      %v2000 = vrot.slane %v1851, 5
      %v2001 = vsel %vm326, %v1999, %v2000
      %v2002 = vrot.slane %v2000, 4
      %v2003 = vrot.slane %v1852, 5
      %v2004 = vsel %vm326, %v2002, %v2003
      %v2005 = vrot.slane %v1853, 5
      %v2006 = vrot.slane %v2005, 4
      %v2007 = vrot.slane %v1854, 5
      %v2008 = vsel %vm326, %v2006, %v2007
      %v2009 = vrot.slane %v2007, 4
      %v2010 = vrot.slane %v1855, 5
      %v2011 = vsel %vm326, %v2009, %v2010
      %v2012 = vrot.slane %v1856, 5
      %v2013 = vrot.slane %v2012, 4
      %v2014 = vrot.slane %v1857, 5
      %v2015 = vsel %vm326, %v2013, %v2014
      %v2016 = vrot.slane %v2014, 4
      %v2017 = vrot.slane %v1858, 5
      %v2018 = vsel %vm326, %v2016, %v2017
      %s2019 = scalar_lea.vmem %s1, 8
      %v2020 = vld [vmem:[%s2019] sm:$0x3]
      %v2021 = vunpack.c.l.b16 %v1910
      %v2022 = vunpack.c.l.b16 %v1913
      %v2023 = vunpack.c.l.b16 %v1917
      %v2024 = vunpack.c.l.b16 %v1920
      %v2025 = vunpack.c.l.b16 %v1924
      %v2026 = vunpack.c.l.b16 %v1927
      %v2027 = vunpack.c.l.b16 %v1931
      %v2028 = vunpack.c.l.b16 %v1934
      %v2029 = vunpack.c.l.b16 %v1938
      %v2030 = vunpack.c.l.b16 %v1941
      %v2031 = vunpack.c.l.b16 %v1945
      %v2032 = vunpack.c.l.b16 %v1948
      %v2033 = vunpack.c.l.b16 %v1952
      %v2034 = vunpack.c.l.b16 %v1955
      %v2035 = vunpack.c.l.b16 %v1959
      %v2036 = vunpack.c.l.b16 %v1962
      %v2037 = vunpack.c.l.b16 %v1966
      %v2038 = vunpack.c.l.b16 %v1969
      %v2039 = vunpack.c.l.b16 %v1973
      %v2040 = vunpack.c.l.b16 %v1976
      %v2041 = vunpack.c.l.b16 %v1980
      %v2042 = vunpack.c.l.b16 %v1983
      %v2043 = vunpack.c.l.b16 %v1987
      %v2044 = vunpack.c.l.b16 %v1990
      %v2045 = vunpack.c.l.b16 %v1994
      %v2046 = vunpack.c.l.b16 %v1997
      %v2047 = vunpack.c.l.b16 %v2001
      %v2048 = vunpack.c.l.b16 %v2004
      %v2049 = vunpack.c.l.b16 %v2008
      %v2050 = vunpack.c.l.b16 %v2011
      %v2051 = vunpack.c.l.b16 %v2015
      %v2052 = vunpack.c.l.b16 %v2018
      %v2053 = vpack.c.b16 %v2022, %v2021
      %v2054 = vpack.c.b16 %v2024, %v2023
      %v2055 = vpack.c.b16 %v2026, %v2025
      %v2056 = vpack.c.b16 %v2028, %v2027
      %v2057 = vpack.c.b16 %v2030, %v2029
      %v2058 = vpack.c.b16 %v2032, %v2031
      %v2059 = vpack.c.b16 %v2034, %v2033
      %v2060 = vpack.c.b16 %v2036, %v2035
      %v2061 = vpack.c.b16 %v2038, %v2037
      %v2062 = vpack.c.b16 %v2040, %v2039
      %v2063 = vpack.c.b16 %v2042, %v2041
      %v2064 = vpack.c.b16 %v2044, %v2043
      %v2065 = vpack.c.b16 %v2046, %v2045
      %v2066 = vpack.c.b16 %v2048, %v2047
      %v2067 = vpack.c.b16 %v2050, %v2049
      %v2068 = vpack.c.b16 %v2052, %v2051
      %v2070 = vsel %vm489, %v2053, 0
      %v2073 = vsel %vm489, %v2054, 0
      %v2076 = vsel %vm489, %v2055, 0
      %v2079 = vsel %vm489, %v2056, 0
      %v2082 = vsel %vm489, %v2057, 0
      %v2085 = vsel %vm489, %v2058, 0
      %v2088 = vsel %vm489, %v2059, 0
      %v2091 = vsel %vm489, %v2060, 0
      %v2094 = vsel %vm489, %v2061, 0
      %v2097 = vsel %vm489, %v2062, 0
      %v2100 = vsel %vm489, %v2063, 0
      %v2103 = vsel %vm489, %v2064, 0
      %v2106 = vsel %vm489, %v2065, 0
      %v2109 = vsel %vm489, %v2066, 0
      %v2112 = vsel %vm489, %v2067, 0
      %v2115 = vsel %vm489, %v2068, 0
      %v2118 = vsel %vm538, %v2020, 0
      %2120 = vmatprep.subr.bf16.mxu0 0
      %2121 = vmatpush1.bf16.msra.mxu0 %v2118
      %2122 = vmatprep.subr.bf16.mxu0 0
      %2123 = vmatpush1.bf16.msra.mxu0 0
      %2124 = vmatprep.subr.bf16.mxu0 0
      %2125 = vmatpush1.bf16.msra.mxu0 0
      %2126 = vmatprep.subr.bf16.mxu0 0
      %2127 = vmatpush1.bf16.msra.mxu0 0
      %2128 = vmatprep.subr.bf16.mxu0 0
      %2129 = vmatpush1.bf16.msra.mxu0 0
      %2130 = vmatprep.subr.bf16.mxu0 0
      %2131 = vmatpush1.bf16.msra.mxu0 0
      %2132 = vmatprep.subr.bf16.mxu0 0
      %2133 = vmatpush1.bf16.msra.mxu0 0
      %2134 = vmatprep.subr.bf16.mxu0 0
      %2135 = vmatpush1.bf16.msra.mxu0 0
      %2136 = vmatprep.subr.bf16.mxu0 0
      %2137 = vmatpush1.bf16.msra.mxu0 0
      %2138 = vmatprep.subr.bf16.mxu0 0
      %2139 = vmatpush1.bf16.msra.mxu0 0
      %2140 = vmatprep.subr.bf16.mxu0 0
      %2141 = vmatpush1.bf16.msra.mxu0 0
      %2142 = vmatprep.subr.bf16.mxu0 0
      %2143 = vmatpush1.bf16.msra.mxu0 0
      %2144 = vmatprep.subr.bf16.mxu0 0
      %2145 = vmatpush1.bf16.msra.mxu0 0
      %2146 = vmatprep.subr.bf16.mxu0 0
      %2147 = vmatpush1.bf16.msra.mxu0 0
      %2148 = vmatprep.subr.bf16.mxu0 0
      %2149 = vmatpush1.bf16.msra.mxu0 0
      %2150 = vmatprep.subr.bf16.mxu0 0
      %2151 = vmatpush1.bf16.msra.mxu0 0
      %2152 = vmatprep.mubr.bf16.mxu0 0
      %2153 = vmatmul.mubr.bf16.gmra.mrb[0].mxu0 %v2070
      %v2154 = vpop.f32.mrb[0].mxu0
      %v2155 = vadd.f32 0.0, %v2154
      %v2156 = vpop.f32.mrb[0].mxu0
      %v2157 = vpop.f32.mrb[0].mxu0
      %v2158 = vadd.f32 0.0, %v2157
      %v2159 = vpop.f32.mrb[0].mxu0
      %2160 = vmatprep.mubr.bf16.mxu0 0
      %2161 = vmatmul.mubr.bf16.gmra.mrb[0].mxu0 %v2073
      %v2162 = vpop.f32.mrb[0].mxu0
      %v2163 = vadd.f32 0.0, %v2162
      %v2164 = vpop.f32.mrb[0].mxu0
      %v2165 = vpop.f32.mrb[0].mxu0
      %v2166 = vadd.f32 0.0, %v2165
      %v2167 = vpop.f32.mrb[0].mxu0
      %2168 = vmatprep.mubr.bf16.mxu0 0
      %2169 = vmatmul.mubr.bf16.gmra.mrb[0].mxu0 %v2076
      %v2170 = vpop.f32.mrb[0].mxu0
      %v2171 = vadd.f32 0.0, %v2170
      %v2172 = vpop.f32.mrb[0].mxu0
      %v2173 = vpop.f32.mrb[0].mxu0
      %v2174 = vadd.f32 0.0, %v2173
      %v2175 = vpop.f32.mrb[0].mxu0
      %2176 = vmatprep.mubr.bf16.mxu0 0
      %2177 = vmatmul.mubr.bf16.gmra.mrb[0].mxu0 %v2079
      %v2178 = vpop.f32.mrb[0].mxu0
      %v2179 = vadd.f32 0.0, %v2178
      %v2180 = vpop.f32.mrb[0].mxu0
      %v2181 = vpop.f32.mrb[0].mxu0
      %v2182 = vadd.f32 0.0, %v2181
      %v2183 = vpop.f32.mrb[0].mxu0
      %2184 = vmatprep.mubr.bf16.mxu0 0
      %2185 = vmatmul.mubr.bf16.gmra.mrb[0].mxu0 %v2082
      %v2186 = vpop.f32.mrb[0].mxu0
      %v2187 = vadd.f32 0.0, %v2186
      %v2188 = vpop.f32.mrb[0].mxu0
      %v2189 = vpop.f32.mrb[0].mxu0
      %v2190 = vadd.f32 0.0, %v2189
      %v2191 = vpop.f32.mrb[0].mxu0
      %2192 = vmatprep.mubr.bf16.mxu0 0
      %2193 = vmatmul.mubr.bf16.gmra.mrb[0].mxu0 %v2085
      %v2194 = vpop.f32.mrb[0].mxu0
      %v2195 = vadd.f32 0.0, %v2194
      %v2196 = vpop.f32.mrb[0].mxu0
      %v2197 = vpop.f32.mrb[0].mxu0
      %v2198 = vadd.f32 0.0, %v2197
      %v2199 = vpop.f32.mrb[0].mxu0
      %2200 = vmatprep.mubr.bf16.mxu0 0
      %2201 = vmatmul.mubr.bf16.gmra.mrb[0].mxu0 %v2088
      %v2202 = vpop.f32.mrb[0].mxu0
      %v2203 = vadd.f32 0.0, %v2202
      %v2204 = vpop.f32.mrb[0].mxu0
      %v2205 = vpop.f32.mrb[0].mxu0
      %v2206 = vadd.f32 0.0, %v2205
      %v2207 = vpop.f32.mrb[0].mxu0
      %2208 = vmatprep.mubr.bf16.mxu0 0
      %2209 = vmatmul.mubr.bf16.gmra.mrb[0].mxu0 %v2091
      %v2210 = vpop.f32.mrb[0].mxu0
      %v2211 = vadd.f32 0.0, %v2210
      %v2212 = vpop.f32.mrb[0].mxu0
      %v2213 = vpop.f32.mrb[0].mxu0
      %v2214 = vadd.f32 0.0, %v2213
      %v2215 = vpop.f32.mrb[0].mxu0
      %2216 = vmatprep.mubr.bf16.mxu0 0
      %2217 = vmatmul.mubr.bf16.gmra.mrb[0].mxu0 %v2094
      %v2218 = vpop.f32.mrb[0].mxu0
      %v2219 = vadd.f32 0.0, %v2218
      %v2220 = vpop.f32.mrb[0].mxu0
      %v2221 = vpop.f32.mrb[0].mxu0
      %v2222 = vadd.f32 0.0, %v2221
      %v2223 = vpop.f32.mrb[0].mxu0
      %2224 = vmatprep.mubr.bf16.mxu0 0
      %2225 = vmatmul.mubr.bf16.gmra.mrb[0].mxu0 %v2097
      %v2226 = vpop.f32.mrb[0].mxu0
      %v2227 = vadd.f32 0.0, %v2226
      %v2228 = vpop.f32.mrb[0].mxu0
      %v2229 = vpop.f32.mrb[0].mxu0
      %v2230 = vadd.f32 0.0, %v2229
      %v2231 = vpop.f32.mrb[0].mxu0
      %2232 = vmatprep.mubr.bf16.mxu0 0
      %2233 = vmatmul.mubr.bf16.gmra.mrb[0].mxu0 %v2100
      %v2234 = vpop.f32.mrb[0].mxu0
      %v2235 = vadd.f32 0.0, %v2234
      %v2236 = vpop.f32.mrb[0].mxu0
      %v2237 = vpop.f32.mrb[0].mxu0
      %v2238 = vadd.f32 0.0, %v2237
      %v2239 = vpop.f32.mrb[0].mxu0
      %2240 = vmatprep.mubr.bf16.mxu0 0
      %2241 = vmatmul.mubr.bf16.gmra.mrb[0].mxu0 %v2103
      %v2242 = vpop.f32.mrb[0].mxu0
      %v2243 = vadd.f32 0.0, %v2242
      %v2244 = vpop.f32.mrb[0].mxu0
      %v2245 = vpop.f32.mrb[0].mxu0
      %v2246 = vadd.f32 0.0, %v2245
      %v2247 = vpop.f32.mrb[0].mxu0
      %2248 = vmatprep.mubr.bf16.mxu0 0
      %2249 = vmatmul.mubr.bf16.gmra.mrb[0].mxu0 %v2106
      %v2250 = vpop.f32.mrb[0].mxu0
      %v2251 = vadd.f32 0.0, %v2250
      %v2252 = vpop.f32.mrb[0].mxu0
      %v2253 = vpop.f32.mrb[0].mxu0
      %v2254 = vadd.f32 0.0, %v2253
      %v2255 = vpop.f32.mrb[0].mxu0
      %2256 = vmatprep.mubr.bf16.mxu0 0
      %2257 = vmatmul.mubr.bf16.gmra.mrb[0].mxu0 %v2109
      %v2258 = vpop.f32.mrb[0].mxu0
      %v2259 = vadd.f32 0.0, %v2258
      %v2260 = vpop.f32.mrb[0].mxu0
      %v2261 = vpop.f32.mrb[0].mxu0
      %v2262 = vadd.f32 0.0, %v2261
      %v2263 = vpop.f32.mrb[0].mxu0
      %2264 = vmatprep.mubr.bf16.mxu0 0
      %2265 = vmatmul.mubr.bf16.gmra.mrb[0].mxu0 %v2112
      %v2266 = vpop.f32.mrb[0].mxu0
      %v2267 = vadd.f32 0.0, %v2266
      %v2268 = vpop.f32.mrb[0].mxu0
      %v2269 = vpop.f32.mrb[0].mxu0
      %v2270 = vadd.f32 0.0, %v2269
      %v2271 = vpop.f32.mrb[0].mxu0
      %2272 = vmatprep.mubr.bf16.mxu0 0
      %2273 = vmatmul.mubr.bf16.gmra.mrb[0].mxu0 %v2115
      %v2274 = vpop.f32.mrb[0].mxu0
      %v2275 = vadd.f32 0.0, %v2274
      %v2276 = vpop.f32.mrb[0].mxu0
      %v2277 = vpop.f32.mrb[0].mxu0
      %v2278 = vadd.f32 0.0, %v2277
      %v2279 = vpop.f32.mrb[0].mxu0
      %2280 = vdwg.mxu0
      %v2281 = vadd.f32 %v1779, %v2155
      %v2282 = vadd.f32 %v1780, %v2158
      %v2283 = vadd.f32 %v1781, %v2163
      %v2284 = vadd.f32 %v1782, %v2166
      %v2285 = vadd.f32 %v1783, %v2171
      %v2286 = vadd.f32 %v1784, %v2174
      %v2287 = vadd.f32 %v1785, %v2179
      %v2288 = vadd.f32 %v1786, %v2182
      %v2289 = vadd.f32 %v1787, %v2187
      %v2290 = vadd.f32 %v1788, %v2190
      %v2291 = vadd.f32 %v1789, %v2195
      %v2292 = vadd.f32 %v1790, %v2198
      %v2293 = vadd.f32 %v1791, %v2203
      %v2294 = vadd.f32 %v1792, %v2206
      %v2295 = vadd.f32 %v1793, %v2211
      %v2296 = vadd.f32 %v1794, %v2214
      %v2297 = vadd.f32 %v1795, %v2219
      %v2298 = vadd.f32 %v1796, %v2222
      %v2299 = vadd.f32 %v1797, %v2227
      %v2300 = vadd.f32 %v1798, %v2230
      %v2301 = vadd.f32 %v1799, %v2235
      %v2302 = vadd.f32 %v1800, %v2238
      %v2303 = vadd.f32 %v1801, %v2243
      %v2304 = vadd.f32 %v1802, %v2246
      %v2305 = vadd.f32 %v1803, %v2251
      %v2306 = vadd.f32 %v1804, %v2254
      %v2307 = vadd.f32 %v1805, %v2259
      %v2308 = vadd.f32 %v1806, %v2262
      %v2309 = vadd.f32 %v1807, %v2267
      %v2310 = vadd.f32 %v1808, %v2270
      %v2311 = vadd.f32 %v1809, %v2275
      %v2312 = vadd.f32 %v1810, %v2278
      %v2313 = vld [vmem:[%s1452] sm:$0xc]
      %v2314 = vld [vmem:[%s1452 + $0x8] sm:$0x3]
      %v2315 = vld [vmem:[%s1452 + $0xc] sm:$0xc]
      %v2316 = vld [vmem:[%s1452 + $0x14] sm:$0x3]
      %v2317 = vld [vmem:[%s1452 + $0x18] sm:$0xc]
      %v2318 = vld [vmem:[%s1452 + $0x20] sm:$0x3]
      %v2319 = vld [vmem:[%s1452 + $0x24] sm:$0xc]
      %v2320 = vld [vmem:[%s1452 + $0x2c] sm:$0x3]
      %v2321 = vld [vmem:[%s1452 + $0x30] sm:$0xc]
      %v2322 = vld [vmem:[%s1452 + $0x38] sm:$0x3]
      %v2323 = vld [vmem:[%s1452 + $0x3c] sm:$0xc]
      %v2324 = vld [vmem:[%s1452 + $0x44] sm:$0x3]
      %v2325 = vld [vmem:[%s1452 + $0x48] sm:$0xc]
      %v2326 = vld [vmem:[%s1452 + $0x50] sm:$0x3]
      %v2327 = vld [vmem:[%s1452 + $0x54] sm:$0xc]
      %v2328 = vld [vmem:[%s1452 + $0x5c] sm:$0x3]
      %v2329 = vld [vmem:[%s1452 + $0x60] sm:$0xc]
      %v2330 = vld [vmem:[%s1452 + $0x68] sm:$0x3]
      %v2331 = vld [vmem:[%s1452 + $0x6c] sm:$0xc]
      %v2332 = vld [vmem:[%s1452 + $0x74] sm:$0x3]
      %v2333 = vld [vmem:[%s1452 + $0x78] sm:$0xc]
      %v2334 = vld [vmem:[%s1452 + $0x80] sm:$0x3]
      %v2335 = vld [vmem:[%s1452 + $0x84] sm:$0xc]
      %v2336 = vld [vmem:[%s1452 + $0x8c] sm:$0x3]
      %v2337 = vld [vmem:[%s1452 + $0x90] sm:$0xc]
      %v2338 = vld [vmem:[%s1452 + $0x98] sm:$0x3]
      %v2339 = vld [vmem:[%s1452 + $0x9c] sm:$0xc]
      %v2340 = vld [vmem:[%s1452 + $0xa4] sm:$0x3]
      %v2341 = vld [vmem:[%s1452 + $0xa8] sm:$0xc]
      %v2342 = vld [vmem:[%s1452 + $0xb0] sm:$0x3]
      %v2343 = vld [vmem:[%s1452 + $0xb4] sm:$0xc]
      %v2344 = vld [vmem:[%s1452 + $0xbc] sm:$0x3]
      %v2377 = vrot.slane %v2313, 6
      %v2378 = vrot.slane %v2377, 4
      %v2379 = vrot.slane %v1812, 6
      %v2380 = vsel %vm1045, %v2378, %v2379
      %v2381 = vrot.slane %v2379, 4
      %v2382 = vrot.slane %v2314, 6
      %v2383 = vsel %vm1045, %v2381, %v2382
      %v2384 = vrot.slane %v2315, 6
      %v2385 = vrot.slane %v2384, 4
      %v2386 = vrot.slane %v1815, 6
      %v2387 = vsel %vm1045, %v2385, %v2386
      %v2388 = vrot.slane %v2386, 4
      %v2389 = vrot.slane %v2316, 6
      %v2390 = vsel %vm1045, %v2388, %v2389
      %v2391 = vrot.slane %v2317, 6
      %v2392 = vrot.slane %v2391, 4
      %v2393 = vrot.slane %v1818, 6
      %v2394 = vsel %vm1045, %v2392, %v2393
      %v2395 = vrot.slane %v2393, 4
      %v2396 = vrot.slane %v2318, 6
      %v2397 = vsel %vm1045, %v2395, %v2396
      %v2398 = vrot.slane %v2319, 6
      %v2399 = vrot.slane %v2398, 4
      %v2400 = vrot.slane %v1821, 6
      %v2401 = vsel %vm1045, %v2399, %v2400
      %v2402 = vrot.slane %v2400, 4
      %v2403 = vrot.slane %v2320, 6
      %v2404 = vsel %vm1045, %v2402, %v2403
      %v2405 = vrot.slane %v2321, 6
      %v2406 = vrot.slane %v2405, 4
      %v2407 = vrot.slane %v1824, 6
      %v2408 = vsel %vm1045, %v2406, %v2407
      %v2409 = vrot.slane %v2407, 4
      %v2410 = vrot.slane %v2322, 6
      %v2411 = vsel %vm1045, %v2409, %v2410
      %v2412 = vrot.slane %v2323, 6
      %v2413 = vrot.slane %v2412, 4
      %v2414 = vrot.slane %v1827, 6
      %v2415 = vsel %vm1045, %v2413, %v2414
      %v2416 = vrot.slane %v2414, 4
      %v2417 = vrot.slane %v2324, 6
      %v2418 = vsel %vm1045, %v2416, %v2417
      %v2419 = vrot.slane %v2325, 6
      %v2420 = vrot.slane %v2419, 4
      %v2421 = vrot.slane %v1830, 6
      %v2422 = vsel %vm1045, %v2420, %v2421
      %v2423 = vrot.slane %v2421, 4
      %v2424 = vrot.slane %v2326, 6
      %v2425 = vsel %vm1045, %v2423, %v2424
      %v2426 = vrot.slane %v2327, 6
      %v2427 = vrot.slane %v2426, 4
      %v2428 = vrot.slane %v1833, 6
      %v2429 = vsel %vm1045, %v2427, %v2428
      %v2430 = vrot.slane %v2428, 4
      %v2431 = vrot.slane %v2328, 6
      %v2432 = vsel %vm1045, %v2430, %v2431
      %v2433 = vrot.slane %v2329, 6
      %v2434 = vrot.slane %v2433, 4
      %v2435 = vrot.slane %v1836, 6
      %v2436 = vsel %vm1045, %v2434, %v2435
      %v2437 = vrot.slane %v2435, 4
      %v2438 = vrot.slane %v2330, 6
      %v2439 = vsel %vm1045, %v2437, %v2438
      %v2440 = vrot.slane %v2331, 6
      %v2441 = vrot.slane %v2440, 4
      %v2442 = vrot.slane %v1839, 6
      %v2443 = vsel %vm1045, %v2441, %v2442
      %v2444 = vrot.slane %v2442, 4
      %v2445 = vrot.slane %v2332, 6
      %v2446 = vsel %vm1045, %v2444, %v2445
      %v2447 = vrot.slane %v2333, 6
      %v2448 = vrot.slane %v2447, 4
      %v2449 = vrot.slane %v1842, 6
      %v2450 = vsel %vm1045, %v2448, %v2449
      %v2451 = vrot.slane %v2449, 4
      %v2452 = vrot.slane %v2334, 6
      %v2453 = vsel %vm1045, %v2451, %v2452
      %v2454 = vrot.slane %v2335, 6
      %v2455 = vrot.slane %v2454, 4
      %v2456 = vrot.slane %v1845, 6
      %v2457 = vsel %vm1045, %v2455, %v2456
      %v2458 = vrot.slane %v2456, 4
      %v2459 = vrot.slane %v2336, 6
      %v2460 = vsel %vm1045, %v2458, %v2459
      %v2461 = vrot.slane %v2337, 6
      %v2462 = vrot.slane %v2461, 4
      %v2463 = vrot.slane %v1848, 6
      %v2464 = vsel %vm1045, %v2462, %v2463
      %v2465 = vrot.slane %v2463, 4
      %v2466 = vrot.slane %v2338, 6
      %v2467 = vsel %vm1045, %v2465, %v2466
      %v2468 = vrot.slane %v2339, 6
      %v2469 = vrot.slane %v2468, 4
      %v2470 = vrot.slane %v1851, 6
      %v2471 = vsel %vm1045, %v2469, %v2470
      %v2472 = vrot.slane %v2470, 4
      %v2473 = vrot.slane %v2340, 6
      %v2474 = vsel %vm1045, %v2472, %v2473
      %v2475 = vrot.slane %v2341, 6
      %v2476 = vrot.slane %v2475, 4
      %v2477 = vrot.slane %v1854, 6
      %v2478 = vsel %vm1045, %v2476, %v2477
      %v2479 = vrot.slane %v2477, 4
      %v2480 = vrot.slane %v2342, 6
      %v2481 = vsel %vm1045, %v2479, %v2480
      %v2482 = vrot.slane %v2343, 6
      %v2483 = vrot.slane %v2482, 4
      %v2484 = vrot.slane %v1857, 6
      %v2485 = vsel %vm1045, %v2483, %v2484
      %v2486 = vrot.slane %v2484, 4
      %v2487 = vrot.slane %v2344, 6
      %v2488 = vsel %vm1045, %v2486, %v2487
      %s2489 = scalar_lea.vmem %s1, 10
      %v2490 = vld [vmem:[%s2489] sm:$0x3]
      %v2491 = vunpack.c.l.b16 %v2380
      %v2492 = vunpack.c.l.b16 %v2383
      %v2493 = vunpack.c.l.b16 %v2387
      %v2494 = vunpack.c.l.b16 %v2390
      %v2495 = vunpack.c.l.b16 %v2394
      %v2496 = vunpack.c.l.b16 %v2397
      %v2497 = vunpack.c.l.b16 %v2401
      %v2498 = vunpack.c.l.b16 %v2404
      %v2499 = vunpack.c.l.b16 %v2408
      %v2500 = vunpack.c.l.b16 %v2411
      %v2501 = vunpack.c.l.b16 %v2415
      %v2502 = vunpack.c.l.b16 %v2418
      %v2503 = vunpack.c.l.b16 %v2422
      %v2504 = vunpack.c.l.b16 %v2425
      %v2505 = vunpack.c.l.b16 %v2429
      %v2506 = vunpack.c.l.b16 %v2432
      %v2507 = vunpack.c.l.b16 %v2436
      %v2508 = vunpack.c.l.b16 %v2439
      %v2509 = vunpack.c.l.b16 %v2443
      %v2510 = vunpack.c.l.b16 %v2446
      %v2511 = vunpack.c.l.b16 %v2450
      %v2512 = vunpack.c.l.b16 %v2453
      %v2513 = vunpack.c.l.b16 %v2457
      %v2514 = vunpack.c.l.b16 %v2460
      %v2515 = vunpack.c.l.b16 %v2464
      %v2516 = vunpack.c.l.b16 %v2467
      %v2517 = vunpack.c.l.b16 %v2471
      %v2518 = vunpack.c.l.b16 %v2474
      %v2519 = vunpack.c.l.b16 %v2478
      %v2520 = vunpack.c.l.b16 %v2481
      %v2521 = vunpack.c.l.b16 %v2485
      %v2522 = vunpack.c.l.b16 %v2488
      %v2523 = vpack.c.b16 %v2492, %v2491
      %v2524 = vpack.c.b16 %v2494, %v2493
      %v2525 = vpack.c.b16 %v2496, %v2495
      %v2526 = vpack.c.b16 %v2498, %v2497
      %v2527 = vpack.c.b16 %v2500, %v2499
      %v2528 = vpack.c.b16 %v2502, %v2501
      %v2529 = vpack.c.b16 %v2504, %v2503
      %v2530 = vpack.c.b16 %v2506, %v2505
      %v2531 = vpack.c.b16 %v2508, %v2507
      %v2532 = vpack.c.b16 %v2510, %v2509
      %v2533 = vpack.c.b16 %v2512, %v2511
      %v2534 = vpack.c.b16 %v2514, %v2513
      %v2535 = vpack.c.b16 %v2516, %v2515
      %v2536 = vpack.c.b16 %v2518, %v2517
      %v2537 = vpack.c.b16 %v2520, %v2519
      %v2538 = vpack.c.b16 %v2522, %v2521
      %v2540 = vsel %vm489, %v2523, 0
      %v2543 = vsel %vm489, %v2524, 0
      %v2546 = vsel %vm489, %v2525, 0
      %v2549 = vsel %vm489, %v2526, 0
      %v2552 = vsel %vm489, %v2527, 0
      %v2555 = vsel %vm489, %v2528, 0
      %v2558 = vsel %vm489, %v2529, 0
      %v2561 = vsel %vm489, %v2530, 0
      %v2564 = vsel %vm489, %v2531, 0
      %v2567 = vsel %vm489, %v2532, 0
      %v2570 = vsel %vm489, %v2533, 0
      %v2573 = vsel %vm489, %v2534, 0
      %v2576 = vsel %vm489, %v2535, 0
      %v2579 = vsel %vm489, %v2536, 0
      %v2582 = vsel %vm489, %v2537, 0
      %v2585 = vsel %vm489, %v2538, 0
      %v2588 = vsel %vm538, %v2490, 0
      %2590 = vmatprep.subr.bf16.mxu0 0
      %2591 = vmatpush1.bf16.msra.mxu0 %v2588
      %2592 = vmatprep.subr.bf16.mxu0 0
      %2593 = vmatpush1.bf16.msra.mxu0 0
      %2594 = vmatprep.subr.bf16.mxu0 0
      %2595 = vmatpush1.bf16.msra.mxu0 0
      %2596 = vmatprep.subr.bf16.mxu0 0
      %2597 = vmatpush1.bf16.msra.mxu0 0
      %2598 = vmatprep.subr.bf16.mxu0 0
      %2599 = vmatpush1.bf16.msra.mxu0 0
      %2600 = vmatprep.subr.bf16.mxu0 0
      %2601 = vmatpush1.bf16.msra.mxu0 0
      %2602 = vmatprep.subr.bf16.mxu0 0
      %2603 = vmatpush1.bf16.msra.mxu0 0
      %2604 = vmatprep.subr.bf16.mxu0 0
      %2605 = vmatpush1.bf16.msra.mxu0 0
      %2606 = vmatprep.subr.bf16.mxu0 0
      %2607 = vmatpush1.bf16.msra.mxu0 0
      %2608 = vmatprep.subr.bf16.mxu0 0
      %2609 = vmatpush1.bf16.msra.mxu0 0
      %2610 = vmatprep.subr.bf16.mxu0 0
      %2611 = vmatpush1.bf16.msra.mxu0 0
      %2612 = vmatprep.subr.bf16.mxu0 0
      %2613 = vmatpush1.bf16.msra.mxu0 0
      %2614 = vmatprep.subr.bf16.mxu0 0
      %2615 = vmatpush1.bf16.msra.mxu0 0
      %2616 = vmatprep.subr.bf16.mxu0 0
      %2617 = vmatpush1.bf16.msra.mxu0 0
      %2618 = vmatprep.subr.bf16.mxu0 0
      %2619 = vmatpush1.bf16.msra.mxu0 0
      %2620 = vmatprep.subr.bf16.mxu0 0
      %2621 = vmatpush1.bf16.msra.mxu0 0
      %2622 = vmatprep.mubr.bf16.mxu0 0
      %2623 = vmatmul.mubr.bf16.gmra.mrb[0].mxu0 %v2540
      %v2624 = vpop.f32.mrb[0].mxu0
      %v2625 = vadd.f32 0.0, %v2624
      %v2626 = vpop.f32.mrb[0].mxu0
      %v2627 = vpop.f32.mrb[0].mxu0
      %v2628 = vadd.f32 0.0, %v2627
      %v2629 = vpop.f32.mrb[0].mxu0
      %2630 = vmatprep.mubr.bf16.mxu0 0
      %2631 = vmatmul.mubr.bf16.gmra.mrb[0].mxu0 %v2543
      %v2632 = vpop.f32.mrb[0].mxu0
      %v2633 = vadd.f32 0.0, %v2632
      %v2634 = vpop.f32.mrb[0].mxu0
      %v2635 = vpop.f32.mrb[0].mxu0
      %v2636 = vadd.f32 0.0, %v2635
      %v2637 = vpop.f32.mrb[0].mxu0
      %2638 = vmatprep.mubr.bf16.mxu0 0
      %2639 = vmatmul.mubr.bf16.gmra.mrb[0].mxu0 %v2546
      %v2640 = vpop.f32.mrb[0].mxu0
      %v2641 = vadd.f32 0.0, %v2640
      %v2642 = vpop.f32.mrb[0].mxu0
      %v2643 = vpop.f32.mrb[0].mxu0
      %v2644 = vadd.f32 0.0, %v2643
      %v2645 = vpop.f32.mrb[0].mxu0
      %2646 = vmatprep.mubr.bf16.mxu0 0
      %2647 = vmatmul.mubr.bf16.gmra.mrb[0].mxu0 %v2549
      %v2648 = vpop.f32.mrb[0].mxu0
      %v2649 = vadd.f32 0.0, %v2648
      %v2650 = vpop.f32.mrb[0].mxu0
      %v2651 = vpop.f32.mrb[0].mxu0
      %v2652 = vadd.f32 0.0, %v2651
      %v2653 = vpop.f32.mrb[0].mxu0
      %2654 = vmatprep.mubr.bf16.mxu0 0
      %2655 = vmatmul.mubr.bf16.gmra.mrb[0].mxu0 %v2552
      %v2656 = vpop.f32.mrb[0].mxu0
      %v2657 = vadd.f32 0.0, %v2656
      %v2658 = vpop.f32.mrb[0].mxu0
      %v2659 = vpop.f32.mrb[0].mxu0
      %v2660 = vadd.f32 0.0, %v2659
      %v2661 = vpop.f32.mrb[0].mxu0
      %2662 = vmatprep.mubr.bf16.mxu0 0
      %2663 = vmatmul.mubr.bf16.gmra.mrb[0].mxu0 %v2555
      %v2664 = vpop.f32.mrb[0].mxu0
      %v2665 = vadd.f32 0.0, %v2664
      %v2666 = vpop.f32.mrb[0].mxu0
      %v2667 = vpop.f32.mrb[0].mxu0
      %v2668 = vadd.f32 0.0, %v2667
      %v2669 = vpop.f32.mrb[0].mxu0
      %2670 = vmatprep.mubr.bf16.mxu0 0
      %2671 = vmatmul.mubr.bf16.gmra.mrb[0].mxu0 %v2558
      %v2672 = vpop.f32.mrb[0].mxu0
      %v2673 = vadd.f32 0.0, %v2672
      %v2674 = vpop.f32.mrb[0].mxu0
      %v2675 = vpop.f32.mrb[0].mxu0
      %v2676 = vadd.f32 0.0, %v2675
      %v2677 = vpop.f32.mrb[0].mxu0
      %2678 = vmatprep.mubr.bf16.mxu0 0
      %2679 = vmatmul.mubr.bf16.gmra.mrb[0].mxu0 %v2561
      %v2680 = vpop.f32.mrb[0].mxu0
      %v2681 = vadd.f32 0.0, %v2680
      %v2682 = vpop.f32.mrb[0].mxu0
      %v2683 = vpop.f32.mrb[0].mxu0
      %v2684 = vadd.f32 0.0, %v2683
      %v2685 = vpop.f32.mrb[0].mxu0
      %2686 = vmatprep.mubr.bf16.mxu0 0
      %2687 = vmatmul.mubr.bf16.gmra.mrb[0].mxu0 %v2564
      %v2688 = vpop.f32.mrb[0].mxu0
      %v2689 = vadd.f32 0.0, %v2688
      %v2690 = vpop.f32.mrb[0].mxu0
      %v2691 = vpop.f32.mrb[0].mxu0
      %v2692 = vadd.f32 0.0, %v2691
      %v2693 = vpop.f32.mrb[0].mxu0
      %2694 = vmatprep.mubr.bf16.mxu0 0
      %2695 = vmatmul.mubr.bf16.gmra.mrb[0].mxu0 %v2567
      %v2696 = vpop.f32.mrb[0].mxu0
      %v2697 = vadd.f32 0.0, %v2696
      %v2698 = vpop.f32.mrb[0].mxu0
      %v2699 = vpop.f32.mrb[0].mxu0
      %v2700 = vadd.f32 0.0, %v2699
      %v2701 = vpop.f32.mrb[0].mxu0
      %2702 = vmatprep.mubr.bf16.mxu0 0
      %2703 = vmatmul.mubr.bf16.gmra.mrb[0].mxu0 %v2570
      %v2704 = vpop.f32.mrb[0].mxu0
      %v2705 = vadd.f32 0.0, %v2704
      %v2706 = vpop.f32.mrb[0].mxu0
      %v2707 = vpop.f32.mrb[0].mxu0
      %v2708 = vadd.f32 0.0, %v2707
      %v2709 = vpop.f32.mrb[0].mxu0
      %2710 = vmatprep.mubr.bf16.mxu0 0
      %2711 = vmatmul.mubr.bf16.gmra.mrb[0].mxu0 %v2573
      %v2712 = vpop.f32.mrb[0].mxu0
      %v2713 = vadd.f32 0.0, %v2712
      %v2714 = vpop.f32.mrb[0].mxu0
      %v2715 = vpop.f32.mrb[0].mxu0
      %v2716 = vadd.f32 0.0, %v2715
      %v2717 = vpop.f32.mrb[0].mxu0
      %2718 = vmatprep.mubr.bf16.mxu0 0
      %2719 = vmatmul.mubr.bf16.gmra.mrb[0].mxu0 %v2576
      %v2720 = vpop.f32.mrb[0].mxu0
      %v2721 = vadd.f32 0.0, %v2720
      %v2722 = vpop.f32.mrb[0].mxu0
      %v2723 = vpop.f32.mrb[0].mxu0
      %v2724 = vadd.f32 0.0, %v2723
      %v2725 = vpop.f32.mrb[0].mxu0
      %2726 = vmatprep.mubr.bf16.mxu0 0
      %2727 = vmatmul.mubr.bf16.gmra.mrb[0].mxu0 %v2579
      %v2728 = vpop.f32.mrb[0].mxu0
      %v2729 = vadd.f32 0.0, %v2728
      %v2730 = vpop.f32.mrb[0].mxu0
      %v2731 = vpop.f32.mrb[0].mxu0
      %v2732 = vadd.f32 0.0, %v2731
      %v2733 = vpop.f32.mrb[0].mxu0
      %2734 = vmatprep.mubr.bf16.mxu0 0
      %2735 = vmatmul.mubr.bf16.gmra.mrb[0].mxu0 %v2582
      %v2736 = vpop.f32.mrb[0].mxu0
      %v2737 = vadd.f32 0.0, %v2736
      %v2738 = vpop.f32.mrb[0].mxu0
      %v2739 = vpop.f32.mrb[0].mxu0
      %v2740 = vadd.f32 0.0, %v2739
      %v2741 = vpop.f32.mrb[0].mxu0
      %2742 = vmatprep.mubr.bf16.mxu0 0
      %2743 = vmatmul.mubr.bf16.gmra.mrb[0].mxu0 %v2585
      %v2744 = vpop.f32.mrb[0].mxu0
      %v2745 = vadd.f32 0.0, %v2744
      %v2746 = vpop.f32.mrb[0].mxu0
      %v2747 = vpop.f32.mrb[0].mxu0
      %v2748 = vadd.f32 0.0, %v2747
      %v2749 = vpop.f32.mrb[0].mxu0
      %2750 = vdwg.mxu0
      %v2751 = vadd.f32 %v2281, %v2625
      %v2752 = vadd.f32 %v2282, %v2628
      %v2753 = vadd.f32 %v2283, %v2633
      %v2754 = vadd.f32 %v2284, %v2636
      %v2755 = vadd.f32 %v2285, %v2641
      %v2756 = vadd.f32 %v2286, %v2644
      %v2757 = vadd.f32 %v2287, %v2649
      %v2758 = vadd.f32 %v2288, %v2652
      %v2759 = vadd.f32 %v2289, %v2657
      %v2760 = vadd.f32 %v2290, %v2660
      %v2761 = vadd.f32 %v2291, %v2665
      %v2762 = vadd.f32 %v2292, %v2668
      %v2763 = vadd.f32 %v2293, %v2673
      %v2764 = vadd.f32 %v2294, %v2676
      %v2765 = vadd.f32 %v2295, %v2681
      %v2766 = vadd.f32 %v2296, %v2684
      %v2767 = vadd.f32 %v2297, %v2689
      %v2768 = vadd.f32 %v2298, %v2692
      %v2769 = vadd.f32 %v2299, %v2697
      %v2770 = vadd.f32 %v2300, %v2700
      %v2771 = vadd.f32 %v2301, %v2705
      %v2772 = vadd.f32 %v2302, %v2708
      %v2773 = vadd.f32 %v2303, %v2713
      %v2774 = vadd.f32 %v2304, %v2716
      %v2775 = vadd.f32 %v2305, %v2721
      %v2776 = vadd.f32 %v2306, %v2724
      %v2777 = vadd.f32 %v2307, %v2729
      %v2778 = vadd.f32 %v2308, %v2732
      %v2779 = vadd.f32 %v2309, %v2737
      %v2780 = vadd.f32 %v2310, %v2740
      %v2781 = vadd.f32 %v2311, %v2745
      %v2782 = vadd.f32 %v2312, %v2748
      %s2783 = scalar_lea.vmem %s198, 48
      %v2784 = vld [vmem:[%s2783] sm:$0xf]
      %v2785 = vld [vmem:[%s2783 + $0x4] sm:$0xf]
      %v2786 = vld [vmem:[%s2783 + $0xc] sm:$0xf]
      %v2787 = vld [vmem:[%s2783 + $0x10] sm:$0xf]
      %v2788 = vld [vmem:[%s2783 + $0x18] sm:$0xf]
      %v2789 = vld [vmem:[%s2783 + $0x1c] sm:$0xf]
      %v2790 = vld [vmem:[%s2783 + $0x24] sm:$0xf]
      %v2791 = vld [vmem:[%s2783 + $0x28] sm:$0xf]
      %v2792 = vld [vmem:[%s2783 + $0x30] sm:$0xf]
      %v2793 = vld [vmem:[%s2783 + $0x34] sm:$0xf]
      %v2794 = vld [vmem:[%s2783 + $0x3c] sm:$0xf]
      %v2795 = vld [vmem:[%s2783 + $0x40] sm:$0xf]
      %v2796 = vld [vmem:[%s2783 + $0x48] sm:$0xf]
      %v2797 = vld [vmem:[%s2783 + $0x4c] sm:$0xf]
      %v2798 = vld [vmem:[%s2783 + $0x54] sm:$0xf]
      %v2799 = vld [vmem:[%s2783 + $0x58] sm:$0xf]
      %v2800 = vld [vmem:[%s2783 + $0x60] sm:$0xf]
      %v2801 = vld [vmem:[%s2783 + $0x64] sm:$0xf]
      %v2802 = vld [vmem:[%s2783 + $0x6c] sm:$0xf]
      %v2803 = vld [vmem:[%s2783 + $0x70] sm:$0xf]
      %v2804 = vld [vmem:[%s2783 + $0x78] sm:$0xf]
      %v2805 = vld [vmem:[%s2783 + $0x7c] sm:$0xf]
      %v2806 = vld [vmem:[%s2783 + $0x84] sm:$0xf]
      %v2807 = vld [vmem:[%s2783 + $0x88] sm:$0xf]
      %v2808 = vld [vmem:[%s2783 + $0x90] sm:$0xf]
      %v2809 = vld [vmem:[%s2783 + $0x94] sm:$0xf]
      %v2810 = vld [vmem:[%s2783 + $0x9c] sm:$0xf]
      %v2811 = vld [vmem:[%s2783 + $0xa0] sm:$0xf]
      %v2812 = vld [vmem:[%s2783 + $0xa8] sm:$0xf]
      %v2813 = vld [vmem:[%s2783 + $0xac] sm:$0xf]
      %v2814 = vld [vmem:[%s2783 + $0xb4] sm:$0xf]
      %v2815 = vld [vmem:[%s2783 + $0xb8] sm:$0xf]
      %s2816 = scalar_lea.vmem %s1, 12
      %v2817 = vld [vmem:[%s2816] sm:$0x3]
      %v2850 = vunpack.c.l.b16 %v2784
      %v2851 = vunpack.c.l.b16 %v2785
      %v2852 = vunpack.c.l.b16 %v2786
      %v2853 = vunpack.c.l.b16 %v2787
      %v2854 = vunpack.c.l.b16 %v2788
      %v2855 = vunpack.c.l.b16 %v2789
      %v2856 = vunpack.c.l.b16 %v2790
      %v2857 = vunpack.c.l.b16 %v2791
      %v2858 = vunpack.c.l.b16 %v2792
      %v2859 = vunpack.c.l.b16 %v2793
      %v2860 = vunpack.c.l.b16 %v2794
      %v2861 = vunpack.c.l.b16 %v2795
      %v2862 = vunpack.c.l.b16 %v2796
      %v2863 = vunpack.c.l.b16 %v2797
      %v2864 = vunpack.c.l.b16 %v2798
      %v2865 = vunpack.c.l.b16 %v2799
      %v2866 = vunpack.c.l.b16 %v2800
      %v2867 = vunpack.c.l.b16 %v2801
      %v2868 = vunpack.c.l.b16 %v2802
      %v2869 = vunpack.c.l.b16 %v2803
      %v2870 = vunpack.c.l.b16 %v2804
      %v2871 = vunpack.c.l.b16 %v2805
      %v2872 = vunpack.c.l.b16 %v2806
      %v2873 = vunpack.c.l.b16 %v2807
      %v2874 = vunpack.c.l.b16 %v2808
      %v2875 = vunpack.c.l.b16 %v2809
      %v2876 = vunpack.c.l.b16 %v2810
      %v2877 = vunpack.c.l.b16 %v2811
      %v2878 = vunpack.c.l.b16 %v2812
      %v2879 = vunpack.c.l.b16 %v2813
      %v2880 = vunpack.c.l.b16 %v2814
      %v2881 = vunpack.c.l.b16 %v2815
      %v2882 = vpack.c.b16 %v2851, %v2850
      %v2883 = vpack.c.b16 %v2853, %v2852
      %v2884 = vpack.c.b16 %v2855, %v2854
      %v2885 = vpack.c.b16 %v2857, %v2856
      %v2886 = vpack.c.b16 %v2859, %v2858
      %v2887 = vpack.c.b16 %v2861, %v2860
      %v2888 = vpack.c.b16 %v2863, %v2862
      %v2889 = vpack.c.b16 %v2865, %v2864
      %v2890 = vpack.c.b16 %v2867, %v2866
      %v2891 = vpack.c.b16 %v2869, %v2868
      %v2892 = vpack.c.b16 %v2871, %v2870
      %v2893 = vpack.c.b16 %v2873, %v2872
      %v2894 = vpack.c.b16 %v2875, %v2874
      %v2895 = vpack.c.b16 %v2877, %v2876
      %v2896 = vpack.c.b16 %v2879, %v2878
      %v2897 = vpack.c.b16 %v2881, %v2880
      %v2899 = vsel %vm489, %v2882, 0
      %v2902 = vsel %vm489, %v2883, 0
      %v2905 = vsel %vm489, %v2884, 0
      %v2908 = vsel %vm489, %v2885, 0
      %v2911 = vsel %vm489, %v2886, 0
      %v2914 = vsel %vm489, %v2887, 0
      %v2917 = vsel %vm489, %v2888, 0
      %v2920 = vsel %vm489, %v2889, 0
      %v2923 = vsel %vm489, %v2890, 0
      %v2926 = vsel %vm489, %v2891, 0
      %v2929 = vsel %vm489, %v2892, 0
      %v2932 = vsel %vm489, %v2893, 0
      %v2935 = vsel %vm489, %v2894, 0
      %v2938 = vsel %vm489, %v2895, 0
      %v2941 = vsel %vm489, %v2896, 0
      %v2944 = vsel %vm489, %v2897, 0
      %v2947 = vsel %vm538, %v2817, 0
      %2949 = vmatprep.subr.bf16.mxu0 0
      %2950 = vmatpush1.bf16.msra.mxu0 %v2947
      %2951 = vmatprep.subr.bf16.mxu0 0
      %2952 = vmatpush1.bf16.msra.mxu0 0
      %2953 = vmatprep.subr.bf16.mxu0 0
      %2954 = vmatpush1.bf16.msra.mxu0 0
      %2955 = vmatprep.subr.bf16.mxu0 0
      %2956 = vmatpush1.bf16.msra.mxu0 0
      %2957 = vmatprep.subr.bf16.mxu0 0
      %2958 = vmatpush1.bf16.msra.mxu0 0
      %2959 = vmatprep.subr.bf16.mxu0 0
      %2960 = vmatpush1.bf16.msra.mxu0 0
      %2961 = vmatprep.subr.bf16.mxu0 0
      %2962 = vmatpush1.bf16.msra.mxu0 0
      %2963 = vmatprep.subr.bf16.mxu0 0
      %2964 = vmatpush1.bf16.msra.mxu0 0
      %2965 = vmatprep.subr.bf16.mxu0 0
      %2966 = vmatpush1.bf16.msra.mxu0 0
      %2967 = vmatprep.subr.bf16.mxu0 0
      %2968 = vmatpush1.bf16.msra.mxu0 0
      %2969 = vmatprep.subr.bf16.mxu0 0
      %2970 = vmatpush1.bf16.msra.mxu0 0
      %2971 = vmatprep.subr.bf16.mxu0 0
      %2972 = vmatpush1.bf16.msra.mxu0 0
      %2973 = vmatprep.subr.bf16.mxu0 0
      %2974 = vmatpush1.bf16.msra.mxu0 0
      %2975 = vmatprep.subr.bf16.mxu0 0
      %2976 = vmatpush1.bf16.msra.mxu0 0
      %2977 = vmatprep.subr.bf16.mxu0 0
      %2978 = vmatpush1.bf16.msra.mxu0 0
      %2979 = vmatprep.subr.bf16.mxu0 0
      %2980 = vmatpush1.bf16.msra.mxu0 0
      %2981 = vmatprep.mubr.bf16.mxu0 0
      %2982 = vmatmul.mubr.bf16.gmra.mrb[0].mxu0 %v2899
      %v2983 = vpop.f32.mrb[0].mxu0
      %v2984 = vadd.f32 0.0, %v2983
      %v2985 = vpop.f32.mrb[0].mxu0
      %v2986 = vpop.f32.mrb[0].mxu0
      %v2987 = vadd.f32 0.0, %v2986
      %v2988 = vpop.f32.mrb[0].mxu0
      %2989 = vmatprep.mubr.bf16.mxu0 0
      %2990 = vmatmul.mubr.bf16.gmra.mrb[0].mxu0 %v2902
      %v2991 = vpop.f32.mrb[0].mxu0
      %v2992 = vadd.f32 0.0, %v2991
      %v2993 = vpop.f32.mrb[0].mxu0
      %v2994 = vpop.f32.mrb[0].mxu0
      %v2995 = vadd.f32 0.0, %v2994
      %v2996 = vpop.f32.mrb[0].mxu0
      %2997 = vmatprep.mubr.bf16.mxu0 0
      %2998 = vmatmul.mubr.bf16.gmra.mrb[0].mxu0 %v2905
      %v2999 = vpop.f32.mrb[0].mxu0
      %v3000 = vadd.f32 0.0, %v2999
      %v3001 = vpop.f32.mrb[0].mxu0
      %v3002 = vpop.f32.mrb[0].mxu0
      %v3003 = vadd.f32 0.0, %v3002
      %v3004 = vpop.f32.mrb[0].mxu0
      %3005 = vmatprep.mubr.bf16.mxu0 0
      %3006 = vmatmul.mubr.bf16.gmra.mrb[0].mxu0 %v2908
      %v3007 = vpop.f32.mrb[0].mxu0
      %v3008 = vadd.f32 0.0, %v3007
      %v3009 = vpop.f32.mrb[0].mxu0
      %v3010 = vpop.f32.mrb[0].mxu0
      %v3011 = vadd.f32 0.0, %v3010
      %v3012 = vpop.f32.mrb[0].mxu0
      %3013 = vmatprep.mubr.bf16.mxu0 0
      %3014 = vmatmul.mubr.bf16.gmra.mrb[0].mxu0 %v2911
      %v3015 = vpop.f32.mrb[0].mxu0
      %v3016 = vadd.f32 0.0, %v3015
      %v3017 = vpop.f32.mrb[0].mxu0
      %v3018 = vpop.f32.mrb[0].mxu0
      %v3019 = vadd.f32 0.0, %v3018
      %v3020 = vpop.f32.mrb[0].mxu0
      %3021 = vmatprep.mubr.bf16.mxu0 0
      %3022 = vmatmul.mubr.bf16.gmra.mrb[0].mxu0 %v2914
      %v3023 = vpop.f32.mrb[0].mxu0
      %v3024 = vadd.f32 0.0, %v3023
      %v3025 = vpop.f32.mrb[0].mxu0
      %v3026 = vpop.f32.mrb[0].mxu0
      %v3027 = vadd.f32 0.0, %v3026
      %v3028 = vpop.f32.mrb[0].mxu0
      %3029 = vmatprep.mubr.bf16.mxu0 0
      %3030 = vmatmul.mubr.bf16.gmra.mrb[0].mxu0 %v2917
      %v3031 = vpop.f32.mrb[0].mxu0
      %v3032 = vadd.f32 0.0, %v3031
      %v3033 = vpop.f32.mrb[0].mxu0
      %v3034 = vpop.f32.mrb[0].mxu0
      %v3035 = vadd.f32 0.0, %v3034
      %v3036 = vpop.f32.mrb[0].mxu0
      %3037 = vmatprep.mubr.bf16.mxu0 0
      %3038 = vmatmul.mubr.bf16.gmra.mrb[0].mxu0 %v2920
      %v3039 = vpop.f32.mrb[0].mxu0
      %v3040 = vadd.f32 0.0, %v3039
      %v3041 = vpop.f32.mrb[0].mxu0
      %v3042 = vpop.f32.mrb[0].mxu0
      %v3043 = vadd.f32 0.0, %v3042
      %v3044 = vpop.f32.mrb[0].mxu0
      %3045 = vmatprep.mubr.bf16.mxu0 0
      %3046 = vmatmul.mubr.bf16.gmra.mrb[0].mxu0 %v2923
      %v3047 = vpop.f32.mrb[0].mxu0
      %v3048 = vadd.f32 0.0, %v3047
      %v3049 = vpop.f32.mrb[0].mxu0
      %v3050 = vpop.f32.mrb[0].mxu0
      %v3051 = vadd.f32 0.0, %v3050
      %v3052 = vpop.f32.mrb[0].mxu0
      %3053 = vmatprep.mubr.bf16.mxu0 0
      %3054 = vmatmul.mubr.bf16.gmra.mrb[0].mxu0 %v2926
      %v3055 = vpop.f32.mrb[0].mxu0
      %v3056 = vadd.f32 0.0, %v3055
      %v3057 = vpop.f32.mrb[0].mxu0
      %v3058 = vpop.f32.mrb[0].mxu0
      %v3059 = vadd.f32 0.0, %v3058
      %v3060 = vpop.f32.mrb[0].mxu0
      %3061 = vmatprep.mubr.bf16.mxu0 0
      %3062 = vmatmul.mubr.bf16.gmra.mrb[0].mxu0 %v2929
      %v3063 = vpop.f32.mrb[0].mxu0
      %v3064 = vadd.f32 0.0, %v3063
      %v3065 = vpop.f32.mrb[0].mxu0
      %v3066 = vpop.f32.mrb[0].mxu0
      %v3067 = vadd.f32 0.0, %v3066
      %v3068 = vpop.f32.mrb[0].mxu0
      %3069 = vmatprep.mubr.bf16.mxu0 0
      %3070 = vmatmul.mubr.bf16.gmra.mrb[0].mxu0 %v2932
      %v3071 = vpop.f32.mrb[0].mxu0
      %v3072 = vadd.f32 0.0, %v3071
      %v3073 = vpop.f32.mrb[0].mxu0
      %v3074 = vpop.f32.mrb[0].mxu0
      %v3075 = vadd.f32 0.0, %v3074
      %v3076 = vpop.f32.mrb[0].mxu0
      %3077 = vmatprep.mubr.bf16.mxu0 0
      %3078 = vmatmul.mubr.bf16.gmra.mrb[0].mxu0 %v2935
      %v3079 = vpop.f32.mrb[0].mxu0
      %v3080 = vadd.f32 0.0, %v3079
      %v3081 = vpop.f32.mrb[0].mxu0
      %v3082 = vpop.f32.mrb[0].mxu0
      %v3083 = vadd.f32 0.0, %v3082
      %v3084 = vpop.f32.mrb[0].mxu0
      %3085 = vmatprep.mubr.bf16.mxu0 0
      %3086 = vmatmul.mubr.bf16.gmra.mrb[0].mxu0 %v2938
      %v3087 = vpop.f32.mrb[0].mxu0
      %v3088 = vadd.f32 0.0, %v3087
      %v3089 = vpop.f32.mrb[0].mxu0
      %v3090 = vpop.f32.mrb[0].mxu0
      %v3091 = vadd.f32 0.0, %v3090
      %v3092 = vpop.f32.mrb[0].mxu0
      %3093 = vmatprep.mubr.bf16.mxu0 0
      %3094 = vmatmul.mubr.bf16.gmra.mrb[0].mxu0 %v2941
      %v3095 = vpop.f32.mrb[0].mxu0
      %v3096 = vadd.f32 0.0, %v3095
      %v3097 = vpop.f32.mrb[0].mxu0
      %v3098 = vpop.f32.mrb[0].mxu0
      %v3099 = vadd.f32 0.0, %v3098
      %v3100 = vpop.f32.mrb[0].mxu0
      %3101 = vmatprep.mubr.bf16.mxu0 0
      %3102 = vmatmul.mubr.bf16.gmra.mrb[0].mxu0 %v2944
      %v3103 = vpop.f32.mrb[0].mxu0
      %v3104 = vadd.f32 0.0, %v3103
      %v3105 = vpop.f32.mrb[0].mxu0
      %v3106 = vpop.f32.mrb[0].mxu0
      %v3107 = vadd.f32 0.0, %v3106
      %v3108 = vpop.f32.mrb[0].mxu0
      %3109 = vdwg.mxu0
      %v3110 = vadd.f32 %v2751, %v2984
      %v3111 = vadd.f32 %v2752, %v2987
      %v3112 = vadd.f32 %v2753, %v2992
      %v3113 = vadd.f32 %v2754, %v2995
      %v3114 = vadd.f32 %v2755, %v3000
      %v3115 = vadd.f32 %v2756, %v3003
      %v3116 = vadd.f32 %v2757, %v3008
      %v3117 = vadd.f32 %v2758, %v3011
      %v3118 = vadd.f32 %v2759, %v3016
      %v3119 = vadd.f32 %v2760, %v3019
      %v3120 = vadd.f32 %v2761, %v3024
      %v3121 = vadd.f32 %v2762, %v3027
      %v3122 = vadd.f32 %v2763, %v3032
      %v3123 = vadd.f32 %v2764, %v3035
      %v3124 = vadd.f32 %v2765, %v3040
      %v3125 = vadd.f32 %v2766, %v3043
      %v3126 = vadd.f32 %v2767, %v3048
      %v3127 = vadd.f32 %v2768, %v3051
      %v3128 = vadd.f32 %v2769, %v3056
      %v3129 = vadd.f32 %v2770, %v3059
      %v3130 = vadd.f32 %v2771, %v3064
      %v3131 = vadd.f32 %v2772, %v3067
      %v3132 = vadd.f32 %v2773, %v3072
      %v3133 = vadd.f32 %v2774, %v3075
      %v3134 = vadd.f32 %v2775, %v3080
      %v3135 = vadd.f32 %v2776, %v3083
      %v3136 = vadd.f32 %v2777, %v3088
      %v3137 = vadd.f32 %v2778, %v3091
      %v3138 = vadd.f32 %v2779, %v3096
      %v3139 = vadd.f32 %v2780, %v3099
      %v3140 = vadd.f32 %v2781, %v3104
      %v3141 = vadd.f32 %v2782, %v3107
      %v3142 = vld [vmem:[%s2783] sm:$0xe]
      %v3143 = vld [vmem:[%s2783 + $0x4] sm:$0xf]
      %v3144 = vld [vmem:[%s2783 + $0x8] sm:$0x1]
      %v3145 = vld [vmem:[%s2783 + $0xc] sm:$0xe]
      %v3146 = vld [vmem:[%s2783 + $0x10] sm:$0xf]
      %v3147 = vld [vmem:[%s2783 + $0x14] sm:$0x1]
      %v3148 = vld [vmem:[%s2783 + $0x18] sm:$0xe]
      %v3149 = vld [vmem:[%s2783 + $0x1c] sm:$0xf]
      %v3150 = vld [vmem:[%s2783 + $0x20] sm:$0x1]
      %v3151 = vld [vmem:[%s2783 + $0x24] sm:$0xe]
      %v3152 = vld [vmem:[%s2783 + $0x28] sm:$0xf]
      %v3153 = vld [vmem:[%s2783 + $0x2c] sm:$0x1]
      %v3154 = vld [vmem:[%s2783 + $0x30] sm:$0xe]
      %v3155 = vld [vmem:[%s2783 + $0x34] sm:$0xf]
      %v3156 = vld [vmem:[%s2783 + $0x38] sm:$0x1]
      %v3157 = vld [vmem:[%s2783 + $0x3c] sm:$0xe]
      %v3158 = vld [vmem:[%s2783 + $0x40] sm:$0xf]
      %v3159 = vld [vmem:[%s2783 + $0x44] sm:$0x1]
      %v3160 = vld [vmem:[%s2783 + $0x48] sm:$0xe]
      %v3161 = vld [vmem:[%s2783 + $0x4c] sm:$0xf]
      %v3162 = vld [vmem:[%s2783 + $0x50] sm:$0x1]
      %v3163 = vld [vmem:[%s2783 + $0x54] sm:$0xe]
      %v3164 = vld [vmem:[%s2783 + $0x58] sm:$0xf]
      %v3165 = vld [vmem:[%s2783 + $0x5c] sm:$0x1]
      %v3166 = vld [vmem:[%s2783 + $0x60] sm:$0xe]
      %v3167 = vld [vmem:[%s2783 + $0x64] sm:$0xf]
      %v3168 = vld [vmem:[%s2783 + $0x68] sm:$0x1]
      %v3169 = vld [vmem:[%s2783 + $0x6c] sm:$0xe]
      %v3170 = vld [vmem:[%s2783 + $0x70] sm:$0xf]
      %v3171 = vld [vmem:[%s2783 + $0x74] sm:$0x1]
      %v3172 = vld [vmem:[%s2783 + $0x78] sm:$0xe]
      %v3173 = vld [vmem:[%s2783 + $0x7c] sm:$0xf]
      %v3174 = vld [vmem:[%s2783 + $0x80] sm:$0x1]
      %v3175 = vld [vmem:[%s2783 + $0x84] sm:$0xe]
      %v3176 = vld [vmem:[%s2783 + $0x88] sm:$0xf]
      %v3177 = vld [vmem:[%s2783 + $0x8c] sm:$0x1]
      %v3178 = vld [vmem:[%s2783 + $0x90] sm:$0xe]
      %v3179 = vld [vmem:[%s2783 + $0x94] sm:$0xf]
      %v3180 = vld [vmem:[%s2783 + $0x98] sm:$0x1]
      %v3181 = vld [vmem:[%s2783 + $0x9c] sm:$0xe]
      %v3182 = vld [vmem:[%s2783 + $0xa0] sm:$0xf]
      %v3183 = vld [vmem:[%s2783 + $0xa4] sm:$0x1]
      %v3184 = vld [vmem:[%s2783 + $0xa8] sm:$0xe]
      %v3185 = vld [vmem:[%s2783 + $0xac] sm:$0xf]
      %v3186 = vld [vmem:[%s2783 + $0xb0] sm:$0x1]
      %v3187 = vld [vmem:[%s2783 + $0xb4] sm:$0xe]
      %v3188 = vld [vmem:[%s2783 + $0xb8] sm:$0xf]
      %v3189 = vld [vmem:[%s2783 + $0xbc] sm:$0x1]
      %v3238 = vrot.slane %v3142, 5
      %v3239 = vrot.slane %v3238, 4
      %v3240 = vrot.slane %v3143, 5
      %v3241 = vsel %vm326, %v3239, %v3240
      %v3242 = vrot.slane %v3240, 4
      %v3243 = vrot.slane %v3144, 5
      %v3244 = vsel %vm326, %v3242, %v3243
      %v3245 = vrot.slane %v3145, 5
      %v3246 = vrot.slane %v3245, 4
      %v3247 = vrot.slane %v3146, 5
      %v3248 = vsel %vm326, %v3246, %v3247
      %v3249 = vrot.slane %v3247, 4
      %v3250 = vrot.slane %v3147, 5
      %v3251 = vsel %vm326, %v3249, %v3250
      %v3252 = vrot.slane %v3148, 5
      %v3253 = vrot.slane %v3252, 4
      %v3254 = vrot.slane %v3149, 5
      %v3255 = vsel %vm326, %v3253, %v3254
      %v3256 = vrot.slane %v3254, 4
      %v3257 = vrot.slane %v3150, 5
      %v3258 = vsel %vm326, %v3256, %v3257
      %v3259 = vrot.slane %v3151, 5
      %v3260 = vrot.slane %v3259, 4
      %v3261 = vrot.slane %v3152, 5
      %v3262 = vsel %vm326, %v3260, %v3261
      %v3263 = vrot.slane %v3261, 4
      %v3264 = vrot.slane %v3153, 5
      %v3265 = vsel %vm326, %v3263, %v3264
      %v3266 = vrot.slane %v3154, 5
      %v3267 = vrot.slane %v3266, 4
      %v3268 = vrot.slane %v3155, 5
      %v3269 = vsel %vm326, %v3267, %v3268
      %v3270 = vrot.slane %v3268, 4
      %v3271 = vrot.slane %v3156, 5
      %v3272 = vsel %vm326, %v3270, %v3271
      %v3273 = vrot.slane %v3157, 5
      %v3274 = vrot.slane %v3273, 4
      %v3275 = vrot.slane %v3158, 5
      %v3276 = vsel %vm326, %v3274, %v3275
      %v3277 = vrot.slane %v3275, 4
      %v3278 = vrot.slane %v3159, 5
      %v3279 = vsel %vm326, %v3277, %v3278
      %v3280 = vrot.slane %v3160, 5
      %v3281 = vrot.slane %v3280, 4
      %v3282 = vrot.slane %v3161, 5
      %v3283 = vsel %vm326, %v3281, %v3282
      %v3284 = vrot.slane %v3282, 4
      %v3285 = vrot.slane %v3162, 5
      %v3286 = vsel %vm326, %v3284, %v3285
      %v3287 = vrot.slane %v3163, 5
      %v3288 = vrot.slane %v3287, 4
      %v3289 = vrot.slane %v3164, 5
      %v3290 = vsel %vm326, %v3288, %v3289
      %v3291 = vrot.slane %v3289, 4
      %v3292 = vrot.slane %v3165, 5
      %v3293 = vsel %vm326, %v3291, %v3292
      %v3294 = vrot.slane %v3166, 5
      %v3295 = vrot.slane %v3294, 4
      %v3296 = vrot.slane %v3167, 5
      %v3297 = vsel %vm326, %v3295, %v3296
      %v3298 = vrot.slane %v3296, 4
      %v3299 = vrot.slane %v3168, 5
      %v3300 = vsel %vm326, %v3298, %v3299
      %v3301 = vrot.slane %v3169, 5
      %v3302 = vrot.slane %v3301, 4
      %v3303 = vrot.slane %v3170, 5
      %v3304 = vsel %vm326, %v3302, %v3303
      %v3305 = vrot.slane %v3303, 4
      %v3306 = vrot.slane %v3171, 5
      %v3307 = vsel %vm326, %v3305, %v3306
      %v3308 = vrot.slane %v3172, 5
      %v3309 = vrot.slane %v3308, 4
      %v3310 = vrot.slane %v3173, 5
      %v3311 = vsel %vm326, %v3309, %v3310
      %v3312 = vrot.slane %v3310, 4
      %v3313 = vrot.slane %v3174, 5
      %v3314 = vsel %vm326, %v3312, %v3313
      %v3315 = vrot.slane %v3175, 5
      %v3316 = vrot.slane %v3315, 4
      %v3317 = vrot.slane %v3176, 5
      %v3318 = vsel %vm326, %v3316, %v3317
      %v3319 = vrot.slane %v3317, 4
      %v3320 = vrot.slane %v3177, 5
      %v3321 = vsel %vm326, %v3319, %v3320
      %v3322 = vrot.slane %v3178, 5
      %v3323 = vrot.slane %v3322, 4
      %v3324 = vrot.slane %v3179, 5
      %v3325 = vsel %vm326, %v3323, %v3324
      %v3326 = vrot.slane %v3324, 4
      %v3327 = vrot.slane %v3180, 5
      %v3328 = vsel %vm326, %v3326, %v3327
      %v3329 = vrot.slane %v3181, 5
      %v3330 = vrot.slane %v3329, 4
      %v3331 = vrot.slane %v3182, 5
      %v3332 = vsel %vm326, %v3330, %v3331
      %v3333 = vrot.slane %v3331, 4
      %v3334 = vrot.slane %v3183, 5
      %v3335 = vsel %vm326, %v3333, %v3334
      %v3336 = vrot.slane %v3184, 5
      %v3337 = vrot.slane %v3336, 4
      %v3338 = vrot.slane %v3185, 5
      %v3339 = vsel %vm326, %v3337, %v3338
      %v3340 = vrot.slane %v3338, 4
      %v3341 = vrot.slane %v3186, 5
      %v3342 = vsel %vm326, %v3340, %v3341
      %v3343 = vrot.slane %v3187, 5
      %v3344 = vrot.slane %v3343, 4
      %v3345 = vrot.slane %v3188, 5
      %v3346 = vsel %vm326, %v3344, %v3345
      %v3347 = vrot.slane %v3345, 4
      %v3348 = vrot.slane %v3189, 5
      %v3349 = vsel %vm326, %v3347, %v3348
      %s3350 = scalar_lea.vmem %s1, 14
      %v3351 = vld [vmem:[%s3350] sm:$0x3]
      %v3352 = vunpack.c.l.b16 %v3241
      %v3353 = vunpack.c.l.b16 %v3244
      %v3354 = vunpack.c.l.b16 %v3248
      %v3355 = vunpack.c.l.b16 %v3251
      %v3356 = vunpack.c.l.b16 %v3255
      %v3357 = vunpack.c.l.b16 %v3258
      %v3358 = vunpack.c.l.b16 %v3262
      %v3359 = vunpack.c.l.b16 %v3265
      %v3360 = vunpack.c.l.b16 %v3269
      %v3361 = vunpack.c.l.b16 %v3272
      %v3362 = vunpack.c.l.b16 %v3276
      %v3363 = vunpack.c.l.b16 %v3279
      %v3364 = vunpack.c.l.b16 %v3283
      %v3365 = vunpack.c.l.b16 %v3286
      %v3366 = vunpack.c.l.b16 %v3290
      %v3367 = vunpack.c.l.b16 %v3293
      %v3368 = vunpack.c.l.b16 %v3297
      %v3369 = vunpack.c.l.b16 %v3300
      %v3370 = vunpack.c.l.b16 %v3304
      %v3371 = vunpack.c.l.b16 %v3307
      %v3372 = vunpack.c.l.b16 %v3311
      %v3373 = vunpack.c.l.b16 %v3314
      %v3374 = vunpack.c.l.b16 %v3318
      %v3375 = vunpack.c.l.b16 %v3321
      %v3376 = vunpack.c.l.b16 %v3325
      %v3377 = vunpack.c.l.b16 %v3328
      %v3378 = vunpack.c.l.b16 %v3332
      %v3379 = vunpack.c.l.b16 %v3335
      %v3380 = vunpack.c.l.b16 %v3339
      %v3381 = vunpack.c.l.b16 %v3342
      %v3382 = vunpack.c.l.b16 %v3346
      %v3383 = vunpack.c.l.b16 %v3349
      %v3384 = vpack.c.b16 %v3353, %v3352
      %v3385 = vpack.c.b16 %v3355, %v3354
      %v3386 = vpack.c.b16 %v3357, %v3356
      %v3387 = vpack.c.b16 %v3359, %v3358
      %v3388 = vpack.c.b16 %v3361, %v3360
      %v3389 = vpack.c.b16 %v3363, %v3362
      %v3390 = vpack.c.b16 %v3365, %v3364
      %v3391 = vpack.c.b16 %v3367, %v3366
      %v3392 = vpack.c.b16 %v3369, %v3368
      %v3393 = vpack.c.b16 %v3371, %v3370
      %v3394 = vpack.c.b16 %v3373, %v3372
      %v3395 = vpack.c.b16 %v3375, %v3374
      %v3396 = vpack.c.b16 %v3377, %v3376
      %v3397 = vpack.c.b16 %v3379, %v3378
      %v3398 = vpack.c.b16 %v3381, %v3380
      %v3399 = vpack.c.b16 %v3383, %v3382
      %v3401 = vsel %vm489, %v3384, 0
      %v3404 = vsel %vm489, %v3385, 0
      %v3407 = vsel %vm489, %v3386, 0
      %v3410 = vsel %vm489, %v3387, 0
      %v3413 = vsel %vm489, %v3388, 0
      %v3416 = vsel %vm489, %v3389, 0
      %v3419 = vsel %vm489, %v3390, 0
      %v3422 = vsel %vm489, %v3391, 0
      %v3425 = vsel %vm489, %v3392, 0
      %v3428 = vsel %vm489, %v3393, 0
      %v3431 = vsel %vm489, %v3394, 0
      %v3434 = vsel %vm489, %v3395, 0
      %v3437 = vsel %vm489, %v3396, 0
      %v3440 = vsel %vm489, %v3397, 0
      %v3443 = vsel %vm489, %v3398, 0
      %v3446 = vsel %vm489, %v3399, 0
      %v3449 = vsel %vm538, %v3351, 0
      %3451 = vmatprep.subr.bf16.mxu0 0
      %3452 = vmatpush1.bf16.msra.mxu0 %v3449
      %3453 = vmatprep.subr.bf16.mxu0 0
      %3454 = vmatpush1.bf16.msra.mxu0 0
      %3455 = vmatprep.subr.bf16.mxu0 0
      %3456 = vmatpush1.bf16.msra.mxu0 0
      %3457 = vmatprep.subr.bf16.mxu0 0
      %3458 = vmatpush1.bf16.msra.mxu0 0
      %3459 = vmatprep.subr.bf16.mxu0 0
      %3460 = vmatpush1.bf16.msra.mxu0 0
      %3461 = vmatprep.subr.bf16.mxu0 0
      %3462 = vmatpush1.bf16.msra.mxu0 0
      %3463 = vmatprep.subr.bf16.mxu0 0
      %3464 = vmatpush1.bf16.msra.mxu0 0
      %3465 = vmatprep.subr.bf16.mxu0 0
      %3466 = vmatpush1.bf16.msra.mxu0 0
      %3467 = vmatprep.subr.bf16.mxu0 0
      %3468 = vmatpush1.bf16.msra.mxu0 0
      %3469 = vmatprep.subr.bf16.mxu0 0
      %3470 = vmatpush1.bf16.msra.mxu0 0
      %3471 = vmatprep.subr.bf16.mxu0 0
      %3472 = vmatpush1.bf16.msra.mxu0 0
      %3473 = vmatprep.subr.bf16.mxu0 0
      %3474 = vmatpush1.bf16.msra.mxu0 0
      %3475 = vmatprep.subr.bf16.mxu0 0
      %3476 = vmatpush1.bf16.msra.mxu0 0
      %3477 = vmatprep.subr.bf16.mxu0 0
      %3478 = vmatpush1.bf16.msra.mxu0 0
      %3479 = vmatprep.subr.bf16.mxu0 0
      %3480 = vmatpush1.bf16.msra.mxu0 0
      %3481 = vmatprep.subr.bf16.mxu0 0
      %3482 = vmatpush1.bf16.msra.mxu0 0
      %3483 = vmatprep.mubr.bf16.mxu0 0
      %3484 = vmatmul.mubr.bf16.gmra.mrb[0].mxu0 %v3401
      %v3485 = vpop.f32.mrb[0].mxu0
      %v3486 = vadd.f32 0.0, %v3485
      %v3487 = vpop.f32.mrb[0].mxu0
      %v3488 = vpop.f32.mrb[0].mxu0
      %v3489 = vadd.f32 0.0, %v3488
      %v3490 = vpop.f32.mrb[0].mxu0
      %3491 = vmatprep.mubr.bf16.mxu0 0
      %3492 = vmatmul.mubr.bf16.gmra.mrb[0].mxu0 %v3404
      %v3493 = vpop.f32.mrb[0].mxu0
      %v3494 = vadd.f32 0.0, %v3493
      %v3495 = vpop.f32.mrb[0].mxu0
      %v3496 = vpop.f32.mrb[0].mxu0
      %v3497 = vadd.f32 0.0, %v3496
      %v3498 = vpop.f32.mrb[0].mxu0
      %3499 = vmatprep.mubr.bf16.mxu0 0
      %3500 = vmatmul.mubr.bf16.gmra.mrb[0].mxu0 %v3407
      %v3501 = vpop.f32.mrb[0].mxu0
      %v3502 = vadd.f32 0.0, %v3501
      %v3503 = vpop.f32.mrb[0].mxu0
      %v3504 = vpop.f32.mrb[0].mxu0
      %v3505 = vadd.f32 0.0, %v3504
      %v3506 = vpop.f32.mrb[0].mxu0
      %3507 = vmatprep.mubr.bf16.mxu0 0
      %3508 = vmatmul.mubr.bf16.gmra.mrb[0].mxu0 %v3410
      %v3509 = vpop.f32.mrb[0].mxu0
      %v3510 = vadd.f32 0.0, %v3509
      %v3511 = vpop.f32.mrb[0].mxu0
      %v3512 = vpop.f32.mrb[0].mxu0
      %v3513 = vadd.f32 0.0, %v3512
      %v3514 = vpop.f32.mrb[0].mxu0
      %3515 = vmatprep.mubr.bf16.mxu0 0
      %3516 = vmatmul.mubr.bf16.gmra.mrb[0].mxu0 %v3413
      %v3517 = vpop.f32.mrb[0].mxu0
      %v3518 = vadd.f32 0.0, %v3517
      %v3519 = vpop.f32.mrb[0].mxu0
      %v3520 = vpop.f32.mrb[0].mxu0
      %v3521 = vadd.f32 0.0, %v3520
      %v3522 = vpop.f32.mrb[0].mxu0
      %3523 = vmatprep.mubr.bf16.mxu0 0
      %3524 = vmatmul.mubr.bf16.gmra.mrb[0].mxu0 %v3416
      %v3525 = vpop.f32.mrb[0].mxu0
      %v3526 = vadd.f32 0.0, %v3525
      %v3527 = vpop.f32.mrb[0].mxu0
      %v3528 = vpop.f32.mrb[0].mxu0
      %v3529 = vadd.f32 0.0, %v3528
      %v3530 = vpop.f32.mrb[0].mxu0
      %3531 = vmatprep.mubr.bf16.mxu0 0
      %3532 = vmatmul.mubr.bf16.gmra.mrb[0].mxu0 %v3419
      %v3533 = vpop.f32.mrb[0].mxu0
      %v3534 = vadd.f32 0.0, %v3533
      %v3535 = vpop.f32.mrb[0].mxu0
      %v3536 = vpop.f32.mrb[0].mxu0
      %v3537 = vadd.f32 0.0, %v3536
      %v3538 = vpop.f32.mrb[0].mxu0
      %3539 = vmatprep.mubr.bf16.mxu0 0
      %3540 = vmatmul.mubr.bf16.gmra.mrb[0].mxu0 %v3422
      %v3541 = vpop.f32.mrb[0].mxu0
      %v3542 = vadd.f32 0.0, %v3541
      %v3543 = vpop.f32.mrb[0].mxu0
      %v3544 = vpop.f32.mrb[0].mxu0
      %v3545 = vadd.f32 0.0, %v3544
      %v3546 = vpop.f32.mrb[0].mxu0
      %3547 = vmatprep.mubr.bf16.mxu0 0
      %3548 = vmatmul.mubr.bf16.gmra.mrb[0].mxu0 %v3425
      %v3549 = vpop.f32.mrb[0].mxu0
      %v3550 = vadd.f32 0.0, %v3549
      %v3551 = vpop.f32.mrb[0].mxu0
      %v3552 = vpop.f32.mrb[0].mxu0
      %v3553 = vadd.f32 0.0, %v3552
      %v3554 = vpop.f32.mrb[0].mxu0
      %3555 = vmatprep.mubr.bf16.mxu0 0
      %3556 = vmatmul.mubr.bf16.gmra.mrb[0].mxu0 %v3428
      %v3557 = vpop.f32.mrb[0].mxu0
      %v3558 = vadd.f32 0.0, %v3557
      %v3559 = vpop.f32.mrb[0].mxu0
      %v3560 = vpop.f32.mrb[0].mxu0
      %v3561 = vadd.f32 0.0, %v3560
      %v3562 = vpop.f32.mrb[0].mxu0
      %3563 = vmatprep.mubr.bf16.mxu0 0
      %3564 = vmatmul.mubr.bf16.gmra.mrb[0].mxu0 %v3431
      %v3565 = vpop.f32.mrb[0].mxu0
      %v3566 = vadd.f32 0.0, %v3565
      %v3567 = vpop.f32.mrb[0].mxu0
      %v3568 = vpop.f32.mrb[0].mxu0
      %v3569 = vadd.f32 0.0, %v3568
      %v3570 = vpop.f32.mrb[0].mxu0
      %3571 = vmatprep.mubr.bf16.mxu0 0
      %3572 = vmatmul.mubr.bf16.gmra.mrb[0].mxu0 %v3434
      %v3573 = vpop.f32.mrb[0].mxu0
      %v3574 = vadd.f32 0.0, %v3573
      %v3575 = vpop.f32.mrb[0].mxu0
      %v3576 = vpop.f32.mrb[0].mxu0
      %v3577 = vadd.f32 0.0, %v3576
      %v3578 = vpop.f32.mrb[0].mxu0
      %3579 = vmatprep.mubr.bf16.mxu0 0
      %3580 = vmatmul.mubr.bf16.gmra.mrb[0].mxu0 %v3437
      %v3581 = vpop.f32.mrb[0].mxu0
      %v3582 = vadd.f32 0.0, %v3581
      %v3583 = vpop.f32.mrb[0].mxu0
      %v3584 = vpop.f32.mrb[0].mxu0
      %v3585 = vadd.f32 0.0, %v3584
      %v3586 = vpop.f32.mrb[0].mxu0
      %3587 = vmatprep.mubr.bf16.mxu0 0
      %3588 = vmatmul.mubr.bf16.gmra.mrb[0].mxu0 %v3440
      %v3589 = vpop.f32.mrb[0].mxu0
      %v3590 = vadd.f32 0.0, %v3589
      %v3591 = vpop.f32.mrb[0].mxu0
      %v3592 = vpop.f32.mrb[0].mxu0
      %v3593 = vadd.f32 0.0, %v3592
      %v3594 = vpop.f32.mrb[0].mxu0
      %3595 = vmatprep.mubr.bf16.mxu0 0
      %3596 = vmatmul.mubr.bf16.gmra.mrb[0].mxu0 %v3443
      %v3597 = vpop.f32.mrb[0].mxu0
      %v3598 = vadd.f32 0.0, %v3597
      %v3599 = vpop.f32.mrb[0].mxu0
      %v3600 = vpop.f32.mrb[0].mxu0
      %v3601 = vadd.f32 0.0, %v3600
      %v3602 = vpop.f32.mrb[0].mxu0
      %3603 = vmatprep.mubr.bf16.mxu0 0
      %3604 = vmatmul.mubr.bf16.gmra.mrb[0].mxu0 %v3446
      %v3605 = vpop.f32.mrb[0].mxu0
      %v3606 = vadd.f32 0.0, %v3605
      %v3607 = vpop.f32.mrb[0].mxu0
      %v3608 = vpop.f32.mrb[0].mxu0
      %v3609 = vadd.f32 0.0, %v3608
      %v3610 = vpop.f32.mrb[0].mxu0
      %3611 = vdwg.mxu0
      %v3612 = vadd.f32 %v3110, %v3486
      %v3613 = vadd.f32 %v3111, %v3489
      %v3614 = vadd.f32 %v3112, %v3494
      %v3615 = vadd.f32 %v3113, %v3497
      %v3616 = vadd.f32 %v3114, %v3502
      %v3617 = vadd.f32 %v3115, %v3505
      %v3618 = vadd.f32 %v3116, %v3510
      %v3619 = vadd.f32 %v3117, %v3513
      %v3620 = vadd.f32 %v3118, %v3518
      %v3621 = vadd.f32 %v3119, %v3521
      %v3622 = vadd.f32 %v3120, %v3526
      %v3623 = vadd.f32 %v3121, %v3529
      %v3624 = vadd.f32 %v3122, %v3534
      %v3625 = vadd.f32 %v3123, %v3537
      %v3626 = vadd.f32 %v3124, %v3542
      %v3627 = vadd.f32 %v3125, %v3545
      %v3628 = vadd.f32 %v3126, %v3550
      %v3629 = vadd.f32 %v3127, %v3553
      %v3630 = vadd.f32 %v3128, %v3558
      %v3631 = vadd.f32 %v3129, %v3561
      %v3632 = vadd.f32 %v3130, %v3566
      %v3633 = vadd.f32 %v3131, %v3569
      %v3634 = vadd.f32 %v3132, %v3574
      %v3635 = vadd.f32 %v3133, %v3577
      %v3636 = vadd.f32 %v3134, %v3582
      %v3637 = vadd.f32 %v3135, %v3585
      %v3638 = vadd.f32 %v3136, %v3590
      %v3639 = vadd.f32 %v3137, %v3593
      %v3640 = vadd.f32 %v3138, %v3598
      %v3641 = vadd.f32 %v3139, %v3601
      %v3642 = vadd.f32 %v3140, %v3606
      %v3643 = vadd.f32 %v3141, %v3609
      %v3644 = vld [vmem:[%s2783] sm:$0xc]
      %v3645 = vld [vmem:[%s2783 + $0x8] sm:$0x3]
      %v3646 = vld [vmem:[%s2783 + $0xc] sm:$0xc]
      %v3647 = vld [vmem:[%s2783 + $0x14] sm:$0x3]
      %v3648 = vld [vmem:[%s2783 + $0x18] sm:$0xc]
      %v3649 = vld [vmem:[%s2783 + $0x20] sm:$0x3]
      %v3650 = vld [vmem:[%s2783 + $0x24] sm:$0xc]
      %v3651 = vld [vmem:[%s2783 + $0x2c] sm:$0x3]
      %v3652 = vld [vmem:[%s2783 + $0x30] sm:$0xc]
      %v3653 = vld [vmem:[%s2783 + $0x38] sm:$0x3]
      %v3654 = vld [vmem:[%s2783 + $0x3c] sm:$0xc]
      %v3655 = vld [vmem:[%s2783 + $0x44] sm:$0x3]
      %v3656 = vld [vmem:[%s2783 + $0x48] sm:$0xc]
      %v3657 = vld [vmem:[%s2783 + $0x50] sm:$0x3]
      %v3658 = vld [vmem:[%s2783 + $0x54] sm:$0xc]
      %v3659 = vld [vmem:[%s2783 + $0x5c] sm:$0x3]
      %v3660 = vld [vmem:[%s2783 + $0x60] sm:$0xc]
      %v3661 = vld [vmem:[%s2783 + $0x68] sm:$0x3]
      %v3662 = vld [vmem:[%s2783 + $0x6c] sm:$0xc]
      %v3663 = vld [vmem:[%s2783 + $0x74] sm:$0x3]
      %v3664 = vld [vmem:[%s2783 + $0x78] sm:$0xc]
      %v3665 = vld [vmem:[%s2783 + $0x80] sm:$0x3]
      %v3666 = vld [vmem:[%s2783 + $0x84] sm:$0xc]
      %v3667 = vld [vmem:[%s2783 + $0x8c] sm:$0x3]
      %v3668 = vld [vmem:[%s2783 + $0x90] sm:$0xc]
      %v3669 = vld [vmem:[%s2783 + $0x98] sm:$0x3]
      %v3670 = vld [vmem:[%s2783 + $0x9c] sm:$0xc]
      %v3671 = vld [vmem:[%s2783 + $0xa4] sm:$0x3]
      %v3672 = vld [vmem:[%s2783 + $0xa8] sm:$0xc]
      %v3673 = vld [vmem:[%s2783 + $0xb0] sm:$0x3]
      %v3674 = vld [vmem:[%s2783 + $0xb4] sm:$0xc]
      %v3675 = vld [vmem:[%s2783 + $0xbc] sm:$0x3]
      %v3708 = vrot.slane %v3644, 6
      %v3709 = vrot.slane %v3708, 4
      %v3710 = vrot.slane %v3143, 6
      %v3711 = vsel %vm1045, %v3709, %v3710
      %v3712 = vrot.slane %v3710, 4
      %v3713 = vrot.slane %v3645, 6
      %v3714 = vsel %vm1045, %v3712, %v3713
      %v3715 = vrot.slane %v3646, 6
      %v3716 = vrot.slane %v3715, 4
      %v3717 = vrot.slane %v3146, 6
      %v3718 = vsel %vm1045, %v3716, %v3717
      %v3719 = vrot.slane %v3717, 4
      %v3720 = vrot.slane %v3647, 6
      %v3721 = vsel %vm1045, %v3719, %v3720
      %v3722 = vrot.slane %v3648, 6
      %v3723 = vrot.slane %v3722, 4
      %v3724 = vrot.slane %v3149, 6
      %v3725 = vsel %vm1045, %v3723, %v3724
      %v3726 = vrot.slane %v3724, 4
      %v3727 = vrot.slane %v3649, 6
      %v3728 = vsel %vm1045, %v3726, %v3727
      %v3729 = vrot.slane %v3650, 6
      %v3730 = vrot.slane %v3729, 4
      %v3731 = vrot.slane %v3152, 6
      %v3732 = vsel %vm1045, %v3730, %v3731
      %v3733 = vrot.slane %v3731, 4
      %v3734 = vrot.slane %v3651, 6
      %v3735 = vsel %vm1045, %v3733, %v3734
      %v3736 = vrot.slane %v3652, 6
      %v3737 = vrot.slane %v3736, 4
      %v3738 = vrot.slane %v3155, 6
      %v3739 = vsel %vm1045, %v3737, %v3738
      %v3740 = vrot.slane %v3738, 4
      %v3741 = vrot.slane %v3653, 6
      %v3742 = vsel %vm1045, %v3740, %v3741
      %v3743 = vrot.slane %v3654, 6
      %v3744 = vrot.slane %v3743, 4
      %v3745 = vrot.slane %v3158, 6
      %v3746 = vsel %vm1045, %v3744, %v3745
      %v3747 = vrot.slane %v3745, 4
      %v3748 = vrot.slane %v3655, 6
      %v3749 = vsel %vm1045, %v3747, %v3748
      %v3750 = vrot.slane %v3656, 6
      %v3751 = vrot.slane %v3750, 4
      %v3752 = vrot.slane %v3161, 6
      %v3753 = vsel %vm1045, %v3751, %v3752
      %v3754 = vrot.slane %v3752, 4
      %v3755 = vrot.slane %v3657, 6
      %v3756 = vsel %vm1045, %v3754, %v3755
      %v3757 = vrot.slane %v3658, 6
      %v3758 = vrot.slane %v3757, 4
      %v3759 = vrot.slane %v3164, 6
      %v3760 = vsel %vm1045, %v3758, %v3759
      %v3761 = vrot.slane %v3759, 4
      %v3762 = vrot.slane %v3659, 6
      %v3763 = vsel %vm1045, %v3761, %v3762
      %v3764 = vrot.slane %v3660, 6
      %v3765 = vrot.slane %v3764, 4
      %v3766 = vrot.slane %v3167, 6
      %v3767 = vsel %vm1045, %v3765, %v3766
      %v3768 = vrot.slane %v3766, 4
      %v3769 = vrot.slane %v3661, 6
      %v3770 = vsel %vm1045, %v3768, %v3769
      %v3771 = vrot.slane %v3662, 6
      %v3772 = vrot.slane %v3771, 4
      %v3773 = vrot.slane %v3170, 6
      %v3774 = vsel %vm1045, %v3772, %v3773
      %v3775 = vrot.slane %v3773, 4
      %v3776 = vrot.slane %v3663, 6
      %v3777 = vsel %vm1045, %v3775, %v3776
      %v3778 = vrot.slane %v3664, 6
      %v3779 = vrot.slane %v3778, 4
      %v3780 = vrot.slane %v3173, 6
      %v3781 = vsel %vm1045, %v3779, %v3780
      %v3782 = vrot.slane %v3780, 4
      %v3783 = vrot.slane %v3665, 6
      %v3784 = vsel %vm1045, %v3782, %v3783
      %v3785 = vrot.slane %v3666, 6
      %v3786 = vrot.slane %v3785, 4
      %v3787 = vrot.slane %v3176, 6
      %v3788 = vsel %vm1045, %v3786, %v3787
      %v3789 = vrot.slane %v3787, 4
      %v3790 = vrot.slane %v3667, 6
      %v3791 = vsel %vm1045, %v3789, %v3790
      %v3792 = vrot.slane %v3668, 6
      %v3793 = vrot.slane %v3792, 4
      %v3794 = vrot.slane %v3179, 6
      %v3795 = vsel %vm1045, %v3793, %v3794
      %v3796 = vrot.slane %v3794, 4
      %v3797 = vrot.slane %v3669, 6
      %v3798 = vsel %vm1045, %v3796, %v3797
      %v3799 = vrot.slane %v3670, 6
      %v3800 = vrot.slane %v3799, 4
      %v3801 = vrot.slane %v3182, 6
      %v3802 = vsel %vm1045, %v3800, %v3801
      %v3803 = vrot.slane %v3801, 4
      %v3804 = vrot.slane %v3671, 6
      %v3805 = vsel %vm1045, %v3803, %v3804
      %v3806 = vrot.slane %v3672, 6
      %v3807 = vrot.slane %v3806, 4
      %v3808 = vrot.slane %v3185, 6
      %v3809 = vsel %vm1045, %v3807, %v3808
      %v3810 = vrot.slane %v3808, 4
      %v3811 = vrot.slane %v3673, 6
      %v3812 = vsel %vm1045, %v3810, %v3811
      %v3813 = vrot.slane %v3674, 6
      %v3814 = vrot.slane %v3813, 4
      %v3815 = vrot.slane %v3188, 6
      %v3816 = vsel %vm1045, %v3814, %v3815
      %v3817 = vrot.slane %v3815, 4
      %v3818 = vrot.slane %v3675, 6
      %v3819 = vsel %vm1045, %v3817, %v3818
      %s3820 = scalar_lea.vmem %s1, 16
      %v3821 = vld [vmem:[%s3820] sm:$0x3]
      %v3822 = vunpack.c.l.b16 %v3711
      %v3823 = vunpack.c.l.b16 %v3714
      %v3824 = vunpack.c.l.b16 %v3718
      %v3825 = vunpack.c.l.b16 %v3721
      %v3826 = vunpack.c.l.b16 %v3725
      %v3827 = vunpack.c.l.b16 %v3728
      %v3828 = vunpack.c.l.b16 %v3732
      %v3829 = vunpack.c.l.b16 %v3735
      %v3830 = vunpack.c.l.b16 %v3739
      %v3831 = vunpack.c.l.b16 %v3742
      %v3832 = vunpack.c.l.b16 %v3746
      %v3833 = vunpack.c.l.b16 %v3749
      %v3834 = vunpack.c.l.b16 %v3753
      %v3835 = vunpack.c.l.b16 %v3756
      %v3836 = vunpack.c.l.b16 %v3760
      %v3837 = vunpack.c.l.b16 %v3763
      %v3838 = vunpack.c.l.b16 %v3767
      %v3839 = vunpack.c.l.b16 %v3770
      %v3840 = vunpack.c.l.b16 %v3774
      %v3841 = vunpack.c.l.b16 %v3777
      %v3842 = vunpack.c.l.b16 %v3781
      %v3843 = vunpack.c.l.b16 %v3784
      %v3844 = vunpack.c.l.b16 %v3788
      %v3845 = vunpack.c.l.b16 %v3791
      %v3846 = vunpack.c.l.b16 %v3795
      %v3847 = vunpack.c.l.b16 %v3798
      %v3848 = vunpack.c.l.b16 %v3802
      %v3849 = vunpack.c.l.b16 %v3805
      %v3850 = vunpack.c.l.b16 %v3809
      %v3851 = vunpack.c.l.b16 %v3812
      %v3852 = vunpack.c.l.b16 %v3816
      %v3853 = vunpack.c.l.b16 %v3819
      %v3854 = vpack.c.b16 %v3823, %v3822
      %v3855 = vpack.c.b16 %v3825, %v3824
      %v3856 = vpack.c.b16 %v3827, %v3826
      %v3857 = vpack.c.b16 %v3829, %v3828
      %v3858 = vpack.c.b16 %v3831, %v3830
      %v3859 = vpack.c.b16 %v3833, %v3832
      %v3860 = vpack.c.b16 %v3835, %v3834
      %v3861 = vpack.c.b16 %v3837, %v3836
      %v3862 = vpack.c.b16 %v3839, %v3838
      %v3863 = vpack.c.b16 %v3841, %v3840
      %v3864 = vpack.c.b16 %v3843, %v3842
      %v3865 = vpack.c.b16 %v3845, %v3844
      %v3866 = vpack.c.b16 %v3847, %v3846
      %v3867 = vpack.c.b16 %v3849, %v3848
      %v3868 = vpack.c.b16 %v3851, %v3850
      %v3869 = vpack.c.b16 %v3853, %v3852
      %v3871 = vsel %vm489, %v3854, 0
      %v3874 = vsel %vm489, %v3855, 0
      %v3877 = vsel %vm489, %v3856, 0
      %v3880 = vsel %vm489, %v3857, 0
      %v3883 = vsel %vm489, %v3858, 0
      %v3886 = vsel %vm489, %v3859, 0
      %v3889 = vsel %vm489, %v3860, 0
      %v3892 = vsel %vm489, %v3861, 0
      %v3895 = vsel %vm489, %v3862, 0
      %v3898 = vsel %vm489, %v3863, 0
      %v3901 = vsel %vm489, %v3864, 0
      %v3904 = vsel %vm489, %v3865, 0
      %v3907 = vsel %vm489, %v3866, 0
      %v3910 = vsel %vm489, %v3867, 0
      %v3913 = vsel %vm489, %v3868, 0
      %v3916 = vsel %vm489, %v3869, 0
      %v3919 = vsel %vm538, %v3821, 0
      %3921 = vmatprep.subr.bf16.mxu0 0
      %3922 = vmatpush1.bf16.msra.mxu0 %v3919
      %3923 = vmatprep.subr.bf16.mxu0 0
      %3924 = vmatpush1.bf16.msra.mxu0 0
      %3925 = vmatprep.subr.bf16.mxu0 0
      %3926 = vmatpush1.bf16.msra.mxu0 0
      %3927 = vmatprep.subr.bf16.mxu0 0
      %3928 = vmatpush1.bf16.msra.mxu0 0
      %3929 = vmatprep.subr.bf16.mxu0 0
      %3930 = vmatpush1.bf16.msra.mxu0 0
      %3931 = vmatprep.subr.bf16.mxu0 0
      %3932 = vmatpush1.bf16.msra.mxu0 0
      %3933 = vmatprep.subr.bf16.mxu0 0
      %3934 = vmatpush1.bf16.msra.mxu0 0
      %3935 = vmatprep.subr.bf16.mxu0 0
      %3936 = vmatpush1.bf16.msra.mxu0 0
      %3937 = vmatprep.subr.bf16.mxu0 0
      %3938 = vmatpush1.bf16.msra.mxu0 0
      %3939 = vmatprep.subr.bf16.mxu0 0
      %3940 = vmatpush1.bf16.msra.mxu0 0
      %3941 = vmatprep.subr.bf16.mxu0 0
      %3942 = vmatpush1.bf16.msra.mxu0 0
      %3943 = vmatprep.subr.bf16.mxu0 0
      %3944 = vmatpush1.bf16.msra.mxu0 0
      %3945 = vmatprep.subr.bf16.mxu0 0
      %3946 = vmatpush1.bf16.msra.mxu0 0
      %3947 = vmatprep.subr.bf16.mxu0 0
      %3948 = vmatpush1.bf16.msra.mxu0 0
      %3949 = vmatprep.subr.bf16.mxu0 0
      %3950 = vmatpush1.bf16.msra.mxu0 0
      %3951 = vmatprep.subr.bf16.mxu0 0
      %3952 = vmatpush1.bf16.msra.mxu0 0
      %3953 = vmatprep.mubr.bf16.mxu0 0
      %3954 = vmatmul.mubr.bf16.gmra.mrb[0].mxu0 %v3871
      %v3955 = vpop.f32.mrb[0].mxu0
      %v3956 = vadd.f32 0.0, %v3955
      %v3957 = vpop.f32.mrb[0].mxu0
      %v3958 = vpop.f32.mrb[0].mxu0
      %v3959 = vadd.f32 0.0, %v3958
      %v3960 = vpop.f32.mrb[0].mxu0
      %3961 = vmatprep.mubr.bf16.mxu0 0
      %3962 = vmatmul.mubr.bf16.gmra.mrb[0].mxu0 %v3874
      %v3963 = vpop.f32.mrb[0].mxu0
      %v3964 = vadd.f32 0.0, %v3963
      %v3965 = vpop.f32.mrb[0].mxu0
      %v3966 = vpop.f32.mrb[0].mxu0
      %v3967 = vadd.f32 0.0, %v3966
      %v3968 = vpop.f32.mrb[0].mxu0
      %3969 = vmatprep.mubr.bf16.mxu0 0
      %3970 = vmatmul.mubr.bf16.gmra.mrb[0].mxu0 %v3877
      %v3971 = vpop.f32.mrb[0].mxu0
      %v3972 = vadd.f32 0.0, %v3971
      %v3973 = vpop.f32.mrb[0].mxu0
      %v3974 = vpop.f32.mrb[0].mxu0
      %v3975 = vadd.f32 0.0, %v3974
      %v3976 = vpop.f32.mrb[0].mxu0
      %3977 = vmatprep.mubr.bf16.mxu0 0
      %3978 = vmatmul.mubr.bf16.gmra.mrb[0].mxu0 %v3880
      %v3979 = vpop.f32.mrb[0].mxu0
      %v3980 = vadd.f32 0.0, %v3979
      %v3981 = vpop.f32.mrb[0].mxu0
      %v3982 = vpop.f32.mrb[0].mxu0
      %v3983 = vadd.f32 0.0, %v3982
      %v3984 = vpop.f32.mrb[0].mxu0
      %3985 = vmatprep.mubr.bf16.mxu0 0
      %3986 = vmatmul.mubr.bf16.gmra.mrb[0].mxu0 %v3883
      %v3987 = vpop.f32.mrb[0].mxu0
      %v3988 = vadd.f32 0.0, %v3987
      %v3989 = vpop.f32.mrb[0].mxu0
      %v3990 = vpop.f32.mrb[0].mxu0
      %v3991 = vadd.f32 0.0, %v3990
      %v3992 = vpop.f32.mrb[0].mxu0
      %3993 = vmatprep.mubr.bf16.mxu0 0
      %3994 = vmatmul.mubr.bf16.gmra.mrb[0].mxu0 %v3886
      %v3995 = vpop.f32.mrb[0].mxu0
      %v3996 = vadd.f32 0.0, %v3995
      %v3997 = vpop.f32.mrb[0].mxu0
      %v3998 = vpop.f32.mrb[0].mxu0
      %v3999 = vadd.f32 0.0, %v3998
      %v4000 = vpop.f32.mrb[0].mxu0
      %4001 = vmatprep.mubr.bf16.mxu0 0
      %4002 = vmatmul.mubr.bf16.gmra.mrb[0].mxu0 %v3889
      %v4003 = vpop.f32.mrb[0].mxu0
      %v4004 = vadd.f32 0.0, %v4003
      %v4005 = vpop.f32.mrb[0].mxu0
      %v4006 = vpop.f32.mrb[0].mxu0
      %v4007 = vadd.f32 0.0, %v4006
      %v4008 = vpop.f32.mrb[0].mxu0
      %4009 = vmatprep.mubr.bf16.mxu0 0
      %4010 = vmatmul.mubr.bf16.gmra.mrb[0].mxu0 %v3892
      %v4011 = vpop.f32.mrb[0].mxu0
      %v4012 = vadd.f32 0.0, %v4011
      %v4013 = vpop.f32.mrb[0].mxu0
      %v4014 = vpop.f32.mrb[0].mxu0
      %v4015 = vadd.f32 0.0, %v4014
      %v4016 = vpop.f32.mrb[0].mxu0
      %4017 = vmatprep.mubr.bf16.mxu0 0
      %4018 = vmatmul.mubr.bf16.gmra.mrb[0].mxu0 %v3895
      %v4019 = vpop.f32.mrb[0].mxu0
      %v4020 = vadd.f32 0.0, %v4019
      %v4021 = vpop.f32.mrb[0].mxu0
      %v4022 = vpop.f32.mrb[0].mxu0
      %v4023 = vadd.f32 0.0, %v4022
      %v4024 = vpop.f32.mrb[0].mxu0
      %4025 = vmatprep.mubr.bf16.mxu0 0
      %4026 = vmatmul.mubr.bf16.gmra.mrb[0].mxu0 %v3898
      %v4027 = vpop.f32.mrb[0].mxu0
      %v4028 = vadd.f32 0.0, %v4027
      %v4029 = vpop.f32.mrb[0].mxu0
      %v4030 = vpop.f32.mrb[0].mxu0
      %v4031 = vadd.f32 0.0, %v4030
      %v4032 = vpop.f32.mrb[0].mxu0
      %4033 = vmatprep.mubr.bf16.mxu0 0
      %4034 = vmatmul.mubr.bf16.gmra.mrb[0].mxu0 %v3901
      %v4035 = vpop.f32.mrb[0].mxu0
      %v4036 = vadd.f32 0.0, %v4035
      %v4037 = vpop.f32.mrb[0].mxu0
      %v4038 = vpop.f32.mrb[0].mxu0
      %v4039 = vadd.f32 0.0, %v4038
      %v4040 = vpop.f32.mrb[0].mxu0
      %4041 = vmatprep.mubr.bf16.mxu0 0
      %4042 = vmatmul.mubr.bf16.gmra.mrb[0].mxu0 %v3904
      %v4043 = vpop.f32.mrb[0].mxu0
      %v4044 = vadd.f32 0.0, %v4043
      %v4045 = vpop.f32.mrb[0].mxu0
      %v4046 = vpop.f32.mrb[0].mxu0
      %v4047 = vadd.f32 0.0, %v4046
      %v4048 = vpop.f32.mrb[0].mxu0
      %4049 = vmatprep.mubr.bf16.mxu0 0
      %4050 = vmatmul.mubr.bf16.gmra.mrb[0].mxu0 %v3907
      %v4051 = vpop.f32.mrb[0].mxu0
      %v4052 = vadd.f32 0.0, %v4051
      %v4053 = vpop.f32.mrb[0].mxu0
      %v4054 = vpop.f32.mrb[0].mxu0
      %v4055 = vadd.f32 0.0, %v4054
      %v4056 = vpop.f32.mrb[0].mxu0
      %4057 = vmatprep.mubr.bf16.mxu0 0
      %4058 = vmatmul.mubr.bf16.gmra.mrb[0].mxu0 %v3910
      %v4059 = vpop.f32.mrb[0].mxu0
      %v4060 = vadd.f32 0.0, %v4059
      %v4061 = vpop.f32.mrb[0].mxu0
      %v4062 = vpop.f32.mrb[0].mxu0
      %v4063 = vadd.f32 0.0, %v4062
      %v4064 = vpop.f32.mrb[0].mxu0
      %4065 = vmatprep.mubr.bf16.mxu0 0
      %4066 = vmatmul.mubr.bf16.gmra.mrb[0].mxu0 %v3913
      %v4067 = vpop.f32.mrb[0].mxu0
      %v4068 = vadd.f32 0.0, %v4067
      %v4069 = vpop.f32.mrb[0].mxu0
      %v4070 = vpop.f32.mrb[0].mxu0
      %v4071 = vadd.f32 0.0, %v4070
      %v4072 = vpop.f32.mrb[0].mxu0
      %4073 = vmatprep.mubr.bf16.mxu0 0
      %4074 = vmatmul.mubr.bf16.gmra.mrb[0].mxu0 %v3916
      %v4075 = vpop.f32.mrb[0].mxu0
      %v4076 = vadd.f32 0.0, %v4075
      %v4077 = vpop.f32.mrb[0].mxu0
      %v4078 = vpop.f32.mrb[0].mxu0
      %v4079 = vadd.f32 0.0, %v4078
      %v4080 = vpop.f32.mrb[0].mxu0
      %4081 = vdwg.mxu0
      %v4082 = vadd.f32 %v3612, %v3956
      %v4083 = vadd.f32 %v3613, %v3959
      %v4084 = vadd.f32 %v3614, %v3964
      %v4085 = vadd.f32 %v3615, %v3967
      %v4086 = vadd.f32 %v3616, %v3972
      %v4087 = vadd.f32 %v3617, %v3975
      %v4088 = vadd.f32 %v3618, %v3980
      %v4089 = vadd.f32 %v3619, %v3983
      %v4090 = vadd.f32 %v3620, %v3988
      %v4091 = vadd.f32 %v3621, %v3991
      %v4092 = vadd.f32 %v3622, %v3996
      %v4093 = vadd.f32 %v3623, %v3999
      %v4094 = vadd.f32 %v3624, %v4004
      %v4095 = vadd.f32 %v3625, %v4007
      %v4096 = vadd.f32 %v3626, %v4012
      %v4097 = vadd.f32 %v3627, %v4015
      %v4098 = vadd.f32 %v3628, %v4020
      %v4099 = vadd.f32 %v3629, %v4023
      %v4100 = vadd.f32 %v3630, %v4028
      %v4101 = vadd.f32 %v3631, %v4031
      %v4102 = vadd.f32 %v3632, %v4036
      %v4103 = vadd.f32 %v3633, %v4039
      %v4104 = vadd.f32 %v3634, %v4044
      %v4105 = vadd.f32 %v3635, %v4047
      %v4106 = vadd.f32 %v3636, %v4052
      %v4107 = vadd.f32 %v3637, %v4055
      %v4108 = vadd.f32 %v3638, %v4060
      %v4109 = vadd.f32 %v3639, %v4063
      %v4110 = vadd.f32 %v3640, %v4068
      %v4111 = vadd.f32 %v3641, %v4071
      %v4112 = vadd.f32 %v3642, %v4076
      %v4113 = vadd.f32 %v3643, %v4079
      %v4114 = vld [vmem:[%s2] sm:$0x1]
      %v4116 = vlaneseq
      %v4117 = vshrl.u32 %v4116, 7
      %v4118 = vsub.s32 0, %v4117
      %v4119 = vrot.slane %v4114, %v4118
      %v4121 = vadd.f32 %v4082, %v4119
      %v4122 = vadd.f32 %v4083, %v4119
      %v4123 = vadd.f32 %v4084, %v4119
      %v4124 = vadd.f32 %v4085, %v4119
      %v4125 = vadd.f32 %v4086, %v4119
      %v4126 = vadd.f32 %v4087, %v4119
      %v4127 = vadd.f32 %v4088, %v4119
      %v4128 = vadd.f32 %v4089, %v4119
      %v4129 = vadd.f32 %v4090, %v4119
      %v4130 = vadd.f32 %v4091, %v4119
      %v4131 = vadd.f32 %v4092, %v4119
      %v4132 = vadd.f32 %v4093, %v4119
      %v4133 = vadd.f32 %v4094, %v4119
      %v4134 = vadd.f32 %v4095, %v4119
      %v4135 = vadd.f32 %v4096, %v4119
      %v4136 = vadd.f32 %v4097, %v4119
      %v4137 = vadd.f32 %v4098, %v4119
      %v4138 = vadd.f32 %v4099, %v4119
      %v4139 = vadd.f32 %v4100, %v4119
      %v4140 = vadd.f32 %v4101, %v4119
      %v4141 = vadd.f32 %v4102, %v4119
      %v4142 = vadd.f32 %v4103, %v4119
      %v4143 = vadd.f32 %v4104, %v4119
      %v4144 = vadd.f32 %v4105, %v4119
      %v4145 = vadd.f32 %v4106, %v4119
      %v4146 = vadd.f32 %v4107, %v4119
      %v4147 = vadd.f32 %v4108, %v4119
      %v4148 = vadd.f32 %v4109, %v4119
      %v4149 = vadd.f32 %v4110, %v4119
      %v4150 = vadd.f32 %v4111, %v4119
      %v4151 = vadd.f32 %v4112, %v4119
      %v4152 = vadd.f32 %v4113, %v4119
      %v4153 = vmax.f32 %v4121, 0.0
      %v4154 = vmax.f32 %v4122, 0.0
      %v4155 = vmax.f32 %v4123, 0.0
      %v4156 = vmax.f32 %v4124, 0.0
      %v4157 = vmax.f32 %v4125, 0.0
      %v4158 = vmax.f32 %v4126, 0.0
      %v4159 = vmax.f32 %v4127, 0.0
      %v4160 = vmax.f32 %v4128, 0.0
      %v4161 = vmax.f32 %v4129, 0.0
      %v4162 = vmax.f32 %v4130, 0.0
      %v4163 = vmax.f32 %v4131, 0.0
      %v4164 = vmax.f32 %v4132, 0.0
      %v4165 = vmax.f32 %v4133, 0.0
      %v4166 = vmax.f32 %v4134, 0.0
      %v4167 = vmax.f32 %v4135, 0.0
      %v4168 = vmax.f32 %v4136, 0.0
      %v4169 = vmax.f32 %v4137, 0.0
      %v4170 = vmax.f32 %v4138, 0.0
      %v4171 = vmax.f32 %v4139, 0.0
      %v4172 = vmax.f32 %v4140, 0.0
      %v4173 = vmax.f32 %v4141, 0.0
      %v4174 = vmax.f32 %v4142, 0.0
      %v4175 = vmax.f32 %v4143, 0.0
      %v4176 = vmax.f32 %v4144, 0.0
      %v4177 = vmax.f32 %v4145, 0.0
      %v4178 = vmax.f32 %v4146, 0.0
      %v4179 = vmax.f32 %v4147, 0.0
      %v4180 = vmax.f32 %v4148, 0.0
      %v4181 = vmax.f32 %v4149, 0.0
      %v4182 = vmax.f32 %v4150, 0.0
      %v4183 = vmax.f32 %v4151, 0.0
      %v4184 = vmax.f32 %v4152, 0.0
      %v4185 = vpack.c.bf16 %v4154, %v4153
      %v4186 = vpack.c.bf16 %v4156, %v4155
      %v4187 = vpack.c.bf16 %v4158, %v4157
      %v4188 = vpack.c.bf16 %v4160, %v4159
      %v4189 = vpack.c.bf16 %v4162, %v4161
      %v4190 = vpack.c.bf16 %v4164, %v4163
      %v4191 = vpack.c.bf16 %v4166, %v4165
      %v4192 = vpack.c.bf16 %v4168, %v4167
      %v4193 = vpack.c.bf16 %v4170, %v4169
      %v4194 = vpack.c.bf16 %v4172, %v4171
      %v4195 = vpack.c.bf16 %v4174, %v4173
      %v4196 = vpack.c.bf16 %v4176, %v4175
      %v4197 = vpack.c.bf16 %v4178, %v4177
      %v4198 = vpack.c.bf16 %v4180, %v4179
      %v4199 = vpack.c.bf16 %v4182, %v4181
      %v4200 = vpack.c.bf16 %v4184, %v4183
      %v4217 = vunpack.c.l.b16 %v4185
      %v4218 = vunpack.c.h.b16 %v4185
      %v4219 = vunpack.c.l.b16 %v4186
      %v4220 = vunpack.c.h.b16 %v4186
      %v4221 = vunpack.c.l.b16 %v4187
      %v4222 = vunpack.c.h.b16 %v4187
      %v4223 = vunpack.c.l.b16 %v4188
      %v4224 = vunpack.c.h.b16 %v4188
      %v4225 = vunpack.c.l.b16 %v4189
      %v4226 = vunpack.c.h.b16 %v4189
      %v4227 = vunpack.c.l.b16 %v4190
      %v4228 = vunpack.c.h.b16 %v4190
      %v4229 = vunpack.c.l.b16 %v4191
      %v4230 = vunpack.c.h.b16 %v4191
      %v4231 = vunpack.c.l.b16 %v4192
      %v4232 = vunpack.c.h.b16 %v4192
      %v4233 = vunpack.c.l.b16 %v4193
      %v4234 = vunpack.c.h.b16 %v4193
      %v4235 = vunpack.c.l.b16 %v4194
      %v4236 = vunpack.c.h.b16 %v4194
      %v4237 = vunpack.c.l.b16 %v4195
      %v4238 = vunpack.c.h.b16 %v4195
      %v4239 = vunpack.c.l.b16 %v4196
      %v4240 = vunpack.c.h.b16 %v4196
      %v4241 = vunpack.c.l.b16 %v4197
      %v4242 = vunpack.c.h.b16 %v4197
      %v4243 = vunpack.c.l.b16 %v4198
      %v4244 = vunpack.c.h.b16 %v4198
      %v4245 = vunpack.c.l.b16 %v4199
      %v4246 = vunpack.c.h.b16 %v4199
      %v4247 = vunpack.c.l.b16 %v4200
      %v4248 = vunpack.c.h.b16 %v4200
      %v4249 = vpack.c.b16 %v4217, %v4217
      %v4250 = vpack.c.b16 %v4218, %v4218
      %v4251 = vpack.c.b16 %v4219, %v4219
      %v4252 = vpack.c.b16 %v4220, %v4220
      %v4253 = vpack.c.b16 %v4221, %v4221
      %v4254 = vpack.c.b16 %v4222, %v4222
      %v4255 = vpack.c.b16 %v4223, %v4223
      %v4256 = vpack.c.b16 %v4224, %v4224
      %v4257 = vpack.c.b16 %v4225, %v4225
      %v4258 = vpack.c.b16 %v4226, %v4226
      %v4259 = vpack.c.b16 %v4227, %v4227
      %v4260 = vpack.c.b16 %v4228, %v4228
      %v4261 = vpack.c.b16 %v4229, %v4229
      %v4262 = vpack.c.b16 %v4230, %v4230
      %v4263 = vpack.c.b16 %v4231, %v4231
      %v4264 = vpack.c.b16 %v4232, %v4232
      %v4265 = vpack.c.b16 %v4233, %v4233
      %v4266 = vpack.c.b16 %v4234, %v4234
      %v4267 = vpack.c.b16 %v4235, %v4235
      %v4268 = vpack.c.b16 %v4236, %v4236
      %v4269 = vpack.c.b16 %v4237, %v4237
      %v4270 = vpack.c.b16 %v4238, %v4238
      %v4271 = vpack.c.b16 %v4239, %v4239
      %v4272 = vpack.c.b16 %v4240, %v4240
      %v4273 = vpack.c.b16 %v4241, %v4241
      %v4274 = vpack.c.b16 %v4242, %v4242
      %v4275 = vpack.c.b16 %v4243, %v4243
      %v4276 = vpack.c.b16 %v4244, %v4244
      %v4277 = vpack.c.b16 %v4245, %v4245
      %v4278 = vpack.c.b16 %v4246, %v4246
      %v4279 = vpack.c.b16 %v4247, %v4247
      %v4280 = vpack.c.b16 %v4248, %v4248
      %4313 = vst [vmem:[%s208] sm:$0xf] %v4249
      %4314 = vst [vmem:[%s208 + $0x4] sm:$0xf] %v4250
      %4315 = vst [vmem:[%s208 + $0x8] sm:$0xf] %v4251
      %4316 = vst [vmem:[%s208 + $0xc] sm:$0xf] %v4252
      %4317 = vst [vmem:[%s208 + $0x10] sm:$0xf] %v4253
      %4318 = vst [vmem:[%s208 + $0x14] sm:$0xf] %v4254
      %4319 = vst [vmem:[%s208 + $0x18] sm:$0xf] %v4255
      %4320 = vst [vmem:[%s208 + $0x1c] sm:$0xf] %v4256
      %4321 = vst [vmem:[%s208 + $0x20] sm:$0xf] %v4257
      %4322 = vst [vmem:[%s208 + $0x24] sm:$0xf] %v4258
      %4323 = vst [vmem:[%s208 + $0x28] sm:$0xf] %v4259
      %4324 = vst [vmem:[%s208 + $0x2c] sm:$0xf] %v4260
      %4325 = vst [vmem:[%s208 + $0x30] sm:$0xf] %v4261
      %4326 = vst [vmem:[%s208 + $0x34] sm:$0xf] %v4262
      %4327 = vst [vmem:[%s208 + $0x38] sm:$0xf] %v4263
      %4328 = vst [vmem:[%s208 + $0x3c] sm:$0xf] %v4264
      %4329 = vst [vmem:[%s208 + $0x40] sm:$0xf] %v4265
      %4330 = vst [vmem:[%s208 + $0x44] sm:$0xf] %v4266
      %4331 = vst [vmem:[%s208 + $0x48] sm:$0xf] %v4267
      %4332 = vst [vmem:[%s208 + $0x4c] sm:$0xf] %v4268
      %4333 = vst [vmem:[%s208 + $0x50] sm:$0xf] %v4269
      %4334 = vst [vmem:[%s208 + $0x54] sm:$0xf] %v4270
      %4335 = vst [vmem:[%s208 + $0x58] sm:$0xf] %v4271
      %4336 = vst [vmem:[%s208 + $0x5c] sm:$0xf] %v4272
      %4337 = vst [vmem:[%s208 + $0x60] sm:$0xf] %v4273
      %4338 = vst [vmem:[%s208 + $0x64] sm:$0xf] %v4274
      %4339 = vst [vmem:[%s208 + $0x68] sm:$0xf] %v4275
      %4340 = vst [vmem:[%s208 + $0x6c] sm:$0xf] %v4276
      %4341 = vst [vmem:[%s208 + $0x70] sm:$0xf] %v4277
      %4342 = vst [vmem:[%s208 + $0x74] sm:$0xf] %v4278
      %4343 = vst [vmem:[%s208 + $0x78] sm:$0xf] %v4279
      %4344 = vst [vmem:[%s208 + $0x7c] sm:$0xf] %v4280
      %s4345 = smul.u32 16, %s19
      %p4346 = scmp.lt.s32.totalorder %s18, 1
      %s4347 = scalar_select %p4346, %s18, 1
      %p4348 = scmp.lt.s32.totalorder %s4345, 15
      %s4349 = scalar_select %p4348, %s4345, 15
      %s4350 = smul.addr %s4349, 2
      %s4351 = smul.addr %s4347, 32
      %s4352 = sadd.s32 %s4350, %s4351
      %s4353 = smul.addr %s4352, 4
      %s4354 = scalar_lea.vmem %s3, %s4353
      // Predicated region
      $region33: #{scam_conv_pallas.1} parent=31 // pred_check
        %p4355 = pneg %p116
      $region34: #{scam_conv_pallas.1} parent=31 // pred_check_branch
        %4357 = sbr.rel (%p4355) target = $region36
      $region35: #{scam_conv_pallas.1} parent=31 // pred_region
        %s4358 = smul.u32 16, %s19
      $region36: #{scam_conv_pallas.1} parent=31 // pred_fallthru
        _
    $region32: #{scam_conv_pallas.1} parent=5 // pred_fallthru
      _
    %p4359 = scmp.le.s32.totalorder 2, %s9
    // Predicated region
    $region37: #{scam_conv_pallas.1} parent=5 // pred_check
      %p4360 = pneg %p4359
    $region38: #{scam_conv_pallas.1} parent=5 // pred_check_branch
      %4362 = sbr.rel (%p4360) target = $region40
    $region39: #{scam_conv_pallas.1} parent=5 // pred_region
      %s4363 = ssub.s32 %s9, 2
      // Predicated region
      $region41: #{scam_conv_pallas.1} parent=39 // pred_check
        %p4364 = pneg %p122
      $region42: #{scam_conv_pallas.1} parent=39 // pred_check_branch
        %4366 = sbr.rel (%p4364) target = $region44
      $region43: #{scam_conv_pallas.1} parent=39 // pred_region
        %s4367 = smul.u32 16, %s21
        %p4368 = scmp.lt.s32.totalorder %s20, 1
        %s4369 = scalar_select %p4368, %s20, 1
        %p4370 = scmp.lt.s32.totalorder %s4367, 15
        %s4371 = scalar_select %p4370, %s4367, 15
        %s4372 = smul.addr %s4371, 2
        %s4373 = smul.addr %s4369, 32
        %s4374 = sadd.s32 %s4372, %s4373
        %s4375 = smul.addr %s4374, 4
        %s4376 = scalar_lea.vmem %s3, %s4375
      $region44: #{scam_conv_pallas.1} parent=39 // pred_fallthru
        _
    $region40: #{scam_conv_pallas.1} parent=5 // pred_fallthru
      _
  $region6: #{scam_conv_pallas.1} parent=0 // loop_footer
    %s13 = sadd.s32 1, %s9
  $region7: #{scam_conv_pallas.1} parent=0 // loop_footer_branch
    %8 = sbr.rel target = $region3
  $region8: #{scam_conv_pallas.1} parent=0 // loop_exit
    _

</llo_original>
